<compile_context>
chip_gen: v6e
topology: v6e:2x2x1
jax: 0.10.0
libtpu: 0.0.40
codegen_flags: <defaults>
</compile_context>

<pallas_src>
import functools

import jax
import jax.numpy as jnp
from jax.experimental import pallas as pl
from jax.experimental.pallas import tpu as pltpu

X_DIM = 784
N_HID = 1000
Z_DIM = 2

# Lane-aligned (multiple-of-128) padded sizes.
X_PAD = 896      # 7 * 128
HID_PAD = 1024   # 8 * 128
Z_PAD = 128      # lane-dense output head

TM = 128         # batch tile (rows per grid step)


def qnet_kernel(x_ref, w1_ref, b1_ref, w2_ref, b2_ref, w3_ref, b3_ref, o_ref):
    # hidden 1: Linear (bf16 x bf16 -> f32 acc) + (dropout: identity in eval) + relu (f32 epilogue)
    h1 = jnp.dot(x_ref[...], w1_ref[...], preferred_element_type=jnp.float32)
    h1 = jnp.maximum(h1 + b1_ref[...], 0.0)

    # hidden 2: Linear + (dropout: identity in eval) + relu
    h2 = jnp.dot(h1.astype(jnp.bfloat16), w2_ref[...],
                 preferred_element_type=jnp.float32)
    h2 = jnp.maximum(h2 + b2_ref[...], 0.0)

    # output head: Linear(hidden -> z), lane-padded to 128 columns
    out = jnp.dot(h2.astype(jnp.bfloat16), w3_ref[...],
                  preferred_element_type=jnp.float32)
    o_ref[...] = (out + b3_ref[...]).astype(o_ref.dtype)


def prepare_params(w1, b1, w2, b2, w3, b3):
    """Pad to lane-aligned shapes and cast weights to bf16 (biases stay f32).

    Inputs are f32 with PyTorch-equivalent values in (in, out) layout.
    Zero padding is inert: padded input features are zeroed, padded hidden
    columns get zero weights + zero bias (ReLU(0)=0 feeds zero weight rows
    downstream), padded head columns are zero and sliced off in the wrapper.
    """
    def pad2(a, r, c):
        return jnp.zeros((r, c), a.dtype).at[: a.shape[0], : a.shape[1]].set(a)

    w1p = pad2(w1, X_PAD, HID_PAD).astype(jnp.bfloat16)
    b1p = pad2(b1, 1, HID_PAD).astype(jnp.float32)
    w2p = pad2(w2, HID_PAD, HID_PAD).astype(jnp.bfloat16)
    b2p = pad2(b2, 1, HID_PAD).astype(jnp.float32)
    w3p = pad2(w3, HID_PAD, Z_PAD).astype(jnp.bfloat16)
    b3p = pad2(b3, 1, Z_PAD).astype(jnp.float32)
    return w1p, b1p, w2p, b2p, w3p, b3p


@functools.partial(jax.jit, static_argnames=("tm",))
def qnet_forward(x, w1p, b1p, w2p, b2p, w3p, b3p, tm=TM):
    """x: (B, X_DIM) f32; params already padded/cast via prepare_params."""
    B = x.shape[0]
    n_tiles = pl.cdiv(B, tm)
    Bp = n_tiles * tm

    # Pad batch to a tile multiple and features to X_PAD; stream x as bf16.
    xp = jnp.zeros((Bp, X_PAD), jnp.bfloat16)
    xp = xp.at[:B, :X_DIM].set(x.astype(jnp.bfloat16))

    batch_spec = lambda shape: pl.BlockSpec(shape, lambda i: (i, 0))
    resident = lambda shape: pl.BlockSpec(shape, lambda i: (0, 0))

    out_padded = pl.pallas_call(
        qnet_kernel,
        out_shape=jax.ShapeDtypeStruct((Bp, Z_PAD), jnp.float32),
        grid=(n_tiles,),
        in_specs=[
            batch_spec((tm, X_PAD)),
            resident((X_PAD, HID_PAD)), resident((1, HID_PAD)),
            resident((HID_PAD, HID_PAD)), resident((1, HID_PAD)),
            resident((HID_PAD, Z_PAD)), resident((1, Z_PAD)),
        ],
        out_specs=batch_spec((tm, Z_PAD)),
        compiler_params=pltpu.CompilerParams(
            dimension_semantics=("parallel",),
            vmem_limit_bytes=32 * 1024 * 1024,
        ),
    )(xp, w1p, b1p, w2p, b2p, w3p, b3p)

    # Slice away batch padding and the lane-padded head columns.
    return out_padded[:B, :Z_DIM]


def init_params(key):
    """Deterministic PyTorch-style init (uniform(-1/sqrt(fan_in), 1/sqrt(fan_in)))."""
    ks = jax.random.split(key, 6)

    def lin(kw, kb, fan_in, fan_out):
        bound = 1.0 / jnp.sqrt(jnp.float32(fan_in))
        # stored as (in, out) so the kernel computes x @ W
        w = jax.random.uniform(kw, (fan_in, fan_out), jnp.float32, -bound, bound)
        b = jax.random.uniform(kb, (1, fan_out), jnp.float32, -bound, bound)
        return w, b

    w1, b1 = lin(ks[0], ks[1], X_DIM, N_HID)
    w2, b2 = lin(ks[2], ks[3], N_HID, N_HID)
    w3, b3 = lin(ks[4], ks[5], N_HID, Z_DIM)
    return w1, b1, w2, b2, w3, b3


if __name__ == "__main__":
    key = jax.random.PRNGKey(0)
    k_x, k_p = jax.random.split(key)

    B = 8
    x = jax.random.normal(k_x, (B, X_DIM), jnp.float32)
    params_f32 = init_params(k_p)
    params = prepare_params(*params_f32)

    out = qnet_forward(x, *params)
    out = jax.block_until_ready(out)
    assert out.shape == (B, Z_DIM)

    # Matched reference in plain JAX using the SAME bf16-quantized params and
    # f32 accumulation, so the comparison is tight.
    w1p, b1p, w2p, b2p, w3p, b3p = params
    xb = x.astype(jnp.bfloat16)
    h = jnp.maximum(
        jnp.dot(xb, w1p[:X_DIM, :], preferred_element_type=jnp.float32) + b1p, 0.0)
    h = jnp.maximum(
        jnp.dot(h.astype(jnp.bfloat16), w2p, preferred_element_type=jnp.float32) + b2p, 0.0)
    ref = (jnp.dot(h.astype(jnp.bfloat16), w3p, preferred_element_type=jnp.float32)
           + b3p)[:, :Z_DIM]
    assert jnp.allclose(out, ref, atol=2e-2, rtol=2e-2)

    # Loose sanity check against the original f32 math (bf16 quantization noise
    # over a ~1000-wide contraction).
    w1, b1, w2, b2, w3, b3 = params_f32
    hf = jnp.maximum(x @ w1 + b1, 0.0)
    hf = jnp.maximum(hf @ w2 + b2, 0.0)
    ref_f32 = hf @ w3 + b3
    assert jnp.allclose(out, ref_f32, atol=2e-1, rtol=2e-1)

    print("KERNEL_OK")
</pallas_src>

<mosaic_0001>
module attributes {stable_mosaic.version = 11 : i64} {
  func.func @qnet_kernel(%arg0: i32, %arg1: memref<128x896xbf16, #tpu.memory_space<vmem>>, %arg2: memref<896x1024xbf16, #tpu.memory_space<vmem>>, %arg3: memref<1x1024xf32, #tpu.memory_space<vmem>>, %arg4: memref<1024x1024xbf16, #tpu.memory_space<vmem>>, %arg5: memref<1x1024xf32, #tpu.memory_space<vmem>>, %arg6: memref<1024x128xbf16, #tpu.memory_space<vmem>>, %arg7: memref<1x128xf32, #tpu.memory_space<vmem>>, %arg8: memref<128x128xf32, #tpu.memory_space<vmem>>) attributes {dimension_semantics = [#tpu.dimension_semantics<parallel>], iteration_bounds = array<i64: 1>, scalar_prefetch = 0 : i64, scratch_operands = 0 : i64, tpu.core_type = #tpu.core_type<tc>, window_params = [{transform_indices = @transform_0, window_bounds = array<i64: 128, 896>}, {pipeline_mode = #tpu.pipeline_mode<synchronous>, transform_indices = @transform_1, window_bounds = array<i64: 896, 1024>}, {pipeline_mode = #tpu.pipeline_mode<synchronous>, transform_indices = @transform_2, window_bounds = array<i64: 1, 1024>}, {pipeline_mode = #tpu.pipeline_mode<synchronous>, transform_indices = @transform_3, window_bounds = array<i64: 1024, 1024>}, {pipeline_mode = #tpu.pipeline_mode<synchronous>, transform_indices = @transform_4, window_bounds = array<i64: 1, 1024>}, {pipeline_mode = #tpu.pipeline_mode<synchronous>, transform_indices = @transform_5, window_bounds = array<i64: 1024, 128>}, {pipeline_mode = #tpu.pipeline_mode<synchronous>, transform_indices = @transform_6, window_bounds = array<i64: 1, 128>}, {transform_indices = @transform_7, window_bounds = array<i64: 128, 128>}]} {
    %c0 = arith.constant 0 : index
    %c0_0 = arith.constant 0 : index
    %0 = vector.load %arg1[%c0, %c0_0] : memref<128x896xbf16, #tpu.memory_space<vmem>>, vector<128x896xbf16>
    %c0_1 = arith.constant 0 : index
    %c0_2 = arith.constant 0 : index
    %1 = vector.load %arg2[%c0_1, %c0_2] : memref<896x1024xbf16, #tpu.memory_space<vmem>>, vector<896x1024xbf16>
    %cst = arith.constant dense<0.000000e+00> : vector<128x1024xf32>
    %2 = tpu.matmul %0, %1, %cst {dimension_numbers = #tpu.dot_dimension_numbers<[1], [0], [0], [1], [0, 0, 1, 1], [], []>} : vector<128x896xbf16>, vector<896x1024xbf16>, vector<128x1024xf32> -> vector<128x1024xf32>
    %c0_3 = arith.constant 0 : index
    %c0_4 = arith.constant 0 : index
    %3 = vector.load %arg3[%c0_3, %c0_4] : memref<1x1024xf32, #tpu.memory_space<vmem>>, vector<1x1024xf32>
    %4 = vector.broadcast %3 : vector<1x1024xf32> to vector<128x1024xf32>
    %5 = arith.addf %2, %4 : vector<128x1024xf32>
    %cst_5 = arith.constant 0.000000e+00 : f32
    %6 = vector.broadcast %cst_5 : f32 to vector<128x1024xf32>
    %7 = arith.maximumf %5, %6 : vector<128x1024xf32>
    %8 = arith.truncf %7 : vector<128x1024xf32> to vector<128x1024xbf16>
    %c0_6 = arith.constant 0 : index
    %c0_7 = arith.constant 0 : index
    %9 = vector.load %arg4[%c0_6, %c0_7] : memref<1024x1024xbf16, #tpu.memory_space<vmem>>, vector<1024x1024xbf16>
    %cst_8 = arith.constant dense<0.000000e+00> : vector<128x1024xf32>
    %10 = tpu.matmul %8, %9, %cst_8 {dimension_numbers = #tpu.dot_dimension_numbers<[1], [0], [0], [1], [0, 0, 1, 1], [], []>} : vector<128x1024xbf16>, vector<1024x1024xbf16>, vector<128x1024xf32> -> vector<128x1024xf32>
    %c0_9 = arith.constant 0 : index
    %c0_10 = arith.constant 0 : index
    %11 = vector.load %arg5[%c0_9, %c0_10] : memref<1x1024xf32, #tpu.memory_space<vmem>>, vector<1x1024xf32>
    %12 = vector.broadcast %11 : vector<1x1024xf32> to vector<128x1024xf32>
    %13 = arith.addf %10, %12 : vector<128x1024xf32>
    %cst_11 = arith.constant 0.000000e+00 : f32
    %14 = vector.broadcast %cst_11 : f32 to vector<128x1024xf32>
    %15 = arith.maximumf %13, %14 : vector<128x1024xf32>
    %16 = arith.truncf %15 : vector<128x1024xf32> to vector<128x1024xbf16>
    %c0_12 = arith.constant 0 : index
    %c0_13 = arith.constant 0 : index
    %17 = vector.load %arg6[%c0_12, %c0_13] : memref<1024x128xbf16, #tpu.memory_space<vmem>>, vector<1024x128xbf16>
    %cst_14 = arith.constant dense<0.000000e+00> : vector<128x128xf32>
    %18 = tpu.matmul %16, %17, %cst_14 {dimension_numbers = #tpu.dot_dimension_numbers<[1], [0], [0], [1], [0, 0, 1, 1], [], []>} : vector<128x1024xbf16>, vector<1024x128xbf16>, vector<128x128xf32> -> vector<128x128xf32>
    %c0_15 = arith.constant 0 : index
    %c0_16 = arith.constant 0 : index
    %19 = vector.load %arg7[%c0_15, %c0_16] : memref<1x128xf32, #tpu.memory_space<vmem>>, vector<1x128xf32>
    %20 = vector.broadcast %19 : vector<1x128xf32> to vector<128x128xf32>
    %21 = arith.addf %18, %20 : vector<128x128xf32>
    %c0_17 = arith.constant 0 : index
    %c0_18 = arith.constant 0 : index
    %22 = vector.load %arg8[%c0_17, %c0_18] : memref<128x128xf32, #tpu.memory_space<vmem>>, vector<128x128xf32>
    tpu.vector_store %arg8[%c0_17, %c0_18], %21 {strides = array<i32>} : memref<128x128xf32, #tpu.memory_space<vmem>>, vector<128x128xf32>,
    return
  }
  func.func @transform_0(%arg0: i32) -> (i32, i32) {
    %c0_i32 = arith.constant 0 : i32
    %c0_i32_0 = arith.constant 0 : i32
    return %arg0, %c0_i32 : i32, i32
  }
  func.func @transform_1(%arg0: i32) -> (i32, i32) {
    %c0_i32 = arith.constant 0 : i32
    %c0_i32_0 = arith.constant 0 : i32
    %c0_i32_1 = arith.constant 0 : i32
    return %c0_i32, %c0_i32_0 : i32, i32
  }
  func.func @transform_2(%arg0: i32) -> (i32, i32) {
    %c0_i32 = arith.constant 0 : i32
    %c0_i32_0 = arith.constant 0 : i32
    %c0_i32_1 = arith.constant 0 : i32
    return %c0_i32, %c0_i32_0 : i32, i32
  }
  func.func @transform_3(%arg0: i32) -> (i32, i32) {
    %c0_i32 = arith.constant 0 : i32
    %c0_i32_0 = arith.constant 0 : i32
    %c0_i32_1 = arith.constant 0 : i32
    return %c0_i32, %c0_i32_0 : i32, i32
  }
  func.func @transform_4(%arg0: i32) -> (i32, i32) {
    %c0_i32 = arith.constant 0 : i32
    %c0_i32_0 = arith.constant 0 : i32
    %c0_i32_1 = arith.constant 0 : i32
    return %c0_i32, %c0_i32_0 : i32, i32
  }
  func.func @transform_5(%arg0: i32) -> (i32, i32) {
    %c0_i32 = arith.constant 0 : i32
    %c0_i32_0 = arith.constant 0 : i32
    %c0_i32_1 = arith.constant 0 : i32
    return %c0_i32, %c0_i32_0 : i32, i32
  }
  func.func @transform_6(%arg0: i32) -> (i32, i32) {
    %c0_i32 = arith.constant 0 : i32
    %c0_i32_0 = arith.constant 0 : i32
    %c0_i32_1 = arith.constant 0 : i32
    return %c0_i32, %c0_i32_0 : i32, i32
  }
  func.func @transform_7(%arg0: i32) -> (i32, i32) {
    %c0_i32 = arith.constant 0 : i32
    %c0_i32_0 = arith.constant 0 : i32
    return %arg0, %c0_i32 : i32, i32
  }
}

</mosaic_0001>

<llo_original>
// kernel: qnet_forward.1
$region0: #{qnet_forward.1}
  #allocation0 [shape = 'u32[]', space=smem, size = 0x4, offset = 0x4, fixed_abs, tag = 'smem constant byte address 0x4 - core index']
  #allocation1 [shape = 'u32[144,128]{1,0:T(1,128)}', space=vmem, size = 0x12000, scoped, tag = 'internal scratch']
  %s0 = inlined_call_operand.vmem [shape: bf16[128,896], index: 0, kind: input, shape index: {}]
  %s1 = inlined_call_operand.hbm [shape: bf16[896,1024], index: 1, kind: input, shape index: {}]
  %s2 = inlined_call_operand.hbm [shape: f32[1,1024], index: 2, kind: input, shape index: {}]
  %s3 = inlined_call_operand.hbm [shape: bf16[1024,1024], index: 3, kind: input, shape index: {}]
  %s4 = inlined_call_operand.hbm [shape: f32[1,1024], index: 4, kind: input, shape index: {}]
  %s5 = inlined_call_operand.hbm [shape: bf16[1024,128], index: 5, kind: input, shape index: {}]
  %s6 = inlined_call_operand.hbm [shape: f32[1,128], index: 6, kind: input, shape index: {}]
  %s7 = inlined_call_operand.vmem [shape: f32[128,128], index: 7, kind: output, shape index: {}]
  %s8 = sld [smem:[#allocation0]]
  $region62: #{qnet_forward.1} parent=0
    _
  %s10 = ssub.s32 1, %s8
  %s11 = scalar_select 0, %s10, %s8
  $region1: #{qnet_forward.1} parent=0
    #allocation2 [shape = 'u8[1835008]{0}', space=vmem, size = 0x1c0000, scoped, tag = 'input window, operand 1, single buffered']
    #allocation3 [shape = 's32[1]{0}', space=sflag, size = 0x4, scoped, tag = 'scoped memory for qnet_forward.1']
    #allocation4 [shape = 'u8[4096]{0}', space=vmem, size = 0x1000, scoped, tag = 'input window, operand 2, single buffered']
    #allocation5 [shape = 's32[1]{0}', space=sflag, size = 0x4, scoped, tag = 'scoped memory for qnet_forward.1']
    #allocation6 [shape = 'u8[2097152]{0}', space=vmem, size = 0x200000, scoped, tag = 'input window, operand 3, single buffered']
    #allocation7 [shape = 'u8[4096]{0}', space=vmem, size = 0x1000, scoped, tag = 'input window, operand 4, single buffered']
    #allocation8 [shape = 's32[1]{0}', space=sflag, size = 0x4, scoped, tag = 'scoped memory for qnet_forward.1']
    #allocation9 [shape = 'u8[262144]{0}', space=vmem, size = 0x40000, scoped, tag = 'input window, operand 5, single buffered']
    #allocation10 [shape = 'u8[512]{0}', space=vmem, size = 0x400, scoped, tag = 'input window, operand 6, single buffered']
    #allocation11 [shape = 's32[1]{0}', space=sflag, size = 0x4, scoped, tag = 'scoped memory for qnet_forward.1']
    %12 = vsyncpa [#allocation3], 0
    %13 = vsyncpa [#allocation5], 0
    %14 = vsyncpa [#allocation8], 0
    %15 = vsyncpa [#allocation11], 0
    // Predicated region
    $region2: #{qnet_forward.1} parent=1 // pred_check
      _
    $region3: #{qnet_forward.1} parent=1 // pred_check_branch
      %17 = sbr.rel (0) target = $region5
    $region4: #{qnet_forward.1} parent=1 // pred_region
      _
    $region5: #{qnet_forward.1} parent=1 // pred_fallthru
      _
    // Predicated region
    $region6: #{qnet_forward.1} parent=1 // pred_check
      _
    $region7: #{qnet_forward.1} parent=1 // pred_check_branch
      %19 = sbr.rel (0) target = $region9
    $region8: #{qnet_forward.1} parent=1 // pred_region
      %s21 = ssub.s32 57344, 57344
      %22 = vsyncadd [#allocation3], %s21
      %s23 = sshll.u32 [#allocation2], 4
      %s24 = int_to_ptr.vmem [resolvable:$true] %s23
      %29 = dma.hbm_to_vmem [thread:$0]  %s1, 57344, %s24, [#allocation3], 512, 512, 32
    $region9: #{qnet_forward.1} parent=1 // pred_fallthru
      _
    // Predicated region
    $region10: #{qnet_forward.1} parent=1 // pred_check
      _
    $region11: #{qnet_forward.1} parent=1 // pred_check_branch
      %31 = sbr.rel (0) target = $region13
    $region12: #{qnet_forward.1} parent=1 // pred_region
      %s33 = ssub.s32 128, 128
      %34 = vsyncadd [#allocation5], %s33
      %s36 = sshll.u32 [#allocation4], 4
      %s37 = int_to_ptr.vmem [resolvable:$true] %s36
      %39 = dma.hbm_to_vmem [thread:$0]  %s2, 128, %s37, [#allocation5]
    $region13: #{qnet_forward.1} parent=1 // pred_fallthru
      _
    // Predicated region
    $region14: #{qnet_forward.1} parent=1 // pred_check
      _
    $region15: #{qnet_forward.1} parent=1 // pred_check_branch
      %41 = sbr.rel (0) target = $region17
    $region16: #{qnet_forward.1} parent=1 // pred_region
      %s43 = ssub.s32 65536, 65536
      %44 = vsyncadd [#allocation5], %s43
      %s45 = sshll.u32 [#allocation6], 4
      %s46 = int_to_ptr.vmem [resolvable:$true] %s45
      %51 = dma.hbm_to_vmem [thread:$0]  %s3, 65536, %s46, [#allocation5], 512, 512, 32
    $region17: #{qnet_forward.1} parent=1 // pred_fallthru
      _
    // Predicated region
    $region18: #{qnet_forward.1} parent=1 // pred_check
      _
    $region19: #{qnet_forward.1} parent=1 // pred_check_branch
      %53 = sbr.rel (0) target = $region21
    $region20: #{qnet_forward.1} parent=1 // pred_region
      %s55 = ssub.s32 128, 128
      %56 = vsyncadd [#allocation8], %s55
      %s58 = sshll.u32 [#allocation7], 4
      %s59 = int_to_ptr.vmem [resolvable:$true] %s58
      %61 = dma.hbm_to_vmem [thread:$0]  %s4, 128, %s59, [#allocation8]
    $region21: #{qnet_forward.1} parent=1 // pred_fallthru
      _
    // Predicated region
    $region22: #{qnet_forward.1} parent=1 // pred_check
      _
    $region23: #{qnet_forward.1} parent=1 // pred_check_branch
      %63 = sbr.rel (0) target = $region25
    $region24: #{qnet_forward.1} parent=1 // pred_region
      %s65 = ssub.s32 8192, 8192
      %66 = vsyncadd [#allocation8], %s65
      %s67 = sshll.u32 [#allocation9], 4
      %s68 = int_to_ptr.vmem [resolvable:$true] %s67
      %73 = dma.hbm_to_vmem [thread:$0]  %s5, 8192, %s68, [#allocation8], 64, 64, 4
    $region25: #{qnet_forward.1} parent=1 // pred_fallthru
      _
    // Predicated region
    $region26: #{qnet_forward.1} parent=1 // pred_check
      _
    $region27: #{qnet_forward.1} parent=1 // pred_check_branch
      %75 = sbr.rel (0) target = $region29
    $region28: #{qnet_forward.1} parent=1 // pred_region
      %s77 = ssub.s32 16, 16
      %78 = vsyncadd [#allocation11], %s77
      %s80 = sshll.u32 [#allocation10], 4
      %s81 = int_to_ptr.vmem [resolvable:$true] %s80
      %83 = dma.hbm_to_vmem [thread:$0]  %s6, 16, %s81, [#allocation11]
    $region29: #{qnet_forward.1} parent=1 // pred_fallthru
      _
    // Predicated region
    $region30: #{qnet_forward.1} parent=1 // pred_check
      _
    $region31: #{qnet_forward.1} parent=1 // pred_check_branch
      %85 = sbr.rel (0) target = $region33
    $region32: #{qnet_forward.1} parent=1 // pred_region
      %86 = dma.done [#allocation3], 57344
    $region33: #{qnet_forward.1} parent=1 // pred_fallthru
      _
    // Predicated region
    $region34: #{qnet_forward.1} parent=1 // pred_check
      _
    $region35: #{qnet_forward.1} parent=1 // pred_check_branch
      %88 = sbr.rel (0) target = $region37
    $region36: #{qnet_forward.1} parent=1 // pred_region
      %89 = dma.done [#allocation5], 128
    $region37: #{qnet_forward.1} parent=1 // pred_fallthru
      _
    // Predicated region
    $region38: #{qnet_forward.1} parent=1 // pred_check
      _
    $region39: #{qnet_forward.1} parent=1 // pred_check_branch
      %91 = sbr.rel (0) target = $region41
    $region40: #{qnet_forward.1} parent=1 // pred_region
      %92 = dma.done [#allocation5], 65536
    $region41: #{qnet_forward.1} parent=1 // pred_fallthru
      _
    // Predicated region
    $region42: #{qnet_forward.1} parent=1 // pred_check
      _
    $region43: #{qnet_forward.1} parent=1 // pred_check_branch
      %94 = sbr.rel (0) target = $region45
    $region44: #{qnet_forward.1} parent=1 // pred_region
      %95 = dma.done [#allocation8], 128
    $region45: #{qnet_forward.1} parent=1 // pred_fallthru
      _
    // Predicated region
    $region46: #{qnet_forward.1} parent=1 // pred_check
      _
    $region47: #{qnet_forward.1} parent=1 // pred_check_branch
      %97 = sbr.rel (0) target = $region49
    $region48: #{qnet_forward.1} parent=1 // pred_region
      %98 = dma.done [#allocation8], 8192
    $region49: #{qnet_forward.1} parent=1 // pred_fallthru
      _
    // Predicated region
    $region50: #{qnet_forward.1} parent=1 // pred_check
      _
    $region51: #{qnet_forward.1} parent=1 // pred_check_branch
      %100 = sbr.rel (0) target = $region53
    $region52: #{qnet_forward.1} parent=1 // pred_region
      %101 = dma.done [#allocation11], 16
    $region53: #{qnet_forward.1} parent=1 // pred_fallthru
      _
    %v103 = vld [vmem:[%s0] sm:$0xff]
    %v104 = vld [vmem:[%s0 + $0x8] sm:$0xff]
    %v105 = vld [vmem:[%s0 + $0x10] sm:$0xff]
    %v106 = vld [vmem:[%s0 + $0x18] sm:$0xf]
    %v107 = vld [vmem:[%s0 + $0x1c] sm:$0xff]
    %v108 = vld [vmem:[%s0 + $0x24] sm:$0xff]
    %v109 = vld [vmem:[%s0 + $0x2c] sm:$0xff]
    %v110 = vld [vmem:[%s0 + $0x34] sm:$0xf]
    %v111 = vld [vmem:[%s0 + $0x38] sm:$0xff]
    %v112 = vld [vmem:[%s0 + $0x40] sm:$0xff]
    %v113 = vld [vmem:[%s0 + $0x48] sm:$0xff]
    %v114 = vld [vmem:[%s0 + $0x50] sm:$0xf]
    %v115 = vld [vmem:[%s0 + $0x54] sm:$0xff]
    %v116 = vld [vmem:[%s0 + $0x5c] sm:$0xff]
    %v117 = vld [vmem:[%s0 + $0x64] sm:$0xff]
    %v118 = vld [vmem:[%s0 + $0x6c] sm:$0xf]
    %v119 = vld [vmem:[%s0 + $0x70] sm:$0xff]
    %v120 = vld [vmem:[%s0 + $0x78] sm:$0xff]
    %v121 = vld [vmem:[%s0 + $0x80] sm:$0xff]
    %v122 = vld [vmem:[%s0 + $0x88] sm:$0xf]
    %v123 = vld [vmem:[%s0 + $0x8c] sm:$0xff]
    %v124 = vld [vmem:[%s0 + $0x94] sm:$0xff]
    %v125 = vld [vmem:[%s0 + $0x9c] sm:$0xff]
    %v126 = vld [vmem:[%s0 + $0xa4] sm:$0xf]
    %v127 = vld [vmem:[%s0 + $0xa8] sm:$0xff]
    %v128 = vld [vmem:[%s0 + $0xb0] sm:$0xff]
    %v129 = vld [vmem:[%s0 + $0xb8] sm:$0xff]
    %v130 = vld [vmem:[%s0 + $0xc0] sm:$0xf]
    %v131 = vld [vmem:[%s0 + $0xc4] sm:$0xff]
    %v132 = vld [vmem:[%s0 + $0xcc] sm:$0xff]
    %v133 = vld [vmem:[%s0 + $0xd4] sm:$0xff]
    %v134 = vld [vmem:[%s0 + $0xdc] sm:$0xf]
    %v135 = vld [vmem:[%s0 + $0xe0] sm:$0xff]
    %v136 = vld [vmem:[%s0 + $0xe8] sm:$0xff]
    %v137 = vld [vmem:[%s0 + $0xf0] sm:$0xff]
    %v138 = vld [vmem:[%s0 + $0xf8] sm:$0xf]
    %v139 = vld [vmem:[%s0 + $0xfc] sm:$0xff]
    %v140 = vld [vmem:[%s0 + $0x104] sm:$0xff]
    %v141 = vld [vmem:[%s0 + $0x10c] sm:$0xff]
    %v142 = vld [vmem:[%s0 + $0x114] sm:$0xf]
    %v143 = vld [vmem:[%s0 + $0x118] sm:$0xff]
    %v144 = vld [vmem:[%s0 + $0x120] sm:$0xff]
    %v145 = vld [vmem:[%s0 + $0x128] sm:$0xff]
    %v146 = vld [vmem:[%s0 + $0x130] sm:$0xf]
    %v147 = vld [vmem:[%s0 + $0x134] sm:$0xff]
    %v148 = vld [vmem:[%s0 + $0x13c] sm:$0xff]
    %v149 = vld [vmem:[%s0 + $0x144] sm:$0xff]
    %v150 = vld [vmem:[%s0 + $0x14c] sm:$0xf]
    %v151 = vld [vmem:[%s0 + $0x150] sm:$0xff]
    %v152 = vld [vmem:[%s0 + $0x158] sm:$0xff]
    %v153 = vld [vmem:[%s0 + $0x160] sm:$0xff]
    %v154 = vld [vmem:[%s0 + $0x168] sm:$0xf]
    %v155 = vld [vmem:[%s0 + $0x16c] sm:$0xff]
    %v156 = vld [vmem:[%s0 + $0x174] sm:$0xff]
    %v157 = vld [vmem:[%s0 + $0x17c] sm:$0xff]
    %v158 = vld [vmem:[%s0 + $0x184] sm:$0xf]
    %v159 = vld [vmem:[%s0 + $0x188] sm:$0xff]
    %v160 = vld [vmem:[%s0 + $0x190] sm:$0xff]
    %v161 = vld [vmem:[%s0 + $0x198] sm:$0xff]
    %v162 = vld [vmem:[%s0 + $0x1a0] sm:$0xf]
    %v163 = vld [vmem:[%s0 + $0x1a4] sm:$0xff]
    %v164 = vld [vmem:[%s0 + $0x1ac] sm:$0xff]
    %v165 = vld [vmem:[%s0 + $0x1b4] sm:$0xff]
    %v166 = vld [vmem:[%s0 + $0x1bc] sm:$0xf]
    %v167 = vld [vmem:[#allocation2] sm:$0xff]
    %v168 = vld [vmem:[#allocation2 + $0x8] sm:$0xff]
    %v169 = vld [vmem:[#allocation2 + $0x10] sm:$0xff]
    %v170 = vld [vmem:[#allocation2 + $0x18] sm:$0xff]
    %v171 = vld [vmem:[#allocation2 + $0x20] sm:$0xff]
    %v172 = vld [vmem:[#allocation2 + $0x28] sm:$0xff]
    %v173 = vld [vmem:[#allocation2 + $0x30] sm:$0xff]
    %v174 = vld [vmem:[#allocation2 + $0x38] sm:$0xff]
    %v175 = vld [vmem:[#allocation2 + $0x40] sm:$0xff]
    %v176 = vld [vmem:[#allocation2 + $0x48] sm:$0xff]
    %v177 = vld [vmem:[#allocation2 + $0x50] sm:$0xff]
    %v178 = vld [vmem:[#allocation2 + $0x58] sm:$0xff]
    %v179 = vld [vmem:[#allocation2 + $0x60] sm:$0xff]
    %v180 = vld [vmem:[#allocation2 + $0x68] sm:$0xff]
    %v181 = vld [vmem:[#allocation2 + $0x70] sm:$0xff]
    %v182 = vld [vmem:[#allocation2 + $0x78] sm:$0xff]
    %v183 = vld [vmem:[#allocation2 + $0x80] sm:$0xff]
    %v184 = vld [vmem:[#allocation2 + $0x88] sm:$0xff]
    %v185 = vld [vmem:[#allocation2 + $0x90] sm:$0xff]
    %v186 = vld [vmem:[#allocation2 + $0x98] sm:$0xff]
    %v187 = vld [vmem:[#allocation2 + $0xa0] sm:$0xff]
    %v188 = vld [vmem:[#allocation2 + $0xa8] sm:$0xff]
    %v189 = vld [vmem:[#allocation2 + $0xb0] sm:$0xff]
    %v190 = vld [vmem:[#allocation2 + $0xb8] sm:$0xff]
    %v191 = vld [vmem:[#allocation2 + $0xc0] sm:$0xff]
    %v192 = vld [vmem:[#allocation2 + $0xc8] sm:$0xff]
    %v193 = vld [vmem:[#allocation2 + $0xd0] sm:$0xff]
    %v194 = vld [vmem:[#allocation2 + $0xd8] sm:$0xff]
    %v195 = vld [vmem:[#allocation2 + $0xe0] sm:$0xff]
    %v196 = vld [vmem:[#allocation2 + $0xe8] sm:$0xff]
    %v197 = vld [vmem:[#allocation2 + $0xf0] sm:$0xff]
    %v198 = vld [vmem:[#allocation2 + $0xf8] sm:$0xff]
    %v199 = vld [vmem:[#allocation2 + $0x100] sm:$0xff]
    %v200 = vld [vmem:[#allocation2 + $0x108] sm:$0xff]
    %v201 = vld [vmem:[#allocation2 + $0x110] sm:$0xff]
    %v202 = vld [vmem:[#allocation2 + $0x118] sm:$0xff]
    %v203 = vld [vmem:[#allocation2 + $0x120] sm:$0xff]
    %v204 = vld [vmem:[#allocation2 + $0x128] sm:$0xff]
    %v205 = vld [vmem:[#allocation2 + $0x130] sm:$0xff]
    %v206 = vld [vmem:[#allocation2 + $0x138] sm:$0xff]
    %v207 = vld [vmem:[#allocation2 + $0x140] sm:$0xff]
    %v208 = vld [vmem:[#allocation2 + $0x148] sm:$0xff]
    %v209 = vld [vmem:[#allocation2 + $0x150] sm:$0xff]
    %v210 = vld [vmem:[#allocation2 + $0x158] sm:$0xff]
    %v211 = vld [vmem:[#allocation2 + $0x160] sm:$0xff]
    %v212 = vld [vmem:[#allocation2 + $0x168] sm:$0xff]
    %v213 = vld [vmem:[#allocation2 + $0x170] sm:$0xff]
    %v214 = vld [vmem:[#allocation2 + $0x178] sm:$0xff]
    %v215 = vld [vmem:[#allocation2 + $0x180] sm:$0xff]
    %v216 = vld [vmem:[#allocation2 + $0x188] sm:$0xff]
    %v217 = vld [vmem:[#allocation2 + $0x190] sm:$0xff]
    %v218 = vld [vmem:[#allocation2 + $0x198] sm:$0xff]
    %v219 = vld [vmem:[#allocation2 + $0x1a0] sm:$0xff]
    %v220 = vld [vmem:[#allocation2 + $0x1a8] sm:$0xff]
    %v221 = vld [vmem:[#allocation2 + $0x1b0] sm:$0xff]
    %v222 = vld [vmem:[#allocation2 + $0x1b8] sm:$0xff]
    %v223 = vld [vmem:[#allocation2 + $0x1c0] sm:$0xff]
    %v224 = vld [vmem:[#allocation2 + $0x1c8] sm:$0xff]
    %v225 = vld [vmem:[#allocation2 + $0x1d0] sm:$0xff]
    %v226 = vld [vmem:[#allocation2 + $0x1d8] sm:$0xff]
    %v227 = vld [vmem:[#allocation2 + $0x1e0] sm:$0xff]
    %v228 = vld [vmem:[#allocation2 + $0x1e8] sm:$0xff]
    %v229 = vld [vmem:[#allocation2 + $0x1f0] sm:$0xff]
    %v230 = vld [vmem:[#allocation2 + $0x1f8] sm:$0xff]
    %v231 = vld [vmem:[#allocation2 + $0x200] sm:$0xff]
    %v232 = vld [vmem:[#allocation2 + $0x208] sm:$0xff]
    %v233 = vld [vmem:[#allocation2 + $0x210] sm:$0xff]
    %v234 = vld [vmem:[#allocation2 + $0x218] sm:$0xff]
    %v235 = vld [vmem:[#allocation2 + $0x220] sm:$0xff]
    %v236 = vld [vmem:[#allocation2 + $0x228] sm:$0xff]
    %v237 = vld [vmem:[#allocation2 + $0x230] sm:$0xff]
    %v238 = vld [vmem:[#allocation2 + $0x238] sm:$0xff]
    %v239 = vld [vmem:[#allocation2 + $0x240] sm:$0xff]
    %v240 = vld [vmem:[#allocation2 + $0x248] sm:$0xff]
    %v241 = vld [vmem:[#allocation2 + $0x250] sm:$0xff]
    %v242 = vld [vmem:[#allocation2 + $0x258] sm:$0xff]
    %v243 = vld [vmem:[#allocation2 + $0x260] sm:$0xff]
    %v244 = vld [vmem:[#allocation2 + $0x268] sm:$0xff]
    %v245 = vld [vmem:[#allocation2 + $0x270] sm:$0xff]
    %v246 = vld [vmem:[#allocation2 + $0x278] sm:$0xff]
    %v247 = vld [vmem:[#allocation2 + $0x280] sm:$0xff]
    %v248 = vld [vmem:[#allocation2 + $0x288] sm:$0xff]
    %v249 = vld [vmem:[#allocation2 + $0x290] sm:$0xff]
    %v250 = vld [vmem:[#allocation2 + $0x298] sm:$0xff]
    %v251 = vld [vmem:[#allocation2 + $0x2a0] sm:$0xff]
    %v252 = vld [vmem:[#allocation2 + $0x2a8] sm:$0xff]
    %v253 = vld [vmem:[#allocation2 + $0x2b0] sm:$0xff]
    %v254 = vld [vmem:[#allocation2 + $0x2b8] sm:$0xff]
    %v255 = vld [vmem:[#allocation2 + $0x2c0] sm:$0xff]
    %v256 = vld [vmem:[#allocation2 + $0x2c8] sm:$0xff]
    %v257 = vld [vmem:[#allocation2 + $0x2d0] sm:$0xff]
    %v258 = vld [vmem:[#allocation2 + $0x2d8] sm:$0xff]
    %v259 = vld [vmem:[#allocation2 + $0x2e0] sm:$0xff]
    %v260 = vld [vmem:[#allocation2 + $0x2e8] sm:$0xff]
    %v261 = vld [vmem:[#allocation2 + $0x2f0] sm:$0xff]
    %v262 = vld [vmem:[#allocation2 + $0x2f8] sm:$0xff]
    %v263 = vld [vmem:[#allocation2 + $0x300] sm:$0xff]
    %v264 = vld [vmem:[#allocation2 + $0x308] sm:$0xff]
    %v265 = vld [vmem:[#allocation2 + $0x310] sm:$0xff]
    %v266 = vld [vmem:[#allocation2 + $0x318] sm:$0xff]
    %v267 = vld [vmem:[#allocation2 + $0x320] sm:$0xff]
    %v268 = vld [vmem:[#allocation2 + $0x328] sm:$0xff]
    %v269 = vld [vmem:[#allocation2 + $0x330] sm:$0xff]
    %v270 = vld [vmem:[#allocation2 + $0x338] sm:$0xff]
    %v271 = vld [vmem:[#allocation2 + $0x340] sm:$0xff]
    %v272 = vld [vmem:[#allocation2 + $0x348] sm:$0xff]
    %v273 = vld [vmem:[#allocation2 + $0x350] sm:$0xff]
    %v274 = vld [vmem:[#allocation2 + $0x358] sm:$0xff]
    %v275 = vld [vmem:[#allocation2 + $0x360] sm:$0xff]
    %v276 = vld [vmem:[#allocation2 + $0x368] sm:$0xff]
    %v277 = vld [vmem:[#allocation2 + $0x370] sm:$0xff]
    %v278 = vld [vmem:[#allocation2 + $0x378] sm:$0xff]
    %v279 = vld [vmem:[#allocation2 + $0x380] sm:$0xff]
    %v280 = vld [vmem:[#allocation2 + $0x388] sm:$0xff]
    %v281 = vld [vmem:[#allocation2 + $0x390] sm:$0xff]
    %v282 = vld [vmem:[#allocation2 + $0x398] sm:$0xff]
    %v283 = vld [vmem:[#allocation2 + $0x3a0] sm:$0xff]
    %v284 = vld [vmem:[#allocation2 + $0x3a8] sm:$0xff]
    %v285 = vld [vmem:[#allocation2 + $0x3b0] sm:$0xff]
    %v286 = vld [vmem:[#allocation2 + $0x3b8] sm:$0xff]
    %v287 = vld [vmem:[#allocation2 + $0x3c0] sm:$0xff]
    %v288 = vld [vmem:[#allocation2 + $0x3c8] sm:$0xff]
    %v289 = vld [vmem:[#allocation2 + $0x3d0] sm:$0xff]
    %v290 = vld [vmem:[#allocation2 + $0x3d8] sm:$0xff]
    %v291 = vld [vmem:[#allocation2 + $0x3e0] sm:$0xff]
    %v292 = vld [vmem:[#allocation2 + $0x3e8] sm:$0xff]
    %v293 = vld [vmem:[#allocation2 + $0x3f0] sm:$0xff]
    %v294 = vld [vmem:[#allocation2 + $0x3f8] sm:$0xff]
    %v295 = vld [vmem:[#allocation2 + $0x400] sm:$0xff]
    %v296 = vld [vmem:[#allocation2 + $0x408] sm:$0xff]
    %v297 = vld [vmem:[#allocation2 + $0x410] sm:$0xff]
    %v298 = vld [vmem:[#allocation2 + $0x418] sm:$0xff]
    %v299 = vld [vmem:[#allocation2 + $0x420] sm:$0xff]
    %v300 = vld [vmem:[#allocation2 + $0x428] sm:$0xff]
    %v301 = vld [vmem:[#allocation2 + $0x430] sm:$0xff]
    %v302 = vld [vmem:[#allocation2 + $0x438] sm:$0xff]
    %v303 = vld [vmem:[#allocation2 + $0x440] sm:$0xff]
    %v304 = vld [vmem:[#allocation2 + $0x448] sm:$0xff]
    %v305 = vld [vmem:[#allocation2 + $0x450] sm:$0xff]
    %v306 = vld [vmem:[#allocation2 + $0x458] sm:$0xff]
    %v307 = vld [vmem:[#allocation2 + $0x460] sm:$0xff]
    %v308 = vld [vmem:[#allocation2 + $0x468] sm:$0xff]
    %v309 = vld [vmem:[#allocation2 + $0x470] sm:$0xff]
    %v310 = vld [vmem:[#allocation2 + $0x478] sm:$0xff]
    %v311 = vld [vmem:[#allocation2 + $0x480] sm:$0xff]
    %v312 = vld [vmem:[#allocation2 + $0x488] sm:$0xff]
    %v313 = vld [vmem:[#allocation2 + $0x490] sm:$0xff]
    %v314 = vld [vmem:[#allocation2 + $0x498] sm:$0xff]
    %v315 = vld [vmem:[#allocation2 + $0x4a0] sm:$0xff]
    %v316 = vld [vmem:[#allocation2 + $0x4a8] sm:$0xff]
    %v317 = vld [vmem:[#allocation2 + $0x4b0] sm:$0xff]
    %v318 = vld [vmem:[#allocation2 + $0x4b8] sm:$0xff]
    %v319 = vld [vmem:[#allocation2 + $0x4c0] sm:$0xff]
    %v320 = vld [vmem:[#allocation2 + $0x4c8] sm:$0xff]
    %v321 = vld [vmem:[#allocation2 + $0x4d0] sm:$0xff]
    %v322 = vld [vmem:[#allocation2 + $0x4d8] sm:$0xff]
    %v323 = vld [vmem:[#allocation2 + $0x4e0] sm:$0xff]
    %v324 = vld [vmem:[#allocation2 + $0x4e8] sm:$0xff]
    %v325 = vld [vmem:[#allocation2 + $0x4f0] sm:$0xff]
    %v326 = vld [vmem:[#allocation2 + $0x4f8] sm:$0xff]
    %v327 = vld [vmem:[#allocation2 + $0x500] sm:$0xff]
    %v328 = vld [vmem:[#allocation2 + $0x508] sm:$0xff]
    %v329 = vld [vmem:[#allocation2 + $0x510] sm:$0xff]
    %v330 = vld [vmem:[#allocation2 + $0x518] sm:$0xff]
    %v331 = vld [vmem:[#allocation2 + $0x520] sm:$0xff]
    %v332 = vld [vmem:[#allocation2 + $0x528] sm:$0xff]
    %v333 = vld [vmem:[#allocation2 + $0x530] sm:$0xff]
    %v334 = vld [vmem:[#allocation2 + $0x538] sm:$0xff]
    %v335 = vld [vmem:[#allocation2 + $0x540] sm:$0xff]
    %v336 = vld [vmem:[#allocation2 + $0x548] sm:$0xff]
    %v337 = vld [vmem:[#allocation2 + $0x550] sm:$0xff]
    %v338 = vld [vmem:[#allocation2 + $0x558] sm:$0xff]
    %v339 = vld [vmem:[#allocation2 + $0x560] sm:$0xff]
    %v340 = vld [vmem:[#allocation2 + $0x568] sm:$0xff]
    %v341 = vld [vmem:[#allocation2 + $0x570] sm:$0xff]
    %v342 = vld [vmem:[#allocation2 + $0x578] sm:$0xff]
    %v343 = vld [vmem:[#allocation2 + $0x580] sm:$0xff]
    %v344 = vld [vmem:[#allocation2 + $0x588] sm:$0xff]
    %v345 = vld [vmem:[#allocation2 + $0x590] sm:$0xff]
    %v346 = vld [vmem:[#allocation2 + $0x598] sm:$0xff]
    %v347 = vld [vmem:[#allocation2 + $0x5a0] sm:$0xff]
    %v348 = vld [vmem:[#allocation2 + $0x5a8] sm:$0xff]
    %v349 = vld [vmem:[#allocation2 + $0x5b0] sm:$0xff]
    %v350 = vld [vmem:[#allocation2 + $0x5b8] sm:$0xff]
    %v351 = vld [vmem:[#allocation2 + $0x5c0] sm:$0xff]
    %v352 = vld [vmem:[#allocation2 + $0x5c8] sm:$0xff]
    %v353 = vld [vmem:[#allocation2 + $0x5d0] sm:$0xff]
    %v354 = vld [vmem:[#allocation2 + $0x5d8] sm:$0xff]
    %v355 = vld [vmem:[#allocation2 + $0x5e0] sm:$0xff]
    %v356 = vld [vmem:[#allocation2 + $0x5e8] sm:$0xff]
    %v357 = vld [vmem:[#allocation2 + $0x5f0] sm:$0xff]
    %v358 = vld [vmem:[#allocation2 + $0x5f8] sm:$0xff]
    %v359 = vld [vmem:[#allocation2 + $0x600] sm:$0xff]
    %v360 = vld [vmem:[#allocation2 + $0x608] sm:$0xff]
    %v361 = vld [vmem:[#allocation2 + $0x610] sm:$0xff]
    %v362 = vld [vmem:[#allocation2 + $0x618] sm:$0xff]
    %v363 = vld [vmem:[#allocation2 + $0x620] sm:$0xff]
    %v364 = vld [vmem:[#allocation2 + $0x628] sm:$0xff]
    %v365 = vld [vmem:[#allocation2 + $0x630] sm:$0xff]
    %v366 = vld [vmem:[#allocation2 + $0x638] sm:$0xff]
    %v367 = vld [vmem:[#allocation2 + $0x640] sm:$0xff]
    %v368 = vld [vmem:[#allocation2 + $0x648] sm:$0xff]
    %v369 = vld [vmem:[#allocation2 + $0x650] sm:$0xff]
    %v370 = vld [vmem:[#allocation2 + $0x658] sm:$0xff]
    %v371 = vld [vmem:[#allocation2 + $0x660] sm:$0xff]
    %v372 = vld [vmem:[#allocation2 + $0x668] sm:$0xff]
    %v373 = vld [vmem:[#allocation2 + $0x670] sm:$0xff]
    %v374 = vld [vmem:[#allocation2 + $0x678] sm:$0xff]
    %v375 = vld [vmem:[#allocation2 + $0x680] sm:$0xff]
    %v376 = vld [vmem:[#allocation2 + $0x688] sm:$0xff]
    %v377 = vld [vmem:[#allocation2 + $0x690] sm:$0xff]
    %v378 = vld [vmem:[#allocation2 + $0x698] sm:$0xff]
    %v379 = vld [vmem:[#allocation2 + $0x6a0] sm:$0xff]
    %v380 = vld [vmem:[#allocation2 + $0x6a8] sm:$0xff]
    %v381 = vld [vmem:[#allocation2 + $0x6b0] sm:$0xff]
    %v382 = vld [vmem:[#allocation2 + $0x6b8] sm:$0xff]
    %v383 = vld [vmem:[#allocation2 + $0x6c0] sm:$0xff]
    %v384 = vld [vmem:[#allocation2 + $0x6c8] sm:$0xff]
    %v385 = vld [vmem:[#allocation2 + $0x6d0] sm:$0xff]
    %v386 = vld [vmem:[#allocation2 + $0x6d8] sm:$0xff]
    %v387 = vld [vmem:[#allocation2 + $0x6e0] sm:$0xff]
    %v388 = vld [vmem:[#allocation2 + $0x6e8] sm:$0xff]
    %v389 = vld [vmem:[#allocation2 + $0x6f0] sm:$0xff]
    %v390 = vld [vmem:[#allocation2 + $0x6f8] sm:$0xff]
    %v391 = vld [vmem:[#allocation2 + $0x700] sm:$0xff]
    %v392 = vld [vmem:[#allocation2 + $0x708] sm:$0xff]
    %v393 = vld [vmem:[#allocation2 + $0x710] sm:$0xff]
    %v394 = vld [vmem:[#allocation2 + $0x718] sm:$0xff]
    %v395 = vld [vmem:[#allocation2 + $0x720] sm:$0xff]
    %v396 = vld [vmem:[#allocation2 + $0x728] sm:$0xff]
    %v397 = vld [vmem:[#allocation2 + $0x730] sm:$0xff]
    %v398 = vld [vmem:[#allocation2 + $0x738] sm:$0xff]
    %v399 = vld [vmem:[#allocation2 + $0x740] sm:$0xff]
    %v400 = vld [vmem:[#allocation2 + $0x748] sm:$0xff]
    %v401 = vld [vmem:[#allocation2 + $0x750] sm:$0xff]
    %v402 = vld [vmem:[#allocation2 + $0x758] sm:$0xff]
    %v403 = vld [vmem:[#allocation2 + $0x760] sm:$0xff]
    %v404 = vld [vmem:[#allocation2 + $0x768] sm:$0xff]
    %v405 = vld [vmem:[#allocation2 + $0x770] sm:$0xff]
    %v406 = vld [vmem:[#allocation2 + $0x778] sm:$0xff]
    %v407 = vld [vmem:[#allocation2 + $0x780] sm:$0xff]
    %v408 = vld [vmem:[#allocation2 + $0x788] sm:$0xff]
    %v409 = vld [vmem:[#allocation2 + $0x790] sm:$0xff]
    %v410 = vld [vmem:[#allocation2 + $0x798] sm:$0xff]
    %v411 = vld [vmem:[#allocation2 + $0x7a0] sm:$0xff]
    %v412 = vld [vmem:[#allocation2 + $0x7a8] sm:$0xff]
    %v413 = vld [vmem:[#allocation2 + $0x7b0] sm:$0xff]
    %v414 = vld [vmem:[#allocation2 + $0x7b8] sm:$0xff]
    %v415 = vld [vmem:[#allocation2 + $0x7c0] sm:$0xff]
    %v416 = vld [vmem:[#allocation2 + $0x7c8] sm:$0xff]
    %v417 = vld [vmem:[#allocation2 + $0x7d0] sm:$0xff]
    %v418 = vld [vmem:[#allocation2 + $0x7d8] sm:$0xff]
    %v419 = vld [vmem:[#allocation2 + $0x7e0] sm:$0xff]
    %v420 = vld [vmem:[#allocation2 + $0x7e8] sm:$0xff]
    %v421 = vld [vmem:[#allocation2 + $0x7f0] sm:$0xff]
    %v422 = vld [vmem:[#allocation2 + $0x7f8] sm:$0xff]
    %v423 = vld [vmem:[#allocation2 + $0x800] sm:$0xff]
    %v424 = vld [vmem:[#allocation2 + $0x808] sm:$0xff]
    %v425 = vld [vmem:[#allocation2 + $0x810] sm:$0xff]
    %v426 = vld [vmem:[#allocation2 + $0x818] sm:$0xff]
    %v427 = vld [vmem:[#allocation2 + $0x820] sm:$0xff]
    %v428 = vld [vmem:[#allocation2 + $0x828] sm:$0xff]
    %v429 = vld [vmem:[#allocation2 + $0x830] sm:$0xff]
    %v430 = vld [vmem:[#allocation2 + $0x838] sm:$0xff]
    %v431 = vld [vmem:[#allocation2 + $0x840] sm:$0xff]
    %v432 = vld [vmem:[#allocation2 + $0x848] sm:$0xff]
    %v433 = vld [vmem:[#allocation2 + $0x850] sm:$0xff]
    %v434 = vld [vmem:[#allocation2 + $0x858] sm:$0xff]
    %v435 = vld [vmem:[#allocation2 + $0x860] sm:$0xff]
    %v436 = vld [vmem:[#allocation2 + $0x868] sm:$0xff]
    %v437 = vld [vmem:[#allocation2 + $0x870] sm:$0xff]
    %v438 = vld [vmem:[#allocation2 + $0x878] sm:$0xff]
    %v439 = vld [vmem:[#allocation2 + $0x880] sm:$0xff]
    %v440 = vld [vmem:[#allocation2 + $0x888] sm:$0xff]
    %v441 = vld [vmem:[#allocation2 + $0x890] sm:$0xff]
    %v442 = vld [vmem:[#allocation2 + $0x898] sm:$0xff]
    %v443 = vld [vmem:[#allocation2 + $0x8a0] sm:$0xff]
    %v444 = vld [vmem:[#allocation2 + $0x8a8] sm:$0xff]
    %v445 = vld [vmem:[#allocation2 + $0x8b0] sm:$0xff]
    %v446 = vld [vmem:[#allocation2 + $0x8b8] sm:$0xff]
    %v447 = vld [vmem:[#allocation2 + $0x8c0] sm:$0xff]
    %v448 = vld [vmem:[#allocation2 + $0x8c8] sm:$0xff]
    %v449 = vld [vmem:[#allocation2 + $0x8d0] sm:$0xff]
    %v450 = vld [vmem:[#allocation2 + $0x8d8] sm:$0xff]
    %v451 = vld [vmem:[#allocation2 + $0x8e0] sm:$0xff]
    %v452 = vld [vmem:[#allocation2 + $0x8e8] sm:$0xff]
    %v453 = vld [vmem:[#allocation2 + $0x8f0] sm:$0xff]
    %v454 = vld [vmem:[#allocation2 + $0x8f8] sm:$0xff]
    %v455 = vld [vmem:[#allocation2 + $0x900] sm:$0xff]
    %v456 = vld [vmem:[#allocation2 + $0x908] sm:$0xff]
    %v457 = vld [vmem:[#allocation2 + $0x910] sm:$0xff]
    %v458 = vld [vmem:[#allocation2 + $0x918] sm:$0xff]
    %v459 = vld [vmem:[#allocation2 + $0x920] sm:$0xff]
    %v460 = vld [vmem:[#allocation2 + $0x928] sm:$0xff]
    %v461 = vld [vmem:[#allocation2 + $0x930] sm:$0xff]
    %v462 = vld [vmem:[#allocation2 + $0x938] sm:$0xff]
    %v463 = vld [vmem:[#allocation2 + $0x940] sm:$0xff]
    %v464 = vld [vmem:[#allocation2 + $0x948] sm:$0xff]
    %v465 = vld [vmem:[#allocation2 + $0x950] sm:$0xff]
    %v466 = vld [vmem:[#allocation2 + $0x958] sm:$0xff]
    %v467 = vld [vmem:[#allocation2 + $0x960] sm:$0xff]
    %v468 = vld [vmem:[#allocation2 + $0x968] sm:$0xff]
    %v469 = vld [vmem:[#allocation2 + $0x970] sm:$0xff]
    %v470 = vld [vmem:[#allocation2 + $0x978] sm:$0xff]
    %v471 = vld [vmem:[#allocation2 + $0x980] sm:$0xff]
    %v472 = vld [vmem:[#allocation2 + $0x988] sm:$0xff]
    %v473 = vld [vmem:[#allocation2 + $0x990] sm:$0xff]
    %v474 = vld [vmem:[#allocation2 + $0x998] sm:$0xff]
    %v475 = vld [vmem:[#allocation2 + $0x9a0] sm:$0xff]
    %v476 = vld [vmem:[#allocation2 + $0x9a8] sm:$0xff]
    %v477 = vld [vmem:[#allocation2 + $0x9b0] sm:$0xff]
    %v478 = vld [vmem:[#allocation2 + $0x9b8] sm:$0xff]
    %v479 = vld [vmem:[#allocation2 + $0x9c0] sm:$0xff]
    %v480 = vld [vmem:[#allocation2 + $0x9c8] sm:$0xff]
    %v481 = vld [vmem:[#allocation2 + $0x9d0] sm:$0xff]
    %v482 = vld [vmem:[#allocation2 + $0x9d8] sm:$0xff]
    %v483 = vld [vmem:[#allocation2 + $0x9e0] sm:$0xff]
    %v484 = vld [vmem:[#allocation2 + $0x9e8] sm:$0xff]
    %v485 = vld [vmem:[#allocation2 + $0x9f0] sm:$0xff]
    %v486 = vld [vmem:[#allocation2 + $0x9f8] sm:$0xff]
    %v487 = vld [vmem:[#allocation2 + $0xa00] sm:$0xff]
    %v488 = vld [vmem:[#allocation2 + $0xa08] sm:$0xff]
    %v489 = vld [vmem:[#allocation2 + $0xa10] sm:$0xff]
    %v490 = vld [vmem:[#allocation2 + $0xa18] sm:$0xff]
    %v491 = vld [vmem:[#allocation2 + $0xa20] sm:$0xff]
    %v492 = vld [vmem:[#allocation2 + $0xa28] sm:$0xff]
    %v493 = vld [vmem:[#allocation2 + $0xa30] sm:$0xff]
    %v494 = vld [vmem:[#allocation2 + $0xa38] sm:$0xff]
    %v495 = vld [vmem:[#allocation2 + $0xa40] sm:$0xff]
    %v496 = vld [vmem:[#allocation2 + $0xa48] sm:$0xff]
    %v497 = vld [vmem:[#allocation2 + $0xa50] sm:$0xff]
    %v498 = vld [vmem:[#allocation2 + $0xa58] sm:$0xff]
    %v499 = vld [vmem:[#allocation2 + $0xa60] sm:$0xff]
    %v500 = vld [vmem:[#allocation2 + $0xa68] sm:$0xff]
    %v501 = vld [vmem:[#allocation2 + $0xa70] sm:$0xff]
    %v502 = vld [vmem:[#allocation2 + $0xa78] sm:$0xff]
    %v503 = vld [vmem:[#allocation2 + $0xa80] sm:$0xff]
    %v504 = vld [vmem:[#allocation2 + $0xa88] sm:$0xff]
    %v505 = vld [vmem:[#allocation2 + $0xa90] sm:$0xff]
    %v506 = vld [vmem:[#allocation2 + $0xa98] sm:$0xff]
    %v507 = vld [vmem:[#allocation2 + $0xaa0] sm:$0xff]
    %v508 = vld [vmem:[#allocation2 + $0xaa8] sm:$0xff]
    %v509 = vld [vmem:[#allocation2 + $0xab0] sm:$0xff]
    %v510 = vld [vmem:[#allocation2 + $0xab8] sm:$0xff]
    %v511 = vld [vmem:[#allocation2 + $0xac0] sm:$0xff]
    %v512 = vld [vmem:[#allocation2 + $0xac8] sm:$0xff]
    %v513 = vld [vmem:[#allocation2 + $0xad0] sm:$0xff]
    %v514 = vld [vmem:[#allocation2 + $0xad8] sm:$0xff]
    %v515 = vld [vmem:[#allocation2 + $0xae0] sm:$0xff]
    %v516 = vld [vmem:[#allocation2 + $0xae8] sm:$0xff]
    %v517 = vld [vmem:[#allocation2 + $0xaf0] sm:$0xff]
    %v518 = vld [vmem:[#allocation2 + $0xaf8] sm:$0xff]
    %v519 = vld [vmem:[#allocation2 + $0xb00] sm:$0xff]
    %v520 = vld [vmem:[#allocation2 + $0xb08] sm:$0xff]
    %v521 = vld [vmem:[#allocation2 + $0xb10] sm:$0xff]
    %v522 = vld [vmem:[#allocation2 + $0xb18] sm:$0xff]
    %v523 = vld [vmem:[#allocation2 + $0xb20] sm:$0xff]
    %v524 = vld [vmem:[#allocation2 + $0xb28] sm:$0xff]
    %v525 = vld [vmem:[#allocation2 + $0xb30] sm:$0xff]
    %v526 = vld [vmem:[#allocation2 + $0xb38] sm:$0xff]
    %v527 = vld [vmem:[#allocation2 + $0xb40] sm:$0xff]
    %v528 = vld [vmem:[#allocation2 + $0xb48] sm:$0xff]
    %v529 = vld [vmem:[#allocation2 + $0xb50] sm:$0xff]
    %v530 = vld [vmem:[#allocation2 + $0xb58] sm:$0xff]
    %v531 = vld [vmem:[#allocation2 + $0xb60] sm:$0xff]
    %v532 = vld [vmem:[#allocation2 + $0xb68] sm:$0xff]
    %v533 = vld [vmem:[#allocation2 + $0xb70] sm:$0xff]
    %v534 = vld [vmem:[#allocation2 + $0xb78] sm:$0xff]
    %v535 = vld [vmem:[#allocation2 + $0xb80] sm:$0xff]
    %v536 = vld [vmem:[#allocation2 + $0xb88] sm:$0xff]
    %v537 = vld [vmem:[#allocation2 + $0xb90] sm:$0xff]
    %v538 = vld [vmem:[#allocation2 + $0xb98] sm:$0xff]
    %v539 = vld [vmem:[#allocation2 + $0xba0] sm:$0xff]
    %v540 = vld [vmem:[#allocation2 + $0xba8] sm:$0xff]
    %v541 = vld [vmem:[#allocation2 + $0xbb0] sm:$0xff]
    %v542 = vld [vmem:[#allocation2 + $0xbb8] sm:$0xff]
    %v543 = vld [vmem:[#allocation2 + $0xbc0] sm:$0xff]
    %v544 = vld [vmem:[#allocation2 + $0xbc8] sm:$0xff]
    %v545 = vld [vmem:[#allocation2 + $0xbd0] sm:$0xff]
    %v546 = vld [vmem:[#allocation2 + $0xbd8] sm:$0xff]
    %v547 = vld [vmem:[#allocation2 + $0xbe0] sm:$0xff]
    %v548 = vld [vmem:[#allocation2 + $0xbe8] sm:$0xff]
    %v549 = vld [vmem:[#allocation2 + $0xbf0] sm:$0xff]
    %v550 = vld [vmem:[#allocation2 + $0xbf8] sm:$0xff]
    %v551 = vld [vmem:[#allocation2 + $0xc00] sm:$0xff]
    %v552 = vld [vmem:[#allocation2 + $0xc08] sm:$0xff]
    %v553 = vld [vmem:[#allocation2 + $0xc10] sm:$0xff]
    %v554 = vld [vmem:[#allocation2 + $0xc18] sm:$0xff]
    %v555 = vld [vmem:[#allocation2 + $0xc20] sm:$0xff]
    %v556 = vld [vmem:[#allocation2 + $0xc28] sm:$0xff]
    %v557 = vld [vmem:[#allocation2 + $0xc30] sm:$0xff]
    %v558 = vld [vmem:[#allocation2 + $0xc38] sm:$0xff]
    %v559 = vld [vmem:[#allocation2 + $0xc40] sm:$0xff]
    %v560 = vld [vmem:[#allocation2 + $0xc48] sm:$0xff]
    %v561 = vld [vmem:[#allocation2 + $0xc50] sm:$0xff]
    %v562 = vld [vmem:[#allocation2 + $0xc58] sm:$0xff]
    %v563 = vld [vmem:[#allocation2 + $0xc60] sm:$0xff]
    %v564 = vld [vmem:[#allocation2 + $0xc68] sm:$0xff]
    %v565 = vld [vmem:[#allocation2 + $0xc70] sm:$0xff]
    %v566 = vld [vmem:[#allocation2 + $0xc78] sm:$0xff]
    %v567 = vld [vmem:[#allocation2 + $0xc80] sm:$0xff]
    %v568 = vld [vmem:[#allocation2 + $0xc88] sm:$0xff]
    %v569 = vld [vmem:[#allocation2 + $0xc90] sm:$0xff]
    %v570 = vld [vmem:[#allocation2 + $0xc98] sm:$0xff]
    %v571 = vld [vmem:[#allocation2 + $0xca0] sm:$0xff]
    %v572 = vld [vmem:[#allocation2 + $0xca8] sm:$0xff]
    %v573 = vld [vmem:[#allocation2 + $0xcb0] sm:$0xff]
    %v574 = vld [vmem:[#allocation2 + $0xcb8] sm:$0xff]
    %v575 = vld [vmem:[#allocation2 + $0xcc0] sm:$0xff]
    %v576 = vld [vmem:[#allocation2 + $0xcc8] sm:$0xff]
    %v577 = vld [vmem:[#allocation2 + $0xcd0] sm:$0xff]
    %v578 = vld [vmem:[#allocation2 + $0xcd8] sm:$0xff]
    %v579 = vld [vmem:[#allocation2 + $0xce0] sm:$0xff]
    %v580 = vld [vmem:[#allocation2 + $0xce8] sm:$0xff]
    %v581 = vld [vmem:[#allocation2 + $0xcf0] sm:$0xff]
    %v582 = vld [vmem:[#allocation2 + $0xcf8] sm:$0xff]
    %v583 = vld [vmem:[#allocation2 + $0xd00] sm:$0xff]
    %v584 = vld [vmem:[#allocation2 + $0xd08] sm:$0xff]
    %v585 = vld [vmem:[#allocation2 + $0xd10] sm:$0xff]
    %v586 = vld [vmem:[#allocation2 + $0xd18] sm:$0xff]
    %v587 = vld [vmem:[#allocation2 + $0xd20] sm:$0xff]
    %v588 = vld [vmem:[#allocation2 + $0xd28] sm:$0xff]
    %v589 = vld [vmem:[#allocation2 + $0xd30] sm:$0xff]
    %v590 = vld [vmem:[#allocation2 + $0xd38] sm:$0xff]
    %v591 = vld [vmem:[#allocation2 + $0xd40] sm:$0xff]
    %v592 = vld [vmem:[#allocation2 + $0xd48] sm:$0xff]
    %v593 = vld [vmem:[#allocation2 + $0xd50] sm:$0xff]
    %v594 = vld [vmem:[#allocation2 + $0xd58] sm:$0xff]
    %v595 = vld [vmem:[#allocation2 + $0xd60] sm:$0xff]
    %v596 = vld [vmem:[#allocation2 + $0xd68] sm:$0xff]
    %v597 = vld [vmem:[#allocation2 + $0xd70] sm:$0xff]
    %v598 = vld [vmem:[#allocation2 + $0xd78] sm:$0xff]
    %v599 = vld [vmem:[#allocation2 + $0xd80] sm:$0xff]
    %v600 = vld [vmem:[#allocation2 + $0xd88] sm:$0xff]
    %v601 = vld [vmem:[#allocation2 + $0xd90] sm:$0xff]
    %v602 = vld [vmem:[#allocation2 + $0xd98] sm:$0xff]
    %v603 = vld [vmem:[#allocation2 + $0xda0] sm:$0xff]
    %v604 = vld [vmem:[#allocation2 + $0xda8] sm:$0xff]
    %v605 = vld [vmem:[#allocation2 + $0xdb0] sm:$0xff]
    %v606 = vld [vmem:[#allocation2 + $0xdb8] sm:$0xff]
    %v607 = vld [vmem:[#allocation2 + $0xdc0] sm:$0xff]
    %v608 = vld [vmem:[#allocation2 + $0xdc8] sm:$0xff]
    %v609 = vld [vmem:[#allocation2 + $0xdd0] sm:$0xff]
    %v610 = vld [vmem:[#allocation2 + $0xdd8] sm:$0xff]
    %v611 = vld [vmem:[#allocation2 + $0xde0] sm:$0xff]
    %v612 = vld [vmem:[#allocation2 + $0xde8] sm:$0xff]
    %v613 = vld [vmem:[#allocation2 + $0xdf0] sm:$0xff]
    %v614 = vld [vmem:[#allocation2 + $0xdf8] sm:$0xff]
    %v615 = vld [vmem:[#allocation4] sm:$0xff]
    %v617 = vlaneseq
    %v618 = vshrl.u32 %v617, 7
    %v619 = vsub.s32 0, %v618
    %v620 = vrot.slane %v615, %v619
    %v621 = vlaneseq
    %v622 = vshrl.u32 %v621, 7
    %v623 = vsub.s32 1, %v622
    %v624 = vrot.slane %v615, %v623
    %v625 = vlaneseq
    %v626 = vshrl.u32 %v625, 7
    %v627 = vsub.s32 2, %v626
    %v628 = vrot.slane %v615, %v627
    %v629 = vlaneseq
    %v630 = vshrl.u32 %v629, 7
    %v631 = vsub.s32 3, %v630
    %v632 = vrot.slane %v615, %v631
    %v633 = vlaneseq
    %v634 = vshrl.u32 %v633, 7
    %v635 = vsub.s32 4, %v634
    %v636 = vrot.slane %v615, %v635
    %v637 = vlaneseq
    %v638 = vshrl.u32 %v637, 7
    %v639 = vsub.s32 5, %v638
    %v640 = vrot.slane %v615, %v639
    %v641 = vlaneseq
    %v642 = vshrl.u32 %v641, 7
    %v643 = vsub.s32 6, %v642
    %v644 = vrot.slane %v615, %v643
    %v645 = vlaneseq
    %v646 = vshrl.u32 %v645, 7
    %v647 = vsub.s32 7, %v646
    %v648 = vrot.slane %v615, %v647
    %v721 = vunpack.c.l.b16 %v103
    %v722 = vunpack.c.h.b16 %v103
    %v723 = vunpack.c.l.b16 %v104
    %v724 = vunpack.c.h.b16 %v104
    %v725 = vunpack.c.l.b16 %v105
    %v726 = vunpack.c.h.b16 %v105
    %v727 = vunpack.c.l.b16 %v106
    %v728 = vunpack.c.l.b16 %v107
    %v729 = vunpack.c.h.b16 %v107
    %v730 = vunpack.c.l.b16 %v108
    %v731 = vunpack.c.h.b16 %v108
    %v732 = vunpack.c.l.b16 %v109
    %v733 = vunpack.c.h.b16 %v109
    %v734 = vunpack.c.l.b16 %v110
    %v735 = vunpack.c.l.b16 %v111
    %v736 = vunpack.c.h.b16 %v111
    %v737 = vunpack.c.l.b16 %v112
    %v738 = vunpack.c.h.b16 %v112
    %v739 = vunpack.c.l.b16 %v113
    %v740 = vunpack.c.h.b16 %v113
    %v741 = vunpack.c.l.b16 %v114
    %v742 = vunpack.c.l.b16 %v115
    %v743 = vunpack.c.h.b16 %v115
    %v744 = vunpack.c.l.b16 %v116
    %v745 = vunpack.c.h.b16 %v116
    %v746 = vunpack.c.l.b16 %v117
    %v747 = vunpack.c.h.b16 %v117
    %v748 = vunpack.c.l.b16 %v118
    %v749 = vunpack.c.l.b16 %v119
    %v750 = vunpack.c.h.b16 %v119
    %v751 = vunpack.c.l.b16 %v120
    %v752 = vunpack.c.h.b16 %v120
    %v753 = vunpack.c.l.b16 %v121
    %v754 = vunpack.c.h.b16 %v121
    %v755 = vunpack.c.l.b16 %v122
    %v756 = vunpack.c.l.b16 %v123
    %v757 = vunpack.c.h.b16 %v123
    %v758 = vunpack.c.l.b16 %v124
    %v759 = vunpack.c.h.b16 %v124
    %v760 = vunpack.c.l.b16 %v125
    %v761 = vunpack.c.h.b16 %v125
    %v762 = vunpack.c.l.b16 %v126
    %v763 = vunpack.c.l.b16 %v127
    %v764 = vunpack.c.h.b16 %v127
    %v765 = vunpack.c.l.b16 %v128
    %v766 = vunpack.c.h.b16 %v128
    %v767 = vunpack.c.l.b16 %v129
    %v768 = vunpack.c.h.b16 %v129
    %v769 = vunpack.c.l.b16 %v130
    %v770 = vunpack.c.l.b16 %v131
    %v771 = vunpack.c.h.b16 %v131
    %v772 = vunpack.c.l.b16 %v132
    %v773 = vunpack.c.h.b16 %v132
    %v774 = vunpack.c.l.b16 %v133
    %v775 = vunpack.c.h.b16 %v133
    %v776 = vunpack.c.l.b16 %v134
    %v777 = vunpack.c.l.b16 %v135
    %v778 = vunpack.c.h.b16 %v135
    %v779 = vunpack.c.l.b16 %v136
    %v780 = vunpack.c.h.b16 %v136
    %v781 = vunpack.c.l.b16 %v137
    %v782 = vunpack.c.h.b16 %v137
    %v783 = vunpack.c.l.b16 %v138
    %v784 = vunpack.c.l.b16 %v139
    %v785 = vunpack.c.h.b16 %v139
    %v786 = vunpack.c.l.b16 %v140
    %v787 = vunpack.c.h.b16 %v140
    %v788 = vunpack.c.l.b16 %v141
    %v789 = vunpack.c.h.b16 %v141
    %v790 = vunpack.c.l.b16 %v142
    %v791 = vunpack.c.l.b16 %v143
    %v792 = vunpack.c.h.b16 %v143
    %v793 = vunpack.c.l.b16 %v144
    %v794 = vunpack.c.h.b16 %v144
    %v795 = vunpack.c.l.b16 %v145
    %v796 = vunpack.c.h.b16 %v145
    %v797 = vunpack.c.l.b16 %v146
    %v798 = vunpack.c.l.b16 %v147
    %v799 = vunpack.c.h.b16 %v147
    %v800 = vunpack.c.l.b16 %v148
    %v801 = vunpack.c.h.b16 %v148
    %v802 = vunpack.c.l.b16 %v149
    %v803 = vunpack.c.h.b16 %v149
    %v804 = vunpack.c.l.b16 %v150
    %v805 = vunpack.c.l.b16 %v151
    %v806 = vunpack.c.h.b16 %v151
    %v807 = vunpack.c.l.b16 %v152
    %v808 = vunpack.c.h.b16 %v152
    %v809 = vunpack.c.l.b16 %v153
    %v810 = vunpack.c.h.b16 %v153
    %v811 = vunpack.c.l.b16 %v154
    %v812 = vunpack.c.l.b16 %v155
    %v813 = vunpack.c.h.b16 %v155
    %v814 = vunpack.c.l.b16 %v156
    %v815 = vunpack.c.h.b16 %v156
    %v816 = vunpack.c.l.b16 %v157
    %v817 = vunpack.c.h.b16 %v157
    %v818 = vunpack.c.l.b16 %v158
    %v819 = vunpack.c.l.b16 %v159
    %v820 = vunpack.c.h.b16 %v159
    %v821 = vunpack.c.l.b16 %v160
    %v822 = vunpack.c.h.b16 %v160
    %v823 = vunpack.c.l.b16 %v161
    %v824 = vunpack.c.h.b16 %v161
    %v825 = vunpack.c.l.b16 %v162
    %v826 = vunpack.c.l.b16 %v163
    %v827 = vunpack.c.h.b16 %v163
    %v828 = vunpack.c.l.b16 %v164
    %v829 = vunpack.c.h.b16 %v164
    %v830 = vunpack.c.l.b16 %v165
    %v831 = vunpack.c.h.b16 %v165
    %v832 = vunpack.c.l.b16 %v166
    %v833 = vpack.c.b16 %v728, %v721
    %v834 = vpack.c.b16 %v729, %v722
    %v835 = vpack.c.b16 %v730, %v723
    %v836 = vpack.c.b16 %v731, %v724
    %v837 = vpack.c.b16 %v732, %v725
    %v838 = vpack.c.b16 %v733, %v726
    %v839 = vpack.c.b16 %v734, %v727
    %v840 = vpack.c.b16 %v742, %v735
    %v841 = vpack.c.b16 %v743, %v736
    %v842 = vpack.c.b16 %v744, %v737
    %v843 = vpack.c.b16 %v745, %v738
    %v844 = vpack.c.b16 %v746, %v739
    %v845 = vpack.c.b16 %v747, %v740
    %v846 = vpack.c.b16 %v748, %v741
    %v847 = vpack.c.b16 %v756, %v749
    %v848 = vpack.c.b16 %v757, %v750
    %v849 = vpack.c.b16 %v758, %v751
    %v850 = vpack.c.b16 %v759, %v752
    %v851 = vpack.c.b16 %v760, %v753
    %v852 = vpack.c.b16 %v761, %v754
    %v853 = vpack.c.b16 %v762, %v755
    %v854 = vpack.c.b16 %v770, %v763
    %v855 = vpack.c.b16 %v771, %v764
    %v856 = vpack.c.b16 %v772, %v765
    %v857 = vpack.c.b16 %v773, %v766
    %v858 = vpack.c.b16 %v774, %v767
    %v859 = vpack.c.b16 %v775, %v768
    %v860 = vpack.c.b16 %v776, %v769
    %v861 = vpack.c.b16 %v784, %v777
    %v862 = vpack.c.b16 %v785, %v778
    %v863 = vpack.c.b16 %v786, %v779
    %v864 = vpack.c.b16 %v787, %v780
    %v865 = vpack.c.b16 %v788, %v781
    %v866 = vpack.c.b16 %v789, %v782
    %v867 = vpack.c.b16 %v790, %v783
    %v868 = vpack.c.b16 %v798, %v791
    %v869 = vpack.c.b16 %v799, %v792
    %v870 = vpack.c.b16 %v800, %v793
    %v871 = vpack.c.b16 %v801, %v794
    %v872 = vpack.c.b16 %v802, %v795
    %v873 = vpack.c.b16 %v803, %v796
    %v874 = vpack.c.b16 %v804, %v797
    %v875 = vpack.c.b16 %v812, %v805
    %v876 = vpack.c.b16 %v813, %v806
    %v877 = vpack.c.b16 %v814, %v807
    %v878 = vpack.c.b16 %v815, %v808
    %v879 = vpack.c.b16 %v816, %v809
    %v880 = vpack.c.b16 %v817, %v810
    %v881 = vpack.c.b16 %v818, %v811
    %v882 = vpack.c.b16 %v826, %v819
    %v883 = vpack.c.b16 %v827, %v820
    %v884 = vpack.c.b16 %v828, %v821
    %v885 = vpack.c.b16 %v829, %v822
    %v886 = vpack.c.b16 %v830, %v823
    %v887 = vpack.c.b16 %v831, %v824
    %v888 = vpack.c.b16 %v832, %v825
    %v1393 = vunpack.c.l.b16 %v167
    %v1394 = vunpack.c.h.b16 %v167
    %v1395 = vunpack.c.l.b16 %v168
    %v1396 = vunpack.c.h.b16 %v168
    %v1397 = vunpack.c.l.b16 %v169
    %v1398 = vunpack.c.h.b16 %v169
    %v1399 = vunpack.c.l.b16 %v170
    %v1400 = vunpack.c.h.b16 %v170
    %v1401 = vunpack.c.l.b16 %v171
    %v1402 = vunpack.c.h.b16 %v171
    %v1403 = vunpack.c.l.b16 %v172
    %v1404 = vunpack.c.h.b16 %v172
    %v1405 = vunpack.c.l.b16 %v173
    %v1406 = vunpack.c.h.b16 %v173
    %v1407 = vunpack.c.l.b16 %v174
    %v1408 = vunpack.c.h.b16 %v174
    %v1409 = vunpack.c.l.b16 %v175
    %v1410 = vunpack.c.h.b16 %v175
    %v1411 = vunpack.c.l.b16 %v176
    %v1412 = vunpack.c.h.b16 %v176
    %v1413 = vunpack.c.l.b16 %v177
    %v1414 = vunpack.c.h.b16 %v177
    %v1415 = vunpack.c.l.b16 %v178
    %v1416 = vunpack.c.h.b16 %v178
    %v1417 = vunpack.c.l.b16 %v179
    %v1418 = vunpack.c.h.b16 %v179
    %v1419 = vunpack.c.l.b16 %v180
    %v1420 = vunpack.c.h.b16 %v180
    %v1421 = vunpack.c.l.b16 %v181
    %v1422 = vunpack.c.h.b16 %v181
    %v1423 = vunpack.c.l.b16 %v182
    %v1424 = vunpack.c.h.b16 %v182
    %v1425 = vunpack.c.l.b16 %v183
    %v1426 = vunpack.c.h.b16 %v183
    %v1427 = vunpack.c.l.b16 %v184
    %v1428 = vunpack.c.h.b16 %v184
    %v1429 = vunpack.c.l.b16 %v185
    %v1430 = vunpack.c.h.b16 %v185
    %v1431 = vunpack.c.l.b16 %v186
    %v1432 = vunpack.c.h.b16 %v186
    %v1433 = vunpack.c.l.b16 %v187
    %v1434 = vunpack.c.h.b16 %v187
    %v1435 = vunpack.c.l.b16 %v188
    %v1436 = vunpack.c.h.b16 %v188
    %v1437 = vunpack.c.l.b16 %v189
    %v1438 = vunpack.c.h.b16 %v189
    %v1439 = vunpack.c.l.b16 %v190
    %v1440 = vunpack.c.h.b16 %v190
    %v1441 = vunpack.c.l.b16 %v191
    %v1442 = vunpack.c.h.b16 %v191
    %v1443 = vunpack.c.l.b16 %v192
    %v1444 = vunpack.c.h.b16 %v192
    %v1445 = vunpack.c.l.b16 %v193
    %v1446 = vunpack.c.h.b16 %v193
    %v1447 = vunpack.c.l.b16 %v194
    %v1448 = vunpack.c.h.b16 %v194
    %v1449 = vunpack.c.l.b16 %v195
    %v1450 = vunpack.c.h.b16 %v195
    %v1451 = vunpack.c.l.b16 %v196
    %v1452 = vunpack.c.h.b16 %v196
    %v1453 = vunpack.c.l.b16 %v197
    %v1454 = vunpack.c.h.b16 %v197
    %v1455 = vunpack.c.l.b16 %v198
    %v1456 = vunpack.c.h.b16 %v198
    %v1457 = vunpack.c.l.b16 %v199
    %v1458 = vunpack.c.h.b16 %v199
    %v1459 = vunpack.c.l.b16 %v200
    %v1460 = vunpack.c.h.b16 %v200
    %v1461 = vunpack.c.l.b16 %v201
    %v1462 = vunpack.c.h.b16 %v201
    %v1463 = vunpack.c.l.b16 %v202
    %v1464 = vunpack.c.h.b16 %v202
    %v1465 = vunpack.c.l.b16 %v203
    %v1466 = vunpack.c.h.b16 %v203
    %v1467 = vunpack.c.l.b16 %v204
    %v1468 = vunpack.c.h.b16 %v204
    %v1469 = vunpack.c.l.b16 %v205
    %v1470 = vunpack.c.h.b16 %v205
    %v1471 = vunpack.c.l.b16 %v206
    %v1472 = vunpack.c.h.b16 %v206
    %v1473 = vunpack.c.l.b16 %v207
    %v1474 = vunpack.c.h.b16 %v207
    %v1475 = vunpack.c.l.b16 %v208
    %v1476 = vunpack.c.h.b16 %v208
    %v1477 = vunpack.c.l.b16 %v209
    %v1478 = vunpack.c.h.b16 %v209
    %v1479 = vunpack.c.l.b16 %v210
    %v1480 = vunpack.c.h.b16 %v210
    %v1481 = vunpack.c.l.b16 %v211
    %v1482 = vunpack.c.h.b16 %v211
    %v1483 = vunpack.c.l.b16 %v212
    %v1484 = vunpack.c.h.b16 %v212
    %v1485 = vunpack.c.l.b16 %v213
    %v1486 = vunpack.c.h.b16 %v213
    %v1487 = vunpack.c.l.b16 %v214
    %v1488 = vunpack.c.h.b16 %v214
    %v1489 = vunpack.c.l.b16 %v215
    %v1490 = vunpack.c.h.b16 %v215
    %v1491 = vunpack.c.l.b16 %v216
    %v1492 = vunpack.c.h.b16 %v216
    %v1493 = vunpack.c.l.b16 %v217
    %v1494 = vunpack.c.h.b16 %v217
    %v1495 = vunpack.c.l.b16 %v218
    %v1496 = vunpack.c.h.b16 %v218
    %v1497 = vunpack.c.l.b16 %v219
    %v1498 = vunpack.c.h.b16 %v219
    %v1499 = vunpack.c.l.b16 %v220
    %v1500 = vunpack.c.h.b16 %v220
    %v1501 = vunpack.c.l.b16 %v221
    %v1502 = vunpack.c.h.b16 %v221
    %v1503 = vunpack.c.l.b16 %v222
    %v1504 = vunpack.c.h.b16 %v222
    %v1505 = vunpack.c.l.b16 %v223
    %v1506 = vunpack.c.h.b16 %v223
    %v1507 = vunpack.c.l.b16 %v224
    %v1508 = vunpack.c.h.b16 %v224
    %v1509 = vunpack.c.l.b16 %v225
    %v1510 = vunpack.c.h.b16 %v225
    %v1511 = vunpack.c.l.b16 %v226
    %v1512 = vunpack.c.h.b16 %v226
    %v1513 = vunpack.c.l.b16 %v227
    %v1514 = vunpack.c.h.b16 %v227
    %v1515 = vunpack.c.l.b16 %v228
    %v1516 = vunpack.c.h.b16 %v228
    %v1517 = vunpack.c.l.b16 %v229
    %v1518 = vunpack.c.h.b16 %v229
    %v1519 = vunpack.c.l.b16 %v230
    %v1520 = vunpack.c.h.b16 %v230
    %v1521 = vunpack.c.l.b16 %v231
    %v1522 = vunpack.c.h.b16 %v231
    %v1523 = vunpack.c.l.b16 %v232
    %v1524 = vunpack.c.h.b16 %v232
    %v1525 = vunpack.c.l.b16 %v233
    %v1526 = vunpack.c.h.b16 %v233
    %v1527 = vunpack.c.l.b16 %v234
    %v1528 = vunpack.c.h.b16 %v234
    %v1529 = vunpack.c.l.b16 %v235
    %v1530 = vunpack.c.h.b16 %v235
    %v1531 = vunpack.c.l.b16 %v236
    %v1532 = vunpack.c.h.b16 %v236
    %v1533 = vunpack.c.l.b16 %v237
    %v1534 = vunpack.c.h.b16 %v237
    %v1535 = vunpack.c.l.b16 %v238
    %v1536 = vunpack.c.h.b16 %v238
    %v1537 = vunpack.c.l.b16 %v239
    %v1538 = vunpack.c.h.b16 %v239
    %v1539 = vunpack.c.l.b16 %v240
    %v1540 = vunpack.c.h.b16 %v240
    %v1541 = vunpack.c.l.b16 %v241
    %v1542 = vunpack.c.h.b16 %v241
    %v1543 = vunpack.c.l.b16 %v242
    %v1544 = vunpack.c.h.b16 %v242
    %v1545 = vunpack.c.l.b16 %v243
    %v1546 = vunpack.c.h.b16 %v243
    %v1547 = vunpack.c.l.b16 %v244
    %v1548 = vunpack.c.h.b16 %v244
    %v1549 = vunpack.c.l.b16 %v245
    %v1550 = vunpack.c.h.b16 %v245
    %v1551 = vunpack.c.l.b16 %v246
    %v1552 = vunpack.c.h.b16 %v246
    %v1553 = vunpack.c.l.b16 %v247
    %v1554 = vunpack.c.h.b16 %v247
    %v1555 = vunpack.c.l.b16 %v248
    %v1556 = vunpack.c.h.b16 %v248
    %v1557 = vunpack.c.l.b16 %v249
    %v1558 = vunpack.c.h.b16 %v249
    %v1559 = vunpack.c.l.b16 %v250
    %v1560 = vunpack.c.h.b16 %v250
    %v1561 = vunpack.c.l.b16 %v251
    %v1562 = vunpack.c.h.b16 %v251
    %v1563 = vunpack.c.l.b16 %v252
    %v1564 = vunpack.c.h.b16 %v252
    %v1565 = vunpack.c.l.b16 %v253
    %v1566 = vunpack.c.h.b16 %v253
    %v1567 = vunpack.c.l.b16 %v254
    %v1568 = vunpack.c.h.b16 %v254
    %v1569 = vunpack.c.l.b16 %v255
    %v1570 = vunpack.c.h.b16 %v255
    %v1571 = vunpack.c.l.b16 %v256
    %v1572 = vunpack.c.h.b16 %v256
    %v1573 = vunpack.c.l.b16 %v257
    %v1574 = vunpack.c.h.b16 %v257
    %v1575 = vunpack.c.l.b16 %v258
    %v1576 = vunpack.c.h.b16 %v258
    %v1577 = vunpack.c.l.b16 %v259
    %v1578 = vunpack.c.h.b16 %v259
    %v1579 = vunpack.c.l.b16 %v260
    %v1580 = vunpack.c.h.b16 %v260
    %v1581 = vunpack.c.l.b16 %v261
    %v1582 = vunpack.c.h.b16 %v261
    %v1583 = vunpack.c.l.b16 %v262
    %v1584 = vunpack.c.h.b16 %v262
    %v1585 = vunpack.c.l.b16 %v263
    %v1586 = vunpack.c.h.b16 %v263
    %v1587 = vunpack.c.l.b16 %v264
    %v1588 = vunpack.c.h.b16 %v264
    %v1589 = vunpack.c.l.b16 %v265
    %v1590 = vunpack.c.h.b16 %v265
    %v1591 = vunpack.c.l.b16 %v266
    %v1592 = vunpack.c.h.b16 %v266
    %v1593 = vunpack.c.l.b16 %v267
    %v1594 = vunpack.c.h.b16 %v267
    %v1595 = vunpack.c.l.b16 %v268
    %v1596 = vunpack.c.h.b16 %v268
    %v1597 = vunpack.c.l.b16 %v269
    %v1598 = vunpack.c.h.b16 %v269
    %v1599 = vunpack.c.l.b16 %v270
    %v1600 = vunpack.c.h.b16 %v270
    %v1601 = vunpack.c.l.b16 %v271
    %v1602 = vunpack.c.h.b16 %v271
    %v1603 = vunpack.c.l.b16 %v272
    %v1604 = vunpack.c.h.b16 %v272
    %v1605 = vunpack.c.l.b16 %v273
    %v1606 = vunpack.c.h.b16 %v273
    %v1607 = vunpack.c.l.b16 %v274
    %v1608 = vunpack.c.h.b16 %v274
    %v1609 = vunpack.c.l.b16 %v275
    %v1610 = vunpack.c.h.b16 %v275
    %v1611 = vunpack.c.l.b16 %v276
    %v1612 = vunpack.c.h.b16 %v276
    %v1613 = vunpack.c.l.b16 %v277
    %v1614 = vunpack.c.h.b16 %v277
    %v1615 = vunpack.c.l.b16 %v278
    %v1616 = vunpack.c.h.b16 %v278
    %v1617 = vunpack.c.l.b16 %v279
    %v1618 = vunpack.c.h.b16 %v279
    %v1619 = vunpack.c.l.b16 %v280
    %v1620 = vunpack.c.h.b16 %v280
    %v1621 = vunpack.c.l.b16 %v281
    %v1622 = vunpack.c.h.b16 %v281
    %v1623 = vunpack.c.l.b16 %v282
    %v1624 = vunpack.c.h.b16 %v282
    %v1625 = vunpack.c.l.b16 %v283
    %v1626 = vunpack.c.h.b16 %v283
    %v1627 = vunpack.c.l.b16 %v284
    %v1628 = vunpack.c.h.b16 %v284
    %v1629 = vunpack.c.l.b16 %v285
    %v1630 = vunpack.c.h.b16 %v285
    %v1631 = vunpack.c.l.b16 %v286
    %v1632 = vunpack.c.h.b16 %v286
    %v1633 = vunpack.c.l.b16 %v287
    %v1634 = vunpack.c.h.b16 %v287
    %v1635 = vunpack.c.l.b16 %v288
    %v1636 = vunpack.c.h.b16 %v288
    %v1637 = vunpack.c.l.b16 %v289
    %v1638 = vunpack.c.h.b16 %v289
    %v1639 = vunpack.c.l.b16 %v290
    %v1640 = vunpack.c.h.b16 %v290
    %v1641 = vunpack.c.l.b16 %v291
    %v1642 = vunpack.c.h.b16 %v291
    %v1643 = vunpack.c.l.b16 %v292
    %v1644 = vunpack.c.h.b16 %v292
    %v1645 = vunpack.c.l.b16 %v293
    %v1646 = vunpack.c.h.b16 %v293
    %v1647 = vunpack.c.l.b16 %v294
    %v1648 = vunpack.c.h.b16 %v294
    %v1649 = vunpack.c.l.b16 %v295
    %v1650 = vunpack.c.h.b16 %v295
    %v1651 = vunpack.c.l.b16 %v296
    %v1652 = vunpack.c.h.b16 %v296
    %v1653 = vunpack.c.l.b16 %v297
    %v1654 = vunpack.c.h.b16 %v297
    %v1655 = vunpack.c.l.b16 %v298
    %v1656 = vunpack.c.h.b16 %v298
    %v1657 = vunpack.c.l.b16 %v299
    %v1658 = vunpack.c.h.b16 %v299
    %v1659 = vunpack.c.l.b16 %v300
    %v1660 = vunpack.c.h.b16 %v300
    %v1661 = vunpack.c.l.b16 %v301
    %v1662 = vunpack.c.h.b16 %v301
    %v1663 = vunpack.c.l.b16 %v302
    %v1664 = vunpack.c.h.b16 %v302
    %v1665 = vunpack.c.l.b16 %v303
    %v1666 = vunpack.c.h.b16 %v303
    %v1667 = vunpack.c.l.b16 %v304
    %v1668 = vunpack.c.h.b16 %v304
    %v1669 = vunpack.c.l.b16 %v305
    %v1670 = vunpack.c.h.b16 %v305
    %v1671 = vunpack.c.l.b16 %v306
    %v1672 = vunpack.c.h.b16 %v306
    %v1673 = vunpack.c.l.b16 %v307
    %v1674 = vunpack.c.h.b16 %v307
    %v1675 = vunpack.c.l.b16 %v308
    %v1676 = vunpack.c.h.b16 %v308
    %v1677 = vunpack.c.l.b16 %v309
    %v1678 = vunpack.c.h.b16 %v309
    %v1679 = vunpack.c.l.b16 %v310
    %v1680 = vunpack.c.h.b16 %v310
    %v1681 = vunpack.c.l.b16 %v311
    %v1682 = vunpack.c.h.b16 %v311
    %v1683 = vunpack.c.l.b16 %v312
    %v1684 = vunpack.c.h.b16 %v312
    %v1685 = vunpack.c.l.b16 %v313
    %v1686 = vunpack.c.h.b16 %v313
    %v1687 = vunpack.c.l.b16 %v314
    %v1688 = vunpack.c.h.b16 %v314
    %v1689 = vunpack.c.l.b16 %v315
    %v1690 = vunpack.c.h.b16 %v315
    %v1691 = vunpack.c.l.b16 %v316
    %v1692 = vunpack.c.h.b16 %v316
    %v1693 = vunpack.c.l.b16 %v317
    %v1694 = vunpack.c.h.b16 %v317
    %v1695 = vunpack.c.l.b16 %v318
    %v1696 = vunpack.c.h.b16 %v318
    %v1697 = vunpack.c.l.b16 %v319
    %v1698 = vunpack.c.h.b16 %v319
    %v1699 = vunpack.c.l.b16 %v320
    %v1700 = vunpack.c.h.b16 %v320
    %v1701 = vunpack.c.l.b16 %v321
    %v1702 = vunpack.c.h.b16 %v321
    %v1703 = vunpack.c.l.b16 %v322
    %v1704 = vunpack.c.h.b16 %v322
    %v1705 = vunpack.c.l.b16 %v323
    %v1706 = vunpack.c.h.b16 %v323
    %v1707 = vunpack.c.l.b16 %v324
    %v1708 = vunpack.c.h.b16 %v324
    %v1709 = vunpack.c.l.b16 %v325
    %v1710 = vunpack.c.h.b16 %v325
    %v1711 = vunpack.c.l.b16 %v326
    %v1712 = vunpack.c.h.b16 %v326
    %v1713 = vunpack.c.l.b16 %v327
    %v1714 = vunpack.c.h.b16 %v327
    %v1715 = vunpack.c.l.b16 %v328
    %v1716 = vunpack.c.h.b16 %v328
    %v1717 = vunpack.c.l.b16 %v329
    %v1718 = vunpack.c.h.b16 %v329
    %v1719 = vunpack.c.l.b16 %v330
    %v1720 = vunpack.c.h.b16 %v330
    %v1721 = vunpack.c.l.b16 %v331
    %v1722 = vunpack.c.h.b16 %v331
    %v1723 = vunpack.c.l.b16 %v332
    %v1724 = vunpack.c.h.b16 %v332
    %v1725 = vunpack.c.l.b16 %v333
    %v1726 = vunpack.c.h.b16 %v333
    %v1727 = vunpack.c.l.b16 %v334
    %v1728 = vunpack.c.h.b16 %v334
    %v1729 = vunpack.c.l.b16 %v335
    %v1730 = vunpack.c.h.b16 %v335
    %v1731 = vunpack.c.l.b16 %v336
    %v1732 = vunpack.c.h.b16 %v336
    %v1733 = vunpack.c.l.b16 %v337
    %v1734 = vunpack.c.h.b16 %v337
    %v1735 = vunpack.c.l.b16 %v338
    %v1736 = vunpack.c.h.b16 %v338
    %v1737 = vunpack.c.l.b16 %v339
    %v1738 = vunpack.c.h.b16 %v339
    %v1739 = vunpack.c.l.b16 %v340
    %v1740 = vunpack.c.h.b16 %v340
    %v1741 = vunpack.c.l.b16 %v341
    %v1742 = vunpack.c.h.b16 %v341
    %v1743 = vunpack.c.l.b16 %v342
    %v1744 = vunpack.c.h.b16 %v342
    %v1745 = vunpack.c.l.b16 %v343
    %v1746 = vunpack.c.h.b16 %v343
    %v1747 = vunpack.c.l.b16 %v344
    %v1748 = vunpack.c.h.b16 %v344
    %v1749 = vunpack.c.l.b16 %v345
    %v1750 = vunpack.c.h.b16 %v345
    %v1751 = vunpack.c.l.b16 %v346
    %v1752 = vunpack.c.h.b16 %v346
    %v1753 = vunpack.c.l.b16 %v347
    %v1754 = vunpack.c.h.b16 %v347
    %v1755 = vunpack.c.l.b16 %v348
    %v1756 = vunpack.c.h.b16 %v348
    %v1757 = vunpack.c.l.b16 %v349
    %v1758 = vunpack.c.h.b16 %v349
    %v1759 = vunpack.c.l.b16 %v350
    %v1760 = vunpack.c.h.b16 %v350
    %v1761 = vunpack.c.l.b16 %v351
    %v1762 = vunpack.c.h.b16 %v351
    %v1763 = vunpack.c.l.b16 %v352
    %v1764 = vunpack.c.h.b16 %v352
    %v1765 = vunpack.c.l.b16 %v353
    %v1766 = vunpack.c.h.b16 %v353
    %v1767 = vunpack.c.l.b16 %v354
    %v1768 = vunpack.c.h.b16 %v354
    %v1769 = vunpack.c.l.b16 %v355
    %v1770 = vunpack.c.h.b16 %v355
    %v1771 = vunpack.c.l.b16 %v356
    %v1772 = vunpack.c.h.b16 %v356
    %v1773 = vunpack.c.l.b16 %v357
    %v1774 = vunpack.c.h.b16 %v357
    %v1775 = vunpack.c.l.b16 %v358
    %v1776 = vunpack.c.h.b16 %v358
    %v1777 = vunpack.c.l.b16 %v359
    %v1778 = vunpack.c.h.b16 %v359
    %v1779 = vunpack.c.l.b16 %v360
    %v1780 = vunpack.c.h.b16 %v360
    %v1781 = vunpack.c.l.b16 %v361
    %v1782 = vunpack.c.h.b16 %v361
    %v1783 = vunpack.c.l.b16 %v362
    %v1784 = vunpack.c.h.b16 %v362
    %v1785 = vunpack.c.l.b16 %v363
    %v1786 = vunpack.c.h.b16 %v363
    %v1787 = vunpack.c.l.b16 %v364
    %v1788 = vunpack.c.h.b16 %v364
    %v1789 = vunpack.c.l.b16 %v365
    %v1790 = vunpack.c.h.b16 %v365
    %v1791 = vunpack.c.l.b16 %v366
    %v1792 = vunpack.c.h.b16 %v366
    %v1793 = vunpack.c.l.b16 %v367
    %v1794 = vunpack.c.h.b16 %v367
    %v1795 = vunpack.c.l.b16 %v368
    %v1796 = vunpack.c.h.b16 %v368
    %v1797 = vunpack.c.l.b16 %v369
    %v1798 = vunpack.c.h.b16 %v369
    %v1799 = vunpack.c.l.b16 %v370
    %v1800 = vunpack.c.h.b16 %v370
    %v1801 = vunpack.c.l.b16 %v371
    %v1802 = vunpack.c.h.b16 %v371
    %v1803 = vunpack.c.l.b16 %v372
    %v1804 = vunpack.c.h.b16 %v372
    %v1805 = vunpack.c.l.b16 %v373
    %v1806 = vunpack.c.h.b16 %v373
    %v1807 = vunpack.c.l.b16 %v374
    %v1808 = vunpack.c.h.b16 %v374
    %v1809 = vunpack.c.l.b16 %v375
    %v1810 = vunpack.c.h.b16 %v375
    %v1811 = vunpack.c.l.b16 %v376
    %v1812 = vunpack.c.h.b16 %v376
    %v1813 = vunpack.c.l.b16 %v377
    %v1814 = vunpack.c.h.b16 %v377
    %v1815 = vunpack.c.l.b16 %v378
    %v1816 = vunpack.c.h.b16 %v378
    %v1817 = vunpack.c.l.b16 %v379
    %v1818 = vunpack.c.h.b16 %v379
    %v1819 = vunpack.c.l.b16 %v380
    %v1820 = vunpack.c.h.b16 %v380
    %v1821 = vunpack.c.l.b16 %v381
    %v1822 = vunpack.c.h.b16 %v381
    %v1823 = vunpack.c.l.b16 %v382
    %v1824 = vunpack.c.h.b16 %v382
    %v1825 = vunpack.c.l.b16 %v383
    %v1826 = vunpack.c.h.b16 %v383
    %v1827 = vunpack.c.l.b16 %v384
    %v1828 = vunpack.c.h.b16 %v384
    %v1829 = vunpack.c.l.b16 %v385
    %v1830 = vunpack.c.h.b16 %v385
    %v1831 = vunpack.c.l.b16 %v386
    %v1832 = vunpack.c.h.b16 %v386
    %v1833 = vunpack.c.l.b16 %v387
    %v1834 = vunpack.c.h.b16 %v387
    %v1835 = vunpack.c.l.b16 %v388
    %v1836 = vunpack.c.h.b16 %v388
    %v1837 = vunpack.c.l.b16 %v389
    %v1838 = vunpack.c.h.b16 %v389
    %v1839 = vunpack.c.l.b16 %v390
    %v1840 = vunpack.c.h.b16 %v390
    %v1841 = vunpack.c.l.b16 %v391
    %v1842 = vunpack.c.h.b16 %v391
    %v1843 = vunpack.c.l.b16 %v392
    %v1844 = vunpack.c.h.b16 %v392
    %v1845 = vunpack.c.l.b16 %v393
    %v1846 = vunpack.c.h.b16 %v393
    %v1847 = vunpack.c.l.b16 %v394
    %v1848 = vunpack.c.h.b16 %v394
    %v1849 = vunpack.c.l.b16 %v395
    %v1850 = vunpack.c.h.b16 %v395
    %v1851 = vunpack.c.l.b16 %v396
    %v1852 = vunpack.c.h.b16 %v396
    %v1853 = vunpack.c.l.b16 %v397
    %v1854 = vunpack.c.h.b16 %v397
    %v1855 = vunpack.c.l.b16 %v398
    %v1856 = vunpack.c.h.b16 %v398
    %v1857 = vunpack.c.l.b16 %v399
    %v1858 = vunpack.c.h.b16 %v399
    %v1859 = vunpack.c.l.b16 %v400
    %v1860 = vunpack.c.h.b16 %v400
    %v1861 = vunpack.c.l.b16 %v401
    %v1862 = vunpack.c.h.b16 %v401
    %v1863 = vunpack.c.l.b16 %v402
    %v1864 = vunpack.c.h.b16 %v402
    %v1865 = vunpack.c.l.b16 %v403
    %v1866 = vunpack.c.h.b16 %v403
    %v1867 = vunpack.c.l.b16 %v404
    %v1868 = vunpack.c.h.b16 %v404
    %v1869 = vunpack.c.l.b16 %v405
    %v1870 = vunpack.c.h.b16 %v405
    %v1871 = vunpack.c.l.b16 %v406
    %v1872 = vunpack.c.h.b16 %v406
    %v1873 = vunpack.c.l.b16 %v407
    %v1874 = vunpack.c.h.b16 %v407
    %v1875 = vunpack.c.l.b16 %v408
    %v1876 = vunpack.c.h.b16 %v408
    %v1877 = vunpack.c.l.b16 %v409
    %v1878 = vunpack.c.h.b16 %v409
    %v1879 = vunpack.c.l.b16 %v410
    %v1880 = vunpack.c.h.b16 %v410
    %v1881 = vunpack.c.l.b16 %v411
    %v1882 = vunpack.c.h.b16 %v411
    %v1883 = vunpack.c.l.b16 %v412
    %v1884 = vunpack.c.h.b16 %v412
    %v1885 = vunpack.c.l.b16 %v413
    %v1886 = vunpack.c.h.b16 %v413
    %v1887 = vunpack.c.l.b16 %v414
    %v1888 = vunpack.c.h.b16 %v414
    %v1889 = vunpack.c.l.b16 %v415
    %v1890 = vunpack.c.h.b16 %v415
    %v1891 = vunpack.c.l.b16 %v416
    %v1892 = vunpack.c.h.b16 %v416
    %v1893 = vunpack.c.l.b16 %v417
    %v1894 = vunpack.c.h.b16 %v417
    %v1895 = vunpack.c.l.b16 %v418
    %v1896 = vunpack.c.h.b16 %v418
    %v1897 = vunpack.c.l.b16 %v419
    %v1898 = vunpack.c.h.b16 %v419
    %v1899 = vunpack.c.l.b16 %v420
    %v1900 = vunpack.c.h.b16 %v420
    %v1901 = vunpack.c.l.b16 %v421
    %v1902 = vunpack.c.h.b16 %v421
    %v1903 = vunpack.c.l.b16 %v422
    %v1904 = vunpack.c.h.b16 %v422
    %v1905 = vunpack.c.l.b16 %v423
    %v1906 = vunpack.c.h.b16 %v423
    %v1907 = vunpack.c.l.b16 %v424
    %v1908 = vunpack.c.h.b16 %v424
    %v1909 = vunpack.c.l.b16 %v425
    %v1910 = vunpack.c.h.b16 %v425
    %v1911 = vunpack.c.l.b16 %v426
    %v1912 = vunpack.c.h.b16 %v426
    %v1913 = vunpack.c.l.b16 %v427
    %v1914 = vunpack.c.h.b16 %v427
    %v1915 = vunpack.c.l.b16 %v428
    %v1916 = vunpack.c.h.b16 %v428
    %v1917 = vunpack.c.l.b16 %v429
    %v1918 = vunpack.c.h.b16 %v429
    %v1919 = vunpack.c.l.b16 %v430
    %v1920 = vunpack.c.h.b16 %v430
    %v1921 = vunpack.c.l.b16 %v431
    %v1922 = vunpack.c.h.b16 %v431
    %v1923 = vunpack.c.l.b16 %v432
    %v1924 = vunpack.c.h.b16 %v432
    %v1925 = vunpack.c.l.b16 %v433
    %v1926 = vunpack.c.h.b16 %v433
    %v1927 = vunpack.c.l.b16 %v434
    %v1928 = vunpack.c.h.b16 %v434
    %v1929 = vunpack.c.l.b16 %v435
    %v1930 = vunpack.c.h.b16 %v435
    %v1931 = vunpack.c.l.b16 %v436
    %v1932 = vunpack.c.h.b16 %v436
    %v1933 = vunpack.c.l.b16 %v437
    %v1934 = vunpack.c.h.b16 %v437
    %v1935 = vunpack.c.l.b16 %v438
    %v1936 = vunpack.c.h.b16 %v438
    %v1937 = vunpack.c.l.b16 %v439
    %v1938 = vunpack.c.h.b16 %v439
    %v1939 = vunpack.c.l.b16 %v440
    %v1940 = vunpack.c.h.b16 %v440
    %v1941 = vunpack.c.l.b16 %v441
    %v1942 = vunpack.c.h.b16 %v441
    %v1943 = vunpack.c.l.b16 %v442
    %v1944 = vunpack.c.h.b16 %v442
    %v1945 = vunpack.c.l.b16 %v443
    %v1946 = vunpack.c.h.b16 %v443
    %v1947 = vunpack.c.l.b16 %v444
    %v1948 = vunpack.c.h.b16 %v444
    %v1949 = vunpack.c.l.b16 %v445
    %v1950 = vunpack.c.h.b16 %v445
    %v1951 = vunpack.c.l.b16 %v446
    %v1952 = vunpack.c.h.b16 %v446
    %v1953 = vunpack.c.l.b16 %v447
    %v1954 = vunpack.c.h.b16 %v447
    %v1955 = vunpack.c.l.b16 %v448
    %v1956 = vunpack.c.h.b16 %v448
    %v1957 = vunpack.c.l.b16 %v449
    %v1958 = vunpack.c.h.b16 %v449
    %v1959 = vunpack.c.l.b16 %v450
    %v1960 = vunpack.c.h.b16 %v450
    %v1961 = vunpack.c.l.b16 %v451
    %v1962 = vunpack.c.h.b16 %v451
    %v1963 = vunpack.c.l.b16 %v452
    %v1964 = vunpack.c.h.b16 %v452
    %v1965 = vunpack.c.l.b16 %v453
    %v1966 = vunpack.c.h.b16 %v453
    %v1967 = vunpack.c.l.b16 %v454
    %v1968 = vunpack.c.h.b16 %v454
    %v1969 = vunpack.c.l.b16 %v455
    %v1970 = vunpack.c.h.b16 %v455
    %v1971 = vunpack.c.l.b16 %v456
    %v1972 = vunpack.c.h.b16 %v456
    %v1973 = vunpack.c.l.b16 %v457
    %v1974 = vunpack.c.h.b16 %v457
    %v1975 = vunpack.c.l.b16 %v458
    %v1976 = vunpack.c.h.b16 %v458
    %v1977 = vunpack.c.l.b16 %v459
    %v1978 = vunpack.c.h.b16 %v459
    %v1979 = vunpack.c.l.b16 %v460
    %v1980 = vunpack.c.h.b16 %v460
    %v1981 = vunpack.c.l.b16 %v461
    %v1982 = vunpack.c.h.b16 %v461
    %v1983 = vunpack.c.l.b16 %v462
    %v1984 = vunpack.c.h.b16 %v462
    %v1985 = vunpack.c.l.b16 %v463
    %v1986 = vunpack.c.h.b16 %v463
    %v1987 = vunpack.c.l.b16 %v464
    %v1988 = vunpack.c.h.b16 %v464
    %v1989 = vunpack.c.l.b16 %v465
    %v1990 = vunpack.c.h.b16 %v465
    %v1991 = vunpack.c.l.b16 %v466
    %v1992 = vunpack.c.h.b16 %v466
    %v1993 = vunpack.c.l.b16 %v467
    %v1994 = vunpack.c.h.b16 %v467
    %v1995 = vunpack.c.l.b16 %v468
    %v1996 = vunpack.c.h.b16 %v468
    %v1997 = vunpack.c.l.b16 %v469
    %v1998 = vunpack.c.h.b16 %v469
    %v1999 = vunpack.c.l.b16 %v470
    %v2000 = vunpack.c.h.b16 %v470
    %v2001 = vunpack.c.l.b16 %v471
    %v2002 = vunpack.c.h.b16 %v471
    %v2003 = vunpack.c.l.b16 %v472
    %v2004 = vunpack.c.h.b16 %v472
    %v2005 = vunpack.c.l.b16 %v473
    %v2006 = vunpack.c.h.b16 %v473
    %v2007 = vunpack.c.l.b16 %v474
    %v2008 = vunpack.c.h.b16 %v474
    %v2009 = vunpack.c.l.b16 %v475
    %v2010 = vunpack.c.h.b16 %v475
    %v2011 = vunpack.c.l.b16 %v476
    %v2012 = vunpack.c.h.b16 %v476
    %v2013 = vunpack.c.l.b16 %v477
    %v2014 = vunpack.c.h.b16 %v477
    %v2015 = vunpack.c.l.b16 %v478
    %v2016 = vunpack.c.h.b16 %v478
    %v2017 = vunpack.c.l.b16 %v479
    %v2018 = vunpack.c.h.b16 %v479
    %v2019 = vunpack.c.l.b16 %v480
    %v2020 = vunpack.c.h.b16 %v480
    %v2021 = vunpack.c.l.b16 %v481
    %v2022 = vunpack.c.h.b16 %v481
    %v2023 = vunpack.c.l.b16 %v482
    %v2024 = vunpack.c.h.b16 %v482
    %v2025 = vunpack.c.l.b16 %v483
    %v2026 = vunpack.c.h.b16 %v483
    %v2027 = vunpack.c.l.b16 %v484
    %v2028 = vunpack.c.h.b16 %v484
    %v2029 = vunpack.c.l.b16 %v485
    %v2030 = vunpack.c.h.b16 %v485
    %v2031 = vunpack.c.l.b16 %v486
    %v2032 = vunpack.c.h.b16 %v486
    %v2033 = vunpack.c.l.b16 %v487
    %v2034 = vunpack.c.h.b16 %v487
    %v2035 = vunpack.c.l.b16 %v488
    %v2036 = vunpack.c.h.b16 %v488
    %v2037 = vunpack.c.l.b16 %v489
    %v2038 = vunpack.c.h.b16 %v489
    %v2039 = vunpack.c.l.b16 %v490
    %v2040 = vunpack.c.h.b16 %v490
    %v2041 = vunpack.c.l.b16 %v491
    %v2042 = vunpack.c.h.b16 %v491
    %v2043 = vunpack.c.l.b16 %v492
    %v2044 = vunpack.c.h.b16 %v492
    %v2045 = vunpack.c.l.b16 %v493
    %v2046 = vunpack.c.h.b16 %v493
    %v2047 = vunpack.c.l.b16 %v494
    %v2048 = vunpack.c.h.b16 %v494
    %v2049 = vunpack.c.l.b16 %v495
    %v2050 = vunpack.c.h.b16 %v495
    %v2051 = vunpack.c.l.b16 %v496
    %v2052 = vunpack.c.h.b16 %v496
    %v2053 = vunpack.c.l.b16 %v497
    %v2054 = vunpack.c.h.b16 %v497
    %v2055 = vunpack.c.l.b16 %v498
    %v2056 = vunpack.c.h.b16 %v498
    %v2057 = vunpack.c.l.b16 %v499
    %v2058 = vunpack.c.h.b16 %v499
    %v2059 = vunpack.c.l.b16 %v500
    %v2060 = vunpack.c.h.b16 %v500
    %v2061 = vunpack.c.l.b16 %v501
    %v2062 = vunpack.c.h.b16 %v501
    %v2063 = vunpack.c.l.b16 %v502
    %v2064 = vunpack.c.h.b16 %v502
    %v2065 = vunpack.c.l.b16 %v503
    %v2066 = vunpack.c.h.b16 %v503
    %v2067 = vunpack.c.l.b16 %v504
    %v2068 = vunpack.c.h.b16 %v504
    %v2069 = vunpack.c.l.b16 %v505
    %v2070 = vunpack.c.h.b16 %v505
    %v2071 = vunpack.c.l.b16 %v506
    %v2072 = vunpack.c.h.b16 %v506
    %v2073 = vunpack.c.l.b16 %v507
    %v2074 = vunpack.c.h.b16 %v507
    %v2075 = vunpack.c.l.b16 %v508
    %v2076 = vunpack.c.h.b16 %v508
    %v2077 = vunpack.c.l.b16 %v509
    %v2078 = vunpack.c.h.b16 %v509
    %v2079 = vunpack.c.l.b16 %v510
    %v2080 = vunpack.c.h.b16 %v510
    %v2081 = vunpack.c.l.b16 %v511
    %v2082 = vunpack.c.h.b16 %v511
    %v2083 = vunpack.c.l.b16 %v512
    %v2084 = vunpack.c.h.b16 %v512
    %v2085 = vunpack.c.l.b16 %v513
    %v2086 = vunpack.c.h.b16 %v513
    %v2087 = vunpack.c.l.b16 %v514
    %v2088 = vunpack.c.h.b16 %v514
    %v2089 = vunpack.c.l.b16 %v515
    %v2090 = vunpack.c.h.b16 %v515
    %v2091 = vunpack.c.l.b16 %v516
    %v2092 = vunpack.c.h.b16 %v516
    %v2093 = vunpack.c.l.b16 %v517
    %v2094 = vunpack.c.h.b16 %v517
    %v2095 = vunpack.c.l.b16 %v518
    %v2096 = vunpack.c.h.b16 %v518
    %v2097 = vunpack.c.l.b16 %v519
    %v2098 = vunpack.c.h.b16 %v519
    %v2099 = vunpack.c.l.b16 %v520
    %v2100 = vunpack.c.h.b16 %v520
    %v2101 = vunpack.c.l.b16 %v521
    %v2102 = vunpack.c.h.b16 %v521
    %v2103 = vunpack.c.l.b16 %v522
    %v2104 = vunpack.c.h.b16 %v522
    %v2105 = vunpack.c.l.b16 %v523
    %v2106 = vunpack.c.h.b16 %v523
    %v2107 = vunpack.c.l.b16 %v524
    %v2108 = vunpack.c.h.b16 %v524
    %v2109 = vunpack.c.l.b16 %v525
    %v2110 = vunpack.c.h.b16 %v525
    %v2111 = vunpack.c.l.b16 %v526
    %v2112 = vunpack.c.h.b16 %v526
    %v2113 = vunpack.c.l.b16 %v527
    %v2114 = vunpack.c.h.b16 %v527
    %v2115 = vunpack.c.l.b16 %v528
    %v2116 = vunpack.c.h.b16 %v528
    %v2117 = vunpack.c.l.b16 %v529
    %v2118 = vunpack.c.h.b16 %v529
    %v2119 = vunpack.c.l.b16 %v530
    %v2120 = vunpack.c.h.b16 %v530
    %v2121 = vunpack.c.l.b16 %v531
    %v2122 = vunpack.c.h.b16 %v531
    %v2123 = vunpack.c.l.b16 %v532
    %v2124 = vunpack.c.h.b16 %v532
    %v2125 = vunpack.c.l.b16 %v533
    %v2126 = vunpack.c.h.b16 %v533
    %v2127 = vunpack.c.l.b16 %v534
    %v2128 = vunpack.c.h.b16 %v534
    %v2129 = vunpack.c.l.b16 %v535
    %v2130 = vunpack.c.h.b16 %v535
    %v2131 = vunpack.c.l.b16 %v536
    %v2132 = vunpack.c.h.b16 %v536
    %v2133 = vunpack.c.l.b16 %v537
    %v2134 = vunpack.c.h.b16 %v537
    %v2135 = vunpack.c.l.b16 %v538
    %v2136 = vunpack.c.h.b16 %v538
    %v2137 = vunpack.c.l.b16 %v539
    %v2138 = vunpack.c.h.b16 %v539
    %v2139 = vunpack.c.l.b16 %v540
    %v2140 = vunpack.c.h.b16 %v540
    %v2141 = vunpack.c.l.b16 %v541
    %v2142 = vunpack.c.h.b16 %v541
    %v2143 = vunpack.c.l.b16 %v542
    %v2144 = vunpack.c.h.b16 %v542
    %v2145 = vunpack.c.l.b16 %v543
    %v2146 = vunpack.c.h.b16 %v543
    %v2147 = vunpack.c.l.b16 %v544
    %v2148 = vunpack.c.h.b16 %v544
    %v2149 = vunpack.c.l.b16 %v545
    %v2150 = vunpack.c.h.b16 %v545
    %v2151 = vunpack.c.l.b16 %v546
    %v2152 = vunpack.c.h.b16 %v546
    %v2153 = vunpack.c.l.b16 %v547
    %v2154 = vunpack.c.h.b16 %v547
    %v2155 = vunpack.c.l.b16 %v548
    %v2156 = vunpack.c.h.b16 %v548
    %v2157 = vunpack.c.l.b16 %v549
    %v2158 = vunpack.c.h.b16 %v549
    %v2159 = vunpack.c.l.b16 %v550
    %v2160 = vunpack.c.h.b16 %v550
    %v2161 = vunpack.c.l.b16 %v551
    %v2162 = vunpack.c.h.b16 %v551
    %v2163 = vunpack.c.l.b16 %v552
    %v2164 = vunpack.c.h.b16 %v552
    %v2165 = vunpack.c.l.b16 %v553
    %v2166 = vunpack.c.h.b16 %v553
    %v2167 = vunpack.c.l.b16 %v554
    %v2168 = vunpack.c.h.b16 %v554
    %v2169 = vunpack.c.l.b16 %v555
    %v2170 = vunpack.c.h.b16 %v555
    %v2171 = vunpack.c.l.b16 %v556
    %v2172 = vunpack.c.h.b16 %v556
    %v2173 = vunpack.c.l.b16 %v557
    %v2174 = vunpack.c.h.b16 %v557
    %v2175 = vunpack.c.l.b16 %v558
    %v2176 = vunpack.c.h.b16 %v558
    %v2177 = vunpack.c.l.b16 %v559
    %v2178 = vunpack.c.h.b16 %v559
    %v2179 = vunpack.c.l.b16 %v560
    %v2180 = vunpack.c.h.b16 %v560
    %v2181 = vunpack.c.l.b16 %v561
    %v2182 = vunpack.c.h.b16 %v561
    %v2183 = vunpack.c.l.b16 %v562
    %v2184 = vunpack.c.h.b16 %v562
    %v2185 = vunpack.c.l.b16 %v563
    %v2186 = vunpack.c.h.b16 %v563
    %v2187 = vunpack.c.l.b16 %v564
    %v2188 = vunpack.c.h.b16 %v564
    %v2189 = vunpack.c.l.b16 %v565
    %v2190 = vunpack.c.h.b16 %v565
    %v2191 = vunpack.c.l.b16 %v566
    %v2192 = vunpack.c.h.b16 %v566
    %v2193 = vunpack.c.l.b16 %v567
    %v2194 = vunpack.c.h.b16 %v567
    %v2195 = vunpack.c.l.b16 %v568
    %v2196 = vunpack.c.h.b16 %v568
    %v2197 = vunpack.c.l.b16 %v569
    %v2198 = vunpack.c.h.b16 %v569
    %v2199 = vunpack.c.l.b16 %v570
    %v2200 = vunpack.c.h.b16 %v570
    %v2201 = vunpack.c.l.b16 %v571
    %v2202 = vunpack.c.h.b16 %v571
    %v2203 = vunpack.c.l.b16 %v572
    %v2204 = vunpack.c.h.b16 %v572
    %v2205 = vunpack.c.l.b16 %v573
    %v2206 = vunpack.c.h.b16 %v573
    %v2207 = vunpack.c.l.b16 %v574
    %v2208 = vunpack.c.h.b16 %v574
    %v2209 = vunpack.c.l.b16 %v575
    %v2210 = vunpack.c.h.b16 %v575
    %v2211 = vunpack.c.l.b16 %v576
    %v2212 = vunpack.c.h.b16 %v576
    %v2213 = vunpack.c.l.b16 %v577
    %v2214 = vunpack.c.h.b16 %v577
    %v2215 = vunpack.c.l.b16 %v578
    %v2216 = vunpack.c.h.b16 %v578
    %v2217 = vunpack.c.l.b16 %v579
    %v2218 = vunpack.c.h.b16 %v579
    %v2219 = vunpack.c.l.b16 %v580
    %v2220 = vunpack.c.h.b16 %v580
    %v2221 = vunpack.c.l.b16 %v581
    %v2222 = vunpack.c.h.b16 %v581
    %v2223 = vunpack.c.l.b16 %v582
    %v2224 = vunpack.c.h.b16 %v582
    %v2225 = vunpack.c.l.b16 %v583
    %v2226 = vunpack.c.h.b16 %v583
    %v2227 = vunpack.c.l.b16 %v584
    %v2228 = vunpack.c.h.b16 %v584
    %v2229 = vunpack.c.l.b16 %v585
    %v2230 = vunpack.c.h.b16 %v585
    %v2231 = vunpack.c.l.b16 %v586
    %v2232 = vunpack.c.h.b16 %v586
    %v2233 = vunpack.c.l.b16 %v587
    %v2234 = vunpack.c.h.b16 %v587
    %v2235 = vunpack.c.l.b16 %v588
    %v2236 = vunpack.c.h.b16 %v588
    %v2237 = vunpack.c.l.b16 %v589
    %v2238 = vunpack.c.h.b16 %v589
    %v2239 = vunpack.c.l.b16 %v590
    %v2240 = vunpack.c.h.b16 %v590
    %v2241 = vunpack.c.l.b16 %v591
    %v2242 = vunpack.c.h.b16 %v591
    %v2243 = vunpack.c.l.b16 %v592
    %v2244 = vunpack.c.h.b16 %v592
    %v2245 = vunpack.c.l.b16 %v593
    %v2246 = vunpack.c.h.b16 %v593
    %v2247 = vunpack.c.l.b16 %v594
    %v2248 = vunpack.c.h.b16 %v594
    %v2249 = vunpack.c.l.b16 %v595
    %v2250 = vunpack.c.h.b16 %v595
    %v2251 = vunpack.c.l.b16 %v596
    %v2252 = vunpack.c.h.b16 %v596
    %v2253 = vunpack.c.l.b16 %v597
    %v2254 = vunpack.c.h.b16 %v597
    %v2255 = vunpack.c.l.b16 %v598
    %v2256 = vunpack.c.h.b16 %v598
    %v2257 = vunpack.c.l.b16 %v599
    %v2258 = vunpack.c.h.b16 %v599
    %v2259 = vunpack.c.l.b16 %v600
    %v2260 = vunpack.c.h.b16 %v600
    %v2261 = vunpack.c.l.b16 %v601
    %v2262 = vunpack.c.h.b16 %v601
    %v2263 = vunpack.c.l.b16 %v602
    %v2264 = vunpack.c.h.b16 %v602
    %v2265 = vunpack.c.l.b16 %v603
    %v2266 = vunpack.c.h.b16 %v603
    %v2267 = vunpack.c.l.b16 %v604
    %v2268 = vunpack.c.h.b16 %v604
    %v2269 = vunpack.c.l.b16 %v605
    %v2270 = vunpack.c.h.b16 %v605
    %v2271 = vunpack.c.l.b16 %v606
    %v2272 = vunpack.c.h.b16 %v606
    %v2273 = vunpack.c.l.b16 %v607
    %v2274 = vunpack.c.h.b16 %v607
    %v2275 = vunpack.c.l.b16 %v608
    %v2276 = vunpack.c.h.b16 %v608
    %v2277 = vunpack.c.l.b16 %v609
    %v2278 = vunpack.c.h.b16 %v609
    %v2279 = vunpack.c.l.b16 %v610
    %v2280 = vunpack.c.h.b16 %v610
    %v2281 = vunpack.c.l.b16 %v611
    %v2282 = vunpack.c.h.b16 %v611
    %v2283 = vunpack.c.l.b16 %v612
    %v2284 = vunpack.c.h.b16 %v612
    %v2285 = vunpack.c.l.b16 %v613
    %v2286 = vunpack.c.h.b16 %v613
    %v2287 = vunpack.c.l.b16 %v614
    %v2288 = vunpack.c.h.b16 %v614
    %v2289 = vpack.c.b16 %v1401, %v1393
    %v2290 = vpack.c.b16 %v1402, %v1394
    %v2291 = vpack.c.b16 %v1403, %v1395
    %v2292 = vpack.c.b16 %v1404, %v1396
    %v2293 = vpack.c.b16 %v1405, %v1397
    %v2294 = vpack.c.b16 %v1406, %v1398
    %v2295 = vpack.c.b16 %v1407, %v1399
    %v2296 = vpack.c.b16 %v1408, %v1400
    %v2297 = vpack.c.b16 %v1417, %v1409
    %v2298 = vpack.c.b16 %v1418, %v1410
    %v2299 = vpack.c.b16 %v1419, %v1411
    %v2300 = vpack.c.b16 %v1420, %v1412
    %v2301 = vpack.c.b16 %v1421, %v1413
    %v2302 = vpack.c.b16 %v1422, %v1414
    %v2303 = vpack.c.b16 %v1423, %v1415
    %v2304 = vpack.c.b16 %v1424, %v1416
    %v2305 = vpack.c.b16 %v1433, %v1425
    %v2306 = vpack.c.b16 %v1434, %v1426
    %v2307 = vpack.c.b16 %v1435, %v1427
    %v2308 = vpack.c.b16 %v1436, %v1428
    %v2309 = vpack.c.b16 %v1437, %v1429
    %v2310 = vpack.c.b16 %v1438, %v1430
    %v2311 = vpack.c.b16 %v1439, %v1431
    %v2312 = vpack.c.b16 %v1440, %v1432
    %v2313 = vpack.c.b16 %v1449, %v1441
    %v2314 = vpack.c.b16 %v1450, %v1442
    %v2315 = vpack.c.b16 %v1451, %v1443
    %v2316 = vpack.c.b16 %v1452, %v1444
    %v2317 = vpack.c.b16 %v1453, %v1445
    %v2318 = vpack.c.b16 %v1454, %v1446
    %v2319 = vpack.c.b16 %v1455, %v1447
    %v2320 = vpack.c.b16 %v1456, %v1448
    %v2321 = vpack.c.b16 %v1465, %v1457
    %v2322 = vpack.c.b16 %v1466, %v1458
    %v2323 = vpack.c.b16 %v1467, %v1459
    %v2324 = vpack.c.b16 %v1468, %v1460
    %v2325 = vpack.c.b16 %v1469, %v1461
    %v2326 = vpack.c.b16 %v1470, %v1462
    %v2327 = vpack.c.b16 %v1471, %v1463
    %v2328 = vpack.c.b16 %v1472, %v1464
    %v2329 = vpack.c.b16 %v1481, %v1473
    %v2330 = vpack.c.b16 %v1482, %v1474
    %v2331 = vpack.c.b16 %v1483, %v1475
    %v2332 = vpack.c.b16 %v1484, %v1476
    %v2333 = vpack.c.b16 %v1485, %v1477
    %v2334 = vpack.c.b16 %v1486, %v1478
    %v2335 = vpack.c.b16 %v1487, %v1479
    %v2336 = vpack.c.b16 %v1488, %v1480
    %v2337 = vpack.c.b16 %v1497, %v1489
    %v2338 = vpack.c.b16 %v1498, %v1490
    %v2339 = vpack.c.b16 %v1499, %v1491
    %v2340 = vpack.c.b16 %v1500, %v1492
    %v2341 = vpack.c.b16 %v1501, %v1493
    %v2342 = vpack.c.b16 %v1502, %v1494
    %v2343 = vpack.c.b16 %v1503, %v1495
    %v2344 = vpack.c.b16 %v1504, %v1496
    %v2345 = vpack.c.b16 %v1513, %v1505
    %v2346 = vpack.c.b16 %v1514, %v1506
    %v2347 = vpack.c.b16 %v1515, %v1507
    %v2348 = vpack.c.b16 %v1516, %v1508
    %v2349 = vpack.c.b16 %v1517, %v1509
    %v2350 = vpack.c.b16 %v1518, %v1510
    %v2351 = vpack.c.b16 %v1519, %v1511
    %v2352 = vpack.c.b16 %v1520, %v1512
    %v2353 = vpack.c.b16 %v1529, %v1521
    %v2354 = vpack.c.b16 %v1530, %v1522
    %v2355 = vpack.c.b16 %v1531, %v1523
    %v2356 = vpack.c.b16 %v1532, %v1524
    %v2357 = vpack.c.b16 %v1533, %v1525
    %v2358 = vpack.c.b16 %v1534, %v1526
    %v2359 = vpack.c.b16 %v1535, %v1527
    %v2360 = vpack.c.b16 %v1536, %v1528
    %v2361 = vpack.c.b16 %v1545, %v1537
    %v2362 = vpack.c.b16 %v1546, %v1538
    %v2363 = vpack.c.b16 %v1547, %v1539
    %v2364 = vpack.c.b16 %v1548, %v1540
    %v2365 = vpack.c.b16 %v1549, %v1541
    %v2366 = vpack.c.b16 %v1550, %v1542
    %v2367 = vpack.c.b16 %v1551, %v1543
    %v2368 = vpack.c.b16 %v1552, %v1544
    %v2369 = vpack.c.b16 %v1561, %v1553
    %v2370 = vpack.c.b16 %v1562, %v1554
    %v2371 = vpack.c.b16 %v1563, %v1555
    %v2372 = vpack.c.b16 %v1564, %v1556
    %v2373 = vpack.c.b16 %v1565, %v1557
    %v2374 = vpack.c.b16 %v1566, %v1558
    %v2375 = vpack.c.b16 %v1567, %v1559
    %v2376 = vpack.c.b16 %v1568, %v1560
    %v2377 = vpack.c.b16 %v1577, %v1569
    %v2378 = vpack.c.b16 %v1578, %v1570
    %v2379 = vpack.c.b16 %v1579, %v1571
    %v2380 = vpack.c.b16 %v1580, %v1572
    %v2381 = vpack.c.b16 %v1581, %v1573
    %v2382 = vpack.c.b16 %v1582, %v1574
    %v2383 = vpack.c.b16 %v1583, %v1575
    %v2384 = vpack.c.b16 %v1584, %v1576
    %v2385 = vpack.c.b16 %v1593, %v1585
    %v2386 = vpack.c.b16 %v1594, %v1586
    %v2387 = vpack.c.b16 %v1595, %v1587
    %v2388 = vpack.c.b16 %v1596, %v1588
    %v2389 = vpack.c.b16 %v1597, %v1589
    %v2390 = vpack.c.b16 %v1598, %v1590
    %v2391 = vpack.c.b16 %v1599, %v1591
    %v2392 = vpack.c.b16 %v1600, %v1592
    %v2393 = vpack.c.b16 %v1609, %v1601
    %v2394 = vpack.c.b16 %v1610, %v1602
    %v2395 = vpack.c.b16 %v1611, %v1603
    %v2396 = vpack.c.b16 %v1612, %v1604
    %v2397 = vpack.c.b16 %v1613, %v1605
    %v2398 = vpack.c.b16 %v1614, %v1606
    %v2399 = vpack.c.b16 %v1615, %v1607
    %v2400 = vpack.c.b16 %v1616, %v1608
    %v2401 = vpack.c.b16 %v1625, %v1617
    %v2402 = vpack.c.b16 %v1626, %v1618
    %v2403 = vpack.c.b16 %v1627, %v1619
    %v2404 = vpack.c.b16 %v1628, %v1620
    %v2405 = vpack.c.b16 %v1629, %v1621
    %v2406 = vpack.c.b16 %v1630, %v1622
    %v2407 = vpack.c.b16 %v1631, %v1623
    %v2408 = vpack.c.b16 %v1632, %v1624
    %v2409 = vpack.c.b16 %v1641, %v1633
    %v2410 = vpack.c.b16 %v1642, %v1634
    %v2411 = vpack.c.b16 %v1643, %v1635
    %v2412 = vpack.c.b16 %v1644, %v1636
    %v2413 = vpack.c.b16 %v1645, %v1637
    %v2414 = vpack.c.b16 %v1646, %v1638
    %v2415 = vpack.c.b16 %v1647, %v1639
    %v2416 = vpack.c.b16 %v1648, %v1640
    %v2417 = vpack.c.b16 %v1657, %v1649
    %v2418 = vpack.c.b16 %v1658, %v1650
    %v2419 = vpack.c.b16 %v1659, %v1651
    %v2420 = vpack.c.b16 %v1660, %v1652
    %v2421 = vpack.c.b16 %v1661, %v1653
    %v2422 = vpack.c.b16 %v1662, %v1654
    %v2423 = vpack.c.b16 %v1663, %v1655
    %v2424 = vpack.c.b16 %v1664, %v1656
    %v2425 = vpack.c.b16 %v1673, %v1665
    %v2426 = vpack.c.b16 %v1674, %v1666
    %v2427 = vpack.c.b16 %v1675, %v1667
    %v2428 = vpack.c.b16 %v1676, %v1668
    %v2429 = vpack.c.b16 %v1677, %v1669
    %v2430 = vpack.c.b16 %v1678, %v1670
    %v2431 = vpack.c.b16 %v1679, %v1671
    %v2432 = vpack.c.b16 %v1680, %v1672
    %v2433 = vpack.c.b16 %v1689, %v1681
    %v2434 = vpack.c.b16 %v1690, %v1682
    %v2435 = vpack.c.b16 %v1691, %v1683
    %v2436 = vpack.c.b16 %v1692, %v1684
    %v2437 = vpack.c.b16 %v1693, %v1685
    %v2438 = vpack.c.b16 %v1694, %v1686
    %v2439 = vpack.c.b16 %v1695, %v1687
    %v2440 = vpack.c.b16 %v1696, %v1688
    %v2441 = vpack.c.b16 %v1705, %v1697
    %v2442 = vpack.c.b16 %v1706, %v1698
    %v2443 = vpack.c.b16 %v1707, %v1699
    %v2444 = vpack.c.b16 %v1708, %v1700
    %v2445 = vpack.c.b16 %v1709, %v1701
    %v2446 = vpack.c.b16 %v1710, %v1702
    %v2447 = vpack.c.b16 %v1711, %v1703
    %v2448 = vpack.c.b16 %v1712, %v1704
    %v2449 = vpack.c.b16 %v1721, %v1713
    %v2450 = vpack.c.b16 %v1722, %v1714
    %v2451 = vpack.c.b16 %v1723, %v1715
    %v2452 = vpack.c.b16 %v1724, %v1716
    %v2453 = vpack.c.b16 %v1725, %v1717
    %v2454 = vpack.c.b16 %v1726, %v1718
    %v2455 = vpack.c.b16 %v1727, %v1719
    %v2456 = vpack.c.b16 %v1728, %v1720
    %v2457 = vpack.c.b16 %v1737, %v1729
    %v2458 = vpack.c.b16 %v1738, %v1730
    %v2459 = vpack.c.b16 %v1739, %v1731
    %v2460 = vpack.c.b16 %v1740, %v1732
    %v2461 = vpack.c.b16 %v1741, %v1733
    %v2462 = vpack.c.b16 %v1742, %v1734
    %v2463 = vpack.c.b16 %v1743, %v1735
    %v2464 = vpack.c.b16 %v1744, %v1736
    %v2465 = vpack.c.b16 %v1753, %v1745
    %v2466 = vpack.c.b16 %v1754, %v1746
    %v2467 = vpack.c.b16 %v1755, %v1747
    %v2468 = vpack.c.b16 %v1756, %v1748
    %v2469 = vpack.c.b16 %v1757, %v1749
    %v2470 = vpack.c.b16 %v1758, %v1750
    %v2471 = vpack.c.b16 %v1759, %v1751
    %v2472 = vpack.c.b16 %v1760, %v1752
    %v2473 = vpack.c.b16 %v1769, %v1761
    %v2474 = vpack.c.b16 %v1770, %v1762
    %v2475 = vpack.c.b16 %v1771, %v1763
    %v2476 = vpack.c.b16 %v1772, %v1764
    %v2477 = vpack.c.b16 %v1773, %v1765
    %v2478 = vpack.c.b16 %v1774, %v1766
    %v2479 = vpack.c.b16 %v1775, %v1767
    %v2480 = vpack.c.b16 %v1776, %v1768
    %v2481 = vpack.c.b16 %v1785, %v1777
    %v2482 = vpack.c.b16 %v1786, %v1778
    %v2483 = vpack.c.b16 %v1787, %v1779
    %v2484 = vpack.c.b16 %v1788, %v1780
    %v2485 = vpack.c.b16 %v1789, %v1781
    %v2486 = vpack.c.b16 %v1790, %v1782
    %v2487 = vpack.c.b16 %v1791, %v1783
    %v2488 = vpack.c.b16 %v1792, %v1784
    %v2489 = vpack.c.b16 %v1801, %v1793
    %v2490 = vpack.c.b16 %v1802, %v1794
    %v2491 = vpack.c.b16 %v1803, %v1795
    %v2492 = vpack.c.b16 %v1804, %v1796
    %v2493 = vpack.c.b16 %v1805, %v1797
    %v2494 = vpack.c.b16 %v1806, %v1798
    %v2495 = vpack.c.b16 %v1807, %v1799
    %v2496 = vpack.c.b16 %v1808, %v1800
    %v2497 = vpack.c.b16 %v1817, %v1809
    %v2498 = vpack.c.b16 %v1818, %v1810
    %v2499 = vpack.c.b16 %v1819, %v1811
    %v2500 = vpack.c.b16 %v1820, %v1812
    %v2501 = vpack.c.b16 %v1821, %v1813
    %v2502 = vpack.c.b16 %v1822, %v1814
    %v2503 = vpack.c.b16 %v1823, %v1815
    %v2504 = vpack.c.b16 %v1824, %v1816
    %v2505 = vpack.c.b16 %v1833, %v1825
    %v2506 = vpack.c.b16 %v1834, %v1826
    %v2507 = vpack.c.b16 %v1835, %v1827
    %v2508 = vpack.c.b16 %v1836, %v1828
    %v2509 = vpack.c.b16 %v1837, %v1829
    %v2510 = vpack.c.b16 %v1838, %v1830
    %v2511 = vpack.c.b16 %v1839, %v1831
    %v2512 = vpack.c.b16 %v1840, %v1832
    %v2513 = vpack.c.b16 %v1849, %v1841
    %v2514 = vpack.c.b16 %v1850, %v1842
    %v2515 = vpack.c.b16 %v1851, %v1843
    %v2516 = vpack.c.b16 %v1852, %v1844
    %v2517 = vpack.c.b16 %v1853, %v1845
    %v2518 = vpack.c.b16 %v1854, %v1846
    %v2519 = vpack.c.b16 %v1855, %v1847
    %v2520 = vpack.c.b16 %v1856, %v1848
    %v2521 = vpack.c.b16 %v1865, %v1857
    %v2522 = vpack.c.b16 %v1866, %v1858
    %v2523 = vpack.c.b16 %v1867, %v1859
    %v2524 = vpack.c.b16 %v1868, %v1860
    %v2525 = vpack.c.b16 %v1869, %v1861
    %v2526 = vpack.c.b16 %v1870, %v1862
    %v2527 = vpack.c.b16 %v1871, %v1863
    %v2528 = vpack.c.b16 %v1872, %v1864
    %v2529 = vpack.c.b16 %v1881, %v1873
    %v2530 = vpack.c.b16 %v1882, %v1874
    %v2531 = vpack.c.b16 %v1883, %v1875
    %v2532 = vpack.c.b16 %v1884, %v1876
    %v2533 = vpack.c.b16 %v1885, %v1877
    %v2534 = vpack.c.b16 %v1886, %v1878
    %v2535 = vpack.c.b16 %v1887, %v1879
    %v2536 = vpack.c.b16 %v1888, %v1880
    %v2537 = vpack.c.b16 %v1897, %v1889
    %v2538 = vpack.c.b16 %v1898, %v1890
    %v2539 = vpack.c.b16 %v1899, %v1891
    %v2540 = vpack.c.b16 %v1900, %v1892
    %v2541 = vpack.c.b16 %v1901, %v1893
    %v2542 = vpack.c.b16 %v1902, %v1894
    %v2543 = vpack.c.b16 %v1903, %v1895
    %v2544 = vpack.c.b16 %v1904, %v1896
    %v2545 = vpack.c.b16 %v1913, %v1905
    %v2546 = vpack.c.b16 %v1914, %v1906
    %v2547 = vpack.c.b16 %v1915, %v1907
    %v2548 = vpack.c.b16 %v1916, %v1908
    %v2549 = vpack.c.b16 %v1917, %v1909
    %v2550 = vpack.c.b16 %v1918, %v1910
    %v2551 = vpack.c.b16 %v1919, %v1911
    %v2552 = vpack.c.b16 %v1920, %v1912
    %v2553 = vpack.c.b16 %v1929, %v1921
    %v2554 = vpack.c.b16 %v1930, %v1922
    %v2555 = vpack.c.b16 %v1931, %v1923
    %v2556 = vpack.c.b16 %v1932, %v1924
    %v2557 = vpack.c.b16 %v1933, %v1925
    %v2558 = vpack.c.b16 %v1934, %v1926
    %v2559 = vpack.c.b16 %v1935, %v1927
    %v2560 = vpack.c.b16 %v1936, %v1928
    %v2561 = vpack.c.b16 %v1945, %v1937
    %v2562 = vpack.c.b16 %v1946, %v1938
    %v2563 = vpack.c.b16 %v1947, %v1939
    %v2564 = vpack.c.b16 %v1948, %v1940
    %v2565 = vpack.c.b16 %v1949, %v1941
    %v2566 = vpack.c.b16 %v1950, %v1942
    %v2567 = vpack.c.b16 %v1951, %v1943
    %v2568 = vpack.c.b16 %v1952, %v1944
    %v2569 = vpack.c.b16 %v1961, %v1953
    %v2570 = vpack.c.b16 %v1962, %v1954
    %v2571 = vpack.c.b16 %v1963, %v1955
    %v2572 = vpack.c.b16 %v1964, %v1956
    %v2573 = vpack.c.b16 %v1965, %v1957
    %v2574 = vpack.c.b16 %v1966, %v1958
    %v2575 = vpack.c.b16 %v1967, %v1959
    %v2576 = vpack.c.b16 %v1968, %v1960
    %v2577 = vpack.c.b16 %v1977, %v1969
    %v2578 = vpack.c.b16 %v1978, %v1970
    %v2579 = vpack.c.b16 %v1979, %v1971
    %v2580 = vpack.c.b16 %v1980, %v1972
    %v2581 = vpack.c.b16 %v1981, %v1973
    %v2582 = vpack.c.b16 %v1982, %v1974
    %v2583 = vpack.c.b16 %v1983, %v1975
    %v2584 = vpack.c.b16 %v1984, %v1976
    %v2585 = vpack.c.b16 %v1993, %v1985
    %v2586 = vpack.c.b16 %v1994, %v1986
    %v2587 = vpack.c.b16 %v1995, %v1987
    %v2588 = vpack.c.b16 %v1996, %v1988
    %v2589 = vpack.c.b16 %v1997, %v1989
    %v2590 = vpack.c.b16 %v1998, %v1990
    %v2591 = vpack.c.b16 %v1999, %v1991
    %v2592 = vpack.c.b16 %v2000, %v1992
    %v2593 = vpack.c.b16 %v2009, %v2001
    %v2594 = vpack.c.b16 %v2010, %v2002
    %v2595 = vpack.c.b16 %v2011, %v2003
    %v2596 = vpack.c.b16 %v2012, %v2004
    %v2597 = vpack.c.b16 %v2013, %v2005
    %v2598 = vpack.c.b16 %v2014, %v2006
    %v2599 = vpack.c.b16 %v2015, %v2007
    %v2600 = vpack.c.b16 %v2016, %v2008
    %v2601 = vpack.c.b16 %v2025, %v2017
    %v2602 = vpack.c.b16 %v2026, %v2018
    %v2603 = vpack.c.b16 %v2027, %v2019
    %v2604 = vpack.c.b16 %v2028, %v2020
    %v2605 = vpack.c.b16 %v2029, %v2021
    %v2606 = vpack.c.b16 %v2030, %v2022
    %v2607 = vpack.c.b16 %v2031, %v2023
    %v2608 = vpack.c.b16 %v2032, %v2024
    %v2609 = vpack.c.b16 %v2041, %v2033
    %v2610 = vpack.c.b16 %v2042, %v2034
    %v2611 = vpack.c.b16 %v2043, %v2035
    %v2612 = vpack.c.b16 %v2044, %v2036
    %v2613 = vpack.c.b16 %v2045, %v2037
    %v2614 = vpack.c.b16 %v2046, %v2038
    %v2615 = vpack.c.b16 %v2047, %v2039
    %v2616 = vpack.c.b16 %v2048, %v2040
    %v2617 = vpack.c.b16 %v2057, %v2049
    %v2618 = vpack.c.b16 %v2058, %v2050
    %v2619 = vpack.c.b16 %v2059, %v2051
    %v2620 = vpack.c.b16 %v2060, %v2052
    %v2621 = vpack.c.b16 %v2061, %v2053
    %v2622 = vpack.c.b16 %v2062, %v2054
    %v2623 = vpack.c.b16 %v2063, %v2055
    %v2624 = vpack.c.b16 %v2064, %v2056
    %v2625 = vpack.c.b16 %v2073, %v2065
    %v2626 = vpack.c.b16 %v2074, %v2066
    %v2627 = vpack.c.b16 %v2075, %v2067
    %v2628 = vpack.c.b16 %v2076, %v2068
    %v2629 = vpack.c.b16 %v2077, %v2069
    %v2630 = vpack.c.b16 %v2078, %v2070
    %v2631 = vpack.c.b16 %v2079, %v2071
    %v2632 = vpack.c.b16 %v2080, %v2072
    %v2633 = vpack.c.b16 %v2089, %v2081
    %v2634 = vpack.c.b16 %v2090, %v2082
    %v2635 = vpack.c.b16 %v2091, %v2083
    %v2636 = vpack.c.b16 %v2092, %v2084
    %v2637 = vpack.c.b16 %v2093, %v2085
    %v2638 = vpack.c.b16 %v2094, %v2086
    %v2639 = vpack.c.b16 %v2095, %v2087
    %v2640 = vpack.c.b16 %v2096, %v2088
    %v2641 = vpack.c.b16 %v2105, %v2097
    %v2642 = vpack.c.b16 %v2106, %v2098
    %v2643 = vpack.c.b16 %v2107, %v2099
    %v2644 = vpack.c.b16 %v2108, %v2100
    %v2645 = vpack.c.b16 %v2109, %v2101
    %v2646 = vpack.c.b16 %v2110, %v2102
    %v2647 = vpack.c.b16 %v2111, %v2103
    %v2648 = vpack.c.b16 %v2112, %v2104
    %v2649 = vpack.c.b16 %v2121, %v2113
    %v2650 = vpack.c.b16 %v2122, %v2114
    %v2651 = vpack.c.b16 %v2123, %v2115
    %v2652 = vpack.c.b16 %v2124, %v2116
    %v2653 = vpack.c.b16 %v2125, %v2117
    %v2654 = vpack.c.b16 %v2126, %v2118
    %v2655 = vpack.c.b16 %v2127, %v2119
    %v2656 = vpack.c.b16 %v2128, %v2120
    %v2657 = vpack.c.b16 %v2137, %v2129
    %v2658 = vpack.c.b16 %v2138, %v2130
    %v2659 = vpack.c.b16 %v2139, %v2131
    %v2660 = vpack.c.b16 %v2140, %v2132
    %v2661 = vpack.c.b16 %v2141, %v2133
    %v2662 = vpack.c.b16 %v2142, %v2134
    %v2663 = vpack.c.b16 %v2143, %v2135
    %v2664 = vpack.c.b16 %v2144, %v2136
    %v2665 = vpack.c.b16 %v2153, %v2145
    %v2666 = vpack.c.b16 %v2154, %v2146
    %v2667 = vpack.c.b16 %v2155, %v2147
    %v2668 = vpack.c.b16 %v2156, %v2148
    %v2669 = vpack.c.b16 %v2157, %v2149
    %v2670 = vpack.c.b16 %v2158, %v2150
    %v2671 = vpack.c.b16 %v2159, %v2151
    %v2672 = vpack.c.b16 %v2160, %v2152
    %v2673 = vpack.c.b16 %v2169, %v2161
    %v2674 = vpack.c.b16 %v2170, %v2162
    %v2675 = vpack.c.b16 %v2171, %v2163
    %v2676 = vpack.c.b16 %v2172, %v2164
    %v2677 = vpack.c.b16 %v2173, %v2165
    %v2678 = vpack.c.b16 %v2174, %v2166
    %v2679 = vpack.c.b16 %v2175, %v2167
    %v2680 = vpack.c.b16 %v2176, %v2168
    %v2681 = vpack.c.b16 %v2185, %v2177
    %v2682 = vpack.c.b16 %v2186, %v2178
    %v2683 = vpack.c.b16 %v2187, %v2179
    %v2684 = vpack.c.b16 %v2188, %v2180
    %v2685 = vpack.c.b16 %v2189, %v2181
    %v2686 = vpack.c.b16 %v2190, %v2182
    %v2687 = vpack.c.b16 %v2191, %v2183
    %v2688 = vpack.c.b16 %v2192, %v2184
    %v2689 = vpack.c.b16 %v2201, %v2193
    %v2690 = vpack.c.b16 %v2202, %v2194
    %v2691 = vpack.c.b16 %v2203, %v2195
    %v2692 = vpack.c.b16 %v2204, %v2196
    %v2693 = vpack.c.b16 %v2205, %v2197
    %v2694 = vpack.c.b16 %v2206, %v2198
    %v2695 = vpack.c.b16 %v2207, %v2199
    %v2696 = vpack.c.b16 %v2208, %v2200
    %v2697 = vpack.c.b16 %v2217, %v2209
    %v2698 = vpack.c.b16 %v2218, %v2210
    %v2699 = vpack.c.b16 %v2219, %v2211
    %v2700 = vpack.c.b16 %v2220, %v2212
    %v2701 = vpack.c.b16 %v2221, %v2213
    %v2702 = vpack.c.b16 %v2222, %v2214
    %v2703 = vpack.c.b16 %v2223, %v2215
    %v2704 = vpack.c.b16 %v2224, %v2216
    %v2705 = vpack.c.b16 %v2233, %v2225
    %v2706 = vpack.c.b16 %v2234, %v2226
    %v2707 = vpack.c.b16 %v2235, %v2227
    %v2708 = vpack.c.b16 %v2236, %v2228
    %v2709 = vpack.c.b16 %v2237, %v2229
    %v2710 = vpack.c.b16 %v2238, %v2230
    %v2711 = vpack.c.b16 %v2239, %v2231
    %v2712 = vpack.c.b16 %v2240, %v2232
    %v2713 = vpack.c.b16 %v2249, %v2241
    %v2714 = vpack.c.b16 %v2250, %v2242
    %v2715 = vpack.c.b16 %v2251, %v2243
    %v2716 = vpack.c.b16 %v2252, %v2244
    %v2717 = vpack.c.b16 %v2253, %v2245
    %v2718 = vpack.c.b16 %v2254, %v2246
    %v2719 = vpack.c.b16 %v2255, %v2247
    %v2720 = vpack.c.b16 %v2256, %v2248
    %v2721 = vpack.c.b16 %v2265, %v2257
    %v2722 = vpack.c.b16 %v2266, %v2258
    %v2723 = vpack.c.b16 %v2267, %v2259
    %v2724 = vpack.c.b16 %v2268, %v2260
    %v2725 = vpack.c.b16 %v2269, %v2261
    %v2726 = vpack.c.b16 %v2270, %v2262
    %v2727 = vpack.c.b16 %v2271, %v2263
    %v2728 = vpack.c.b16 %v2272, %v2264
    %v2729 = vpack.c.b16 %v2281, %v2273
    %v2730 = vpack.c.b16 %v2282, %v2274
    %v2731 = vpack.c.b16 %v2283, %v2275
    %v2732 = vpack.c.b16 %v2284, %v2276
    %v2733 = vpack.c.b16 %v2285, %v2277
    %v2734 = vpack.c.b16 %v2286, %v2278
    %v2735 = vpack.c.b16 %v2287, %v2279
    %v2736 = vpack.c.b16 %v2288, %v2280
    %3185 = vmatprep.subr.bf16.mxu0 %v2346
    %3186 = vmatpush1.bf16.msra.mxu0 %v2345
    %3187 = vmatprep.subr.bf16.mxu0 %v2338
    %3188 = vmatpush1.bf16.msra.mxu0 %v2337
    %3189 = vmatprep.subr.bf16.mxu0 %v2330
    %3190 = vmatpush1.bf16.msra.mxu0 %v2329
    %3191 = vmatprep.subr.bf16.mxu0 %v2322
    %3192 = vmatpush1.bf16.msra.mxu0 %v2321
    %3193 = vmatprep.subr.bf16.mxu0 %v2314
    %3194 = vmatpush1.bf16.msra.mxu0 %v2313
    %3195 = vmatprep.subr.bf16.mxu0 %v2306
    %3196 = vmatpush1.bf16.msra.mxu0 %v2305
    %3197 = vmatprep.subr.bf16.mxu0 %v2298
    %3198 = vmatpush1.bf16.msra.mxu0 %v2297
    %3199 = vmatprep.subr.bf16.mxu0 %v2290
    %3200 = vmatpush1.bf16.msra.mxu0 %v2289
    %3201 = vmatprep.subr.bf16.mxu0 %v2410
    %3202 = vmatpush2.bf16.msra.mxu0 %v2409
    %3203 = vmatprep.subr.bf16.mxu0 %v2402
    %3204 = vmatpush2.bf16.msra.mxu0 %v2401
    %3205 = vmatprep.subr.bf16.mxu0 %v2394
    %3206 = vmatpush2.bf16.msra.mxu0 %v2393
    %3207 = vmatprep.subr.bf16.mxu0 %v2386
    %3208 = vmatpush2.bf16.msra.mxu0 %v2385
    %3209 = vmatprep.subr.bf16.mxu0 %v2378
    %3210 = vmatpush2.bf16.msra.mxu0 %v2377
    %3211 = vmatprep.subr.bf16.mxu0 %v2370
    %3212 = vmatpush2.bf16.msra.mxu0 %v2369
    %3213 = vmatprep.subr.bf16.mxu0 %v2362
    %3214 = vmatpush2.bf16.msra.mxu0 %v2361
    %3215 = vmatprep.subr.bf16.mxu0 %v2354
    %3216 = vmatpush2.bf16.msra.mxu0 %v2353
    %3217 = vmatprep.mubr.bf16.mxu0 %v834
    %3218 = vmatmul.mubr.bf16.gmra.mxu0 %v833
    %v3219 = vpop.f32.mrf.mxu0
    %v3220 = vadd.f32 %v620, %v3219
    %v3221 = vpop.f32.mrf.mxu0
    %v3222 = vadd.f32 %v624, %v3221
    %v3223 = vpop.f32.mrf.mxu0
    %v3224 = vadd.f32 %v620, %v3223
    %v3225 = vpop.f32.mrf.mxu0
    %v3226 = vadd.f32 %v624, %v3225
    %3227 = vmatprep.mubr.bf16.mxu0 %v841
    %3228 = vmatmul.mubr.bf16.gmra.mxu0 %v840
    %v3229 = vpop.f32.mrf.mxu0
    %v3230 = vadd.f32 %v620, %v3229
    %v3231 = vpop.f32.mrf.mxu0
    %v3232 = vadd.f32 %v624, %v3231
    %v3233 = vpop.f32.mrf.mxu0
    %v3234 = vadd.f32 %v620, %v3233
    %v3235 = vpop.f32.mrf.mxu0
    %v3236 = vadd.f32 %v624, %v3235
    %3237 = vmatprep.mubr.bf16.mxu0 %v848
    %3238 = vmatmul.mubr.bf16.gmra.mxu0 %v847
    %v3239 = vpop.f32.mrf.mxu0
    %v3240 = vadd.f32 %v620, %v3239
    %v3241 = vpop.f32.mrf.mxu0
    %v3242 = vadd.f32 %v624, %v3241
    %v3243 = vpop.f32.mrf.mxu0
    %v3244 = vadd.f32 %v620, %v3243
    %v3245 = vpop.f32.mrf.mxu0
    %v3246 = vadd.f32 %v624, %v3245
    %3247 = vmatprep.mubr.bf16.mxu0 %v855
    %3248 = vmatmul.mubr.bf16.gmra.mxu0 %v854
    %v3249 = vpop.f32.mrf.mxu0
    %v3250 = vadd.f32 %v620, %v3249
    %v3251 = vpop.f32.mrf.mxu0
    %v3252 = vadd.f32 %v624, %v3251
    %v3253 = vpop.f32.mrf.mxu0
    %v3254 = vadd.f32 %v620, %v3253
    %v3255 = vpop.f32.mrf.mxu0
    %v3256 = vadd.f32 %v624, %v3255
    %3257 = vmatprep.mubr.bf16.mxu0 %v862
    %3258 = vmatmul.mubr.bf16.gmra.mxu0 %v861
    %v3259 = vpop.f32.mrf.mxu0
    %v3260 = vadd.f32 %v620, %v3259
    %v3261 = vpop.f32.mrf.mxu0
    %v3262 = vadd.f32 %v624, %v3261
    %v3263 = vpop.f32.mrf.mxu0
    %v3264 = vadd.f32 %v620, %v3263
    %v3265 = vpop.f32.mrf.mxu0
    %v3266 = vadd.f32 %v624, %v3265
    %3267 = vmatprep.mubr.bf16.mxu0 %v869
    %3268 = vmatmul.mubr.bf16.gmra.mxu0 %v868
    %v3269 = vpop.f32.mrf.mxu0
    %v3270 = vadd.f32 %v620, %v3269
    %v3271 = vpop.f32.mrf.mxu0
    %v3272 = vadd.f32 %v624, %v3271
    %v3273 = vpop.f32.mrf.mxu0
    %v3274 = vadd.f32 %v620, %v3273
    %v3275 = vpop.f32.mrf.mxu0
    %v3276 = vadd.f32 %v624, %v3275
    %3277 = vmatprep.mubr.bf16.mxu0 %v876
    %3278 = vmatmul.mubr.bf16.gmra.mxu0 %v875
    %v3279 = vpop.f32.mrf.mxu0
    %v3280 = vadd.f32 %v620, %v3279
    %v3281 = vpop.f32.mrf.mxu0
    %v3282 = vadd.f32 %v624, %v3281
    %v3283 = vpop.f32.mrf.mxu0
    %v3284 = vadd.f32 %v620, %v3283
    %v3285 = vpop.f32.mrf.mxu0
    %v3286 = vadd.f32 %v624, %v3285
    %3287 = vmatprep.mubr.bf16.mxu0 %v883
    %3288 = vmatmul.mubr.bf16.gmra.mxu0 %v882
    %v3289 = vpop.f32.mrf.mxu0
    %v3290 = vadd.f32 %v620, %v3289
    %v3291 = vpop.f32.mrf.mxu0
    %v3292 = vadd.f32 %v624, %v3291
    %v3293 = vpop.f32.mrf.mxu0
    %v3294 = vadd.f32 %v620, %v3293
    %v3295 = vpop.f32.mrf.mxu0
    %v3296 = vadd.f32 %v624, %v3295
    %3297 = vdwg.mxu0
    %3298 = vmatprep.subr.bf16.mxu0 %v2474
    %3299 = vmatpush1.bf16.msra.mxu0 %v2473
    %3300 = vmatprep.subr.bf16.mxu0 %v2466
    %3301 = vmatpush1.bf16.msra.mxu0 %v2465
    %3302 = vmatprep.subr.bf16.mxu0 %v2458
    %3303 = vmatpush1.bf16.msra.mxu0 %v2457
    %3304 = vmatprep.subr.bf16.mxu0 %v2450
    %3305 = vmatpush1.bf16.msra.mxu0 %v2449
    %3306 = vmatprep.subr.bf16.mxu0 %v2442
    %3307 = vmatpush1.bf16.msra.mxu0 %v2441
    %3308 = vmatprep.subr.bf16.mxu0 %v2434
    %3309 = vmatpush1.bf16.msra.mxu0 %v2433
    %3310 = vmatprep.subr.bf16.mxu0 %v2426
    %3311 = vmatpush1.bf16.msra.mxu0 %v2425
    %3312 = vmatprep.subr.bf16.mxu0 %v2418
    %3313 = vmatpush1.bf16.msra.mxu0 %v2417
    %3314 = vmatprep.subr.bf16.mxu0 %v2538
    %3315 = vmatpush2.bf16.msra.mxu0 %v2537
    %3316 = vmatprep.subr.bf16.mxu0 %v2530
    %3317 = vmatpush2.bf16.msra.mxu0 %v2529
    %3318 = vmatprep.subr.bf16.mxu0 %v2522
    %3319 = vmatpush2.bf16.msra.mxu0 %v2521
    %3320 = vmatprep.subr.bf16.mxu0 %v2514
    %3321 = vmatpush2.bf16.msra.mxu0 %v2513
    %3322 = vmatprep.subr.bf16.mxu0 %v2506
    %3323 = vmatpush2.bf16.msra.mxu0 %v2505
    %3324 = vmatprep.subr.bf16.mxu0 %v2498
    %3325 = vmatpush2.bf16.msra.mxu0 %v2497
    %3326 = vmatprep.subr.bf16.mxu0 %v2490
    %3327 = vmatpush2.bf16.msra.mxu0 %v2489
    %3328 = vmatprep.subr.bf16.mxu0 %v2482
    %3329 = vmatpush2.bf16.msra.mxu0 %v2481
    %3330 = vmatprep.mubr.bf16.mxu0 %v836
    %3331 = vmatmul.mubr.bf16.gmra.mxu0 %v835
    %v3332 = vpop.f32.mrf.mxu0
    %v3333 = vadd.f32 %v3220, %v3332
    %v3334 = vpop.f32.mrf.mxu0
    %v3335 = vadd.f32 %v3222, %v3334
    %v3336 = vpop.f32.mrf.mxu0
    %v3337 = vadd.f32 %v3224, %v3336
    %v3338 = vpop.f32.mrf.mxu0
    %v3339 = vadd.f32 %v3226, %v3338
    %3340 = vmatprep.mubr.bf16.mxu0 %v843
    %3341 = vmatmul.mubr.bf16.gmra.mxu0 %v842
    %v3342 = vpop.f32.mrf.mxu0
    %v3343 = vadd.f32 %v3230, %v3342
    %v3344 = vpop.f32.mrf.mxu0
    %v3345 = vadd.f32 %v3232, %v3344
    %v3346 = vpop.f32.mrf.mxu0
    %v3347 = vadd.f32 %v3234, %v3346
    %v3348 = vpop.f32.mrf.mxu0
    %v3349 = vadd.f32 %v3236, %v3348
    %3350 = vmatprep.mubr.bf16.mxu0 %v850
    %3351 = vmatmul.mubr.bf16.gmra.mxu0 %v849
    %v3352 = vpop.f32.mrf.mxu0
    %v3353 = vadd.f32 %v3240, %v3352
    %v3354 = vpop.f32.mrf.mxu0
    %v3355 = vadd.f32 %v3242, %v3354
    %v3356 = vpop.f32.mrf.mxu0
    %v3357 = vadd.f32 %v3244, %v3356
    %v3358 = vpop.f32.mrf.mxu0
    %v3359 = vadd.f32 %v3246, %v3358
    %3360 = vmatprep.mubr.bf16.mxu0 %v857
    %3361 = vmatmul.mubr.bf16.gmra.mxu0 %v856
    %v3362 = vpop.f32.mrf.mxu0
    %v3363 = vadd.f32 %v3250, %v3362
    %v3364 = vpop.f32.mrf.mxu0
    %v3365 = vadd.f32 %v3252, %v3364
    %v3366 = vpop.f32.mrf.mxu0
    %v3367 = vadd.f32 %v3254, %v3366
    %v3368 = vpop.f32.mrf.mxu0
    %v3369 = vadd.f32 %v3256, %v3368
    %3370 = vmatprep.mubr.bf16.mxu0 %v864
    %3371 = vmatmul.mubr.bf16.gmra.mxu0 %v863
    %v3372 = vpop.f32.mrf.mxu0
    %v3373 = vadd.f32 %v3260, %v3372
    %v3374 = vpop.f32.mrf.mxu0
    %v3375 = vadd.f32 %v3262, %v3374
    %v3376 = vpop.f32.mrf.mxu0
    %v3377 = vadd.f32 %v3264, %v3376
    %v3378 = vpop.f32.mrf.mxu0
    %v3379 = vadd.f32 %v3266, %v3378
    %3380 = vmatprep.mubr.bf16.mxu0 %v871
    %3381 = vmatmul.mubr.bf16.gmra.mxu0 %v870
    %v3382 = vpop.f32.mrf.mxu0
    %v3383 = vadd.f32 %v3270, %v3382
    %v3384 = vpop.f32.mrf.mxu0
    %v3385 = vadd.f32 %v3272, %v3384
    %v3386 = vpop.f32.mrf.mxu0
    %v3387 = vadd.f32 %v3274, %v3386
    %v3388 = vpop.f32.mrf.mxu0
    %v3389 = vadd.f32 %v3276, %v3388
    %3390 = vmatprep.mubr.bf16.mxu0 %v878
    %3391 = vmatmul.mubr.bf16.gmra.mxu0 %v877
    %v3392 = vpop.f32.mrf.mxu0
    %v3393 = vadd.f32 %v3280, %v3392
    %v3394 = vpop.f32.mrf.mxu0
    %v3395 = vadd.f32 %v3282, %v3394
    %v3396 = vpop.f32.mrf.mxu0
    %v3397 = vadd.f32 %v3284, %v3396
    %v3398 = vpop.f32.mrf.mxu0
    %v3399 = vadd.f32 %v3286, %v3398
    %3400 = vmatprep.mubr.bf16.mxu0 %v885
    %3401 = vmatmul.mubr.bf16.gmra.mxu0 %v884
    %v3402 = vpop.f32.mrf.mxu0
    %v3403 = vadd.f32 %v3290, %v3402
    %v3404 = vpop.f32.mrf.mxu0
    %v3405 = vadd.f32 %v3292, %v3404
    %v3406 = vpop.f32.mrf.mxu0
    %v3407 = vadd.f32 %v3294, %v3406
    %v3408 = vpop.f32.mrf.mxu0
    %v3409 = vadd.f32 %v3296, %v3408
    %3410 = vdwg.mxu0
    %3411 = vmatprep.subr.bf16.mxu0 %v2602
    %3412 = vmatpush1.bf16.msra.mxu0 %v2601
    %3413 = vmatprep.subr.bf16.mxu0 %v2594
    %3414 = vmatpush1.bf16.msra.mxu0 %v2593
    %3415 = vmatprep.subr.bf16.mxu0 %v2586
    %3416 = vmatpush1.bf16.msra.mxu0 %v2585
    %3417 = vmatprep.subr.bf16.mxu0 %v2578
    %3418 = vmatpush1.bf16.msra.mxu0 %v2577
    %3419 = vmatprep.subr.bf16.mxu0 %v2570
    %3420 = vmatpush1.bf16.msra.mxu0 %v2569
    %3421 = vmatprep.subr.bf16.mxu0 %v2562
    %3422 = vmatpush1.bf16.msra.mxu0 %v2561
    %3423 = vmatprep.subr.bf16.mxu0 %v2554
    %3424 = vmatpush1.bf16.msra.mxu0 %v2553
    %3425 = vmatprep.subr.bf16.mxu0 %v2546
    %3426 = vmatpush1.bf16.msra.mxu0 %v2545
    %3427 = vmatprep.subr.bf16.mxu0 %v2666
    %3428 = vmatpush2.bf16.msra.mxu0 %v2665
    %3429 = vmatprep.subr.bf16.mxu0 %v2658
    %3430 = vmatpush2.bf16.msra.mxu0 %v2657
    %3431 = vmatprep.subr.bf16.mxu0 %v2650
    %3432 = vmatpush2.bf16.msra.mxu0 %v2649
    %3433 = vmatprep.subr.bf16.mxu0 %v2642
    %3434 = vmatpush2.bf16.msra.mxu0 %v2641
    %3435 = vmatprep.subr.bf16.mxu0 %v2634
    %3436 = vmatpush2.bf16.msra.mxu0 %v2633
    %3437 = vmatprep.subr.bf16.mxu0 %v2626
    %3438 = vmatpush2.bf16.msra.mxu0 %v2625
    %3439 = vmatprep.subr.bf16.mxu0 %v2618
    %3440 = vmatpush2.bf16.msra.mxu0 %v2617
    %3441 = vmatprep.subr.bf16.mxu0 %v2610
    %3442 = vmatpush2.bf16.msra.mxu0 %v2609
    %3443 = vmatprep.mubr.bf16.mxu0 %v838
    %3444 = vmatmul.mubr.bf16.gmra.mxu0 %v837
    %v3445 = vpop.f32.mrf.mxu0
    %v3446 = vadd.f32 %v3333, %v3445
    %v3447 = vpop.f32.mrf.mxu0
    %v3448 = vadd.f32 %v3335, %v3447
    %v3449 = vpop.f32.mrf.mxu0
    %v3450 = vadd.f32 %v3337, %v3449
    %v3451 = vpop.f32.mrf.mxu0
    %v3452 = vadd.f32 %v3339, %v3451
    %3453 = vmatprep.mubr.bf16.mxu0 %v845
    %3454 = vmatmul.mubr.bf16.gmra.mxu0 %v844
    %v3455 = vpop.f32.mrf.mxu0
    %v3456 = vadd.f32 %v3343, %v3455
    %v3457 = vpop.f32.mrf.mxu0
    %v3458 = vadd.f32 %v3345, %v3457
    %v3459 = vpop.f32.mrf.mxu0
    %v3460 = vadd.f32 %v3347, %v3459
    %v3461 = vpop.f32.mrf.mxu0
    %v3462 = vadd.f32 %v3349, %v3461
    %3463 = vmatprep.mubr.bf16.mxu0 %v852
    %3464 = vmatmul.mubr.bf16.gmra.mxu0 %v851
    %v3465 = vpop.f32.mrf.mxu0
    %v3466 = vadd.f32 %v3353, %v3465
    %v3467 = vpop.f32.mrf.mxu0
    %v3468 = vadd.f32 %v3355, %v3467
    %v3469 = vpop.f32.mrf.mxu0
    %v3470 = vadd.f32 %v3357, %v3469
    %v3471 = vpop.f32.mrf.mxu0
    %v3472 = vadd.f32 %v3359, %v3471
    %3473 = vmatprep.mubr.bf16.mxu0 %v859
    %3474 = vmatmul.mubr.bf16.gmra.mxu0 %v858
    %v3475 = vpop.f32.mrf.mxu0
    %v3476 = vadd.f32 %v3363, %v3475
    %v3477 = vpop.f32.mrf.mxu0
    %v3478 = vadd.f32 %v3365, %v3477
    %v3479 = vpop.f32.mrf.mxu0
    %v3480 = vadd.f32 %v3367, %v3479
    %v3481 = vpop.f32.mrf.mxu0
    %v3482 = vadd.f32 %v3369, %v3481
    %3483 = vmatprep.mubr.bf16.mxu0 %v866
    %3484 = vmatmul.mubr.bf16.gmra.mxu0 %v865
    %v3485 = vpop.f32.mrf.mxu0
    %v3486 = vadd.f32 %v3373, %v3485
    %v3487 = vpop.f32.mrf.mxu0
    %v3488 = vadd.f32 %v3375, %v3487
    %v3489 = vpop.f32.mrf.mxu0
    %v3490 = vadd.f32 %v3377, %v3489
    %v3491 = vpop.f32.mrf.mxu0
    %v3492 = vadd.f32 %v3379, %v3491
    %3493 = vmatprep.mubr.bf16.mxu0 %v873
    %3494 = vmatmul.mubr.bf16.gmra.mxu0 %v872
    %v3495 = vpop.f32.mrf.mxu0
    %v3496 = vadd.f32 %v3383, %v3495
    %v3497 = vpop.f32.mrf.mxu0
    %v3498 = vadd.f32 %v3385, %v3497
    %v3499 = vpop.f32.mrf.mxu0
    %v3500 = vadd.f32 %v3387, %v3499
    %v3501 = vpop.f32.mrf.mxu0
    %v3502 = vadd.f32 %v3389, %v3501
    %3503 = vmatprep.mubr.bf16.mxu0 %v880
    %3504 = vmatmul.mubr.bf16.gmra.mxu0 %v879
    %v3505 = vpop.f32.mrf.mxu0
    %v3506 = vadd.f32 %v3393, %v3505
    %v3507 = vpop.f32.mrf.mxu0
    %v3508 = vadd.f32 %v3395, %v3507
    %v3509 = vpop.f32.mrf.mxu0
    %v3510 = vadd.f32 %v3397, %v3509
    %v3511 = vpop.f32.mrf.mxu0
    %v3512 = vadd.f32 %v3399, %v3511
    %3513 = vmatprep.mubr.bf16.mxu0 %v887
    %3514 = vmatmul.mubr.bf16.gmra.mxu0 %v886
    %v3515 = vpop.f32.mrf.mxu0
    %v3516 = vadd.f32 %v3403, %v3515
    %v3517 = vpop.f32.mrf.mxu0
    %v3518 = vadd.f32 %v3405, %v3517
    %v3519 = vpop.f32.mrf.mxu0
    %v3520 = vadd.f32 %v3407, %v3519
    %v3521 = vpop.f32.mrf.mxu0
    %v3522 = vadd.f32 %v3409, %v3521
    %3523 = vdwg.mxu0
    %3524 = vmatprep.subr.bf16.mxu0 %v2730
    %3525 = vmatpush1.bf16.msra.mxu0 %v2729
    %3526 = vmatprep.subr.bf16.mxu0 %v2722
    %3527 = vmatpush1.bf16.msra.mxu0 %v2721
    %3528 = vmatprep.subr.bf16.mxu0 %v2714
    %3529 = vmatpush1.bf16.msra.mxu0 %v2713
    %3530 = vmatprep.subr.bf16.mxu0 %v2706
    %3531 = vmatpush1.bf16.msra.mxu0 %v2705
    %3532 = vmatprep.subr.bf16.mxu0 %v2698
    %3533 = vmatpush1.bf16.msra.mxu0 %v2697
    %3534 = vmatprep.subr.bf16.mxu0 %v2690
    %3535 = vmatpush1.bf16.msra.mxu0 %v2689
    %3536 = vmatprep.subr.bf16.mxu0 %v2682
    %3537 = vmatpush1.bf16.msra.mxu0 %v2681
    %3538 = vmatprep.subr.bf16.mxu0 %v2674
    %3539 = vmatpush1.bf16.msra.mxu0 %v2673
    %3540 = vmatprep.subr.bf16.mxu0 0
    %3541 = vmatpush2.bf16.msra.mxu0 0
    %3542 = vmatprep.subr.bf16.mxu0 0
    %3543 = vmatpush2.bf16.msra.mxu0 0
    %3544 = vmatprep.subr.bf16.mxu0 0
    %3545 = vmatpush2.bf16.msra.mxu0 0
    %3546 = vmatprep.subr.bf16.mxu0 0
    %3547 = vmatpush2.bf16.msra.mxu0 0
    %3548 = vmatprep.subr.bf16.mxu0 0
    %3549 = vmatpush2.bf16.msra.mxu0 0
    %3550 = vmatprep.subr.bf16.mxu0 0
    %3551 = vmatpush2.bf16.msra.mxu0 0
    %3552 = vmatprep.subr.bf16.mxu0 0
    %3553 = vmatpush2.bf16.msra.mxu0 0
    %3554 = vmatprep.subr.bf16.mxu0 0
    %3555 = vmatpush2.bf16.msra.mxu0 0
    %3556 = vmatprep.mubr.bf16.mxu0 0
    %3557 = vmatmul.mubr.bf16.gmra.mxu0 %v839
    %v3558 = vpop.f32.mrf.mxu0
    %v3559 = vadd.f32 %v3446, %v3558
    %v3560 = vpop.f32.mrf.mxu0
    %v3561 = vadd.f32 %v3448, %v3560
    %v3562 = vpop.f32.mrf.mxu0
    %v3563 = vadd.f32 %v3450, %v3562
    %v3564 = vpop.f32.mrf.mxu0
    %v3565 = vadd.f32 %v3452, %v3564
    %3566 = vmatprep.mubr.bf16.mxu0 0
    %3567 = vmatmul.mubr.bf16.gmra.mxu0 %v846
    %v3568 = vpop.f32.mrf.mxu0
    %v3569 = vadd.f32 %v3456, %v3568
    %v3570 = vpop.f32.mrf.mxu0
    %v3571 = vadd.f32 %v3458, %v3570
    %v3572 = vpop.f32.mrf.mxu0
    %v3573 = vadd.f32 %v3460, %v3572
    %v3574 = vpop.f32.mrf.mxu0
    %v3575 = vadd.f32 %v3462, %v3574
    %3576 = vmatprep.mubr.bf16.mxu0 0
    %3577 = vmatmul.mubr.bf16.gmra.mxu0 %v853
    %v3578 = vpop.f32.mrf.mxu0
    %v3579 = vadd.f32 %v3466, %v3578
    %v3580 = vpop.f32.mrf.mxu0
    %v3581 = vadd.f32 %v3468, %v3580
    %v3582 = vpop.f32.mrf.mxu0
    %v3583 = vadd.f32 %v3470, %v3582
    %v3584 = vpop.f32.mrf.mxu0
    %v3585 = vadd.f32 %v3472, %v3584
    %3586 = vmatprep.mubr.bf16.mxu0 0
    %3587 = vmatmul.mubr.bf16.gmra.mxu0 %v860
    %v3588 = vpop.f32.mrf.mxu0
    %v3589 = vadd.f32 %v3476, %v3588
    %v3590 = vpop.f32.mrf.mxu0
    %v3591 = vadd.f32 %v3478, %v3590
    %v3592 = vpop.f32.mrf.mxu0
    %v3593 = vadd.f32 %v3480, %v3592
    %v3594 = vpop.f32.mrf.mxu0
    %v3595 = vadd.f32 %v3482, %v3594
    %3596 = vmatprep.mubr.bf16.mxu0 0
    %3597 = vmatmul.mubr.bf16.gmra.mxu0 %v867
    %v3598 = vpop.f32.mrf.mxu0
    %v3599 = vadd.f32 %v3486, %v3598
    %v3600 = vpop.f32.mrf.mxu0
    %v3601 = vadd.f32 %v3488, %v3600
    %v3602 = vpop.f32.mrf.mxu0
    %v3603 = vadd.f32 %v3490, %v3602
    %v3604 = vpop.f32.mrf.mxu0
    %v3605 = vadd.f32 %v3492, %v3604
    %3606 = vmatprep.mubr.bf16.mxu0 0
    %3607 = vmatmul.mubr.bf16.gmra.mxu0 %v874
    %v3608 = vpop.f32.mrf.mxu0
    %v3609 = vadd.f32 %v3496, %v3608
    %v3610 = vpop.f32.mrf.mxu0
    %v3611 = vadd.f32 %v3498, %v3610
    %v3612 = vpop.f32.mrf.mxu0
    %v3613 = vadd.f32 %v3500, %v3612
    %v3614 = vpop.f32.mrf.mxu0
    %v3615 = vadd.f32 %v3502, %v3614
    %3616 = vmatprep.mubr.bf16.mxu0 0
    %3617 = vmatmul.mubr.bf16.gmra.mxu0 %v881
    %v3618 = vpop.f32.mrf.mxu0
    %v3619 = vadd.f32 %v3506, %v3618
    %v3620 = vpop.f32.mrf.mxu0
    %v3621 = vadd.f32 %v3508, %v3620
    %v3622 = vpop.f32.mrf.mxu0
    %v3623 = vadd.f32 %v3510, %v3622
    %v3624 = vpop.f32.mrf.mxu0
    %v3625 = vadd.f32 %v3512, %v3624
    %3626 = vmatprep.mubr.bf16.mxu0 0
    %3627 = vmatmul.mubr.bf16.gmra.mxu0 %v888
    %v3628 = vpop.f32.mrf.mxu0
    %v3629 = vadd.f32 %v3516, %v3628
    %v3630 = vpop.f32.mrf.mxu0
    %v3631 = vadd.f32 %v3518, %v3630
    %v3632 = vpop.f32.mrf.mxu0
    %v3633 = vadd.f32 %v3520, %v3632
    %v3634 = vpop.f32.mrf.mxu0
    %v3635 = vadd.f32 %v3522, %v3634
    %3636 = vdwg.mxu0
    %3637 = vmatprep.subr.bf16.mxu0 %v2348
    %3638 = vmatpush1.bf16.msra.mxu0 %v2347
    %3639 = vmatprep.subr.bf16.mxu0 %v2340
    %3640 = vmatpush1.bf16.msra.mxu0 %v2339
    %3641 = vmatprep.subr.bf16.mxu0 %v2332
    %3642 = vmatpush1.bf16.msra.mxu0 %v2331
    %3643 = vmatprep.subr.bf16.mxu0 %v2324
    %3644 = vmatpush1.bf16.msra.mxu0 %v2323
    %3645 = vmatprep.subr.bf16.mxu0 %v2316
    %3646 = vmatpush1.bf16.msra.mxu0 %v2315
    %3647 = vmatprep.subr.bf16.mxu0 %v2308
    %3648 = vmatpush1.bf16.msra.mxu0 %v2307
    %3649 = vmatprep.subr.bf16.mxu0 %v2300
    %3650 = vmatpush1.bf16.msra.mxu0 %v2299
    %3651 = vmatprep.subr.bf16.mxu0 %v2292
    %3652 = vmatpush1.bf16.msra.mxu0 %v2291
    %3653 = vmatprep.subr.bf16.mxu0 %v2412
    %3654 = vmatpush2.bf16.msra.mxu0 %v2411
    %3655 = vmatprep.subr.bf16.mxu0 %v2404
    %3656 = vmatpush2.bf16.msra.mxu0 %v2403
    %3657 = vmatprep.subr.bf16.mxu0 %v2396
    %3658 = vmatpush2.bf16.msra.mxu0 %v2395
    %3659 = vmatprep.subr.bf16.mxu0 %v2388
    %3660 = vmatpush2.bf16.msra.mxu0 %v2387
    %3661 = vmatprep.subr.bf16.mxu0 %v2380
    %3662 = vmatpush2.bf16.msra.mxu0 %v2379
    %3663 = vmatprep.subr.bf16.mxu0 %v2372
    %3664 = vmatpush2.bf16.msra.mxu0 %v2371
    %3665 = vmatprep.subr.bf16.mxu0 %v2364
    %3666 = vmatpush2.bf16.msra.mxu0 %v2363
    %3667 = vmatprep.subr.bf16.mxu0 %v2356
    %3668 = vmatpush2.bf16.msra.mxu0 %v2355
    %3669 = vmatprep.mubr.bf16.mxu0 %v834
    %3670 = vmatmul.mubr.bf16.gmra.mxu0 %v833
    %v3671 = vpop.f32.mrf.mxu0
    %v3672 = vadd.f32 %v628, %v3671
    %v3673 = vpop.f32.mrf.mxu0
    %v3674 = vadd.f32 %v632, %v3673
    %v3675 = vpop.f32.mrf.mxu0
    %v3676 = vadd.f32 %v628, %v3675
    %v3677 = vpop.f32.mrf.mxu0
    %v3678 = vadd.f32 %v632, %v3677
    %3679 = vmatprep.mubr.bf16.mxu0 %v841
    %3680 = vmatmul.mubr.bf16.gmra.mxu0 %v840
    %v3681 = vpop.f32.mrf.mxu0
    %v3682 = vadd.f32 %v628, %v3681
    %v3683 = vpop.f32.mrf.mxu0
    %v3684 = vadd.f32 %v632, %v3683
    %v3685 = vpop.f32.mrf.mxu0
    %v3686 = vadd.f32 %v628, %v3685
    %v3687 = vpop.f32.mrf.mxu0
    %v3688 = vadd.f32 %v632, %v3687
    %3689 = vmatprep.mubr.bf16.mxu0 %v848
    %3690 = vmatmul.mubr.bf16.gmra.mxu0 %v847
    %v3691 = vpop.f32.mrf.mxu0
    %v3692 = vadd.f32 %v628, %v3691
    %v3693 = vpop.f32.mrf.mxu0
    %v3694 = vadd.f32 %v632, %v3693
    %v3695 = vpop.f32.mrf.mxu0
    %v3696 = vadd.f32 %v628, %v3695
    %v3697 = vpop.f32.mrf.mxu0
    %v3698 = vadd.f32 %v632, %v3697
    %3699 = vmatprep.mubr.bf16.mxu0 %v855
    %3700 = vmatmul.mubr.bf16.gmra.mxu0 %v854
    %v3701 = vpop.f32.mrf.mxu0
    %v3702 = vadd.f32 %v628, %v3701
    %v3703 = vpop.f32.mrf.mxu0
    %v3704 = vadd.f32 %v632, %v3703
    %v3705 = vpop.f32.mrf.mxu0
    %v3706 = vadd.f32 %v628, %v3705
    %v3707 = vpop.f32.mrf.mxu0
    %v3708 = vadd.f32 %v632, %v3707
    %3709 = vmatprep.mubr.bf16.mxu0 %v862
    %3710 = vmatmul.mubr.bf16.gmra.mxu0 %v861
    %v3711 = vpop.f32.mrf.mxu0
    %v3712 = vadd.f32 %v628, %v3711
    %v3713 = vpop.f32.mrf.mxu0
    %v3714 = vadd.f32 %v632, %v3713
    %v3715 = vpop.f32.mrf.mxu0
    %v3716 = vadd.f32 %v628, %v3715
    %v3717 = vpop.f32.mrf.mxu0
    %v3718 = vadd.f32 %v632, %v3717
    %3719 = vmatprep.mubr.bf16.mxu0 %v869
    %3720 = vmatmul.mubr.bf16.gmra.mxu0 %v868
    %v3721 = vpop.f32.mrf.mxu0
    %v3722 = vadd.f32 %v628, %v3721
    %v3723 = vpop.f32.mrf.mxu0
    %v3724 = vadd.f32 %v632, %v3723
    %v3725 = vpop.f32.mrf.mxu0
    %v3726 = vadd.f32 %v628, %v3725
    %v3727 = vpop.f32.mrf.mxu0
    %v3728 = vadd.f32 %v632, %v3727
    %3729 = vmatprep.mubr.bf16.mxu0 %v876
    %3730 = vmatmul.mubr.bf16.gmra.mxu0 %v875
    %v3731 = vpop.f32.mrf.mxu0
    %v3732 = vadd.f32 %v628, %v3731
    %v3733 = vpop.f32.mrf.mxu0
    %v3734 = vadd.f32 %v632, %v3733
    %v3735 = vpop.f32.mrf.mxu0
    %v3736 = vadd.f32 %v628, %v3735
    %v3737 = vpop.f32.mrf.mxu0
    %v3738 = vadd.f32 %v632, %v3737
    %3739 = vmatprep.mubr.bf16.mxu0 %v883
    %3740 = vmatmul.mubr.bf16.gmra.mxu0 %v882
    %v3741 = vpop.f32.mrf.mxu0
    %v3742 = vadd.f32 %v628, %v3741
    %v3743 = vpop.f32.mrf.mxu0
    %v3744 = vadd.f32 %v632, %v3743
    %v3745 = vpop.f32.mrf.mxu0
    %v3746 = vadd.f32 %v628, %v3745
    %v3747 = vpop.f32.mrf.mxu0
    %v3748 = vadd.f32 %v632, %v3747
    %3749 = vdwg.mxu0
    %3750 = vmatprep.subr.bf16.mxu0 %v2476
    %3751 = vmatpush1.bf16.msra.mxu0 %v2475
    %3752 = vmatprep.subr.bf16.mxu0 %v2468
    %3753 = vmatpush1.bf16.msra.mxu0 %v2467
    %3754 = vmatprep.subr.bf16.mxu0 %v2460
    %3755 = vmatpush1.bf16.msra.mxu0 %v2459
    %3756 = vmatprep.subr.bf16.mxu0 %v2452
    %3757 = vmatpush1.bf16.msra.mxu0 %v2451
    %3758 = vmatprep.subr.bf16.mxu0 %v2444
    %3759 = vmatpush1.bf16.msra.mxu0 %v2443
    %3760 = vmatprep.subr.bf16.mxu0 %v2436
    %3761 = vmatpush1.bf16.msra.mxu0 %v2435
    %3762 = vmatprep.subr.bf16.mxu0 %v2428
    %3763 = vmatpush1.bf16.msra.mxu0 %v2427
    %3764 = vmatprep.subr.bf16.mxu0 %v2420
    %3765 = vmatpush1.bf16.msra.mxu0 %v2419
    %3766 = vmatprep.subr.bf16.mxu0 %v2540
    %3767 = vmatpush2.bf16.msra.mxu0 %v2539
    %3768 = vmatprep.subr.bf16.mxu0 %v2532
    %3769 = vmatpush2.bf16.msra.mxu0 %v2531
    %3770 = vmatprep.subr.bf16.mxu0 %v2524
    %3771 = vmatpush2.bf16.msra.mxu0 %v2523
    %3772 = vmatprep.subr.bf16.mxu0 %v2516
    %3773 = vmatpush2.bf16.msra.mxu0 %v2515
    %3774 = vmatprep.subr.bf16.mxu0 %v2508
    %3775 = vmatpush2.bf16.msra.mxu0 %v2507
    %3776 = vmatprep.subr.bf16.mxu0 %v2500
    %3777 = vmatpush2.bf16.msra.mxu0 %v2499
    %3778 = vmatprep.subr.bf16.mxu0 %v2492
    %3779 = vmatpush2.bf16.msra.mxu0 %v2491
    %3780 = vmatprep.subr.bf16.mxu0 %v2484
    %3781 = vmatpush2.bf16.msra.mxu0 %v2483
    %3782 = vmatprep.mubr.bf16.mxu0 %v836
    %3783 = vmatmul.mubr.bf16.gmra.mxu0 %v835
    %v3784 = vpop.f32.mrf.mxu0
    %v3785 = vadd.f32 %v3672, %v3784
    %v3786 = vpop.f32.mrf.mxu0
    %v3787 = vadd.f32 %v3674, %v3786
    %v3788 = vpop.f32.mrf.mxu0
    %v3789 = vadd.f32 %v3676, %v3788
    %v3790 = vpop.f32.mrf.mxu0
    %v3791 = vadd.f32 %v3678, %v3790
    %3792 = vmatprep.mubr.bf16.mxu0 %v843
    %3793 = vmatmul.mubr.bf16.gmra.mxu0 %v842
    %v3794 = vpop.f32.mrf.mxu0
    %v3795 = vadd.f32 %v3682, %v3794
    %v3796 = vpop.f32.mrf.mxu0
    %v3797 = vadd.f32 %v3684, %v3796
    %v3798 = vpop.f32.mrf.mxu0
    %v3799 = vadd.f32 %v3686, %v3798
    %v3800 = vpop.f32.mrf.mxu0
    %v3801 = vadd.f32 %v3688, %v3800
    %3802 = vmatprep.mubr.bf16.mxu0 %v850
    %3803 = vmatmul.mubr.bf16.gmra.mxu0 %v849
    %v3804 = vpop.f32.mrf.mxu0
    %v3805 = vadd.f32 %v3692, %v3804
    %v3806 = vpop.f32.mrf.mxu0
    %v3807 = vadd.f32 %v3694, %v3806
    %v3808 = vpop.f32.mrf.mxu0
    %v3809 = vadd.f32 %v3696, %v3808
    %v3810 = vpop.f32.mrf.mxu0
    %v3811 = vadd.f32 %v3698, %v3810
    %3812 = vmatprep.mubr.bf16.mxu0 %v857
    %3813 = vmatmul.mubr.bf16.gmra.mxu0 %v856
    %v3814 = vpop.f32.mrf.mxu0
    %v3815 = vadd.f32 %v3702, %v3814
    %v3816 = vpop.f32.mrf.mxu0
    %v3817 = vadd.f32 %v3704, %v3816
    %v3818 = vpop.f32.mrf.mxu0
    %v3819 = vadd.f32 %v3706, %v3818
    %v3820 = vpop.f32.mrf.mxu0
    %v3821 = vadd.f32 %v3708, %v3820
    %3822 = vmatprep.mubr.bf16.mxu0 %v864
    %3823 = vmatmul.mubr.bf16.gmra.mxu0 %v863
    %v3824 = vpop.f32.mrf.mxu0
    %v3825 = vadd.f32 %v3712, %v3824
    %v3826 = vpop.f32.mrf.mxu0
    %v3827 = vadd.f32 %v3714, %v3826
    %v3828 = vpop.f32.mrf.mxu0
    %v3829 = vadd.f32 %v3716, %v3828
    %v3830 = vpop.f32.mrf.mxu0
    %v3831 = vadd.f32 %v3718, %v3830
    %3832 = vmatprep.mubr.bf16.mxu0 %v871
    %3833 = vmatmul.mubr.bf16.gmra.mxu0 %v870
    %v3834 = vpop.f32.mrf.mxu0
    %v3835 = vadd.f32 %v3722, %v3834
    %v3836 = vpop.f32.mrf.mxu0
    %v3837 = vadd.f32 %v3724, %v3836
    %v3838 = vpop.f32.mrf.mxu0
    %v3839 = vadd.f32 %v3726, %v3838
    %v3840 = vpop.f32.mrf.mxu0
    %v3841 = vadd.f32 %v3728, %v3840
    %3842 = vmatprep.mubr.bf16.mxu0 %v878
    %3843 = vmatmul.mubr.bf16.gmra.mxu0 %v877
    %v3844 = vpop.f32.mrf.mxu0
    %v3845 = vadd.f32 %v3732, %v3844
    %v3846 = vpop.f32.mrf.mxu0
    %v3847 = vadd.f32 %v3734, %v3846
    %v3848 = vpop.f32.mrf.mxu0
    %v3849 = vadd.f32 %v3736, %v3848
    %v3850 = vpop.f32.mrf.mxu0
    %v3851 = vadd.f32 %v3738, %v3850
    %3852 = vmatprep.mubr.bf16.mxu0 %v885
    %3853 = vmatmul.mubr.bf16.gmra.mxu0 %v884
    %v3854 = vpop.f32.mrf.mxu0
    %v3855 = vadd.f32 %v3742, %v3854
    %v3856 = vpop.f32.mrf.mxu0
    %v3857 = vadd.f32 %v3744, %v3856
    %v3858 = vpop.f32.mrf.mxu0
    %v3859 = vadd.f32 %v3746, %v3858
    %v3860 = vpop.f32.mrf.mxu0
    %v3861 = vadd.f32 %v3748, %v3860
    %3862 = vdwg.mxu0
    %3863 = vmatprep.subr.bf16.mxu0 %v2604
    %3864 = vmatpush1.bf16.msra.mxu0 %v2603
    %3865 = vmatprep.subr.bf16.mxu0 %v2596
    %3866 = vmatpush1.bf16.msra.mxu0 %v2595
    %3867 = vmatprep.subr.bf16.mxu0 %v2588
    %3868 = vmatpush1.bf16.msra.mxu0 %v2587
    %3869 = vmatprep.subr.bf16.mxu0 %v2580
    %3870 = vmatpush1.bf16.msra.mxu0 %v2579
    %3871 = vmatprep.subr.bf16.mxu0 %v2572
    %3872 = vmatpush1.bf16.msra.mxu0 %v2571
    %3873 = vmatprep.subr.bf16.mxu0 %v2564
    %3874 = vmatpush1.bf16.msra.mxu0 %v2563
    %3875 = vmatprep.subr.bf16.mxu0 %v2556
    %3876 = vmatpush1.bf16.msra.mxu0 %v2555
    %3877 = vmatprep.subr.bf16.mxu0 %v2548
    %3878 = vmatpush1.bf16.msra.mxu0 %v2547
    %3879 = vmatprep.subr.bf16.mxu0 %v2668
    %3880 = vmatpush2.bf16.msra.mxu0 %v2667
    %3881 = vmatprep.subr.bf16.mxu0 %v2660
    %3882 = vmatpush2.bf16.msra.mxu0 %v2659
    %3883 = vmatprep.subr.bf16.mxu0 %v2652
    %3884 = vmatpush2.bf16.msra.mxu0 %v2651
    %3885 = vmatprep.subr.bf16.mxu0 %v2644
    %3886 = vmatpush2.bf16.msra.mxu0 %v2643
    %3887 = vmatprep.subr.bf16.mxu0 %v2636
    %3888 = vmatpush2.bf16.msra.mxu0 %v2635
    %3889 = vmatprep.subr.bf16.mxu0 %v2628
    %3890 = vmatpush2.bf16.msra.mxu0 %v2627
    %3891 = vmatprep.subr.bf16.mxu0 %v2620
    %3892 = vmatpush2.bf16.msra.mxu0 %v2619
    %3893 = vmatprep.subr.bf16.mxu0 %v2612
    %3894 = vmatpush2.bf16.msra.mxu0 %v2611
    %3895 = vmatprep.mubr.bf16.mxu0 %v838
    %3896 = vmatmul.mubr.bf16.gmra.mxu0 %v837
    %v3897 = vpop.f32.mrf.mxu0
    %v3898 = vadd.f32 %v3785, %v3897
    %v3899 = vpop.f32.mrf.mxu0
    %v3900 = vadd.f32 %v3787, %v3899
    %v3901 = vpop.f32.mrf.mxu0
    %v3902 = vadd.f32 %v3789, %v3901
    %v3903 = vpop.f32.mrf.mxu0
    %v3904 = vadd.f32 %v3791, %v3903
    %3905 = vmatprep.mubr.bf16.mxu0 %v845
    %3906 = vmatmul.mubr.bf16.gmra.mxu0 %v844
    %v3907 = vpop.f32.mrf.mxu0
    %v3908 = vadd.f32 %v3795, %v3907
    %v3909 = vpop.f32.mrf.mxu0
    %v3910 = vadd.f32 %v3797, %v3909
    %v3911 = vpop.f32.mrf.mxu0
    %v3912 = vadd.f32 %v3799, %v3911
    %v3913 = vpop.f32.mrf.mxu0
    %v3914 = vadd.f32 %v3801, %v3913
    %3915 = vmatprep.mubr.bf16.mxu0 %v852
    %3916 = vmatmul.mubr.bf16.gmra.mxu0 %v851
    %v3917 = vpop.f32.mrf.mxu0
    %v3918 = vadd.f32 %v3805, %v3917
    %v3919 = vpop.f32.mrf.mxu0
    %v3920 = vadd.f32 %v3807, %v3919
    %v3921 = vpop.f32.mrf.mxu0
    %v3922 = vadd.f32 %v3809, %v3921
    %v3923 = vpop.f32.mrf.mxu0
    %v3924 = vadd.f32 %v3811, %v3923
    %3925 = vmatprep.mubr.bf16.mxu0 %v859
    %3926 = vmatmul.mubr.bf16.gmra.mxu0 %v858
    %v3927 = vpop.f32.mrf.mxu0
    %v3928 = vadd.f32 %v3815, %v3927
    %v3929 = vpop.f32.mrf.mxu0
    %v3930 = vadd.f32 %v3817, %v3929
    %v3931 = vpop.f32.mrf.mxu0
    %v3932 = vadd.f32 %v3819, %v3931
    %v3933 = vpop.f32.mrf.mxu0
    %v3934 = vadd.f32 %v3821, %v3933
    %3935 = vmatprep.mubr.bf16.mxu0 %v866
    %3936 = vmatmul.mubr.bf16.gmra.mxu0 %v865
    %v3937 = vpop.f32.mrf.mxu0
    %v3938 = vadd.f32 %v3825, %v3937
    %v3939 = vpop.f32.mrf.mxu0
    %v3940 = vadd.f32 %v3827, %v3939
    %v3941 = vpop.f32.mrf.mxu0
    %v3942 = vadd.f32 %v3829, %v3941
    %v3943 = vpop.f32.mrf.mxu0
    %v3944 = vadd.f32 %v3831, %v3943
    %3945 = vmatprep.mubr.bf16.mxu0 %v873
    %3946 = vmatmul.mubr.bf16.gmra.mxu0 %v872
    %v3947 = vpop.f32.mrf.mxu0
    %v3948 = vadd.f32 %v3835, %v3947
    %v3949 = vpop.f32.mrf.mxu0
    %v3950 = vadd.f32 %v3837, %v3949
    %v3951 = vpop.f32.mrf.mxu0
    %v3952 = vadd.f32 %v3839, %v3951
    %v3953 = vpop.f32.mrf.mxu0
    %v3954 = vadd.f32 %v3841, %v3953
    %3955 = vmatprep.mubr.bf16.mxu0 %v880
    %3956 = vmatmul.mubr.bf16.gmra.mxu0 %v879
    %v3957 = vpop.f32.mrf.mxu0
    %v3958 = vadd.f32 %v3845, %v3957
    %v3959 = vpop.f32.mrf.mxu0
    %v3960 = vadd.f32 %v3847, %v3959
    %v3961 = vpop.f32.mrf.mxu0
    %v3962 = vadd.f32 %v3849, %v3961
    %v3963 = vpop.f32.mrf.mxu0
    %v3964 = vadd.f32 %v3851, %v3963
    %3965 = vmatprep.mubr.bf16.mxu0 %v887
    %3966 = vmatmul.mubr.bf16.gmra.mxu0 %v886
    %v3967 = vpop.f32.mrf.mxu0
    %v3968 = vadd.f32 %v3855, %v3967
    %v3969 = vpop.f32.mrf.mxu0
    %v3970 = vadd.f32 %v3857, %v3969
    %v3971 = vpop.f32.mrf.mxu0
    %v3972 = vadd.f32 %v3859, %v3971
    %v3973 = vpop.f32.mrf.mxu0
    %v3974 = vadd.f32 %v3861, %v3973
    %3975 = vdwg.mxu0
    %3976 = vmatprep.subr.bf16.mxu0 %v2732
    %3977 = vmatpush1.bf16.msra.mxu0 %v2731
    %3978 = vmatprep.subr.bf16.mxu0 %v2724
    %3979 = vmatpush1.bf16.msra.mxu0 %v2723
    %3980 = vmatprep.subr.bf16.mxu0 %v2716
    %3981 = vmatpush1.bf16.msra.mxu0 %v2715
    %3982 = vmatprep.subr.bf16.mxu0 %v2708
    %3983 = vmatpush1.bf16.msra.mxu0 %v2707
    %3984 = vmatprep.subr.bf16.mxu0 %v2700
    %3985 = vmatpush1.bf16.msra.mxu0 %v2699
    %3986 = vmatprep.subr.bf16.mxu0 %v2692
    %3987 = vmatpush1.bf16.msra.mxu0 %v2691
    %3988 = vmatprep.subr.bf16.mxu0 %v2684
    %3989 = vmatpush1.bf16.msra.mxu0 %v2683
    %3990 = vmatprep.subr.bf16.mxu0 %v2676
    %3991 = vmatpush1.bf16.msra.mxu0 %v2675
    %3992 = vmatprep.subr.bf16.mxu0 0
    %3993 = vmatpush2.bf16.msra.mxu0 0
    %3994 = vmatprep.subr.bf16.mxu0 0
    %3995 = vmatpush2.bf16.msra.mxu0 0
    %3996 = vmatprep.subr.bf16.mxu0 0
    %3997 = vmatpush2.bf16.msra.mxu0 0
    %3998 = vmatprep.subr.bf16.mxu0 0
    %3999 = vmatpush2.bf16.msra.mxu0 0
    %4000 = vmatprep.subr.bf16.mxu0 0
    %4001 = vmatpush2.bf16.msra.mxu0 0
    %4002 = vmatprep.subr.bf16.mxu0 0
    %4003 = vmatpush2.bf16.msra.mxu0 0
    %4004 = vmatprep.subr.bf16.mxu0 0
    %4005 = vmatpush2.bf16.msra.mxu0 0
    %4006 = vmatprep.subr.bf16.mxu0 0
    %4007 = vmatpush2.bf16.msra.mxu0 0
    %4008 = vmatprep.mubr.bf16.mxu0 0
    %4009 = vmatmul.mubr.bf16.gmra.mxu0 %v839
    %v4010 = vpop.f32.mrf.mxu0
    %v4011 = vadd.f32 %v3898, %v4010
    %v4012 = vpop.f32.mrf.mxu0
    %v4013 = vadd.f32 %v3900, %v4012
    %v4014 = vpop.f32.mrf.mxu0
    %v4015 = vadd.f32 %v3902, %v4014
    %v4016 = vpop.f32.mrf.mxu0
    %v4017 = vadd.f32 %v3904, %v4016
    %4018 = vmatprep.mubr.bf16.mxu0 0
    %4019 = vmatmul.mubr.bf16.gmra.mxu0 %v846
    %v4020 = vpop.f32.mrf.mxu0
    %v4021 = vadd.f32 %v3908, %v4020
    %v4022 = vpop.f32.mrf.mxu0
    %v4023 = vadd.f32 %v3910, %v4022
    %v4024 = vpop.f32.mrf.mxu0
    %v4025 = vadd.f32 %v3912, %v4024
    %v4026 = vpop.f32.mrf.mxu0
    %v4027 = vadd.f32 %v3914, %v4026
    %4028 = vmatprep.mubr.bf16.mxu0 0
    %4029 = vmatmul.mubr.bf16.gmra.mxu0 %v853
    %v4030 = vpop.f32.mrf.mxu0
    %v4031 = vadd.f32 %v3918, %v4030
    %v4032 = vpop.f32.mrf.mxu0
    %v4033 = vadd.f32 %v3920, %v4032
    %v4034 = vpop.f32.mrf.mxu0
    %v4035 = vadd.f32 %v3922, %v4034
    %v4036 = vpop.f32.mrf.mxu0
    %v4037 = vadd.f32 %v3924, %v4036
    %4038 = vmatprep.mubr.bf16.mxu0 0
    %4039 = vmatmul.mubr.bf16.gmra.mxu0 %v860
    %v4040 = vpop.f32.mrf.mxu0
    %v4041 = vadd.f32 %v3928, %v4040
    %v4042 = vpop.f32.mrf.mxu0
    %v4043 = vadd.f32 %v3930, %v4042
    %v4044 = vpop.f32.mrf.mxu0
    %v4045 = vadd.f32 %v3932, %v4044
    %v4046 = vpop.f32.mrf.mxu0
    %v4047 = vadd.f32 %v3934, %v4046
    %4048 = vmatprep.mubr.bf16.mxu0 0
    %4049 = vmatmul.mubr.bf16.gmra.mxu0 %v867
    %v4050 = vpop.f32.mrf.mxu0
    %v4051 = vadd.f32 %v3938, %v4050
    %v4052 = vpop.f32.mrf.mxu0
    %v4053 = vadd.f32 %v3940, %v4052
    %v4054 = vpop.f32.mrf.mxu0
    %v4055 = vadd.f32 %v3942, %v4054
    %v4056 = vpop.f32.mrf.mxu0
    %v4057 = vadd.f32 %v3944, %v4056
    %4058 = vmatprep.mubr.bf16.mxu0 0
    %4059 = vmatmul.mubr.bf16.gmra.mxu0 %v874
    %v4060 = vpop.f32.mrf.mxu0
    %v4061 = vadd.f32 %v3948, %v4060
    %v4062 = vpop.f32.mrf.mxu0
    %v4063 = vadd.f32 %v3950, %v4062
    %v4064 = vpop.f32.mrf.mxu0
    %v4065 = vadd.f32 %v3952, %v4064
    %v4066 = vpop.f32.mrf.mxu0
    %v4067 = vadd.f32 %v3954, %v4066
    %4068 = vmatprep.mubr.bf16.mxu0 0
    %4069 = vmatmul.mubr.bf16.gmra.mxu0 %v881
    %v4070 = vpop.f32.mrf.mxu0
    %v4071 = vadd.f32 %v3958, %v4070
    %v4072 = vpop.f32.mrf.mxu0
    %v4073 = vadd.f32 %v3960, %v4072
    %v4074 = vpop.f32.mrf.mxu0
    %v4075 = vadd.f32 %v3962, %v4074
    %v4076 = vpop.f32.mrf.mxu0
    %v4077 = vadd.f32 %v3964, %v4076
    %4078 = vmatprep.mubr.bf16.mxu0 0
    %4079 = vmatmul.mubr.bf16.gmra.mxu0 %v888
    %v4080 = vpop.f32.mrf.mxu0
    %v4081 = vadd.f32 %v3968, %v4080
    %v4082 = vpop.f32.mrf.mxu0
    %v4083 = vadd.f32 %v3970, %v4082
    %v4084 = vpop.f32.mrf.mxu0
    %v4085 = vadd.f32 %v3972, %v4084
    %v4086 = vpop.f32.mrf.mxu0
    %v4087 = vadd.f32 %v3974, %v4086
    %4088 = vdwg.mxu0
    %4089 = vmatprep.subr.bf16.mxu0 %v2350
    %4090 = vmatpush1.bf16.msra.mxu0 %v2349
    %4091 = vmatprep.subr.bf16.mxu0 %v2342
    %4092 = vmatpush1.bf16.msra.mxu0 %v2341
    %4093 = vmatprep.subr.bf16.mxu0 %v2334
    %4094 = vmatpush1.bf16.msra.mxu0 %v2333
    %4095 = vmatprep.subr.bf16.mxu0 %v2326
    %4096 = vmatpush1.bf16.msra.mxu0 %v2325
    %4097 = vmatprep.subr.bf16.mxu0 %v2318
    %4098 = vmatpush1.bf16.msra.mxu0 %v2317
    %4099 = vmatprep.subr.bf16.mxu0 %v2310
    %4100 = vmatpush1.bf16.msra.mxu0 %v2309
    %4101 = vmatprep.subr.bf16.mxu0 %v2302
    %4102 = vmatpush1.bf16.msra.mxu0 %v2301
    %4103 = vmatprep.subr.bf16.mxu0 %v2294
    %4104 = vmatpush1.bf16.msra.mxu0 %v2293
    %4105 = vmatprep.subr.bf16.mxu0 %v2414
    %4106 = vmatpush2.bf16.msra.mxu0 %v2413
    %4107 = vmatprep.subr.bf16.mxu0 %v2406
    %4108 = vmatpush2.bf16.msra.mxu0 %v2405
    %4109 = vmatprep.subr.bf16.mxu0 %v2398
    %4110 = vmatpush2.bf16.msra.mxu0 %v2397
    %4111 = vmatprep.subr.bf16.mxu0 %v2390
    %4112 = vmatpush2.bf16.msra.mxu0 %v2389
    %4113 = vmatprep.subr.bf16.mxu0 %v2382
    %4114 = vmatpush2.bf16.msra.mxu0 %v2381
    %4115 = vmatprep.subr.bf16.mxu0 %v2374
    %4116 = vmatpush2.bf16.msra.mxu0 %v2373
    %4117 = vmatprep.subr.bf16.mxu0 %v2366
    %4118 = vmatpush2.bf16.msra.mxu0 %v2365
    %4119 = vmatprep.subr.bf16.mxu0 %v2358
    %4120 = vmatpush2.bf16.msra.mxu0 %v2357
    %4121 = vmatprep.mubr.bf16.mxu0 %v834
    %4122 = vmatmul.mubr.bf16.gmra.mxu0 %v833
    %v4123 = vpop.f32.mrf.mxu0
    %v4124 = vadd.f32 %v636, %v4123
    %v4125 = vpop.f32.mrf.mxu0
    %v4126 = vadd.f32 %v640, %v4125
    %v4127 = vpop.f32.mrf.mxu0
    %v4128 = vadd.f32 %v636, %v4127
    %v4129 = vpop.f32.mrf.mxu0
    %v4130 = vadd.f32 %v640, %v4129
    %4131 = vmatprep.mubr.bf16.mxu0 %v841
    %4132 = vmatmul.mubr.bf16.gmra.mxu0 %v840
    %v4133 = vpop.f32.mrf.mxu0
    %v4134 = vadd.f32 %v636, %v4133
    %v4135 = vpop.f32.mrf.mxu0
    %v4136 = vadd.f32 %v640, %v4135
    %v4137 = vpop.f32.mrf.mxu0
    %v4138 = vadd.f32 %v636, %v4137
    %v4139 = vpop.f32.mrf.mxu0
    %v4140 = vadd.f32 %v640, %v4139
    %4141 = vmatprep.mubr.bf16.mxu0 %v848
    %4142 = vmatmul.mubr.bf16.gmra.mxu0 %v847
    %v4143 = vpop.f32.mrf.mxu0
    %v4144 = vadd.f32 %v636, %v4143
    %v4145 = vpop.f32.mrf.mxu0
    %v4146 = vadd.f32 %v640, %v4145
    %v4147 = vpop.f32.mrf.mxu0
    %v4148 = vadd.f32 %v636, %v4147
    %v4149 = vpop.f32.mrf.mxu0
    %v4150 = vadd.f32 %v640, %v4149
    %4151 = vmatprep.mubr.bf16.mxu0 %v855
    %4152 = vmatmul.mubr.bf16.gmra.mxu0 %v854
    %v4153 = vpop.f32.mrf.mxu0
    %v4154 = vadd.f32 %v636, %v4153
    %v4155 = vpop.f32.mrf.mxu0
    %v4156 = vadd.f32 %v640, %v4155
    %v4157 = vpop.f32.mrf.mxu0
    %v4158 = vadd.f32 %v636, %v4157
    %v4159 = vpop.f32.mrf.mxu0
    %v4160 = vadd.f32 %v640, %v4159
    %4161 = vmatprep.mubr.bf16.mxu0 %v862
    %4162 = vmatmul.mubr.bf16.gmra.mxu0 %v861
    %v4163 = vpop.f32.mrf.mxu0
    %v4164 = vadd.f32 %v636, %v4163
    %v4165 = vpop.f32.mrf.mxu0
    %v4166 = vadd.f32 %v640, %v4165
    %v4167 = vpop.f32.mrf.mxu0
    %v4168 = vadd.f32 %v636, %v4167
    %v4169 = vpop.f32.mrf.mxu0
    %v4170 = vadd.f32 %v640, %v4169
    %4171 = vmatprep.mubr.bf16.mxu0 %v869
    %4172 = vmatmul.mubr.bf16.gmra.mxu0 %v868
    %v4173 = vpop.f32.mrf.mxu0
    %v4174 = vadd.f32 %v636, %v4173
    %v4175 = vpop.f32.mrf.mxu0
    %v4176 = vadd.f32 %v640, %v4175
    %v4177 = vpop.f32.mrf.mxu0
    %v4178 = vadd.f32 %v636, %v4177
    %v4179 = vpop.f32.mrf.mxu0
    %v4180 = vadd.f32 %v640, %v4179
    %4181 = vmatprep.mubr.bf16.mxu0 %v876
    %4182 = vmatmul.mubr.bf16.gmra.mxu0 %v875
    %v4183 = vpop.f32.mrf.mxu0
    %v4184 = vadd.f32 %v636, %v4183
    %v4185 = vpop.f32.mrf.mxu0
    %v4186 = vadd.f32 %v640, %v4185
    %v4187 = vpop.f32.mrf.mxu0
    %v4188 = vadd.f32 %v636, %v4187
    %v4189 = vpop.f32.mrf.mxu0
    %v4190 = vadd.f32 %v640, %v4189
    %4191 = vmatprep.mubr.bf16.mxu0 %v883
    %4192 = vmatmul.mubr.bf16.gmra.mxu0 %v882
    %v4193 = vpop.f32.mrf.mxu0
    %v4194 = vadd.f32 %v636, %v4193
    %v4195 = vpop.f32.mrf.mxu0
    %v4196 = vadd.f32 %v640, %v4195
    %v4197 = vpop.f32.mrf.mxu0
    %v4198 = vadd.f32 %v636, %v4197
    %v4199 = vpop.f32.mrf.mxu0
    %v4200 = vadd.f32 %v640, %v4199
    %4201 = vdwg.mxu0
    %4202 = vmatprep.subr.bf16.mxu0 %v2478
    %4203 = vmatpush1.bf16.msra.mxu0 %v2477
    %4204 = vmatprep.subr.bf16.mxu0 %v2470
    %4205 = vmatpush1.bf16.msra.mxu0 %v2469
    %4206 = vmatprep.subr.bf16.mxu0 %v2462
    %4207 = vmatpush1.bf16.msra.mxu0 %v2461
    %4208 = vmatprep.subr.bf16.mxu0 %v2454
    %4209 = vmatpush1.bf16.msra.mxu0 %v2453
    %4210 = vmatprep.subr.bf16.mxu0 %v2446
    %4211 = vmatpush1.bf16.msra.mxu0 %v2445
    %4212 = vmatprep.subr.bf16.mxu0 %v2438
    %4213 = vmatpush1.bf16.msra.mxu0 %v2437
    %4214 = vmatprep.subr.bf16.mxu0 %v2430
    %4215 = vmatpush1.bf16.msra.mxu0 %v2429
    %4216 = vmatprep.subr.bf16.mxu0 %v2422
    %4217 = vmatpush1.bf16.msra.mxu0 %v2421
    %4218 = vmatprep.subr.bf16.mxu0 %v2542
    %4219 = vmatpush2.bf16.msra.mxu0 %v2541
    %4220 = vmatprep.subr.bf16.mxu0 %v2534
    %4221 = vmatpush2.bf16.msra.mxu0 %v2533
    %4222 = vmatprep.subr.bf16.mxu0 %v2526
    %4223 = vmatpush2.bf16.msra.mxu0 %v2525
    %4224 = vmatprep.subr.bf16.mxu0 %v2518
    %4225 = vmatpush2.bf16.msra.mxu0 %v2517
    %4226 = vmatprep.subr.bf16.mxu0 %v2510
    %4227 = vmatpush2.bf16.msra.mxu0 %v2509
    %4228 = vmatprep.subr.bf16.mxu0 %v2502
    %4229 = vmatpush2.bf16.msra.mxu0 %v2501
    %4230 = vmatprep.subr.bf16.mxu0 %v2494
    %4231 = vmatpush2.bf16.msra.mxu0 %v2493
    %4232 = vmatprep.subr.bf16.mxu0 %v2486
    %4233 = vmatpush2.bf16.msra.mxu0 %v2485
    %4234 = vmatprep.mubr.bf16.mxu0 %v836
    %4235 = vmatmul.mubr.bf16.gmra.mxu0 %v835
    %v4236 = vpop.f32.mrf.mxu0
    %v4237 = vadd.f32 %v4124, %v4236
    %v4238 = vpop.f32.mrf.mxu0
    %v4239 = vadd.f32 %v4126, %v4238
    %v4240 = vpop.f32.mrf.mxu0
    %v4241 = vadd.f32 %v4128, %v4240
    %v4242 = vpop.f32.mrf.mxu0
    %v4243 = vadd.f32 %v4130, %v4242
    %4244 = vmatprep.mubr.bf16.mxu0 %v843
    %4245 = vmatmul.mubr.bf16.gmra.mxu0 %v842
    %v4246 = vpop.f32.mrf.mxu0
    %v4247 = vadd.f32 %v4134, %v4246
    %v4248 = vpop.f32.mrf.mxu0
    %v4249 = vadd.f32 %v4136, %v4248
    %v4250 = vpop.f32.mrf.mxu0
    %v4251 = vadd.f32 %v4138, %v4250
    %v4252 = vpop.f32.mrf.mxu0
    %v4253 = vadd.f32 %v4140, %v4252
    %4254 = vmatprep.mubr.bf16.mxu0 %v850
    %4255 = vmatmul.mubr.bf16.gmra.mxu0 %v849
    %v4256 = vpop.f32.mrf.mxu0
    %v4257 = vadd.f32 %v4144, %v4256
    %v4258 = vpop.f32.mrf.mxu0
    %v4259 = vadd.f32 %v4146, %v4258
    %v4260 = vpop.f32.mrf.mxu0
    %v4261 = vadd.f32 %v4148, %v4260
    %v4262 = vpop.f32.mrf.mxu0
    %v4263 = vadd.f32 %v4150, %v4262
    %4264 = vmatprep.mubr.bf16.mxu0 %v857
    %4265 = vmatmul.mubr.bf16.gmra.mxu0 %v856
    %v4266 = vpop.f32.mrf.mxu0
    %v4267 = vadd.f32 %v4154, %v4266
    %v4268 = vpop.f32.mrf.mxu0
    %v4269 = vadd.f32 %v4156, %v4268
    %v4270 = vpop.f32.mrf.mxu0
    %v4271 = vadd.f32 %v4158, %v4270
    %v4272 = vpop.f32.mrf.mxu0
    %v4273 = vadd.f32 %v4160, %v4272
    %4274 = vmatprep.mubr.bf16.mxu0 %v864
    %4275 = vmatmul.mubr.bf16.gmra.mxu0 %v863
    %v4276 = vpop.f32.mrf.mxu0
    %v4277 = vadd.f32 %v4164, %v4276
    %v4278 = vpop.f32.mrf.mxu0
    %v4279 = vadd.f32 %v4166, %v4278
    %v4280 = vpop.f32.mrf.mxu0
    %v4281 = vadd.f32 %v4168, %v4280
    %v4282 = vpop.f32.mrf.mxu0
    %v4283 = vadd.f32 %v4170, %v4282
    %4284 = vmatprep.mubr.bf16.mxu0 %v871
    %4285 = vmatmul.mubr.bf16.gmra.mxu0 %v870
    %v4286 = vpop.f32.mrf.mxu0
    %v4287 = vadd.f32 %v4174, %v4286
    %v4288 = vpop.f32.mrf.mxu0
    %v4289 = vadd.f32 %v4176, %v4288
    %v4290 = vpop.f32.mrf.mxu0
    %v4291 = vadd.f32 %v4178, %v4290
    %v4292 = vpop.f32.mrf.mxu0
    %v4293 = vadd.f32 %v4180, %v4292
    %4294 = vmatprep.mubr.bf16.mxu0 %v878
    %4295 = vmatmul.mubr.bf16.gmra.mxu0 %v877
    %v4296 = vpop.f32.mrf.mxu0
    %v4297 = vadd.f32 %v4184, %v4296
    %v4298 = vpop.f32.mrf.mxu0
    %v4299 = vadd.f32 %v4186, %v4298
    %v4300 = vpop.f32.mrf.mxu0
    %v4301 = vadd.f32 %v4188, %v4300
    %v4302 = vpop.f32.mrf.mxu0
    %v4303 = vadd.f32 %v4190, %v4302
    %4304 = vmatprep.mubr.bf16.mxu0 %v885
    %4305 = vmatmul.mubr.bf16.gmra.mxu0 %v884
    %v4306 = vpop.f32.mrf.mxu0
    %v4307 = vadd.f32 %v4194, %v4306
    %v4308 = vpop.f32.mrf.mxu0
    %v4309 = vadd.f32 %v4196, %v4308
    %v4310 = vpop.f32.mrf.mxu0
    %v4311 = vadd.f32 %v4198, %v4310
    %v4312 = vpop.f32.mrf.mxu0
    %v4313 = vadd.f32 %v4200, %v4312
    %4314 = vdwg.mxu0
    %4315 = vmatprep.subr.bf16.mxu0 %v2606
    %4316 = vmatpush1.bf16.msra.mxu0 %v2605
    %4317 = vmatprep.subr.bf16.mxu0 %v2598
    %4318 = vmatpush1.bf16.msra.mxu0 %v2597
    %4319 = vmatprep.subr.bf16.mxu0 %v2590
    %4320 = vmatpush1.bf16.msra.mxu0 %v2589
    %4321 = vmatprep.subr.bf16.mxu0 %v2582
    %4322 = vmatpush1.bf16.msra.mxu0 %v2581
    %4323 = vmatprep.subr.bf16.mxu0 %v2574
    %4324 = vmatpush1.bf16.msra.mxu0 %v2573
    %4325 = vmatprep.subr.bf16.mxu0 %v2566
    %4326 = vmatpush1.bf16.msra.mxu0 %v2565
    %4327 = vmatprep.subr.bf16.mxu0 %v2558
    %4328 = vmatpush1.bf16.msra.mxu0 %v2557
    %4329 = vmatprep.subr.bf16.mxu0 %v2550
    %4330 = vmatpush1.bf16.msra.mxu0 %v2549
    %4331 = vmatprep.subr.bf16.mxu0 %v2670
    %4332 = vmatpush2.bf16.msra.mxu0 %v2669
    %4333 = vmatprep.subr.bf16.mxu0 %v2662
    %4334 = vmatpush2.bf16.msra.mxu0 %v2661
    %4335 = vmatprep.subr.bf16.mxu0 %v2654
    %4336 = vmatpush2.bf16.msra.mxu0 %v2653
    %4337 = vmatprep.subr.bf16.mxu0 %v2646
    %4338 = vmatpush2.bf16.msra.mxu0 %v2645
    %4339 = vmatprep.subr.bf16.mxu0 %v2638
    %4340 = vmatpush2.bf16.msra.mxu0 %v2637
    %4341 = vmatprep.subr.bf16.mxu0 %v2630
    %4342 = vmatpush2.bf16.msra.mxu0 %v2629
    %4343 = vmatprep.subr.bf16.mxu0 %v2622
    %4344 = vmatpush2.bf16.msra.mxu0 %v2621
    %4345 = vmatprep.subr.bf16.mxu0 %v2614
    %4346 = vmatpush2.bf16.msra.mxu0 %v2613
    %4347 = vmatprep.mubr.bf16.mxu0 %v838
    %4348 = vmatmul.mubr.bf16.gmra.mxu0 %v837
    %v4349 = vpop.f32.mrf.mxu0
    %v4350 = vadd.f32 %v4237, %v4349
    %v4351 = vpop.f32.mrf.mxu0
    %v4352 = vadd.f32 %v4239, %v4351
    %v4353 = vpop.f32.mrf.mxu0
    %v4354 = vadd.f32 %v4241, %v4353
    %v4355 = vpop.f32.mrf.mxu0
    %v4356 = vadd.f32 %v4243, %v4355
    %4357 = vmatprep.mubr.bf16.mxu0 %v845
    %4358 = vmatmul.mubr.bf16.gmra.mxu0 %v844
    %v4359 = vpop.f32.mrf.mxu0
    %v4360 = vadd.f32 %v4247, %v4359
    %v4361 = vpop.f32.mrf.mxu0
    %v4362 = vadd.f32 %v4249, %v4361
    %v4363 = vpop.f32.mrf.mxu0
    %v4364 = vadd.f32 %v4251, %v4363
    %v4365 = vpop.f32.mrf.mxu0
    %v4366 = vadd.f32 %v4253, %v4365
    %4367 = vmatprep.mubr.bf16.mxu0 %v852
    %4368 = vmatmul.mubr.bf16.gmra.mxu0 %v851
    %v4369 = vpop.f32.mrf.mxu0
    %v4370 = vadd.f32 %v4257, %v4369
    %v4371 = vpop.f32.mrf.mxu0
    %v4372 = vadd.f32 %v4259, %v4371
    %v4373 = vpop.f32.mrf.mxu0
    %v4374 = vadd.f32 %v4261, %v4373
    %v4375 = vpop.f32.mrf.mxu0
    %v4376 = vadd.f32 %v4263, %v4375
    %4377 = vmatprep.mubr.bf16.mxu0 %v859
    %4378 = vmatmul.mubr.bf16.gmra.mxu0 %v858
    %v4379 = vpop.f32.mrf.mxu0
    %v4380 = vadd.f32 %v4267, %v4379
    %v4381 = vpop.f32.mrf.mxu0
    %v4382 = vadd.f32 %v4269, %v4381
    %v4383 = vpop.f32.mrf.mxu0
    %v4384 = vadd.f32 %v4271, %v4383
    %v4385 = vpop.f32.mrf.mxu0
    %v4386 = vadd.f32 %v4273, %v4385
    %4387 = vmatprep.mubr.bf16.mxu0 %v866
    %4388 = vmatmul.mubr.bf16.gmra.mxu0 %v865
    %v4389 = vpop.f32.mrf.mxu0
    %v4390 = vadd.f32 %v4277, %v4389
    %v4391 = vpop.f32.mrf.mxu0
    %v4392 = vadd.f32 %v4279, %v4391
    %v4393 = vpop.f32.mrf.mxu0
    %v4394 = vadd.f32 %v4281, %v4393
    %v4395 = vpop.f32.mrf.mxu0
    %v4396 = vadd.f32 %v4283, %v4395
    %4397 = vmatprep.mubr.bf16.mxu0 %v873
    %4398 = vmatmul.mubr.bf16.gmra.mxu0 %v872
    %v4399 = vpop.f32.mrf.mxu0
    %v4400 = vadd.f32 %v4287, %v4399
    %v4401 = vpop.f32.mrf.mxu0
    %v4402 = vadd.f32 %v4289, %v4401
    %v4403 = vpop.f32.mrf.mxu0
    %v4404 = vadd.f32 %v4291, %v4403
    %v4405 = vpop.f32.mrf.mxu0
    %v4406 = vadd.f32 %v4293, %v4405
    %4407 = vmatprep.mubr.bf16.mxu0 %v880
    %4408 = vmatmul.mubr.bf16.gmra.mxu0 %v879
    %v4409 = vpop.f32.mrf.mxu0
    %v4410 = vadd.f32 %v4297, %v4409
    %v4411 = vpop.f32.mrf.mxu0
    %v4412 = vadd.f32 %v4299, %v4411
    %v4413 = vpop.f32.mrf.mxu0
    %v4414 = vadd.f32 %v4301, %v4413
    %v4415 = vpop.f32.mrf.mxu0
    %v4416 = vadd.f32 %v4303, %v4415
    %4417 = vmatprep.mubr.bf16.mxu0 %v887
    %4418 = vmatmul.mubr.bf16.gmra.mxu0 %v886
    %v4419 = vpop.f32.mrf.mxu0
    %v4420 = vadd.f32 %v4307, %v4419
    %v4421 = vpop.f32.mrf.mxu0
    %v4422 = vadd.f32 %v4309, %v4421
    %v4423 = vpop.f32.mrf.mxu0
    %v4424 = vadd.f32 %v4311, %v4423
    %v4425 = vpop.f32.mrf.mxu0
    %v4426 = vadd.f32 %v4313, %v4425
    %4427 = vdwg.mxu0
    %4428 = vmatprep.subr.bf16.mxu0 %v2734
    %4429 = vmatpush1.bf16.msra.mxu0 %v2733
    %4430 = vmatprep.subr.bf16.mxu0 %v2726
    %4431 = vmatpush1.bf16.msra.mxu0 %v2725
    %4432 = vmatprep.subr.bf16.mxu0 %v2718
    %4433 = vmatpush1.bf16.msra.mxu0 %v2717
    %4434 = vmatprep.subr.bf16.mxu0 %v2710
    %4435 = vmatpush1.bf16.msra.mxu0 %v2709
    %4436 = vmatprep.subr.bf16.mxu0 %v2702
    %4437 = vmatpush1.bf16.msra.mxu0 %v2701
    %4438 = vmatprep.subr.bf16.mxu0 %v2694
    %4439 = vmatpush1.bf16.msra.mxu0 %v2693
    %4440 = vmatprep.subr.bf16.mxu0 %v2686
    %4441 = vmatpush1.bf16.msra.mxu0 %v2685
    %4442 = vmatprep.subr.bf16.mxu0 %v2678
    %4443 = vmatpush1.bf16.msra.mxu0 %v2677
    %4444 = vmatprep.subr.bf16.mxu0 0
    %4445 = vmatpush2.bf16.msra.mxu0 0
    %4446 = vmatprep.subr.bf16.mxu0 0
    %4447 = vmatpush2.bf16.msra.mxu0 0
    %4448 = vmatprep.subr.bf16.mxu0 0
    %4449 = vmatpush2.bf16.msra.mxu0 0
    %4450 = vmatprep.subr.bf16.mxu0 0
    %4451 = vmatpush2.bf16.msra.mxu0 0
    %4452 = vmatprep.subr.bf16.mxu0 0
    %4453 = vmatpush2.bf16.msra.mxu0 0
    %4454 = vmatprep.subr.bf16.mxu0 0
    %4455 = vmatpush2.bf16.msra.mxu0 0
    %4456 = vmatprep.subr.bf16.mxu0 0
    %4457 = vmatpush2.bf16.msra.mxu0 0
    %4458 = vmatprep.subr.bf16.mxu0 0
    %4459 = vmatpush2.bf16.msra.mxu0 0
    %4460 = vmatprep.mubr.bf16.mxu0 0
    %4461 = vmatmul.mubr.bf16.gmra.mxu0 %v839
    %v4462 = vpop.f32.mrf.mxu0
    %v4463 = vadd.f32 %v4350, %v4462
    %v4464 = vpop.f32.mrf.mxu0
    %v4465 = vadd.f32 %v4352, %v4464
    %v4466 = vpop.f32.mrf.mxu0
    %v4467 = vadd.f32 %v4354, %v4466
    %v4468 = vpop.f32.mrf.mxu0
    %v4469 = vadd.f32 %v4356, %v4468
    %4470 = vmatprep.mubr.bf16.mxu0 0
    %4471 = vmatmul.mubr.bf16.gmra.mxu0 %v846
    %v4472 = vpop.f32.mrf.mxu0
    %v4473 = vadd.f32 %v4360, %v4472
    %v4474 = vpop.f32.mrf.mxu0
    %v4475 = vadd.f32 %v4362, %v4474
    %v4476 = vpop.f32.mrf.mxu0
    %v4477 = vadd.f32 %v4364, %v4476
    %v4478 = vpop.f32.mrf.mxu0
    %v4479 = vadd.f32 %v4366, %v4478
    %4480 = vmatprep.mubr.bf16.mxu0 0
    %4481 = vmatmul.mubr.bf16.gmra.mxu0 %v853
    %v4482 = vpop.f32.mrf.mxu0
    %v4483 = vadd.f32 %v4370, %v4482
    %v4484 = vpop.f32.mrf.mxu0
    %v4485 = vadd.f32 %v4372, %v4484
    %v4486 = vpop.f32.mrf.mxu0
    %v4487 = vadd.f32 %v4374, %v4486
    %v4488 = vpop.f32.mrf.mxu0
    %v4489 = vadd.f32 %v4376, %v4488
    %4490 = vmatprep.mubr.bf16.mxu0 0
    %4491 = vmatmul.mubr.bf16.gmra.mxu0 %v860
    %v4492 = vpop.f32.mrf.mxu0
    %v4493 = vadd.f32 %v4380, %v4492
    %v4494 = vpop.f32.mrf.mxu0
    %v4495 = vadd.f32 %v4382, %v4494
    %v4496 = vpop.f32.mrf.mxu0
    %v4497 = vadd.f32 %v4384, %v4496
    %v4498 = vpop.f32.mrf.mxu0
    %v4499 = vadd.f32 %v4386, %v4498
    %4500 = vmatprep.mubr.bf16.mxu0 0
    %4501 = vmatmul.mubr.bf16.gmra.mxu0 %v867
    %v4502 = vpop.f32.mrf.mxu0
    %v4503 = vadd.f32 %v4390, %v4502
    %v4504 = vpop.f32.mrf.mxu0
    %v4505 = vadd.f32 %v4392, %v4504
    %v4506 = vpop.f32.mrf.mxu0
    %v4507 = vadd.f32 %v4394, %v4506
    %v4508 = vpop.f32.mrf.mxu0
    %v4509 = vadd.f32 %v4396, %v4508
    %4510 = vmatprep.mubr.bf16.mxu0 0
    %4511 = vmatmul.mubr.bf16.gmra.mxu0 %v874
    %v4512 = vpop.f32.mrf.mxu0
    %v4513 = vadd.f32 %v4400, %v4512
    %v4514 = vpop.f32.mrf.mxu0
    %v4515 = vadd.f32 %v4402, %v4514
    %v4516 = vpop.f32.mrf.mxu0
    %v4517 = vadd.f32 %v4404, %v4516
    %v4518 = vpop.f32.mrf.mxu0
    %v4519 = vadd.f32 %v4406, %v4518
    %4520 = vmatprep.mubr.bf16.mxu0 0
    %4521 = vmatmul.mubr.bf16.gmra.mxu0 %v881
    %v4522 = vpop.f32.mrf.mxu0
    %v4523 = vadd.f32 %v4410, %v4522
    %v4524 = vpop.f32.mrf.mxu0
    %v4525 = vadd.f32 %v4412, %v4524
    %v4526 = vpop.f32.mrf.mxu0
    %v4527 = vadd.f32 %v4414, %v4526
    %v4528 = vpop.f32.mrf.mxu0
    %v4529 = vadd.f32 %v4416, %v4528
    %4530 = vmatprep.mubr.bf16.mxu0 0
    %4531 = vmatmul.mubr.bf16.gmra.mxu0 %v888
    %v4532 = vpop.f32.mrf.mxu0
    %v4533 = vadd.f32 %v4420, %v4532
    %v4534 = vpop.f32.mrf.mxu0
    %v4535 = vadd.f32 %v4422, %v4534
    %v4536 = vpop.f32.mrf.mxu0
    %v4537 = vadd.f32 %v4424, %v4536
    %v4538 = vpop.f32.mrf.mxu0
    %v4539 = vadd.f32 %v4426, %v4538
    %4540 = vdwg.mxu0
    %4541 = vmatprep.subr.bf16.mxu0 %v2352
    %4542 = vmatpush1.bf16.msra.mxu0 %v2351
    %4543 = vmatprep.subr.bf16.mxu0 %v2344
    %4544 = vmatpush1.bf16.msra.mxu0 %v2343
    %4545 = vmatprep.subr.bf16.mxu0 %v2336
    %4546 = vmatpush1.bf16.msra.mxu0 %v2335
    %4547 = vmatprep.subr.bf16.mxu0 %v2328
    %4548 = vmatpush1.bf16.msra.mxu0 %v2327
    %4549 = vmatprep.subr.bf16.mxu0 %v2320
    %4550 = vmatpush1.bf16.msra.mxu0 %v2319
    %4551 = vmatprep.subr.bf16.mxu0 %v2312
    %4552 = vmatpush1.bf16.msra.mxu0 %v2311
    %4553 = vmatprep.subr.bf16.mxu0 %v2304
    %4554 = vmatpush1.bf16.msra.mxu0 %v2303
    %4555 = vmatprep.subr.bf16.mxu0 %v2296
    %4556 = vmatpush1.bf16.msra.mxu0 %v2295
    %4557 = vmatprep.subr.bf16.mxu0 %v2416
    %4558 = vmatpush2.bf16.msra.mxu0 %v2415
    %4559 = vmatprep.subr.bf16.mxu0 %v2408
    %4560 = vmatpush2.bf16.msra.mxu0 %v2407
    %4561 = vmatprep.subr.bf16.mxu0 %v2400
    %4562 = vmatpush2.bf16.msra.mxu0 %v2399
    %4563 = vmatprep.subr.bf16.mxu0 %v2392
    %4564 = vmatpush2.bf16.msra.mxu0 %v2391
    %4565 = vmatprep.subr.bf16.mxu0 %v2384
    %4566 = vmatpush2.bf16.msra.mxu0 %v2383
    %4567 = vmatprep.subr.bf16.mxu0 %v2376
    %4568 = vmatpush2.bf16.msra.mxu0 %v2375
    %4569 = vmatprep.subr.bf16.mxu0 %v2368
    %4570 = vmatpush2.bf16.msra.mxu0 %v2367
    %4571 = vmatprep.subr.bf16.mxu0 %v2360
    %4572 = vmatpush2.bf16.msra.mxu0 %v2359
    %4573 = vmatprep.mubr.bf16.mxu0 %v834
    %4574 = vmatmul.mubr.bf16.gmra.mxu0 %v833
    %v4575 = vpop.f32.mrf.mxu0
    %v4576 = vadd.f32 %v644, %v4575
    %v4577 = vpop.f32.mrf.mxu0
    %v4578 = vadd.f32 %v648, %v4577
    %v4579 = vpop.f32.mrf.mxu0
    %v4580 = vadd.f32 %v644, %v4579
    %v4581 = vpop.f32.mrf.mxu0
    %v4582 = vadd.f32 %v648, %v4581
    %4583 = vmatprep.mubr.bf16.mxu0 %v841
    %4584 = vmatmul.mubr.bf16.gmra.mxu0 %v840
    %v4585 = vpop.f32.mrf.mxu0
    %v4586 = vadd.f32 %v644, %v4585
    %v4587 = vpop.f32.mrf.mxu0
    %v4588 = vadd.f32 %v648, %v4587
    %v4589 = vpop.f32.mrf.mxu0
    %v4590 = vadd.f32 %v644, %v4589
    %v4591 = vpop.f32.mrf.mxu0
    %v4592 = vadd.f32 %v648, %v4591
    %4593 = vmatprep.mubr.bf16.mxu0 %v848
    %4594 = vmatmul.mubr.bf16.gmra.mxu0 %v847
    %v4595 = vpop.f32.mrf.mxu0
    %v4596 = vadd.f32 %v644, %v4595
    %v4597 = vpop.f32.mrf.mxu0
    %v4598 = vadd.f32 %v648, %v4597
    %v4599 = vpop.f32.mrf.mxu0
    %v4600 = vadd.f32 %v644, %v4599
    %v4601 = vpop.f32.mrf.mxu0
    %v4602 = vadd.f32 %v648, %v4601
    %4603 = vmatprep.mubr.bf16.mxu0 %v855
    %4604 = vmatmul.mubr.bf16.gmra.mxu0 %v854
    %v4605 = vpop.f32.mrf.mxu0
    %v4606 = vadd.f32 %v644, %v4605
    %v4607 = vpop.f32.mrf.mxu0
    %v4608 = vadd.f32 %v648, %v4607
    %v4609 = vpop.f32.mrf.mxu0
    %v4610 = vadd.f32 %v644, %v4609
    %v4611 = vpop.f32.mrf.mxu0
    %v4612 = vadd.f32 %v648, %v4611
    %4613 = vmatprep.mubr.bf16.mxu0 %v862
    %4614 = vmatmul.mubr.bf16.gmra.mxu0 %v861
    %v4615 = vpop.f32.mrf.mxu0
    %v4616 = vadd.f32 %v644, %v4615
    %v4617 = vpop.f32.mrf.mxu0
    %v4618 = vadd.f32 %v648, %v4617
    %v4619 = vpop.f32.mrf.mxu0
    %v4620 = vadd.f32 %v644, %v4619
    %v4621 = vpop.f32.mrf.mxu0
    %v4622 = vadd.f32 %v648, %v4621
    %4623 = vmatprep.mubr.bf16.mxu0 %v869
    %4624 = vmatmul.mubr.bf16.gmra.mxu0 %v868
    %v4625 = vpop.f32.mrf.mxu0
    %v4626 = vadd.f32 %v644, %v4625
    %v4627 = vpop.f32.mrf.mxu0
    %v4628 = vadd.f32 %v648, %v4627
    %v4629 = vpop.f32.mrf.mxu0
    %v4630 = vadd.f32 %v644, %v4629
    %v4631 = vpop.f32.mrf.mxu0
    %v4632 = vadd.f32 %v648, %v4631
    %4633 = vmatprep.mubr.bf16.mxu0 %v876
    %4634 = vmatmul.mubr.bf16.gmra.mxu0 %v875
    %v4635 = vpop.f32.mrf.mxu0
    %v4636 = vadd.f32 %v644, %v4635
    %v4637 = vpop.f32.mrf.mxu0
    %v4638 = vadd.f32 %v648, %v4637
    %v4639 = vpop.f32.mrf.mxu0
    %v4640 = vadd.f32 %v644, %v4639
    %v4641 = vpop.f32.mrf.mxu0
    %v4642 = vadd.f32 %v648, %v4641
    %4643 = vmatprep.mubr.bf16.mxu0 %v883
    %4644 = vmatmul.mubr.bf16.gmra.mxu0 %v882
    %v4645 = vpop.f32.mrf.mxu0
    %v4646 = vadd.f32 %v644, %v4645
    %v4647 = vpop.f32.mrf.mxu0
    %v4648 = vadd.f32 %v648, %v4647
    %v4649 = vpop.f32.mrf.mxu0
    %v4650 = vadd.f32 %v644, %v4649
    %v4651 = vpop.f32.mrf.mxu0
    %v4652 = vadd.f32 %v648, %v4651
    %4653 = vdwg.mxu0
    %4654 = vmatprep.subr.bf16.mxu0 %v2480
    %4655 = vmatpush1.bf16.msra.mxu0 %v2479
    %4656 = vmatprep.subr.bf16.mxu0 %v2472
    %4657 = vmatpush1.bf16.msra.mxu0 %v2471
    %4658 = vmatprep.subr.bf16.mxu0 %v2464
    %4659 = vmatpush1.bf16.msra.mxu0 %v2463
    %4660 = vmatprep.subr.bf16.mxu0 %v2456
    %4661 = vmatpush1.bf16.msra.mxu0 %v2455
    %4662 = vmatprep.subr.bf16.mxu0 %v2448
    %4663 = vmatpush1.bf16.msra.mxu0 %v2447
    %4664 = vmatprep.subr.bf16.mxu0 %v2440
    %4665 = vmatpush1.bf16.msra.mxu0 %v2439
    %4666 = vmatprep.subr.bf16.mxu0 %v2432
    %4667 = vmatpush1.bf16.msra.mxu0 %v2431
    %4668 = vmatprep.subr.bf16.mxu0 %v2424
    %4669 = vmatpush1.bf16.msra.mxu0 %v2423
    %4670 = vmatprep.subr.bf16.mxu0 %v2544
    %4671 = vmatpush2.bf16.msra.mxu0 %v2543
    %4672 = vmatprep.subr.bf16.mxu0 %v2536
    %4673 = vmatpush2.bf16.msra.mxu0 %v2535
    %4674 = vmatprep.subr.bf16.mxu0 %v2528
    %4675 = vmatpush2.bf16.msra.mxu0 %v2527
    %4676 = vmatprep.subr.bf16.mxu0 %v2520
    %4677 = vmatpush2.bf16.msra.mxu0 %v2519
    %4678 = vmatprep.subr.bf16.mxu0 %v2512
    %4679 = vmatpush2.bf16.msra.mxu0 %v2511
    %4680 = vmatprep.subr.bf16.mxu0 %v2504
    %4681 = vmatpush2.bf16.msra.mxu0 %v2503
    %4682 = vmatprep.subr.bf16.mxu0 %v2496
    %4683 = vmatpush2.bf16.msra.mxu0 %v2495
    %4684 = vmatprep.subr.bf16.mxu0 %v2488
    %4685 = vmatpush2.bf16.msra.mxu0 %v2487
    %4686 = vmatprep.mubr.bf16.mxu0 %v836
    %4687 = vmatmul.mubr.bf16.gmra.mxu0 %v835
    %v4688 = vpop.f32.mrf.mxu0
    %v4689 = vadd.f32 %v4576, %v4688
    %v4690 = vpop.f32.mrf.mxu0
    %v4691 = vadd.f32 %v4578, %v4690
    %v4692 = vpop.f32.mrf.mxu0
    %v4693 = vadd.f32 %v4580, %v4692
    %v4694 = vpop.f32.mrf.mxu0
    %v4695 = vadd.f32 %v4582, %v4694
    %4696 = vmatprep.mubr.bf16.mxu0 %v843
    %4697 = vmatmul.mubr.bf16.gmra.mxu0 %v842
    %v4698 = vpop.f32.mrf.mxu0
    %v4699 = vadd.f32 %v4586, %v4698
    %v4700 = vpop.f32.mrf.mxu0
    %v4701 = vadd.f32 %v4588, %v4700
    %v4702 = vpop.f32.mrf.mxu0
    %v4703 = vadd.f32 %v4590, %v4702
    %v4704 = vpop.f32.mrf.mxu0
    %v4705 = vadd.f32 %v4592, %v4704
    %4706 = vmatprep.mubr.bf16.mxu0 %v850
    %4707 = vmatmul.mubr.bf16.gmra.mxu0 %v849
    %v4708 = vpop.f32.mrf.mxu0
    %v4709 = vadd.f32 %v4596, %v4708
    %v4710 = vpop.f32.mrf.mxu0
    %v4711 = vadd.f32 %v4598, %v4710
    %v4712 = vpop.f32.mrf.mxu0
    %v4713 = vadd.f32 %v4600, %v4712
    %v4714 = vpop.f32.mrf.mxu0
    %v4715 = vadd.f32 %v4602, %v4714
    %4716 = vmatprep.mubr.bf16.mxu0 %v857
    %4717 = vmatmul.mubr.bf16.gmra.mxu0 %v856
    %v4718 = vpop.f32.mrf.mxu0
    %v4719 = vadd.f32 %v4606, %v4718
    %v4720 = vpop.f32.mrf.mxu0
    %v4721 = vadd.f32 %v4608, %v4720
    %v4722 = vpop.f32.mrf.mxu0
    %v4723 = vadd.f32 %v4610, %v4722
    %v4724 = vpop.f32.mrf.mxu0
    %v4725 = vadd.f32 %v4612, %v4724
    %4726 = vmatprep.mubr.bf16.mxu0 %v864
    %4727 = vmatmul.mubr.bf16.gmra.mxu0 %v863
    %v4728 = vpop.f32.mrf.mxu0
    %v4729 = vadd.f32 %v4616, %v4728
    %v4730 = vpop.f32.mrf.mxu0
    %v4731 = vadd.f32 %v4618, %v4730
    %v4732 = vpop.f32.mrf.mxu0
    %v4733 = vadd.f32 %v4620, %v4732
    %v4734 = vpop.f32.mrf.mxu0
    %v4735 = vadd.f32 %v4622, %v4734
    %4736 = vmatprep.mubr.bf16.mxu0 %v871
    %4737 = vmatmul.mubr.bf16.gmra.mxu0 %v870
    %v4738 = vpop.f32.mrf.mxu0
    %v4739 = vadd.f32 %v4626, %v4738
    %v4740 = vpop.f32.mrf.mxu0
    %v4741 = vadd.f32 %v4628, %v4740
    %v4742 = vpop.f32.mrf.mxu0
    %v4743 = vadd.f32 %v4630, %v4742
    %v4744 = vpop.f32.mrf.mxu0
    %v4745 = vadd.f32 %v4632, %v4744
    %4746 = vmatprep.mubr.bf16.mxu0 %v878
    %4747 = vmatmul.mubr.bf16.gmra.mxu0 %v877
    %v4748 = vpop.f32.mrf.mxu0
    %v4749 = vadd.f32 %v4636, %v4748
    %v4750 = vpop.f32.mrf.mxu0
    %v4751 = vadd.f32 %v4638, %v4750
    %v4752 = vpop.f32.mrf.mxu0
    %v4753 = vadd.f32 %v4640, %v4752
    %v4754 = vpop.f32.mrf.mxu0
    %v4755 = vadd.f32 %v4642, %v4754
    %4756 = vmatprep.mubr.bf16.mxu0 %v885
    %4757 = vmatmul.mubr.bf16.gmra.mxu0 %v884
    %v4758 = vpop.f32.mrf.mxu0
    %v4759 = vadd.f32 %v4646, %v4758
    %v4760 = vpop.f32.mrf.mxu0
    %v4761 = vadd.f32 %v4648, %v4760
    %v4762 = vpop.f32.mrf.mxu0
    %v4763 = vadd.f32 %v4650, %v4762
    %v4764 = vpop.f32.mrf.mxu0
    %v4765 = vadd.f32 %v4652, %v4764
    %4766 = vdwg.mxu0
    %4767 = vmatprep.subr.bf16.mxu0 %v2608
    %4768 = vmatpush1.bf16.msra.mxu0 %v2607
    %4769 = vmatprep.subr.bf16.mxu0 %v2600
    %4770 = vmatpush1.bf16.msra.mxu0 %v2599
    %4771 = vmatprep.subr.bf16.mxu0 %v2592
    %4772 = vmatpush1.bf16.msra.mxu0 %v2591
    %4773 = vmatprep.subr.bf16.mxu0 %v2584
    %4774 = vmatpush1.bf16.msra.mxu0 %v2583
    %4775 = vmatprep.subr.bf16.mxu0 %v2576
    %4776 = vmatpush1.bf16.msra.mxu0 %v2575
    %4777 = vmatprep.subr.bf16.mxu0 %v2568
    %4778 = vmatpush1.bf16.msra.mxu0 %v2567
    %4779 = vmatprep.subr.bf16.mxu0 %v2560
    %4780 = vmatpush1.bf16.msra.mxu0 %v2559
    %4781 = vmatprep.subr.bf16.mxu0 %v2552
    %4782 = vmatpush1.bf16.msra.mxu0 %v2551
    %4783 = vmatprep.subr.bf16.mxu0 %v2672
    %4784 = vmatpush2.bf16.msra.mxu0 %v2671
    %4785 = vmatprep.subr.bf16.mxu0 %v2664
    %4786 = vmatpush2.bf16.msra.mxu0 %v2663
    %4787 = vmatprep.subr.bf16.mxu0 %v2656
    %4788 = vmatpush2.bf16.msra.mxu0 %v2655
    %4789 = vmatprep.subr.bf16.mxu0 %v2648
    %4790 = vmatpush2.bf16.msra.mxu0 %v2647
    %4791 = vmatprep.subr.bf16.mxu0 %v2640
    %4792 = vmatpush2.bf16.msra.mxu0 %v2639
    %4793 = vmatprep.subr.bf16.mxu0 %v2632
    %4794 = vmatpush2.bf16.msra.mxu0 %v2631
    %4795 = vmatprep.subr.bf16.mxu0 %v2624
    %4796 = vmatpush2.bf16.msra.mxu0 %v2623
    %4797 = vmatprep.subr.bf16.mxu0 %v2616
    %4798 = vmatpush2.bf16.msra.mxu0 %v2615
    %4799 = vmatprep.mubr.bf16.mxu0 %v838
    %4800 = vmatmul.mubr.bf16.gmra.mxu0 %v837
    %v4801 = vpop.f32.mrf.mxu0
    %v4802 = vadd.f32 %v4689, %v4801
    %v4803 = vpop.f32.mrf.mxu0
    %v4804 = vadd.f32 %v4691, %v4803
    %v4805 = vpop.f32.mrf.mxu0
    %v4806 = vadd.f32 %v4693, %v4805
    %v4807 = vpop.f32.mrf.mxu0
    %v4808 = vadd.f32 %v4695, %v4807
    %4809 = vmatprep.mubr.bf16.mxu0 %v845
    %4810 = vmatmul.mubr.bf16.gmra.mxu0 %v844
    %v4811 = vpop.f32.mrf.mxu0
    %v4812 = vadd.f32 %v4699, %v4811
    %v4813 = vpop.f32.mrf.mxu0
    %v4814 = vadd.f32 %v4701, %v4813
    %v4815 = vpop.f32.mrf.mxu0
    %v4816 = vadd.f32 %v4703, %v4815
    %v4817 = vpop.f32.mrf.mxu0
    %v4818 = vadd.f32 %v4705, %v4817
    %4819 = vmatprep.mubr.bf16.mxu0 %v852
    %4820 = vmatmul.mubr.bf16.gmra.mxu0 %v851
    %v4821 = vpop.f32.mrf.mxu0
    %v4822 = vadd.f32 %v4709, %v4821
    %v4823 = vpop.f32.mrf.mxu0
    %v4824 = vadd.f32 %v4711, %v4823
    %v4825 = vpop.f32.mrf.mxu0
    %v4826 = vadd.f32 %v4713, %v4825
    %v4827 = vpop.f32.mrf.mxu0
    %v4828 = vadd.f32 %v4715, %v4827
    %4829 = vmatprep.mubr.bf16.mxu0 %v859
    %4830 = vmatmul.mubr.bf16.gmra.mxu0 %v858
    %v4831 = vpop.f32.mrf.mxu0
    %v4832 = vadd.f32 %v4719, %v4831
    %v4833 = vpop.f32.mrf.mxu0
    %v4834 = vadd.f32 %v4721, %v4833
    %v4835 = vpop.f32.mrf.mxu0
    %v4836 = vadd.f32 %v4723, %v4835
    %v4837 = vpop.f32.mrf.mxu0
    %v4838 = vadd.f32 %v4725, %v4837
    %4839 = vmatprep.mubr.bf16.mxu0 %v866
    %4840 = vmatmul.mubr.bf16.gmra.mxu0 %v865
    %v4841 = vpop.f32.mrf.mxu0
    %v4842 = vadd.f32 %v4729, %v4841
    %v4843 = vpop.f32.mrf.mxu0
    %v4844 = vadd.f32 %v4731, %v4843
    %v4845 = vpop.f32.mrf.mxu0
    %v4846 = vadd.f32 %v4733, %v4845
    %v4847 = vpop.f32.mrf.mxu0
    %v4848 = vadd.f32 %v4735, %v4847
    %4849 = vmatprep.mubr.bf16.mxu0 %v873
    %4850 = vmatmul.mubr.bf16.gmra.mxu0 %v872
    %v4851 = vpop.f32.mrf.mxu0
    %v4852 = vadd.f32 %v4739, %v4851
    %v4853 = vpop.f32.mrf.mxu0
    %v4854 = vadd.f32 %v4741, %v4853
    %v4855 = vpop.f32.mrf.mxu0
    %v4856 = vadd.f32 %v4743, %v4855
    %v4857 = vpop.f32.mrf.mxu0
    %v4858 = vadd.f32 %v4745, %v4857
    %4859 = vmatprep.mubr.bf16.mxu0 %v880
    %4860 = vmatmul.mubr.bf16.gmra.mxu0 %v879
    %v4861 = vpop.f32.mrf.mxu0
    %v4862 = vadd.f32 %v4749, %v4861
    %v4863 = vpop.f32.mrf.mxu0
    %v4864 = vadd.f32 %v4751, %v4863
    %v4865 = vpop.f32.mrf.mxu0
    %v4866 = vadd.f32 %v4753, %v4865
    %v4867 = vpop.f32.mrf.mxu0
    %v4868 = vadd.f32 %v4755, %v4867
    %4869 = vmatprep.mubr.bf16.mxu0 %v887
    %4870 = vmatmul.mubr.bf16.gmra.mxu0 %v886
    %v4871 = vpop.f32.mrf.mxu0
    %v4872 = vadd.f32 %v4759, %v4871
    %v4873 = vpop.f32.mrf.mxu0
    %v4874 = vadd.f32 %v4761, %v4873
    %v4875 = vpop.f32.mrf.mxu0
    %v4876 = vadd.f32 %v4763, %v4875
    %v4877 = vpop.f32.mrf.mxu0
    %v4878 = vadd.f32 %v4765, %v4877
    %4879 = vdwg.mxu0
    %4880 = vmatprep.subr.bf16.mxu0 %v2736
    %4881 = vmatpush1.bf16.msra.mxu0 %v2735
    %4882 = vmatprep.subr.bf16.mxu0 %v2728
    %4883 = vmatpush1.bf16.msra.mxu0 %v2727
    %4884 = vmatprep.subr.bf16.mxu0 %v2720
    %4885 = vmatpush1.bf16.msra.mxu0 %v2719
    %4886 = vmatprep.subr.bf16.mxu0 %v2712
    %4887 = vmatpush1.bf16.msra.mxu0 %v2711
    %4888 = vmatprep.subr.bf16.mxu0 %v2704
    %4889 = vmatpush1.bf16.msra.mxu0 %v2703
    %4890 = vmatprep.subr.bf16.mxu0 %v2696
    %4891 = vmatpush1.bf16.msra.mxu0 %v2695
    %4892 = vmatprep.subr.bf16.mxu0 %v2688
    %4893 = vmatpush1.bf16.msra.mxu0 %v2687
    %4894 = vmatprep.subr.bf16.mxu0 %v2680
    %4895 = vmatpush1.bf16.msra.mxu0 %v2679
    %4896 = vmatprep.subr.bf16.mxu0 0
    %4897 = vmatpush2.bf16.msra.mxu0 0
    %4898 = vmatprep.subr.bf16.mxu0 0
    %4899 = vmatpush2.bf16.msra.mxu0 0
    %4900 = vmatprep.subr.bf16.mxu0 0
    %4901 = vmatpush2.bf16.msra.mxu0 0
    %4902 = vmatprep.subr.bf16.mxu0 0
    %4903 = vmatpush2.bf16.msra.mxu0 0
    %4904 = vmatprep.subr.bf16.mxu0 0
    %4905 = vmatpush2.bf16.msra.mxu0 0
    %4906 = vmatprep.subr.bf16.mxu0 0
    %4907 = vmatpush2.bf16.msra.mxu0 0
    %4908 = vmatprep.subr.bf16.mxu0 0
    %4909 = vmatpush2.bf16.msra.mxu0 0
    %4910 = vmatprep.subr.bf16.mxu0 0
    %4911 = vmatpush2.bf16.msra.mxu0 0
    %4912 = vmatprep.mubr.bf16.mxu0 0
    %4913 = vmatmul.mubr.bf16.gmra.mxu0 %v839
    %v4914 = vpop.f32.mrf.mxu0
    %v4915 = vadd.f32 %v4802, %v4914
    %v4916 = vpop.f32.mrf.mxu0
    %v4917 = vadd.f32 %v4804, %v4916
    %v4918 = vpop.f32.mrf.mxu0
    %v4919 = vadd.f32 %v4806, %v4918
    %v4920 = vpop.f32.mrf.mxu0
    %v4921 = vadd.f32 %v4808, %v4920
    %4922 = vmatprep.mubr.bf16.mxu0 0
    %4923 = vmatmul.mubr.bf16.gmra.mxu0 %v846
    %v4924 = vpop.f32.mrf.mxu0
    %v4925 = vadd.f32 %v4812, %v4924
    %v4926 = vpop.f32.mrf.mxu0
    %v4927 = vadd.f32 %v4814, %v4926
    %v4928 = vpop.f32.mrf.mxu0
    %v4929 = vadd.f32 %v4816, %v4928
    %v4930 = vpop.f32.mrf.mxu0
    %v4931 = vadd.f32 %v4818, %v4930
    %4932 = vmatprep.mubr.bf16.mxu0 0
    %4933 = vmatmul.mubr.bf16.gmra.mxu0 %v853
    %v4934 = vpop.f32.mrf.mxu0
    %v4935 = vadd.f32 %v4822, %v4934
    %v4936 = vpop.f32.mrf.mxu0
    %v4937 = vadd.f32 %v4824, %v4936
    %v4938 = vpop.f32.mrf.mxu0
    %v4939 = vadd.f32 %v4826, %v4938
    %v4940 = vpop.f32.mrf.mxu0
    %v4941 = vadd.f32 %v4828, %v4940
    %4942 = vmatprep.mubr.bf16.mxu0 0
    %4943 = vmatmul.mubr.bf16.gmra.mxu0 %v860
    %v4944 = vpop.f32.mrf.mxu0
    %v4945 = vadd.f32 %v4832, %v4944
    %v4946 = vpop.f32.mrf.mxu0
    %v4947 = vadd.f32 %v4834, %v4946
    %v4948 = vpop.f32.mrf.mxu0
    %v4949 = vadd.f32 %v4836, %v4948
    %v4950 = vpop.f32.mrf.mxu0
    %v4951 = vadd.f32 %v4838, %v4950
    %4952 = vmatprep.mubr.bf16.mxu0 0
    %4953 = vmatmul.mubr.bf16.gmra.mxu0 %v867
    %v4954 = vpop.f32.mrf.mxu0
    %v4955 = vadd.f32 %v4842, %v4954
    %v4956 = vpop.f32.mrf.mxu0
    %v4957 = vadd.f32 %v4844, %v4956
    %v4958 = vpop.f32.mrf.mxu0
    %v4959 = vadd.f32 %v4846, %v4958
    %v4960 = vpop.f32.mrf.mxu0
    %v4961 = vadd.f32 %v4848, %v4960
    %4962 = vmatprep.mubr.bf16.mxu0 0
    %4963 = vmatmul.mubr.bf16.gmra.mxu0 %v874
    %v4964 = vpop.f32.mrf.mxu0
    %v4965 = vadd.f32 %v4852, %v4964
    %v4966 = vpop.f32.mrf.mxu0
    %v4967 = vadd.f32 %v4854, %v4966
    %v4968 = vpop.f32.mrf.mxu0
    %v4969 = vadd.f32 %v4856, %v4968
    %v4970 = vpop.f32.mrf.mxu0
    %v4971 = vadd.f32 %v4858, %v4970
    %4972 = vmatprep.mubr.bf16.mxu0 0
    %4973 = vmatmul.mubr.bf16.gmra.mxu0 %v881
    %v4974 = vpop.f32.mrf.mxu0
    %v4975 = vadd.f32 %v4862, %v4974
    %v4976 = vpop.f32.mrf.mxu0
    %v4977 = vadd.f32 %v4864, %v4976
    %v4978 = vpop.f32.mrf.mxu0
    %v4979 = vadd.f32 %v4866, %v4978
    %v4980 = vpop.f32.mrf.mxu0
    %v4981 = vadd.f32 %v4868, %v4980
    %4982 = vmatprep.mubr.bf16.mxu0 0
    %4983 = vmatmul.mubr.bf16.gmra.mxu0 %v888
    %v4984 = vpop.f32.mrf.mxu0
    %v4985 = vadd.f32 %v4872, %v4984
    %v4986 = vpop.f32.mrf.mxu0
    %v4987 = vadd.f32 %v4874, %v4986
    %v4988 = vpop.f32.mrf.mxu0
    %v4989 = vadd.f32 %v4876, %v4988
    %v4990 = vpop.f32.mrf.mxu0
    %v4991 = vadd.f32 %v4878, %v4990
    %4992 = vdwg.mxu0
    %v4993 = vmax.f32 %v3559, 0.0
    %v4994 = vmax.f32 %v3561, 0.0
    %v4995 = vmax.f32 %v4011, 0.0
    %v4996 = vmax.f32 %v4013, 0.0
    %v4997 = vmax.f32 %v4463, 0.0
    %v4998 = vmax.f32 %v4465, 0.0
    %v4999 = vmax.f32 %v4915, 0.0
    %v5000 = vmax.f32 %v4917, 0.0
    %v5001 = vmax.f32 %v3563, 0.0
    %v5002 = vmax.f32 %v3565, 0.0
    %v5003 = vmax.f32 %v4015, 0.0
    %v5004 = vmax.f32 %v4017, 0.0
    %v5005 = vmax.f32 %v4467, 0.0
    %v5006 = vmax.f32 %v4469, 0.0
    %v5007 = vmax.f32 %v4919, 0.0
    %v5008 = vmax.f32 %v4921, 0.0
    %v5009 = vmax.f32 %v3569, 0.0
    %v5010 = vmax.f32 %v3571, 0.0
    %v5011 = vmax.f32 %v4021, 0.0
    %v5012 = vmax.f32 %v4023, 0.0
    %v5013 = vmax.f32 %v4473, 0.0
    %v5014 = vmax.f32 %v4475, 0.0
    %v5015 = vmax.f32 %v4925, 0.0
    %v5016 = vmax.f32 %v4927, 0.0
    %v5017 = vmax.f32 %v3573, 0.0
    %v5018 = vmax.f32 %v3575, 0.0
    %v5019 = vmax.f32 %v4025, 0.0
    %v5020 = vmax.f32 %v4027, 0.0
    %v5021 = vmax.f32 %v4477, 0.0
    %v5022 = vmax.f32 %v4479, 0.0
    %v5023 = vmax.f32 %v4929, 0.0
    %v5024 = vmax.f32 %v4931, 0.0
    %v5025 = vmax.f32 %v3579, 0.0
    %v5026 = vmax.f32 %v3581, 0.0
    %v5027 = vmax.f32 %v4031, 0.0
    %v5028 = vmax.f32 %v4033, 0.0
    %v5029 = vmax.f32 %v4483, 0.0
    %v5030 = vmax.f32 %v4485, 0.0
    %v5031 = vmax.f32 %v4935, 0.0
    %v5032 = vmax.f32 %v4937, 0.0
    %v5033 = vmax.f32 %v3583, 0.0
    %v5034 = vmax.f32 %v3585, 0.0
    %v5035 = vmax.f32 %v4035, 0.0
    %v5036 = vmax.f32 %v4037, 0.0
    %v5037 = vmax.f32 %v4487, 0.0
    %v5038 = vmax.f32 %v4489, 0.0
    %v5039 = vmax.f32 %v4939, 0.0
    %v5040 = vmax.f32 %v4941, 0.0
    %v5041 = vmax.f32 %v3589, 0.0
    %v5042 = vmax.f32 %v3591, 0.0
    %v5043 = vmax.f32 %v4041, 0.0
    %v5044 = vmax.f32 %v4043, 0.0
    %v5045 = vmax.f32 %v4493, 0.0
    %v5046 = vmax.f32 %v4495, 0.0
    %v5047 = vmax.f32 %v4945, 0.0
    %v5048 = vmax.f32 %v4947, 0.0
    %v5049 = vmax.f32 %v3593, 0.0
    %v5050 = vmax.f32 %v3595, 0.0
    %v5051 = vmax.f32 %v4045, 0.0
    %v5052 = vmax.f32 %v4047, 0.0
    %v5053 = vmax.f32 %v4497, 0.0
    %v5054 = vmax.f32 %v4499, 0.0
    %v5055 = vmax.f32 %v4949, 0.0
    %v5056 = vmax.f32 %v4951, 0.0
    %v5057 = vmax.f32 %v3599, 0.0
    %v5058 = vmax.f32 %v3601, 0.0
    %v5059 = vmax.f32 %v4051, 0.0
    %v5060 = vmax.f32 %v4053, 0.0
    %v5061 = vmax.f32 %v4503, 0.0
    %v5062 = vmax.f32 %v4505, 0.0
    %v5063 = vmax.f32 %v4955, 0.0
    %v5064 = vmax.f32 %v4957, 0.0
    %v5065 = vmax.f32 %v3603, 0.0
    %v5066 = vmax.f32 %v3605, 0.0
    %v5067 = vmax.f32 %v4055, 0.0
    %v5068 = vmax.f32 %v4057, 0.0
    %v5069 = vmax.f32 %v4507, 0.0
    %v5070 = vmax.f32 %v4509, 0.0
    %v5071 = vmax.f32 %v4959, 0.0
    %v5072 = vmax.f32 %v4961, 0.0
    %v5073 = vmax.f32 %v3609, 0.0
    %v5074 = vmax.f32 %v3611, 0.0
    %v5075 = vmax.f32 %v4061, 0.0
    %v5076 = vmax.f32 %v4063, 0.0
    %v5077 = vmax.f32 %v4513, 0.0
    %v5078 = vmax.f32 %v4515, 0.0
    %v5079 = vmax.f32 %v4965, 0.0
    %v5080 = vmax.f32 %v4967, 0.0
    %v5081 = vmax.f32 %v3613, 0.0
    %v5082 = vmax.f32 %v3615, 0.0
    %v5083 = vmax.f32 %v4065, 0.0
    %v5084 = vmax.f32 %v4067, 0.0
    %v5085 = vmax.f32 %v4517, 0.0
    %v5086 = vmax.f32 %v4519, 0.0
    %v5087 = vmax.f32 %v4969, 0.0
    %v5088 = vmax.f32 %v4971, 0.0
    %v5089 = vmax.f32 %v3619, 0.0
    %v5090 = vmax.f32 %v3621, 0.0
    %v5091 = vmax.f32 %v4071, 0.0
    %v5092 = vmax.f32 %v4073, 0.0
    %v5093 = vmax.f32 %v4523, 0.0
    %v5094 = vmax.f32 %v4525, 0.0
    %v5095 = vmax.f32 %v4975, 0.0
    %v5096 = vmax.f32 %v4977, 0.0
    %v5097 = vmax.f32 %v3623, 0.0
    %v5098 = vmax.f32 %v3625, 0.0
    %v5099 = vmax.f32 %v4075, 0.0
    %v5100 = vmax.f32 %v4077, 0.0
    %v5101 = vmax.f32 %v4527, 0.0
    %v5102 = vmax.f32 %v4529, 0.0
    %v5103 = vmax.f32 %v4979, 0.0
    %v5104 = vmax.f32 %v4981, 0.0
    %v5105 = vmax.f32 %v3629, 0.0
    %v5106 = vmax.f32 %v3631, 0.0
    %v5107 = vmax.f32 %v4081, 0.0
    %v5108 = vmax.f32 %v4083, 0.0
    %v5109 = vmax.f32 %v4533, 0.0
    %v5110 = vmax.f32 %v4535, 0.0
    %v5111 = vmax.f32 %v4985, 0.0
    %v5112 = vmax.f32 %v4987, 0.0
    %v5113 = vmax.f32 %v3633, 0.0
    %v5114 = vmax.f32 %v3635, 0.0
    %v5115 = vmax.f32 %v4085, 0.0
    %v5116 = vmax.f32 %v4087, 0.0
    %v5117 = vmax.f32 %v4537, 0.0
    %v5118 = vmax.f32 %v4539, 0.0
    %v5119 = vmax.f32 %v4989, 0.0
    %v5120 = vmax.f32 %v4991, 0.0
    %v5121 = vpack.c.bf16 %v5001, %v4993
    %v5122 = vpack.c.bf16 %v5002, %v4994
    %v5123 = vpack.c.bf16 %v5003, %v4995
    %v5124 = vpack.c.bf16 %v5004, %v4996
    %v5125 = vpack.c.bf16 %v5005, %v4997
    %v5126 = vpack.c.bf16 %v5006, %v4998
    %v5127 = vpack.c.bf16 %v5007, %v4999
    %v5128 = vpack.c.bf16 %v5008, %v5000
    %v5129 = vpack.c.bf16 %v5017, %v5009
    %v5130 = vpack.c.bf16 %v5018, %v5010
    %v5131 = vpack.c.bf16 %v5019, %v5011
    %v5132 = vpack.c.bf16 %v5020, %v5012
    %v5133 = vpack.c.bf16 %v5021, %v5013
    %v5134 = vpack.c.bf16 %v5022, %v5014
    %v5135 = vpack.c.bf16 %v5023, %v5015
    %v5136 = vpack.c.bf16 %v5024, %v5016
    %v5137 = vpack.c.bf16 %v5033, %v5025
    %v5138 = vpack.c.bf16 %v5034, %v5026
    %v5139 = vpack.c.bf16 %v5035, %v5027
    %v5140 = vpack.c.bf16 %v5036, %v5028
    %v5141 = vpack.c.bf16 %v5037, %v5029
    %v5142 = vpack.c.bf16 %v5038, %v5030
    %v5143 = vpack.c.bf16 %v5039, %v5031
    %v5144 = vpack.c.bf16 %v5040, %v5032
    %v5145 = vpack.c.bf16 %v5049, %v5041
    %v5146 = vpack.c.bf16 %v5050, %v5042
    %v5147 = vpack.c.bf16 %v5051, %v5043
    %v5148 = vpack.c.bf16 %v5052, %v5044
    %v5149 = vpack.c.bf16 %v5053, %v5045
    %v5150 = vpack.c.bf16 %v5054, %v5046
    %v5151 = vpack.c.bf16 %v5055, %v5047
    %v5152 = vpack.c.bf16 %v5056, %v5048
    %v5153 = vpack.c.bf16 %v5065, %v5057
    %v5154 = vpack.c.bf16 %v5066, %v5058
    %v5155 = vpack.c.bf16 %v5067, %v5059
    %v5156 = vpack.c.bf16 %v5068, %v5060
    %v5157 = vpack.c.bf16 %v5069, %v5061
    %v5158 = vpack.c.bf16 %v5070, %v5062
    %v5159 = vpack.c.bf16 %v5071, %v5063
    %v5160 = vpack.c.bf16 %v5072, %v5064
    %v5161 = vpack.c.bf16 %v5081, %v5073
    %v5162 = vpack.c.bf16 %v5082, %v5074
    %v5163 = vpack.c.bf16 %v5083, %v5075
    %v5164 = vpack.c.bf16 %v5084, %v5076
    %v5165 = vpack.c.bf16 %v5085, %v5077
    %v5166 = vpack.c.bf16 %v5086, %v5078
    %v5167 = vpack.c.bf16 %v5087, %v5079
    %v5168 = vpack.c.bf16 %v5088, %v5080
    %v5169 = vpack.c.bf16 %v5097, %v5089
    %v5170 = vpack.c.bf16 %v5098, %v5090
    %v5171 = vpack.c.bf16 %v5099, %v5091
    %v5172 = vpack.c.bf16 %v5100, %v5092
    %v5173 = vpack.c.bf16 %v5101, %v5093
    %v5174 = vpack.c.bf16 %v5102, %v5094
    %v5175 = vpack.c.bf16 %v5103, %v5095
    %v5176 = vpack.c.bf16 %v5104, %v5096
    %v5177 = vpack.c.bf16 %v5113, %v5105
    %v5178 = vpack.c.bf16 %v5114, %v5106
    %v5179 = vpack.c.bf16 %v5115, %v5107
    %v5180 = vpack.c.bf16 %v5116, %v5108
    %v5181 = vpack.c.bf16 %v5117, %v5109
    %v5182 = vpack.c.bf16 %v5118, %v5110
    %v5183 = vpack.c.bf16 %v5119, %v5111
    %v5184 = vpack.c.bf16 %v5120, %v5112
    %v5185 = vld [vmem:[#allocation6] sm:$0xff]
    %v5186 = vld [vmem:[#allocation6 + $0x8] sm:$0xff]
    %v5187 = vld [vmem:[#allocation6 + $0x10] sm:$0xff]
    %v5188 = vld [vmem:[#allocation6 + $0x18] sm:$0xff]
    %v5189 = vld [vmem:[#allocation6 + $0x20] sm:$0xff]
    %v5190 = vld [vmem:[#allocation6 + $0x28] sm:$0xff]
    %v5191 = vld [vmem:[#allocation6 + $0x30] sm:$0xff]
    %v5192 = vld [vmem:[#allocation6 + $0x38] sm:$0xff]
    %v5193 = vld [vmem:[#allocation6 + $0x40] sm:$0xff]
    %v5194 = vld [vmem:[#allocation6 + $0x48] sm:$0xff]
    %v5195 = vld [vmem:[#allocation6 + $0x50] sm:$0xff]
    %v5196 = vld [vmem:[#allocation6 + $0x58] sm:$0xff]
    %v5197 = vld [vmem:[#allocation6 + $0x60] sm:$0xff]
    %v5198 = vld [vmem:[#allocation6 + $0x68] sm:$0xff]
    %v5199 = vld [vmem:[#allocation6 + $0x70] sm:$0xff]
    %v5200 = vld [vmem:[#allocation6 + $0x78] sm:$0xff]
    %v5201 = vld [vmem:[#allocation6 + $0x80] sm:$0xff]
    %v5202 = vld [vmem:[#allocation6 + $0x88] sm:$0xff]
    %v5203 = vld [vmem:[#allocation6 + $0x90] sm:$0xff]
    %v5204 = vld [vmem:[#allocation6 + $0x98] sm:$0xff]
    %v5205 = vld [vmem:[#allocation6 + $0xa0] sm:$0xff]
    %v5206 = vld [vmem:[#allocation6 + $0xa8] sm:$0xff]
    %v5207 = vld [vmem:[#allocation6 + $0xb0] sm:$0xff]
    %v5208 = vld [vmem:[#allocation6 + $0xb8] sm:$0xff]
    %v5209 = vld [vmem:[#allocation6 + $0xc0] sm:$0xff]
    %v5210 = vld [vmem:[#allocation6 + $0xc8] sm:$0xff]
    %v5211 = vld [vmem:[#allocation6 + $0xd0] sm:$0xff]
    %v5212 = vld [vmem:[#allocation6 + $0xd8] sm:$0xff]
    %v5213 = vld [vmem:[#allocation6 + $0xe0] sm:$0xff]
    %v5214 = vld [vmem:[#allocation6 + $0xe8] sm:$0xff]
    %v5215 = vld [vmem:[#allocation6 + $0xf0] sm:$0xff]
    %v5216 = vld [vmem:[#allocation6 + $0xf8] sm:$0xff]
    %v5217 = vld [vmem:[#allocation6 + $0x100] sm:$0xff]
    %v5218 = vld [vmem:[#allocation6 + $0x108] sm:$0xff]
    %v5219 = vld [vmem:[#allocation6 + $0x110] sm:$0xff]
    %v5220 = vld [vmem:[#allocation6 + $0x118] sm:$0xff]
    %v5221 = vld [vmem:[#allocation6 + $0x120] sm:$0xff]
    %v5222 = vld [vmem:[#allocation6 + $0x128] sm:$0xff]
    %v5223 = vld [vmem:[#allocation6 + $0x130] sm:$0xff]
    %v5224 = vld [vmem:[#allocation6 + $0x138] sm:$0xff]
    %v5225 = vld [vmem:[#allocation6 + $0x140] sm:$0xff]
    %v5226 = vld [vmem:[#allocation6 + $0x148] sm:$0xff]
    %v5227 = vld [vmem:[#allocation6 + $0x150] sm:$0xff]
    %v5228 = vld [vmem:[#allocation6 + $0x158] sm:$0xff]
    %v5229 = vld [vmem:[#allocation6 + $0x160] sm:$0xff]
    %v5230 = vld [vmem:[#allocation6 + $0x168] sm:$0xff]
    %v5231 = vld [vmem:[#allocation6 + $0x170] sm:$0xff]
    %v5232 = vld [vmem:[#allocation6 + $0x178] sm:$0xff]
    %v5233 = vld [vmem:[#allocation6 + $0x180] sm:$0xff]
    %v5234 = vld [vmem:[#allocation6 + $0x188] sm:$0xff]
    %v5235 = vld [vmem:[#allocation6 + $0x190] sm:$0xff]
    %v5236 = vld [vmem:[#allocation6 + $0x198] sm:$0xff]
    %v5237 = vld [vmem:[#allocation6 + $0x1a0] sm:$0xff]
    %v5238 = vld [vmem:[#allocation6 + $0x1a8] sm:$0xff]
    %v5239 = vld [vmem:[#allocation6 + $0x1b0] sm:$0xff]
    %v5240 = vld [vmem:[#allocation6 + $0x1b8] sm:$0xff]
    %v5241 = vld [vmem:[#allocation6 + $0x1c0] sm:$0xff]
    %v5242 = vld [vmem:[#allocation6 + $0x1c8] sm:$0xff]
    %v5243 = vld [vmem:[#allocation6 + $0x1d0] sm:$0xff]
    %v5244 = vld [vmem:[#allocation6 + $0x1d8] sm:$0xff]
    %v5245 = vld [vmem:[#allocation6 + $0x1e0] sm:$0xff]
    %v5246 = vld [vmem:[#allocation6 + $0x1e8] sm:$0xff]
    %v5247 = vld [vmem:[#allocation6 + $0x1f0] sm:$0xff]
    %v5248 = vld [vmem:[#allocation6 + $0x1f8] sm:$0xff]
    %v5249 = vld [vmem:[#allocation6 + $0x200] sm:$0xff]
    %v5250 = vld [vmem:[#allocation6 + $0x208] sm:$0xff]
    %v5251 = vld [vmem:[#allocation6 + $0x210] sm:$0xff]
    %v5252 = vld [vmem:[#allocation6 + $0x218] sm:$0xff]
    %v5253 = vld [vmem:[#allocation6 + $0x220] sm:$0xff]
    %v5254 = vld [vmem:[#allocation6 + $0x228] sm:$0xff]
    %v5255 = vld [vmem:[#allocation6 + $0x230] sm:$0xff]
    %v5256 = vld [vmem:[#allocation6 + $0x238] sm:$0xff]
    %v5257 = vld [vmem:[#allocation6 + $0x240] sm:$0xff]
    %v5258 = vld [vmem:[#allocation6 + $0x248] sm:$0xff]
    %v5259 = vld [vmem:[#allocation6 + $0x250] sm:$0xff]
    %v5260 = vld [vmem:[#allocation6 + $0x258] sm:$0xff]
    %v5261 = vld [vmem:[#allocation6 + $0x260] sm:$0xff]
    %v5262 = vld [vmem:[#allocation6 + $0x268] sm:$0xff]
    %v5263 = vld [vmem:[#allocation6 + $0x270] sm:$0xff]
    %v5264 = vld [vmem:[#allocation6 + $0x278] sm:$0xff]
    %v5265 = vld [vmem:[#allocation6 + $0x280] sm:$0xff]
    %v5266 = vld [vmem:[#allocation6 + $0x288] sm:$0xff]
    %v5267 = vld [vmem:[#allocation6 + $0x290] sm:$0xff]
    %v5268 = vld [vmem:[#allocation6 + $0x298] sm:$0xff]
    %v5269 = vld [vmem:[#allocation6 + $0x2a0] sm:$0xff]
    %v5270 = vld [vmem:[#allocation6 + $0x2a8] sm:$0xff]
    %v5271 = vld [vmem:[#allocation6 + $0x2b0] sm:$0xff]
    %v5272 = vld [vmem:[#allocation6 + $0x2b8] sm:$0xff]
    %v5273 = vld [vmem:[#allocation6 + $0x2c0] sm:$0xff]
    %v5274 = vld [vmem:[#allocation6 + $0x2c8] sm:$0xff]
    %v5275 = vld [vmem:[#allocation6 + $0x2d0] sm:$0xff]
    %v5276 = vld [vmem:[#allocation6 + $0x2d8] sm:$0xff]
    %v5277 = vld [vmem:[#allocation6 + $0x2e0] sm:$0xff]
    %v5278 = vld [vmem:[#allocation6 + $0x2e8] sm:$0xff]
    %v5279 = vld [vmem:[#allocation6 + $0x2f0] sm:$0xff]
    %v5280 = vld [vmem:[#allocation6 + $0x2f8] sm:$0xff]
    %v5281 = vld [vmem:[#allocation6 + $0x300] sm:$0xff]
    %v5282 = vld [vmem:[#allocation6 + $0x308] sm:$0xff]
    %v5283 = vld [vmem:[#allocation6 + $0x310] sm:$0xff]
    %v5284 = vld [vmem:[#allocation6 + $0x318] sm:$0xff]
    %v5285 = vld [vmem:[#allocation6 + $0x320] sm:$0xff]
    %v5286 = vld [vmem:[#allocation6 + $0x328] sm:$0xff]
    %v5287 = vld [vmem:[#allocation6 + $0x330] sm:$0xff]
    %v5288 = vld [vmem:[#allocation6 + $0x338] sm:$0xff]
    %v5289 = vld [vmem:[#allocation6 + $0x340] sm:$0xff]
    %v5290 = vld [vmem:[#allocation6 + $0x348] sm:$0xff]
    %v5291 = vld [vmem:[#allocation6 + $0x350] sm:$0xff]
    %v5292 = vld [vmem:[#allocation6 + $0x358] sm:$0xff]
    %v5293 = vld [vmem:[#allocation6 + $0x360] sm:$0xff]
    %v5294 = vld [vmem:[#allocation6 + $0x368] sm:$0xff]
    %v5295 = vld [vmem:[#allocation6 + $0x370] sm:$0xff]
    %v5296 = vld [vmem:[#allocation6 + $0x378] sm:$0xff]
    %v5297 = vld [vmem:[#allocation6 + $0x380] sm:$0xff]
    %v5298 = vld [vmem:[#allocation6 + $0x388] sm:$0xff]
    %v5299 = vld [vmem:[#allocation6 + $0x390] sm:$0xff]
    %v5300 = vld [vmem:[#allocation6 + $0x398] sm:$0xff]
    %v5301 = vld [vmem:[#allocation6 + $0x3a0] sm:$0xff]
    %v5302 = vld [vmem:[#allocation6 + $0x3a8] sm:$0xff]
    %v5303 = vld [vmem:[#allocation6 + $0x3b0] sm:$0xff]
    %v5304 = vld [vmem:[#allocation6 + $0x3b8] sm:$0xff]
    %v5305 = vld [vmem:[#allocation6 + $0x3c0] sm:$0xff]
    %v5306 = vld [vmem:[#allocation6 + $0x3c8] sm:$0xff]
    %v5307 = vld [vmem:[#allocation6 + $0x3d0] sm:$0xff]
    %v5308 = vld [vmem:[#allocation6 + $0x3d8] sm:$0xff]
    %v5309 = vld [vmem:[#allocation6 + $0x3e0] sm:$0xff]
    %v5310 = vld [vmem:[#allocation6 + $0x3e8] sm:$0xff]
    %v5311 = vld [vmem:[#allocation6 + $0x3f0] sm:$0xff]
    %v5312 = vld [vmem:[#allocation6 + $0x3f8] sm:$0xff]
    %v5313 = vld [vmem:[#allocation6 + $0x400] sm:$0xff]
    %v5314 = vld [vmem:[#allocation6 + $0x408] sm:$0xff]
    %v5315 = vld [vmem:[#allocation6 + $0x410] sm:$0xff]
    %v5316 = vld [vmem:[#allocation6 + $0x418] sm:$0xff]
    %v5317 = vld [vmem:[#allocation6 + $0x420] sm:$0xff]
    %v5318 = vld [vmem:[#allocation6 + $0x428] sm:$0xff]
    %v5319 = vld [vmem:[#allocation6 + $0x430] sm:$0xff]
    %v5320 = vld [vmem:[#allocation6 + $0x438] sm:$0xff]
    %v5321 = vld [vmem:[#allocation6 + $0x440] sm:$0xff]
    %v5322 = vld [vmem:[#allocation6 + $0x448] sm:$0xff]
    %v5323 = vld [vmem:[#allocation6 + $0x450] sm:$0xff]
    %v5324 = vld [vmem:[#allocation6 + $0x458] sm:$0xff]
    %v5325 = vld [vmem:[#allocation6 + $0x460] sm:$0xff]
    %v5326 = vld [vmem:[#allocation6 + $0x468] sm:$0xff]
    %v5327 = vld [vmem:[#allocation6 + $0x470] sm:$0xff]
    %v5328 = vld [vmem:[#allocation6 + $0x478] sm:$0xff]
    %v5329 = vld [vmem:[#allocation6 + $0x480] sm:$0xff]
    %v5330 = vld [vmem:[#allocation6 + $0x488] sm:$0xff]
    %v5331 = vld [vmem:[#allocation6 + $0x490] sm:$0xff]
    %v5332 = vld [vmem:[#allocation6 + $0x498] sm:$0xff]
    %v5333 = vld [vmem:[#allocation6 + $0x4a0] sm:$0xff]
    %v5334 = vld [vmem:[#allocation6 + $0x4a8] sm:$0xff]
    %v5335 = vld [vmem:[#allocation6 + $0x4b0] sm:$0xff]
    %v5336 = vld [vmem:[#allocation6 + $0x4b8] sm:$0xff]
    %v5337 = vld [vmem:[#allocation6 + $0x4c0] sm:$0xff]
    %v5338 = vld [vmem:[#allocation6 + $0x4c8] sm:$0xff]
    %v5339 = vld [vmem:[#allocation6 + $0x4d0] sm:$0xff]
    %v5340 = vld [vmem:[#allocation6 + $0x4d8] sm:$0xff]
    %v5341 = vld [vmem:[#allocation6 + $0x4e0] sm:$0xff]
    %v5342 = vld [vmem:[#allocation6 + $0x4e8] sm:$0xff]
    %v5343 = vld [vmem:[#allocation6 + $0x4f0] sm:$0xff]
    %v5344 = vld [vmem:[#allocation6 + $0x4f8] sm:$0xff]
    %v5345 = vld [vmem:[#allocation6 + $0x500] sm:$0xff]
    %v5346 = vld [vmem:[#allocation6 + $0x508] sm:$0xff]
    %v5347 = vld [vmem:[#allocation6 + $0x510] sm:$0xff]
    %v5348 = vld [vmem:[#allocation6 + $0x518] sm:$0xff]
    %v5349 = vld [vmem:[#allocation6 + $0x520] sm:$0xff]
    %v5350 = vld [vmem:[#allocation6 + $0x528] sm:$0xff]
    %v5351 = vld [vmem:[#allocation6 + $0x530] sm:$0xff]
    %v5352 = vld [vmem:[#allocation6 + $0x538] sm:$0xff]
    %v5353 = vld [vmem:[#allocation6 + $0x540] sm:$0xff]
    %v5354 = vld [vmem:[#allocation6 + $0x548] sm:$0xff]
    %v5355 = vld [vmem:[#allocation6 + $0x550] sm:$0xff]
    %v5356 = vld [vmem:[#allocation6 + $0x558] sm:$0xff]
    %v5357 = vld [vmem:[#allocation6 + $0x560] sm:$0xff]
    %v5358 = vld [vmem:[#allocation6 + $0x568] sm:$0xff]
    %v5359 = vld [vmem:[#allocation6 + $0x570] sm:$0xff]
    %v5360 = vld [vmem:[#allocation6 + $0x578] sm:$0xff]
    %v5361 = vld [vmem:[#allocation6 + $0x580] sm:$0xff]
    %v5362 = vld [vmem:[#allocation6 + $0x588] sm:$0xff]
    %v5363 = vld [vmem:[#allocation6 + $0x590] sm:$0xff]
    %v5364 = vld [vmem:[#allocation6 + $0x598] sm:$0xff]
    %v5365 = vld [vmem:[#allocation6 + $0x5a0] sm:$0xff]
    %v5366 = vld [vmem:[#allocation6 + $0x5a8] sm:$0xff]
    %v5367 = vld [vmem:[#allocation6 + $0x5b0] sm:$0xff]
    %v5368 = vld [vmem:[#allocation6 + $0x5b8] sm:$0xff]
    %v5369 = vld [vmem:[#allocation6 + $0x5c0] sm:$0xff]
    %v5370 = vld [vmem:[#allocation6 + $0x5c8] sm:$0xff]
    %v5371 = vld [vmem:[#allocation6 + $0x5d0] sm:$0xff]
    %v5372 = vld [vmem:[#allocation6 + $0x5d8] sm:$0xff]
    %v5373 = vld [vmem:[#allocation6 + $0x5e0] sm:$0xff]
    %v5374 = vld [vmem:[#allocation6 + $0x5e8] sm:$0xff]
    %v5375 = vld [vmem:[#allocation6 + $0x5f0] sm:$0xff]
    %v5376 = vld [vmem:[#allocation6 + $0x5f8] sm:$0xff]
    %v5377 = vld [vmem:[#allocation6 + $0x600] sm:$0xff]
    %v5378 = vld [vmem:[#allocation6 + $0x608] sm:$0xff]
    %v5379 = vld [vmem:[#allocation6 + $0x610] sm:$0xff]
    %v5380 = vld [vmem:[#allocation6 + $0x618] sm:$0xff]
    %v5381 = vld [vmem:[#allocation6 + $0x620] sm:$0xff]
    %v5382 = vld [vmem:[#allocation6 + $0x628] sm:$0xff]
    %v5383 = vld [vmem:[#allocation6 + $0x630] sm:$0xff]
    %v5384 = vld [vmem:[#allocation6 + $0x638] sm:$0xff]
    %v5385 = vld [vmem:[#allocation6 + $0x640] sm:$0xff]
    %v5386 = vld [vmem:[#allocation6 + $0x648] sm:$0xff]
    %v5387 = vld [vmem:[#allocation6 + $0x650] sm:$0xff]
    %v5388 = vld [vmem:[#allocation6 + $0x658] sm:$0xff]
    %v5389 = vld [vmem:[#allocation6 + $0x660] sm:$0xff]
    %v5390 = vld [vmem:[#allocation6 + $0x668] sm:$0xff]
    %v5391 = vld [vmem:[#allocation6 + $0x670] sm:$0xff]
    %v5392 = vld [vmem:[#allocation6 + $0x678] sm:$0xff]
    %v5393 = vld [vmem:[#allocation6 + $0x680] sm:$0xff]
    %v5394 = vld [vmem:[#allocation6 + $0x688] sm:$0xff]
    %v5395 = vld [vmem:[#allocation6 + $0x690] sm:$0xff]
    %v5396 = vld [vmem:[#allocation6 + $0x698] sm:$0xff]
    %v5397 = vld [vmem:[#allocation6 + $0x6a0] sm:$0xff]
    %v5398 = vld [vmem:[#allocation6 + $0x6a8] sm:$0xff]
    %v5399 = vld [vmem:[#allocation6 + $0x6b0] sm:$0xff]
    %v5400 = vld [vmem:[#allocation6 + $0x6b8] sm:$0xff]
    %v5401 = vld [vmem:[#allocation6 + $0x6c0] sm:$0xff]
    %v5402 = vld [vmem:[#allocation6 + $0x6c8] sm:$0xff]
    %v5403 = vld [vmem:[#allocation6 + $0x6d0] sm:$0xff]
    %v5404 = vld [vmem:[#allocation6 + $0x6d8] sm:$0xff]
    %v5405 = vld [vmem:[#allocation6 + $0x6e0] sm:$0xff]
    %v5406 = vld [vmem:[#allocation6 + $0x6e8] sm:$0xff]
    %v5407 = vld [vmem:[#allocation6 + $0x6f0] sm:$0xff]
    %v5408 = vld [vmem:[#allocation6 + $0x6f8] sm:$0xff]
    %v5409 = vld [vmem:[#allocation6 + $0x700] sm:$0xff]
    %v5410 = vld [vmem:[#allocation6 + $0x708] sm:$0xff]
    %v5411 = vld [vmem:[#allocation6 + $0x710] sm:$0xff]
    %v5412 = vld [vmem:[#allocation6 + $0x718] sm:$0xff]
    %v5413 = vld [vmem:[#allocation6 + $0x720] sm:$0xff]
    %v5414 = vld [vmem:[#allocation6 + $0x728] sm:$0xff]
    %v5415 = vld [vmem:[#allocation6 + $0x730] sm:$0xff]
    %v5416 = vld [vmem:[#allocation6 + $0x738] sm:$0xff]
    %v5417 = vld [vmem:[#allocation6 + $0x740] sm:$0xff]
    %v5418 = vld [vmem:[#allocation6 + $0x748] sm:$0xff]
    %v5419 = vld [vmem:[#allocation6 + $0x750] sm:$0xff]
    %v5420 = vld [vmem:[#allocation6 + $0x758] sm:$0xff]
    %v5421 = vld [vmem:[#allocation6 + $0x760] sm:$0xff]
    %v5422 = vld [vmem:[#allocation6 + $0x768] sm:$0xff]
    %v5423 = vld [vmem:[#allocation6 + $0x770] sm:$0xff]
    %v5424 = vld [vmem:[#allocation6 + $0x778] sm:$0xff]
    %v5425 = vld [vmem:[#allocation6 + $0x780] sm:$0xff]
    %v5426 = vld [vmem:[#allocation6 + $0x788] sm:$0xff]
    %v5427 = vld [vmem:[#allocation6 + $0x790] sm:$0xff]
    %v5428 = vld [vmem:[#allocation6 + $0x798] sm:$0xff]
    %v5429 = vld [vmem:[#allocation6 + $0x7a0] sm:$0xff]
    %v5430 = vld [vmem:[#allocation6 + $0x7a8] sm:$0xff]
    %v5431 = vld [vmem:[#allocation6 + $0x7b0] sm:$0xff]
    %v5432 = vld [vmem:[#allocation6 + $0x7b8] sm:$0xff]
    %v5433 = vld [vmem:[#allocation6 + $0x7c0] sm:$0xff]
    %v5434 = vld [vmem:[#allocation6 + $0x7c8] sm:$0xff]
    %v5435 = vld [vmem:[#allocation6 + $0x7d0] sm:$0xff]
    %v5436 = vld [vmem:[#allocation6 + $0x7d8] sm:$0xff]
    %v5437 = vld [vmem:[#allocation6 + $0x7e0] sm:$0xff]
    %v5438 = vld [vmem:[#allocation6 + $0x7e8] sm:$0xff]
    %v5439 = vld [vmem:[#allocation6 + $0x7f0] sm:$0xff]
    %v5440 = vld [vmem:[#allocation6 + $0x7f8] sm:$0xff]
    %v5441 = vld [vmem:[#allocation6 + $0x800] sm:$0xff]
    %v5442 = vld [vmem:[#allocation6 + $0x808] sm:$0xff]
    %v5443 = vld [vmem:[#allocation6 + $0x810] sm:$0xff]
    %v5444 = vld [vmem:[#allocation6 + $0x818] sm:$0xff]
    %v5445 = vld [vmem:[#allocation6 + $0x820] sm:$0xff]
    %v5446 = vld [vmem:[#allocation6 + $0x828] sm:$0xff]
    %v5447 = vld [vmem:[#allocation6 + $0x830] sm:$0xff]
    %v5448 = vld [vmem:[#allocation6 + $0x838] sm:$0xff]
    %v5449 = vld [vmem:[#allocation6 + $0x840] sm:$0xff]
    %v5450 = vld [vmem:[#allocation6 + $0x848] sm:$0xff]
    %v5451 = vld [vmem:[#allocation6 + $0x850] sm:$0xff]
    %v5452 = vld [vmem:[#allocation6 + $0x858] sm:$0xff]
    %v5453 = vld [vmem:[#allocation6 + $0x860] sm:$0xff]
    %v5454 = vld [vmem:[#allocation6 + $0x868] sm:$0xff]
    %v5455 = vld [vmem:[#allocation6 + $0x870] sm:$0xff]
    %v5456 = vld [vmem:[#allocation6 + $0x878] sm:$0xff]
    %v5457 = vld [vmem:[#allocation6 + $0x880] sm:$0xff]
    %v5458 = vld [vmem:[#allocation6 + $0x888] sm:$0xff]
    %v5459 = vld [vmem:[#allocation6 + $0x890] sm:$0xff]
    %v5460 = vld [vmem:[#allocation6 + $0x898] sm:$0xff]
    %v5461 = vld [vmem:[#allocation6 + $0x8a0] sm:$0xff]
    %v5462 = vld [vmem:[#allocation6 + $0x8a8] sm:$0xff]
    %v5463 = vld [vmem:[#allocation6 + $0x8b0] sm:$0xff]
    %v5464 = vld [vmem:[#allocation6 + $0x8b8] sm:$0xff]
    %v5465 = vld [vmem:[#allocation6 + $0x8c0] sm:$0xff]
    %v5466 = vld [vmem:[#allocation6 + $0x8c8] sm:$0xff]
    %v5467 = vld [vmem:[#allocation6 + $0x8d0] sm:$0xff]
    %v5468 = vld [vmem:[#allocation6 + $0x8d8] sm:$0xff]
    %v5469 = vld [vmem:[#allocation6 + $0x8e0] sm:$0xff]
    %v5470 = vld [vmem:[#allocation6 + $0x8e8] sm:$0xff]
    %v5471 = vld [vmem:[#allocation6 + $0x8f0] sm:$0xff]
    %v5472 = vld [vmem:[#allocation6 + $0x8f8] sm:$0xff]
    %v5473 = vld [vmem:[#allocation6 + $0x900] sm:$0xff]
    %v5474 = vld [vmem:[#allocation6 + $0x908] sm:$0xff]
    %v5475 = vld [vmem:[#allocation6 + $0x910] sm:$0xff]
    %v5476 = vld [vmem:[#allocation6 + $0x918] sm:$0xff]
    %v5477 = vld [vmem:[#allocation6 + $0x920] sm:$0xff]
    %v5478 = vld [vmem:[#allocation6 + $0x928] sm:$0xff]
    %v5479 = vld [vmem:[#allocation6 + $0x930] sm:$0xff]
    %v5480 = vld [vmem:[#allocation6 + $0x938] sm:$0xff]
    %v5481 = vld [vmem:[#allocation6 + $0x940] sm:$0xff]
    %v5482 = vld [vmem:[#allocation6 + $0x948] sm:$0xff]
    %v5483 = vld [vmem:[#allocation6 + $0x950] sm:$0xff]
    %v5484 = vld [vmem:[#allocation6 + $0x958] sm:$0xff]
    %v5485 = vld [vmem:[#allocation6 + $0x960] sm:$0xff]
    %v5486 = vld [vmem:[#allocation6 + $0x968] sm:$0xff]
    %v5487 = vld [vmem:[#allocation6 + $0x970] sm:$0xff]
    %v5488 = vld [vmem:[#allocation6 + $0x978] sm:$0xff]
    %v5489 = vld [vmem:[#allocation6 + $0x980] sm:$0xff]
    %v5490 = vld [vmem:[#allocation6 + $0x988] sm:$0xff]
    %v5491 = vld [vmem:[#allocation6 + $0x990] sm:$0xff]
    %v5492 = vld [vmem:[#allocation6 + $0x998] sm:$0xff]
    %v5493 = vld [vmem:[#allocation6 + $0x9a0] sm:$0xff]
    %v5494 = vld [vmem:[#allocation6 + $0x9a8] sm:$0xff]
    %v5495 = vld [vmem:[#allocation6 + $0x9b0] sm:$0xff]
    %v5496 = vld [vmem:[#allocation6 + $0x9b8] sm:$0xff]
    %v5497 = vld [vmem:[#allocation6 + $0x9c0] sm:$0xff]
    %v5498 = vld [vmem:[#allocation6 + $0x9c8] sm:$0xff]
    %v5499 = vld [vmem:[#allocation6 + $0x9d0] sm:$0xff]
    %v5500 = vld [vmem:[#allocation6 + $0x9d8] sm:$0xff]
    %v5501 = vld [vmem:[#allocation6 + $0x9e0] sm:$0xff]
    %v5502 = vld [vmem:[#allocation6 + $0x9e8] sm:$0xff]
    %v5503 = vld [vmem:[#allocation6 + $0x9f0] sm:$0xff]
    %v5504 = vld [vmem:[#allocation6 + $0x9f8] sm:$0xff]
    %v5505 = vld [vmem:[#allocation6 + $0xa00] sm:$0xff]
    %v5506 = vld [vmem:[#allocation6 + $0xa08] sm:$0xff]
    %v5507 = vld [vmem:[#allocation6 + $0xa10] sm:$0xff]
    %v5508 = vld [vmem:[#allocation6 + $0xa18] sm:$0xff]
    %v5509 = vld [vmem:[#allocation6 + $0xa20] sm:$0xff]
    %v5510 = vld [vmem:[#allocation6 + $0xa28] sm:$0xff]
    %v5511 = vld [vmem:[#allocation6 + $0xa30] sm:$0xff]
    %v5512 = vld [vmem:[#allocation6 + $0xa38] sm:$0xff]
    %v5513 = vld [vmem:[#allocation6 + $0xa40] sm:$0xff]
    %v5514 = vld [vmem:[#allocation6 + $0xa48] sm:$0xff]
    %v5515 = vld [vmem:[#allocation6 + $0xa50] sm:$0xff]
    %v5516 = vld [vmem:[#allocation6 + $0xa58] sm:$0xff]
    %v5517 = vld [vmem:[#allocation6 + $0xa60] sm:$0xff]
    %v5518 = vld [vmem:[#allocation6 + $0xa68] sm:$0xff]
    %v5519 = vld [vmem:[#allocation6 + $0xa70] sm:$0xff]
    %v5520 = vld [vmem:[#allocation6 + $0xa78] sm:$0xff]
    %v5521 = vld [vmem:[#allocation6 + $0xa80] sm:$0xff]
    %v5522 = vld [vmem:[#allocation6 + $0xa88] sm:$0xff]
    %v5523 = vld [vmem:[#allocation6 + $0xa90] sm:$0xff]
    %v5524 = vld [vmem:[#allocation6 + $0xa98] sm:$0xff]
    %v5525 = vld [vmem:[#allocation6 + $0xaa0] sm:$0xff]
    %v5526 = vld [vmem:[#allocation6 + $0xaa8] sm:$0xff]
    %v5527 = vld [vmem:[#allocation6 + $0xab0] sm:$0xff]
    %v5528 = vld [vmem:[#allocation6 + $0xab8] sm:$0xff]
    %v5529 = vld [vmem:[#allocation6 + $0xac0] sm:$0xff]
    %v5530 = vld [vmem:[#allocation6 + $0xac8] sm:$0xff]
    %v5531 = vld [vmem:[#allocation6 + $0xad0] sm:$0xff]
    %v5532 = vld [vmem:[#allocation6 + $0xad8] sm:$0xff]
    %v5533 = vld [vmem:[#allocation6 + $0xae0] sm:$0xff]
    %v5534 = vld [vmem:[#allocation6 + $0xae8] sm:$0xff]
    %v5535 = vld [vmem:[#allocation6 + $0xaf0] sm:$0xff]
    %v5536 = vld [vmem:[#allocation6 + $0xaf8] sm:$0xff]
    %v5537 = vld [vmem:[#allocation6 + $0xb00] sm:$0xff]
    %v5538 = vld [vmem:[#allocation6 + $0xb08] sm:$0xff]
    %v5539 = vld [vmem:[#allocation6 + $0xb10] sm:$0xff]
    %v5540 = vld [vmem:[#allocation6 + $0xb18] sm:$0xff]
    %v5541 = vld [vmem:[#allocation6 + $0xb20] sm:$0xff]
    %v5542 = vld [vmem:[#allocation6 + $0xb28] sm:$0xff]
    %v5543 = vld [vmem:[#allocation6 + $0xb30] sm:$0xff]
    %v5544 = vld [vmem:[#allocation6 + $0xb38] sm:$0xff]
    %v5545 = vld [vmem:[#allocation6 + $0xb40] sm:$0xff]
    %v5546 = vld [vmem:[#allocation6 + $0xb48] sm:$0xff]
    %v5547 = vld [vmem:[#allocation6 + $0xb50] sm:$0xff]
    %v5548 = vld [vmem:[#allocation6 + $0xb58] sm:$0xff]
    %v5549 = vld [vmem:[#allocation6 + $0xb60] sm:$0xff]
    %v5550 = vld [vmem:[#allocation6 + $0xb68] sm:$0xff]
    %v5551 = vld [vmem:[#allocation6 + $0xb70] sm:$0xff]
    %v5552 = vld [vmem:[#allocation6 + $0xb78] sm:$0xff]
    %v5553 = vld [vmem:[#allocation6 + $0xb80] sm:$0xff]
    %v5554 = vld [vmem:[#allocation6 + $0xb88] sm:$0xff]
    %v5555 = vld [vmem:[#allocation6 + $0xb90] sm:$0xff]
    %v5556 = vld [vmem:[#allocation6 + $0xb98] sm:$0xff]
    %v5557 = vld [vmem:[#allocation6 + $0xba0] sm:$0xff]
    %v5558 = vld [vmem:[#allocation6 + $0xba8] sm:$0xff]
    %v5559 = vld [vmem:[#allocation6 + $0xbb0] sm:$0xff]
    %v5560 = vld [vmem:[#allocation6 + $0xbb8] sm:$0xff]
    %v5561 = vld [vmem:[#allocation6 + $0xbc0] sm:$0xff]
    %v5562 = vld [vmem:[#allocation6 + $0xbc8] sm:$0xff]
    %v5563 = vld [vmem:[#allocation6 + $0xbd0] sm:$0xff]
    %v5564 = vld [vmem:[#allocation6 + $0xbd8] sm:$0xff]
    %v5565 = vld [vmem:[#allocation6 + $0xbe0] sm:$0xff]
    %v5566 = vld [vmem:[#allocation6 + $0xbe8] sm:$0xff]
    %v5567 = vld [vmem:[#allocation6 + $0xbf0] sm:$0xff]
    %v5568 = vld [vmem:[#allocation6 + $0xbf8] sm:$0xff]
    %v5569 = vld [vmem:[#allocation6 + $0xc00] sm:$0xff]
    %v5570 = vld [vmem:[#allocation6 + $0xc08] sm:$0xff]
    %v5571 = vld [vmem:[#allocation6 + $0xc10] sm:$0xff]
    %v5572 = vld [vmem:[#allocation6 + $0xc18] sm:$0xff]
    %v5573 = vld [vmem:[#allocation6 + $0xc20] sm:$0xff]
    %v5574 = vld [vmem:[#allocation6 + $0xc28] sm:$0xff]
    %v5575 = vld [vmem:[#allocation6 + $0xc30] sm:$0xff]
    %v5576 = vld [vmem:[#allocation6 + $0xc38] sm:$0xff]
    %v5577 = vld [vmem:[#allocation6 + $0xc40] sm:$0xff]
    %v5578 = vld [vmem:[#allocation6 + $0xc48] sm:$0xff]
    %v5579 = vld [vmem:[#allocation6 + $0xc50] sm:$0xff]
    %v5580 = vld [vmem:[#allocation6 + $0xc58] sm:$0xff]
    %v5581 = vld [vmem:[#allocation6 + $0xc60] sm:$0xff]
    %v5582 = vld [vmem:[#allocation6 + $0xc68] sm:$0xff]
    %v5583 = vld [vmem:[#allocation6 + $0xc70] sm:$0xff]
    %v5584 = vld [vmem:[#allocation6 + $0xc78] sm:$0xff]
    %v5585 = vld [vmem:[#allocation6 + $0xc80] sm:$0xff]
    %v5586 = vld [vmem:[#allocation6 + $0xc88] sm:$0xff]
    %v5587 = vld [vmem:[#allocation6 + $0xc90] sm:$0xff]
    %v5588 = vld [vmem:[#allocation6 + $0xc98] sm:$0xff]
    %v5589 = vld [vmem:[#allocation6 + $0xca0] sm:$0xff]
    %v5590 = vld [vmem:[#allocation6 + $0xca8] sm:$0xff]
    %v5591 = vld [vmem:[#allocation6 + $0xcb0] sm:$0xff]
    %v5592 = vld [vmem:[#allocation6 + $0xcb8] sm:$0xff]
    %v5593 = vld [vmem:[#allocation6 + $0xcc0] sm:$0xff]
    %v5594 = vld [vmem:[#allocation6 + $0xcc8] sm:$0xff]
    %v5595 = vld [vmem:[#allocation6 + $0xcd0] sm:$0xff]
    %v5596 = vld [vmem:[#allocation6 + $0xcd8] sm:$0xff]
    %v5597 = vld [vmem:[#allocation6 + $0xce0] sm:$0xff]
    %v5598 = vld [vmem:[#allocation6 + $0xce8] sm:$0xff]
    %v5599 = vld [vmem:[#allocation6 + $0xcf0] sm:$0xff]
    %v5600 = vld [vmem:[#allocation6 + $0xcf8] sm:$0xff]
    %v5601 = vld [vmem:[#allocation6 + $0xd00] sm:$0xff]
    %v5602 = vld [vmem:[#allocation6 + $0xd08] sm:$0xff]
    %v5603 = vld [vmem:[#allocation6 + $0xd10] sm:$0xff]
    %v5604 = vld [vmem:[#allocation6 + $0xd18] sm:$0xff]
    %v5605 = vld [vmem:[#allocation6 + $0xd20] sm:$0xff]
    %v5606 = vld [vmem:[#allocation6 + $0xd28] sm:$0xff]
    %v5607 = vld [vmem:[#allocation6 + $0xd30] sm:$0xff]
    %v5608 = vld [vmem:[#allocation6 + $0xd38] sm:$0xff]
    %v5609 = vld [vmem:[#allocation6 + $0xd40] sm:$0xff]
    %v5610 = vld [vmem:[#allocation6 + $0xd48] sm:$0xff]
    %v5611 = vld [vmem:[#allocation6 + $0xd50] sm:$0xff]
    %v5612 = vld [vmem:[#allocation6 + $0xd58] sm:$0xff]
    %v5613 = vld [vmem:[#allocation6 + $0xd60] sm:$0xff]
    %v5614 = vld [vmem:[#allocation6 + $0xd68] sm:$0xff]
    %v5615 = vld [vmem:[#allocation6 + $0xd70] sm:$0xff]
    %v5616 = vld [vmem:[#allocation6 + $0xd78] sm:$0xff]
    %v5617 = vld [vmem:[#allocation6 + $0xd80] sm:$0xff]
    %v5618 = vld [vmem:[#allocation6 + $0xd88] sm:$0xff]
    %v5619 = vld [vmem:[#allocation6 + $0xd90] sm:$0xff]
    %v5620 = vld [vmem:[#allocation6 + $0xd98] sm:$0xff]
    %v5621 = vld [vmem:[#allocation6 + $0xda0] sm:$0xff]
    %v5622 = vld [vmem:[#allocation6 + $0xda8] sm:$0xff]
    %v5623 = vld [vmem:[#allocation6 + $0xdb0] sm:$0xff]
    %v5624 = vld [vmem:[#allocation6 + $0xdb8] sm:$0xff]
    %v5625 = vld [vmem:[#allocation6 + $0xdc0] sm:$0xff]
    %v5626 = vld [vmem:[#allocation6 + $0xdc8] sm:$0xff]
    %v5627 = vld [vmem:[#allocation6 + $0xdd0] sm:$0xff]
    %v5628 = vld [vmem:[#allocation6 + $0xdd8] sm:$0xff]
    %v5629 = vld [vmem:[#allocation6 + $0xde0] sm:$0xff]
    %v5630 = vld [vmem:[#allocation6 + $0xde8] sm:$0xff]
    %v5631 = vld [vmem:[#allocation6 + $0xdf0] sm:$0xff]
    %v5632 = vld [vmem:[#allocation6 + $0xdf8] sm:$0xff]
    %v5633 = vld [vmem:[#allocation6 + $0xe00] sm:$0xff]
    %v5634 = vld [vmem:[#allocation6 + $0xe08] sm:$0xff]
    %v5635 = vld [vmem:[#allocation6 + $0xe10] sm:$0xff]
    %v5636 = vld [vmem:[#allocation6 + $0xe18] sm:$0xff]
    %v5637 = vld [vmem:[#allocation6 + $0xe20] sm:$0xff]
    %v5638 = vld [vmem:[#allocation6 + $0xe28] sm:$0xff]
    %v5639 = vld [vmem:[#allocation6 + $0xe30] sm:$0xff]
    %v5640 = vld [vmem:[#allocation6 + $0xe38] sm:$0xff]
    %v5641 = vld [vmem:[#allocation6 + $0xe40] sm:$0xff]
    %v5642 = vld [vmem:[#allocation6 + $0xe48] sm:$0xff]
    %v5643 = vld [vmem:[#allocation6 + $0xe50] sm:$0xff]
    %v5644 = vld [vmem:[#allocation6 + $0xe58] sm:$0xff]
    %v5645 = vld [vmem:[#allocation6 + $0xe60] sm:$0xff]
    %v5646 = vld [vmem:[#allocation6 + $0xe68] sm:$0xff]
    %v5647 = vld [vmem:[#allocation6 + $0xe70] sm:$0xff]
    %v5648 = vld [vmem:[#allocation6 + $0xe78] sm:$0xff]
    %v5649 = vld [vmem:[#allocation6 + $0xe80] sm:$0xff]
    %v5650 = vld [vmem:[#allocation6 + $0xe88] sm:$0xff]
    %v5651 = vld [vmem:[#allocation6 + $0xe90] sm:$0xff]
    %v5652 = vld [vmem:[#allocation6 + $0xe98] sm:$0xff]
    %v5653 = vld [vmem:[#allocation6 + $0xea0] sm:$0xff]
    %v5654 = vld [vmem:[#allocation6 + $0xea8] sm:$0xff]
    %v5655 = vld [vmem:[#allocation6 + $0xeb0] sm:$0xff]
    %v5656 = vld [vmem:[#allocation6 + $0xeb8] sm:$0xff]
    %v5657 = vld [vmem:[#allocation6 + $0xec0] sm:$0xff]
    %v5658 = vld [vmem:[#allocation6 + $0xec8] sm:$0xff]
    %v5659 = vld [vmem:[#allocation6 + $0xed0] sm:$0xff]
    %v5660 = vld [vmem:[#allocation6 + $0xed8] sm:$0xff]
    %v5661 = vld [vmem:[#allocation6 + $0xee0] sm:$0xff]
    %v5662 = vld [vmem:[#allocation6 + $0xee8] sm:$0xff]
    %v5663 = vld [vmem:[#allocation6 + $0xef0] sm:$0xff]
    %v5664 = vld [vmem:[#allocation6 + $0xef8] sm:$0xff]
    %v5665 = vld [vmem:[#allocation6 + $0xf00] sm:$0xff]
    %v5666 = vld [vmem:[#allocation6 + $0xf08] sm:$0xff]
    %v5667 = vld [vmem:[#allocation6 + $0xf10] sm:$0xff]
    %v5668 = vld [vmem:[#allocation6 + $0xf18] sm:$0xff]
    %v5669 = vld [vmem:[#allocation6 + $0xf20] sm:$0xff]
    %v5670 = vld [vmem:[#allocation6 + $0xf28] sm:$0xff]
    %v5671 = vld [vmem:[#allocation6 + $0xf30] sm:$0xff]
    %v5672 = vld [vmem:[#allocation6 + $0xf38] sm:$0xff]
    %v5673 = vld [vmem:[#allocation6 + $0xf40] sm:$0xff]
    %v5674 = vld [vmem:[#allocation6 + $0xf48] sm:$0xff]
    %v5675 = vld [vmem:[#allocation6 + $0xf50] sm:$0xff]
    %v5676 = vld [vmem:[#allocation6 + $0xf58] sm:$0xff]
    %v5677 = vld [vmem:[#allocation6 + $0xf60] sm:$0xff]
    %v5678 = vld [vmem:[#allocation6 + $0xf68] sm:$0xff]
    %v5679 = vld [vmem:[#allocation6 + $0xf70] sm:$0xff]
    %v5680 = vld [vmem:[#allocation6 + $0xf78] sm:$0xff]
    %v5681 = vld [vmem:[#allocation6 + $0xf80] sm:$0xff]
    %v5682 = vld [vmem:[#allocation6 + $0xf88] sm:$0xff]
    %v5683 = vld [vmem:[#allocation6 + $0xf90] sm:$0xff]
    %v5684 = vld [vmem:[#allocation6 + $0xf98] sm:$0xff]
    %v5685 = vld [vmem:[#allocation6 + $0xfa0] sm:$0xff]
    %v5686 = vld [vmem:[#allocation6 + $0xfa8] sm:$0xff]
    %v5687 = vld [vmem:[#allocation6 + $0xfb0] sm:$0xff]
    %v5688 = vld [vmem:[#allocation6 + $0xfb8] sm:$0xff]
    %v5689 = vld [vmem:[#allocation6 + $0xfc0] sm:$0xff]
    %v5690 = vld [vmem:[#allocation6 + $0xfc8] sm:$0xff]
    %v5691 = vld [vmem:[#allocation6 + $0xfd0] sm:$0xff]
    %v5692 = vld [vmem:[#allocation6 + $0xfd8] sm:$0xff]
    %v5693 = vld [vmem:[#allocation6 + $0xfe0] sm:$0xff]
    %v5694 = vld [vmem:[#allocation6 + $0xfe8] sm:$0xff]
    %v5695 = vld [vmem:[#allocation6 + $0xff0] sm:$0xff]
    %v5696 = vld [vmem:[#allocation6 + $0xff8] sm:$0xff]
    %v5697 = vld [vmem:[#allocation7] sm:$0xff]
    %v5699 = vlaneseq
    %v5700 = vshrl.u32 %v5699, 7
    %v5701 = vsub.s32 0, %v5700
    %v5702 = vrot.slane %v5697, %v5701
    %v5703 = vlaneseq
    %v5704 = vshrl.u32 %v5703, 7
    %v5705 = vsub.s32 1, %v5704
    %v5706 = vrot.slane %v5697, %v5705
    %v5707 = vlaneseq
    %v5708 = vshrl.u32 %v5707, 7
    %v5709 = vsub.s32 2, %v5708
    %v5710 = vrot.slane %v5697, %v5709
    %v5711 = vlaneseq
    %v5712 = vshrl.u32 %v5711, 7
    %v5713 = vsub.s32 3, %v5712
    %v5714 = vrot.slane %v5697, %v5713
    %v5715 = vlaneseq
    %v5716 = vshrl.u32 %v5715, 7
    %v5717 = vsub.s32 4, %v5716
    %v5718 = vrot.slane %v5697, %v5717
    %v5719 = vlaneseq
    %v5720 = vshrl.u32 %v5719, 7
    %v5721 = vsub.s32 5, %v5720
    %v5722 = vrot.slane %v5697, %v5721
    %v5723 = vlaneseq
    %v5724 = vshrl.u32 %v5723, 7
    %v5725 = vsub.s32 6, %v5724
    %v5726 = vrot.slane %v5697, %v5725
    %v5727 = vlaneseq
    %v5728 = vshrl.u32 %v5727, 7
    %v5729 = vsub.s32 7, %v5728
    %v5730 = vrot.slane %v5697, %v5729
    %v6251 = vunpack.c.l.b16 %v5185
    %v6252 = vunpack.c.h.b16 %v5185
    %v6253 = vunpack.c.l.b16 %v5186
    %v6254 = vunpack.c.h.b16 %v5186
    %v6255 = vunpack.c.l.b16 %v5187
    %v6256 = vunpack.c.h.b16 %v5187
    %v6257 = vunpack.c.l.b16 %v5188
    %v6258 = vunpack.c.h.b16 %v5188
    %v6259 = vunpack.c.l.b16 %v5189
    %v6260 = vunpack.c.h.b16 %v5189
    %v6261 = vunpack.c.l.b16 %v5190
    %v6262 = vunpack.c.h.b16 %v5190
    %v6263 = vunpack.c.l.b16 %v5191
    %v6264 = vunpack.c.h.b16 %v5191
    %v6265 = vunpack.c.l.b16 %v5192
    %v6266 = vunpack.c.h.b16 %v5192
    %v6267 = vunpack.c.l.b16 %v5193
    %v6268 = vunpack.c.h.b16 %v5193
    %v6269 = vunpack.c.l.b16 %v5194
    %v6270 = vunpack.c.h.b16 %v5194
    %v6271 = vunpack.c.l.b16 %v5195
    %v6272 = vunpack.c.h.b16 %v5195
    %v6273 = vunpack.c.l.b16 %v5196
    %v6274 = vunpack.c.h.b16 %v5196
    %v6275 = vunpack.c.l.b16 %v5197
    %v6276 = vunpack.c.h.b16 %v5197
    %v6277 = vunpack.c.l.b16 %v5198
    %v6278 = vunpack.c.h.b16 %v5198
    %v6279 = vunpack.c.l.b16 %v5199
    %v6280 = vunpack.c.h.b16 %v5199
    %v6281 = vunpack.c.l.b16 %v5200
    %v6282 = vunpack.c.h.b16 %v5200
    %v6283 = vunpack.c.l.b16 %v5201
    %v6284 = vunpack.c.h.b16 %v5201
    %v6285 = vunpack.c.l.b16 %v5202
    %v6286 = vunpack.c.h.b16 %v5202
    %v6287 = vunpack.c.l.b16 %v5203
    %v6288 = vunpack.c.h.b16 %v5203
    %v6289 = vunpack.c.l.b16 %v5204
    %v6290 = vunpack.c.h.b16 %v5204
    %v6291 = vunpack.c.l.b16 %v5205
    %v6292 = vunpack.c.h.b16 %v5205
    %v6293 = vunpack.c.l.b16 %v5206
    %v6294 = vunpack.c.h.b16 %v5206
    %v6295 = vunpack.c.l.b16 %v5207
    %v6296 = vunpack.c.h.b16 %v5207
    %v6297 = vunpack.c.l.b16 %v5208
    %v6298 = vunpack.c.h.b16 %v5208
    %v6299 = vunpack.c.l.b16 %v5209
    %v6300 = vunpack.c.h.b16 %v5209
    %v6301 = vunpack.c.l.b16 %v5210
    %v6302 = vunpack.c.h.b16 %v5210
    %v6303 = vunpack.c.l.b16 %v5211
    %v6304 = vunpack.c.h.b16 %v5211
    %v6305 = vunpack.c.l.b16 %v5212
    %v6306 = vunpack.c.h.b16 %v5212
    %v6307 = vunpack.c.l.b16 %v5213
    %v6308 = vunpack.c.h.b16 %v5213
    %v6309 = vunpack.c.l.b16 %v5214
    %v6310 = vunpack.c.h.b16 %v5214
    %v6311 = vunpack.c.l.b16 %v5215
    %v6312 = vunpack.c.h.b16 %v5215
    %v6313 = vunpack.c.l.b16 %v5216
    %v6314 = vunpack.c.h.b16 %v5216
    %v6315 = vunpack.c.l.b16 %v5217
    %v6316 = vunpack.c.h.b16 %v5217
    %v6317 = vunpack.c.l.b16 %v5218
    %v6318 = vunpack.c.h.b16 %v5218
    %v6319 = vunpack.c.l.b16 %v5219
    %v6320 = vunpack.c.h.b16 %v5219
    %v6321 = vunpack.c.l.b16 %v5220
    %v6322 = vunpack.c.h.b16 %v5220
    %v6323 = vunpack.c.l.b16 %v5221
    %v6324 = vunpack.c.h.b16 %v5221
    %v6325 = vunpack.c.l.b16 %v5222
    %v6326 = vunpack.c.h.b16 %v5222
    %v6327 = vunpack.c.l.b16 %v5223
    %v6328 = vunpack.c.h.b16 %v5223
    %v6329 = vunpack.c.l.b16 %v5224
    %v6330 = vunpack.c.h.b16 %v5224
    %v6331 = vunpack.c.l.b16 %v5225
    %v6332 = vunpack.c.h.b16 %v5225
    %v6333 = vunpack.c.l.b16 %v5226
    %v6334 = vunpack.c.h.b16 %v5226
    %v6335 = vunpack.c.l.b16 %v5227
    %v6336 = vunpack.c.h.b16 %v5227
    %v6337 = vunpack.c.l.b16 %v5228
    %v6338 = vunpack.c.h.b16 %v5228
    %v6339 = vunpack.c.l.b16 %v5229
    %v6340 = vunpack.c.h.b16 %v5229
    %v6341 = vunpack.c.l.b16 %v5230
    %v6342 = vunpack.c.h.b16 %v5230
    %v6343 = vunpack.c.l.b16 %v5231
    %v6344 = vunpack.c.h.b16 %v5231
    %v6345 = vunpack.c.l.b16 %v5232
    %v6346 = vunpack.c.h.b16 %v5232
    %v6347 = vunpack.c.l.b16 %v5233
    %v6348 = vunpack.c.h.b16 %v5233
    %v6349 = vunpack.c.l.b16 %v5234
    %v6350 = vunpack.c.h.b16 %v5234
    %v6351 = vunpack.c.l.b16 %v5235
    %v6352 = vunpack.c.h.b16 %v5235
    %v6353 = vunpack.c.l.b16 %v5236
    %v6354 = vunpack.c.h.b16 %v5236
    %v6355 = vunpack.c.l.b16 %v5237
    %v6356 = vunpack.c.h.b16 %v5237
    %v6357 = vunpack.c.l.b16 %v5238
    %v6358 = vunpack.c.h.b16 %v5238
    %v6359 = vunpack.c.l.b16 %v5239
    %v6360 = vunpack.c.h.b16 %v5239
    %v6361 = vunpack.c.l.b16 %v5240
    %v6362 = vunpack.c.h.b16 %v5240
    %v6363 = vunpack.c.l.b16 %v5241
    %v6364 = vunpack.c.h.b16 %v5241
    %v6365 = vunpack.c.l.b16 %v5242
    %v6366 = vunpack.c.h.b16 %v5242
    %v6367 = vunpack.c.l.b16 %v5243
    %v6368 = vunpack.c.h.b16 %v5243
    %v6369 = vunpack.c.l.b16 %v5244
    %v6370 = vunpack.c.h.b16 %v5244
    %v6371 = vunpack.c.l.b16 %v5245
    %v6372 = vunpack.c.h.b16 %v5245
    %v6373 = vunpack.c.l.b16 %v5246
    %v6374 = vunpack.c.h.b16 %v5246
    %v6375 = vunpack.c.l.b16 %v5247
    %v6376 = vunpack.c.h.b16 %v5247
    %v6377 = vunpack.c.l.b16 %v5248
    %v6378 = vunpack.c.h.b16 %v5248
    %v6379 = vunpack.c.l.b16 %v5249
    %v6380 = vunpack.c.h.b16 %v5249
    %v6381 = vunpack.c.l.b16 %v5250
    %v6382 = vunpack.c.h.b16 %v5250
    %v6383 = vunpack.c.l.b16 %v5251
    %v6384 = vunpack.c.h.b16 %v5251
    %v6385 = vunpack.c.l.b16 %v5252
    %v6386 = vunpack.c.h.b16 %v5252
    %v6387 = vunpack.c.l.b16 %v5253
    %v6388 = vunpack.c.h.b16 %v5253
    %v6389 = vunpack.c.l.b16 %v5254
    %v6390 = vunpack.c.h.b16 %v5254
    %v6391 = vunpack.c.l.b16 %v5255
    %v6392 = vunpack.c.h.b16 %v5255
    %v6393 = vunpack.c.l.b16 %v5256
    %v6394 = vunpack.c.h.b16 %v5256
    %v6395 = vunpack.c.l.b16 %v5257
    %v6396 = vunpack.c.h.b16 %v5257
    %v6397 = vunpack.c.l.b16 %v5258
    %v6398 = vunpack.c.h.b16 %v5258
    %v6399 = vunpack.c.l.b16 %v5259
    %v6400 = vunpack.c.h.b16 %v5259
    %v6401 = vunpack.c.l.b16 %v5260
    %v6402 = vunpack.c.h.b16 %v5260
    %v6403 = vunpack.c.l.b16 %v5261
    %v6404 = vunpack.c.h.b16 %v5261
    %v6405 = vunpack.c.l.b16 %v5262
    %v6406 = vunpack.c.h.b16 %v5262
    %v6407 = vunpack.c.l.b16 %v5263
    %v6408 = vunpack.c.h.b16 %v5263
    %v6409 = vunpack.c.l.b16 %v5264
    %v6410 = vunpack.c.h.b16 %v5264
    %v6411 = vunpack.c.l.b16 %v5265
    %v6412 = vunpack.c.h.b16 %v5265
    %v6413 = vunpack.c.l.b16 %v5266
    %v6414 = vunpack.c.h.b16 %v5266
    %v6415 = vunpack.c.l.b16 %v5267
    %v6416 = vunpack.c.h.b16 %v5267
    %v6417 = vunpack.c.l.b16 %v5268
    %v6418 = vunpack.c.h.b16 %v5268
    %v6419 = vunpack.c.l.b16 %v5269
    %v6420 = vunpack.c.h.b16 %v5269
    %v6421 = vunpack.c.l.b16 %v5270
    %v6422 = vunpack.c.h.b16 %v5270
    %v6423 = vunpack.c.l.b16 %v5271
    %v6424 = vunpack.c.h.b16 %v5271
    %v6425 = vunpack.c.l.b16 %v5272
    %v6426 = vunpack.c.h.b16 %v5272
    %v6427 = vunpack.c.l.b16 %v5273
    %v6428 = vunpack.c.h.b16 %v5273
    %v6429 = vunpack.c.l.b16 %v5274
    %v6430 = vunpack.c.h.b16 %v5274
    %v6431 = vunpack.c.l.b16 %v5275
    %v6432 = vunpack.c.h.b16 %v5275
    %v6433 = vunpack.c.l.b16 %v5276
    %v6434 = vunpack.c.h.b16 %v5276
    %v6435 = vunpack.c.l.b16 %v5277
    %v6436 = vunpack.c.h.b16 %v5277
    %v6437 = vunpack.c.l.b16 %v5278
    %v6438 = vunpack.c.h.b16 %v5278
    %v6439 = vunpack.c.l.b16 %v5279
    %v6440 = vunpack.c.h.b16 %v5279
    %v6441 = vunpack.c.l.b16 %v5280
    %v6442 = vunpack.c.h.b16 %v5280
    %v6443 = vunpack.c.l.b16 %v5281
    %v6444 = vunpack.c.h.b16 %v5281
    %v6445 = vunpack.c.l.b16 %v5282
    %v6446 = vunpack.c.h.b16 %v5282
    %v6447 = vunpack.c.l.b16 %v5283
    %v6448 = vunpack.c.h.b16 %v5283
    %v6449 = vunpack.c.l.b16 %v5284
    %v6450 = vunpack.c.h.b16 %v5284
    %v6451 = vunpack.c.l.b16 %v5285
    %v6452 = vunpack.c.h.b16 %v5285
    %v6453 = vunpack.c.l.b16 %v5286
    %v6454 = vunpack.c.h.b16 %v5286
    %v6455 = vunpack.c.l.b16 %v5287
    %v6456 = vunpack.c.h.b16 %v5287
    %v6457 = vunpack.c.l.b16 %v5288
    %v6458 = vunpack.c.h.b16 %v5288
    %v6459 = vunpack.c.l.b16 %v5289
    %v6460 = vunpack.c.h.b16 %v5289
    %v6461 = vunpack.c.l.b16 %v5290
    %v6462 = vunpack.c.h.b16 %v5290
    %v6463 = vunpack.c.l.b16 %v5291
    %v6464 = vunpack.c.h.b16 %v5291
    %v6465 = vunpack.c.l.b16 %v5292
    %v6466 = vunpack.c.h.b16 %v5292
    %v6467 = vunpack.c.l.b16 %v5293
    %v6468 = vunpack.c.h.b16 %v5293
    %v6469 = vunpack.c.l.b16 %v5294
    %v6470 = vunpack.c.h.b16 %v5294
    %v6471 = vunpack.c.l.b16 %v5295
    %v6472 = vunpack.c.h.b16 %v5295
    %v6473 = vunpack.c.l.b16 %v5296
    %v6474 = vunpack.c.h.b16 %v5296
    %v6475 = vunpack.c.l.b16 %v5297
    %v6476 = vunpack.c.h.b16 %v5297
    %v6477 = vunpack.c.l.b16 %v5298
    %v6478 = vunpack.c.h.b16 %v5298
    %v6479 = vunpack.c.l.b16 %v5299
    %v6480 = vunpack.c.h.b16 %v5299
    %v6481 = vunpack.c.l.b16 %v5300
    %v6482 = vunpack.c.h.b16 %v5300
    %v6483 = vunpack.c.l.b16 %v5301
    %v6484 = vunpack.c.h.b16 %v5301
    %v6485 = vunpack.c.l.b16 %v5302
    %v6486 = vunpack.c.h.b16 %v5302
    %v6487 = vunpack.c.l.b16 %v5303
    %v6488 = vunpack.c.h.b16 %v5303
    %v6489 = vunpack.c.l.b16 %v5304
    %v6490 = vunpack.c.h.b16 %v5304
    %v6491 = vunpack.c.l.b16 %v5305
    %v6492 = vunpack.c.h.b16 %v5305
    %v6493 = vunpack.c.l.b16 %v5306
    %v6494 = vunpack.c.h.b16 %v5306
    %v6495 = vunpack.c.l.b16 %v5307
    %v6496 = vunpack.c.h.b16 %v5307
    %v6497 = vunpack.c.l.b16 %v5308
    %v6498 = vunpack.c.h.b16 %v5308
    %v6499 = vunpack.c.l.b16 %v5309
    %v6500 = vunpack.c.h.b16 %v5309
    %v6501 = vunpack.c.l.b16 %v5310
    %v6502 = vunpack.c.h.b16 %v5310
    %v6503 = vunpack.c.l.b16 %v5311
    %v6504 = vunpack.c.h.b16 %v5311
    %v6505 = vunpack.c.l.b16 %v5312
    %v6506 = vunpack.c.h.b16 %v5312
    %v6507 = vunpack.c.l.b16 %v5313
    %v6508 = vunpack.c.h.b16 %v5313
    %v6509 = vunpack.c.l.b16 %v5314
    %v6510 = vunpack.c.h.b16 %v5314
    %v6511 = vunpack.c.l.b16 %v5315
    %v6512 = vunpack.c.h.b16 %v5315
    %v6513 = vunpack.c.l.b16 %v5316
    %v6514 = vunpack.c.h.b16 %v5316
    %v6515 = vunpack.c.l.b16 %v5317
    %v6516 = vunpack.c.h.b16 %v5317
    %v6517 = vunpack.c.l.b16 %v5318
    %v6518 = vunpack.c.h.b16 %v5318
    %v6519 = vunpack.c.l.b16 %v5319
    %v6520 = vunpack.c.h.b16 %v5319
    %v6521 = vunpack.c.l.b16 %v5320
    %v6522 = vunpack.c.h.b16 %v5320
    %v6523 = vunpack.c.l.b16 %v5321
    %v6524 = vunpack.c.h.b16 %v5321
    %v6525 = vunpack.c.l.b16 %v5322
    %v6526 = vunpack.c.h.b16 %v5322
    %v6527 = vunpack.c.l.b16 %v5323
    %v6528 = vunpack.c.h.b16 %v5323
    %v6529 = vunpack.c.l.b16 %v5324
    %v6530 = vunpack.c.h.b16 %v5324
    %v6531 = vunpack.c.l.b16 %v5325
    %v6532 = vunpack.c.h.b16 %v5325
    %v6533 = vunpack.c.l.b16 %v5326
    %v6534 = vunpack.c.h.b16 %v5326
    %v6535 = vunpack.c.l.b16 %v5327
    %v6536 = vunpack.c.h.b16 %v5327
    %v6537 = vunpack.c.l.b16 %v5328
    %v6538 = vunpack.c.h.b16 %v5328
    %v6539 = vunpack.c.l.b16 %v5329
    %v6540 = vunpack.c.h.b16 %v5329
    %v6541 = vunpack.c.l.b16 %v5330
    %v6542 = vunpack.c.h.b16 %v5330
    %v6543 = vunpack.c.l.b16 %v5331
    %v6544 = vunpack.c.h.b16 %v5331
    %v6545 = vunpack.c.l.b16 %v5332
    %v6546 = vunpack.c.h.b16 %v5332
    %v6547 = vunpack.c.l.b16 %v5333
    %v6548 = vunpack.c.h.b16 %v5333
    %v6549 = vunpack.c.l.b16 %v5334
    %v6550 = vunpack.c.h.b16 %v5334
    %v6551 = vunpack.c.l.b16 %v5335
    %v6552 = vunpack.c.h.b16 %v5335
    %v6553 = vunpack.c.l.b16 %v5336
    %v6554 = vunpack.c.h.b16 %v5336
    %v6555 = vunpack.c.l.b16 %v5337
    %v6556 = vunpack.c.h.b16 %v5337
    %v6557 = vunpack.c.l.b16 %v5338
    %v6558 = vunpack.c.h.b16 %v5338
    %v6559 = vunpack.c.l.b16 %v5339
    %v6560 = vunpack.c.h.b16 %v5339
    %v6561 = vunpack.c.l.b16 %v5340
    %v6562 = vunpack.c.h.b16 %v5340
    %v6563 = vunpack.c.l.b16 %v5341
    %v6564 = vunpack.c.h.b16 %v5341
    %v6565 = vunpack.c.l.b16 %v5342
    %v6566 = vunpack.c.h.b16 %v5342
    %v6567 = vunpack.c.l.b16 %v5343
    %v6568 = vunpack.c.h.b16 %v5343
    %v6569 = vunpack.c.l.b16 %v5344
    %v6570 = vunpack.c.h.b16 %v5344
    %v6571 = vunpack.c.l.b16 %v5345
    %v6572 = vunpack.c.h.b16 %v5345
    %v6573 = vunpack.c.l.b16 %v5346
    %v6574 = vunpack.c.h.b16 %v5346
    %v6575 = vunpack.c.l.b16 %v5347
    %v6576 = vunpack.c.h.b16 %v5347
    %v6577 = vunpack.c.l.b16 %v5348
    %v6578 = vunpack.c.h.b16 %v5348
    %v6579 = vunpack.c.l.b16 %v5349
    %v6580 = vunpack.c.h.b16 %v5349
    %v6581 = vunpack.c.l.b16 %v5350
    %v6582 = vunpack.c.h.b16 %v5350
    %v6583 = vunpack.c.l.b16 %v5351
    %v6584 = vunpack.c.h.b16 %v5351
    %v6585 = vunpack.c.l.b16 %v5352
    %v6586 = vunpack.c.h.b16 %v5352
    %v6587 = vunpack.c.l.b16 %v5353
    %v6588 = vunpack.c.h.b16 %v5353
    %v6589 = vunpack.c.l.b16 %v5354
    %v6590 = vunpack.c.h.b16 %v5354
    %v6591 = vunpack.c.l.b16 %v5355
    %v6592 = vunpack.c.h.b16 %v5355
    %v6593 = vunpack.c.l.b16 %v5356
    %v6594 = vunpack.c.h.b16 %v5356
    %v6595 = vunpack.c.l.b16 %v5357
    %v6596 = vunpack.c.h.b16 %v5357
    %v6597 = vunpack.c.l.b16 %v5358
    %v6598 = vunpack.c.h.b16 %v5358
    %v6599 = vunpack.c.l.b16 %v5359
    %v6600 = vunpack.c.h.b16 %v5359
    %v6601 = vunpack.c.l.b16 %v5360
    %v6602 = vunpack.c.h.b16 %v5360
    %v6603 = vunpack.c.l.b16 %v5361
    %v6604 = vunpack.c.h.b16 %v5361
    %v6605 = vunpack.c.l.b16 %v5362
    %v6606 = vunpack.c.h.b16 %v5362
    %v6607 = vunpack.c.l.b16 %v5363
    %v6608 = vunpack.c.h.b16 %v5363
    %v6609 = vunpack.c.l.b16 %v5364
    %v6610 = vunpack.c.h.b16 %v5364
    %v6611 = vunpack.c.l.b16 %v5365
    %v6612 = vunpack.c.h.b16 %v5365
    %v6613 = vunpack.c.l.b16 %v5366
    %v6614 = vunpack.c.h.b16 %v5366
    %v6615 = vunpack.c.l.b16 %v5367
    %v6616 = vunpack.c.h.b16 %v5367
    %v6617 = vunpack.c.l.b16 %v5368
    %v6618 = vunpack.c.h.b16 %v5368
    %v6619 = vunpack.c.l.b16 %v5369
    %v6620 = vunpack.c.h.b16 %v5369
    %v6621 = vunpack.c.l.b16 %v5370
    %v6622 = vunpack.c.h.b16 %v5370
    %v6623 = vunpack.c.l.b16 %v5371
    %v6624 = vunpack.c.h.b16 %v5371
    %v6625 = vunpack.c.l.b16 %v5372
    %v6626 = vunpack.c.h.b16 %v5372
    %v6627 = vunpack.c.l.b16 %v5373
    %v6628 = vunpack.c.h.b16 %v5373
    %v6629 = vunpack.c.l.b16 %v5374
    %v6630 = vunpack.c.h.b16 %v5374
    %v6631 = vunpack.c.l.b16 %v5375
    %v6632 = vunpack.c.h.b16 %v5375
    %v6633 = vunpack.c.l.b16 %v5376
    %v6634 = vunpack.c.h.b16 %v5376
    %v6635 = vunpack.c.l.b16 %v5377
    %v6636 = vunpack.c.h.b16 %v5377
    %v6637 = vunpack.c.l.b16 %v5378
    %v6638 = vunpack.c.h.b16 %v5378
    %v6639 = vunpack.c.l.b16 %v5379
    %v6640 = vunpack.c.h.b16 %v5379
    %v6641 = vunpack.c.l.b16 %v5380
    %v6642 = vunpack.c.h.b16 %v5380
    %v6643 = vunpack.c.l.b16 %v5381
    %v6644 = vunpack.c.h.b16 %v5381
    %v6645 = vunpack.c.l.b16 %v5382
    %v6646 = vunpack.c.h.b16 %v5382
    %v6647 = vunpack.c.l.b16 %v5383
    %v6648 = vunpack.c.h.b16 %v5383
    %v6649 = vunpack.c.l.b16 %v5384
    %v6650 = vunpack.c.h.b16 %v5384
    %v6651 = vunpack.c.l.b16 %v5385
    %v6652 = vunpack.c.h.b16 %v5385
    %v6653 = vunpack.c.l.b16 %v5386
    %v6654 = vunpack.c.h.b16 %v5386
    %v6655 = vunpack.c.l.b16 %v5387
    %v6656 = vunpack.c.h.b16 %v5387
    %v6657 = vunpack.c.l.b16 %v5388
    %v6658 = vunpack.c.h.b16 %v5388
    %v6659 = vunpack.c.l.b16 %v5389
    %v6660 = vunpack.c.h.b16 %v5389
    %v6661 = vunpack.c.l.b16 %v5390
    %v6662 = vunpack.c.h.b16 %v5390
    %v6663 = vunpack.c.l.b16 %v5391
    %v6664 = vunpack.c.h.b16 %v5391
    %v6665 = vunpack.c.l.b16 %v5392
    %v6666 = vunpack.c.h.b16 %v5392
    %v6667 = vunpack.c.l.b16 %v5393
    %v6668 = vunpack.c.h.b16 %v5393
    %v6669 = vunpack.c.l.b16 %v5394
    %v6670 = vunpack.c.h.b16 %v5394
    %v6671 = vunpack.c.l.b16 %v5395
    %v6672 = vunpack.c.h.b16 %v5395
    %v6673 = vunpack.c.l.b16 %v5396
    %v6674 = vunpack.c.h.b16 %v5396
    %v6675 = vunpack.c.l.b16 %v5397
    %v6676 = vunpack.c.h.b16 %v5397
    %v6677 = vunpack.c.l.b16 %v5398
    %v6678 = vunpack.c.h.b16 %v5398
    %v6679 = vunpack.c.l.b16 %v5399
    %v6680 = vunpack.c.h.b16 %v5399
    %v6681 = vunpack.c.l.b16 %v5400
    %v6682 = vunpack.c.h.b16 %v5400
    %v6683 = vunpack.c.l.b16 %v5401
    %v6684 = vunpack.c.h.b16 %v5401
    %v6685 = vunpack.c.l.b16 %v5402
    %v6686 = vunpack.c.h.b16 %v5402
    %v6687 = vunpack.c.l.b16 %v5403
    %v6688 = vunpack.c.h.b16 %v5403
    %v6689 = vunpack.c.l.b16 %v5404
    %v6690 = vunpack.c.h.b16 %v5404
    %v6691 = vunpack.c.l.b16 %v5405
    %v6692 = vunpack.c.h.b16 %v5405
    %v6693 = vunpack.c.l.b16 %v5406
    %v6694 = vunpack.c.h.b16 %v5406
    %v6695 = vunpack.c.l.b16 %v5407
    %v6696 = vunpack.c.h.b16 %v5407
    %v6697 = vunpack.c.l.b16 %v5408
    %v6698 = vunpack.c.h.b16 %v5408
    %v6699 = vunpack.c.l.b16 %v5409
    %v6700 = vunpack.c.h.b16 %v5409
    %v6701 = vunpack.c.l.b16 %v5410
    %v6702 = vunpack.c.h.b16 %v5410
    %v6703 = vunpack.c.l.b16 %v5411
    %v6704 = vunpack.c.h.b16 %v5411
    %v6705 = vunpack.c.l.b16 %v5412
    %v6706 = vunpack.c.h.b16 %v5412
    %v6707 = vunpack.c.l.b16 %v5413
    %v6708 = vunpack.c.h.b16 %v5413
    %v6709 = vunpack.c.l.b16 %v5414
    %v6710 = vunpack.c.h.b16 %v5414
    %v6711 = vunpack.c.l.b16 %v5415
    %v6712 = vunpack.c.h.b16 %v5415
    %v6713 = vunpack.c.l.b16 %v5416
    %v6714 = vunpack.c.h.b16 %v5416
    %v6715 = vunpack.c.l.b16 %v5417
    %v6716 = vunpack.c.h.b16 %v5417
    %v6717 = vunpack.c.l.b16 %v5418
    %v6718 = vunpack.c.h.b16 %v5418
    %v6719 = vunpack.c.l.b16 %v5419
    %v6720 = vunpack.c.h.b16 %v5419
    %v6721 = vunpack.c.l.b16 %v5420
    %v6722 = vunpack.c.h.b16 %v5420
    %v6723 = vunpack.c.l.b16 %v5421
    %v6724 = vunpack.c.h.b16 %v5421
    %v6725 = vunpack.c.l.b16 %v5422
    %v6726 = vunpack.c.h.b16 %v5422
    %v6727 = vunpack.c.l.b16 %v5423
    %v6728 = vunpack.c.h.b16 %v5423
    %v6729 = vunpack.c.l.b16 %v5424
    %v6730 = vunpack.c.h.b16 %v5424
    %v6731 = vunpack.c.l.b16 %v5425
    %v6732 = vunpack.c.h.b16 %v5425
    %v6733 = vunpack.c.l.b16 %v5426
    %v6734 = vunpack.c.h.b16 %v5426
    %v6735 = vunpack.c.l.b16 %v5427
    %v6736 = vunpack.c.h.b16 %v5427
    %v6737 = vunpack.c.l.b16 %v5428
    %v6738 = vunpack.c.h.b16 %v5428
    %v6739 = vunpack.c.l.b16 %v5429
    %v6740 = vunpack.c.h.b16 %v5429
    %v6741 = vunpack.c.l.b16 %v5430
    %v6742 = vunpack.c.h.b16 %v5430
    %v6743 = vunpack.c.l.b16 %v5431
    %v6744 = vunpack.c.h.b16 %v5431
    %v6745 = vunpack.c.l.b16 %v5432
    %v6746 = vunpack.c.h.b16 %v5432
    %v6747 = vunpack.c.l.b16 %v5433
    %v6748 = vunpack.c.h.b16 %v5433
    %v6749 = vunpack.c.l.b16 %v5434
    %v6750 = vunpack.c.h.b16 %v5434
    %v6751 = vunpack.c.l.b16 %v5435
    %v6752 = vunpack.c.h.b16 %v5435
    %v6753 = vunpack.c.l.b16 %v5436
    %v6754 = vunpack.c.h.b16 %v5436
    %v6755 = vunpack.c.l.b16 %v5437
    %v6756 = vunpack.c.h.b16 %v5437
    %v6757 = vunpack.c.l.b16 %v5438
    %v6758 = vunpack.c.h.b16 %v5438
    %v6759 = vunpack.c.l.b16 %v5439
    %v6760 = vunpack.c.h.b16 %v5439
    %v6761 = vunpack.c.l.b16 %v5440
    %v6762 = vunpack.c.h.b16 %v5440
    %v6763 = vunpack.c.l.b16 %v5441
    %v6764 = vunpack.c.h.b16 %v5441
    %v6765 = vunpack.c.l.b16 %v5442
    %v6766 = vunpack.c.h.b16 %v5442
    %v6767 = vunpack.c.l.b16 %v5443
    %v6768 = vunpack.c.h.b16 %v5443
    %v6769 = vunpack.c.l.b16 %v5444
    %v6770 = vunpack.c.h.b16 %v5444
    %v6771 = vunpack.c.l.b16 %v5445
    %v6772 = vunpack.c.h.b16 %v5445
    %v6773 = vunpack.c.l.b16 %v5446
    %v6774 = vunpack.c.h.b16 %v5446
    %v6775 = vunpack.c.l.b16 %v5447
    %v6776 = vunpack.c.h.b16 %v5447
    %v6777 = vunpack.c.l.b16 %v5448
    %v6778 = vunpack.c.h.b16 %v5448
    %v6779 = vunpack.c.l.b16 %v5449
    %v6780 = vunpack.c.h.b16 %v5449
    %v6781 = vunpack.c.l.b16 %v5450
    %v6782 = vunpack.c.h.b16 %v5450
    %v6783 = vunpack.c.l.b16 %v5451
    %v6784 = vunpack.c.h.b16 %v5451
    %v6785 = vunpack.c.l.b16 %v5452
    %v6786 = vunpack.c.h.b16 %v5452
    %v6787 = vunpack.c.l.b16 %v5453
    %v6788 = vunpack.c.h.b16 %v5453
    %v6789 = vunpack.c.l.b16 %v5454
    %v6790 = vunpack.c.h.b16 %v5454
    %v6791 = vunpack.c.l.b16 %v5455
    %v6792 = vunpack.c.h.b16 %v5455
    %v6793 = vunpack.c.l.b16 %v5456
    %v6794 = vunpack.c.h.b16 %v5456
    %v6795 = vunpack.c.l.b16 %v5457
    %v6796 = vunpack.c.h.b16 %v5457
    %v6797 = vunpack.c.l.b16 %v5458
    %v6798 = vunpack.c.h.b16 %v5458
    %v6799 = vunpack.c.l.b16 %v5459
    %v6800 = vunpack.c.h.b16 %v5459
    %v6801 = vunpack.c.l.b16 %v5460
    %v6802 = vunpack.c.h.b16 %v5460
    %v6803 = vunpack.c.l.b16 %v5461
    %v6804 = vunpack.c.h.b16 %v5461
    %v6805 = vunpack.c.l.b16 %v5462
    %v6806 = vunpack.c.h.b16 %v5462
    %v6807 = vunpack.c.l.b16 %v5463
    %v6808 = vunpack.c.h.b16 %v5463
    %v6809 = vunpack.c.l.b16 %v5464
    %v6810 = vunpack.c.h.b16 %v5464
    %v6811 = vunpack.c.l.b16 %v5465
    %v6812 = vunpack.c.h.b16 %v5465
    %v6813 = vunpack.c.l.b16 %v5466
    %v6814 = vunpack.c.h.b16 %v5466
    %v6815 = vunpack.c.l.b16 %v5467
    %v6816 = vunpack.c.h.b16 %v5467
    %v6817 = vunpack.c.l.b16 %v5468
    %v6818 = vunpack.c.h.b16 %v5468
    %v6819 = vunpack.c.l.b16 %v5469
    %v6820 = vunpack.c.h.b16 %v5469
    %v6821 = vunpack.c.l.b16 %v5470
    %v6822 = vunpack.c.h.b16 %v5470
    %v6823 = vunpack.c.l.b16 %v5471
    %v6824 = vunpack.c.h.b16 %v5471
    %v6825 = vunpack.c.l.b16 %v5472
    %v6826 = vunpack.c.h.b16 %v5472
    %v6827 = vunpack.c.l.b16 %v5473
    %v6828 = vunpack.c.h.b16 %v5473
    %v6829 = vunpack.c.l.b16 %v5474
    %v6830 = vunpack.c.h.b16 %v5474
    %v6831 = vunpack.c.l.b16 %v5475
    %v6832 = vunpack.c.h.b16 %v5475
    %v6833 = vunpack.c.l.b16 %v5476
    %v6834 = vunpack.c.h.b16 %v5476
    %v6835 = vunpack.c.l.b16 %v5477
    %v6836 = vunpack.c.h.b16 %v5477
    %v6837 = vunpack.c.l.b16 %v5478
    %v6838 = vunpack.c.h.b16 %v5478
    %v6839 = vunpack.c.l.b16 %v5479
    %v6840 = vunpack.c.h.b16 %v5479
    %v6841 = vunpack.c.l.b16 %v5480
    %v6842 = vunpack.c.h.b16 %v5480
    %v6843 = vunpack.c.l.b16 %v5481
    %v6844 = vunpack.c.h.b16 %v5481
    %v6845 = vunpack.c.l.b16 %v5482
    %v6846 = vunpack.c.h.b16 %v5482
    %v6847 = vunpack.c.l.b16 %v5483
    %v6848 = vunpack.c.h.b16 %v5483
    %v6849 = vunpack.c.l.b16 %v5484
    %v6850 = vunpack.c.h.b16 %v5484
    %v6851 = vunpack.c.l.b16 %v5485
    %v6852 = vunpack.c.h.b16 %v5485
    %v6853 = vunpack.c.l.b16 %v5486
    %v6854 = vunpack.c.h.b16 %v5486
    %v6855 = vunpack.c.l.b16 %v5487
    %v6856 = vunpack.c.h.b16 %v5487
    %v6857 = vunpack.c.l.b16 %v5488
    %v6858 = vunpack.c.h.b16 %v5488
    %v6859 = vunpack.c.l.b16 %v5489
    %v6860 = vunpack.c.h.b16 %v5489
    %v6861 = vunpack.c.l.b16 %v5490
    %v6862 = vunpack.c.h.b16 %v5490
    %v6863 = vunpack.c.l.b16 %v5491
    %v6864 = vunpack.c.h.b16 %v5491
    %v6865 = vunpack.c.l.b16 %v5492
    %v6866 = vunpack.c.h.b16 %v5492
    %v6867 = vunpack.c.l.b16 %v5493
    %v6868 = vunpack.c.h.b16 %v5493
    %v6869 = vunpack.c.l.b16 %v5494
    %v6870 = vunpack.c.h.b16 %v5494
    %v6871 = vunpack.c.l.b16 %v5495
    %v6872 = vunpack.c.h.b16 %v5495
    %v6873 = vunpack.c.l.b16 %v5496
    %v6874 = vunpack.c.h.b16 %v5496
    %v6875 = vunpack.c.l.b16 %v5497
    %v6876 = vunpack.c.h.b16 %v5497
    %v6877 = vunpack.c.l.b16 %v5498
    %v6878 = vunpack.c.h.b16 %v5498
    %v6879 = vunpack.c.l.b16 %v5499
    %v6880 = vunpack.c.h.b16 %v5499
    %v6881 = vunpack.c.l.b16 %v5500
    %v6882 = vunpack.c.h.b16 %v5500
    %v6883 = vunpack.c.l.b16 %v5501
    %v6884 = vunpack.c.h.b16 %v5501
    %v6885 = vunpack.c.l.b16 %v5502
    %v6886 = vunpack.c.h.b16 %v5502
    %v6887 = vunpack.c.l.b16 %v5503
    %v6888 = vunpack.c.h.b16 %v5503
    %v6889 = vunpack.c.l.b16 %v5504
    %v6890 = vunpack.c.h.b16 %v5504
    %v6891 = vunpack.c.l.b16 %v5505
    %v6892 = vunpack.c.h.b16 %v5505
    %v6893 = vunpack.c.l.b16 %v5506
    %v6894 = vunpack.c.h.b16 %v5506
    %v6895 = vunpack.c.l.b16 %v5507
    %v6896 = vunpack.c.h.b16 %v5507
    %v6897 = vunpack.c.l.b16 %v5508
    %v6898 = vunpack.c.h.b16 %v5508
    %v6899 = vunpack.c.l.b16 %v5509
    %v6900 = vunpack.c.h.b16 %v5509
    %v6901 = vunpack.c.l.b16 %v5510
    %v6902 = vunpack.c.h.b16 %v5510
    %v6903 = vunpack.c.l.b16 %v5511
    %v6904 = vunpack.c.h.b16 %v5511
    %v6905 = vunpack.c.l.b16 %v5512
    %v6906 = vunpack.c.h.b16 %v5512
    %v6907 = vunpack.c.l.b16 %v5513
    %v6908 = vunpack.c.h.b16 %v5513
    %v6909 = vunpack.c.l.b16 %v5514
    %v6910 = vunpack.c.h.b16 %v5514
    %v6911 = vunpack.c.l.b16 %v5515
    %v6912 = vunpack.c.h.b16 %v5515
    %v6913 = vunpack.c.l.b16 %v5516
    %v6914 = vunpack.c.h.b16 %v5516
    %v6915 = vunpack.c.l.b16 %v5517
    %v6916 = vunpack.c.h.b16 %v5517
    %v6917 = vunpack.c.l.b16 %v5518
    %v6918 = vunpack.c.h.b16 %v5518
    %v6919 = vunpack.c.l.b16 %v5519
    %v6920 = vunpack.c.h.b16 %v5519
    %v6921 = vunpack.c.l.b16 %v5520
    %v6922 = vunpack.c.h.b16 %v5520
    %v6923 = vunpack.c.l.b16 %v5521
    %v6924 = vunpack.c.h.b16 %v5521
    %v6925 = vunpack.c.l.b16 %v5522
    %v6926 = vunpack.c.h.b16 %v5522
    %v6927 = vunpack.c.l.b16 %v5523
    %v6928 = vunpack.c.h.b16 %v5523
    %v6929 = vunpack.c.l.b16 %v5524
    %v6930 = vunpack.c.h.b16 %v5524
    %v6931 = vunpack.c.l.b16 %v5525
    %v6932 = vunpack.c.h.b16 %v5525
    %v6933 = vunpack.c.l.b16 %v5526
    %v6934 = vunpack.c.h.b16 %v5526
    %v6935 = vunpack.c.l.b16 %v5527
    %v6936 = vunpack.c.h.b16 %v5527
    %v6937 = vunpack.c.l.b16 %v5528
    %v6938 = vunpack.c.h.b16 %v5528
    %v6939 = vunpack.c.l.b16 %v5529
    %v6940 = vunpack.c.h.b16 %v5529
    %v6941 = vunpack.c.l.b16 %v5530
    %v6942 = vunpack.c.h.b16 %v5530
    %v6943 = vunpack.c.l.b16 %v5531
    %v6944 = vunpack.c.h.b16 %v5531
    %v6945 = vunpack.c.l.b16 %v5532
    %v6946 = vunpack.c.h.b16 %v5532
    %v6947 = vunpack.c.l.b16 %v5533
    %v6948 = vunpack.c.h.b16 %v5533
    %v6949 = vunpack.c.l.b16 %v5534
    %v6950 = vunpack.c.h.b16 %v5534
    %v6951 = vunpack.c.l.b16 %v5535
    %v6952 = vunpack.c.h.b16 %v5535
    %v6953 = vunpack.c.l.b16 %v5536
    %v6954 = vunpack.c.h.b16 %v5536
    %v6955 = vunpack.c.l.b16 %v5537
    %v6956 = vunpack.c.h.b16 %v5537
    %v6957 = vunpack.c.l.b16 %v5538
    %v6958 = vunpack.c.h.b16 %v5538
    %v6959 = vunpack.c.l.b16 %v5539
    %v6960 = vunpack.c.h.b16 %v5539
    %v6961 = vunpack.c.l.b16 %v5540
    %v6962 = vunpack.c.h.b16 %v5540
    %v6963 = vunpack.c.l.b16 %v5541
    %v6964 = vunpack.c.h.b16 %v5541
    %v6965 = vunpack.c.l.b16 %v5542
    %v6966 = vunpack.c.h.b16 %v5542
    %v6967 = vunpack.c.l.b16 %v5543
    %v6968 = vunpack.c.h.b16 %v5543
    %v6969 = vunpack.c.l.b16 %v5544
    %v6970 = vunpack.c.h.b16 %v5544
    %v6971 = vunpack.c.l.b16 %v5545
    %v6972 = vunpack.c.h.b16 %v5545
    %v6973 = vunpack.c.l.b16 %v5546
    %v6974 = vunpack.c.h.b16 %v5546
    %v6975 = vunpack.c.l.b16 %v5547
    %v6976 = vunpack.c.h.b16 %v5547
    %v6977 = vunpack.c.l.b16 %v5548
    %v6978 = vunpack.c.h.b16 %v5548
    %v6979 = vunpack.c.l.b16 %v5549
    %v6980 = vunpack.c.h.b16 %v5549
    %v6981 = vunpack.c.l.b16 %v5550
    %v6982 = vunpack.c.h.b16 %v5550
    %v6983 = vunpack.c.l.b16 %v5551
    %v6984 = vunpack.c.h.b16 %v5551
    %v6985 = vunpack.c.l.b16 %v5552
    %v6986 = vunpack.c.h.b16 %v5552
    %v6987 = vunpack.c.l.b16 %v5553
    %v6988 = vunpack.c.h.b16 %v5553
    %v6989 = vunpack.c.l.b16 %v5554
    %v6990 = vunpack.c.h.b16 %v5554
    %v6991 = vunpack.c.l.b16 %v5555
    %v6992 = vunpack.c.h.b16 %v5555
    %v6993 = vunpack.c.l.b16 %v5556
    %v6994 = vunpack.c.h.b16 %v5556
    %v6995 = vunpack.c.l.b16 %v5557
    %v6996 = vunpack.c.h.b16 %v5557
    %v6997 = vunpack.c.l.b16 %v5558
    %v6998 = vunpack.c.h.b16 %v5558
    %v6999 = vunpack.c.l.b16 %v5559
    %v7000 = vunpack.c.h.b16 %v5559
    %v7001 = vunpack.c.l.b16 %v5560
    %v7002 = vunpack.c.h.b16 %v5560
    %v7003 = vunpack.c.l.b16 %v5561
    %v7004 = vunpack.c.h.b16 %v5561
    %v7005 = vunpack.c.l.b16 %v5562
    %v7006 = vunpack.c.h.b16 %v5562
    %v7007 = vunpack.c.l.b16 %v5563
    %v7008 = vunpack.c.h.b16 %v5563
    %v7009 = vunpack.c.l.b16 %v5564
    %v7010 = vunpack.c.h.b16 %v5564
    %v7011 = vunpack.c.l.b16 %v5565
    %v7012 = vunpack.c.h.b16 %v5565
    %v7013 = vunpack.c.l.b16 %v5566
    %v7014 = vunpack.c.h.b16 %v5566
    %v7015 = vunpack.c.l.b16 %v5567
    %v7016 = vunpack.c.h.b16 %v5567
    %v7017 = vunpack.c.l.b16 %v5568
    %v7018 = vunpack.c.h.b16 %v5568
    %v7019 = vunpack.c.l.b16 %v5569
    %v7020 = vunpack.c.h.b16 %v5569
    %v7021 = vunpack.c.l.b16 %v5570
    %v7022 = vunpack.c.h.b16 %v5570
    %v7023 = vunpack.c.l.b16 %v5571
    %v7024 = vunpack.c.h.b16 %v5571
    %v7025 = vunpack.c.l.b16 %v5572
    %v7026 = vunpack.c.h.b16 %v5572
    %v7027 = vunpack.c.l.b16 %v5573
    %v7028 = vunpack.c.h.b16 %v5573
    %v7029 = vunpack.c.l.b16 %v5574
    %v7030 = vunpack.c.h.b16 %v5574
    %v7031 = vunpack.c.l.b16 %v5575
    %v7032 = vunpack.c.h.b16 %v5575
    %v7033 = vunpack.c.l.b16 %v5576
    %v7034 = vunpack.c.h.b16 %v5576
    %v7035 = vunpack.c.l.b16 %v5577
    %v7036 = vunpack.c.h.b16 %v5577
    %v7037 = vunpack.c.l.b16 %v5578
    %v7038 = vunpack.c.h.b16 %v5578
    %v7039 = vunpack.c.l.b16 %v5579
    %v7040 = vunpack.c.h.b16 %v5579
    %v7041 = vunpack.c.l.b16 %v5580
    %v7042 = vunpack.c.h.b16 %v5580
    %v7043 = vunpack.c.l.b16 %v5581
    %v7044 = vunpack.c.h.b16 %v5581
    %v7045 = vunpack.c.l.b16 %v5582
    %v7046 = vunpack.c.h.b16 %v5582
    %v7047 = vunpack.c.l.b16 %v5583
    %v7048 = vunpack.c.h.b16 %v5583
    %v7049 = vunpack.c.l.b16 %v5584
    %v7050 = vunpack.c.h.b16 %v5584
    %v7051 = vunpack.c.l.b16 %v5585
    %v7052 = vunpack.c.h.b16 %v5585
    %v7053 = vunpack.c.l.b16 %v5586
    %v7054 = vunpack.c.h.b16 %v5586
    %v7055 = vunpack.c.l.b16 %v5587
    %v7056 = vunpack.c.h.b16 %v5587
    %v7057 = vunpack.c.l.b16 %v5588
    %v7058 = vunpack.c.h.b16 %v5588
    %v7059 = vunpack.c.l.b16 %v5589
    %v7060 = vunpack.c.h.b16 %v5589
    %v7061 = vunpack.c.l.b16 %v5590
    %v7062 = vunpack.c.h.b16 %v5590
    %v7063 = vunpack.c.l.b16 %v5591
    %v7064 = vunpack.c.h.b16 %v5591
    %v7065 = vunpack.c.l.b16 %v5592
    %v7066 = vunpack.c.h.b16 %v5592
    %v7067 = vunpack.c.l.b16 %v5593
    %v7068 = vunpack.c.h.b16 %v5593
    %v7069 = vunpack.c.l.b16 %v5594
    %v7070 = vunpack.c.h.b16 %v5594
    %v7071 = vunpack.c.l.b16 %v5595
    %v7072 = vunpack.c.h.b16 %v5595
    %v7073 = vunpack.c.l.b16 %v5596
    %v7074 = vunpack.c.h.b16 %v5596
    %v7075 = vunpack.c.l.b16 %v5597
    %v7076 = vunpack.c.h.b16 %v5597
    %v7077 = vunpack.c.l.b16 %v5598
    %v7078 = vunpack.c.h.b16 %v5598
    %v7079 = vunpack.c.l.b16 %v5599
    %v7080 = vunpack.c.h.b16 %v5599
    %v7081 = vunpack.c.l.b16 %v5600
    %v7082 = vunpack.c.h.b16 %v5600
    %v7083 = vunpack.c.l.b16 %v5601
    %v7084 = vunpack.c.h.b16 %v5601
    %v7085 = vunpack.c.l.b16 %v5602
    %v7086 = vunpack.c.h.b16 %v5602
    %v7087 = vunpack.c.l.b16 %v5603
    %v7088 = vunpack.c.h.b16 %v5603
    %v7089 = vunpack.c.l.b16 %v5604
    %v7090 = vunpack.c.h.b16 %v5604
    %v7091 = vunpack.c.l.b16 %v5605
    %v7092 = vunpack.c.h.b16 %v5605
    %v7093 = vunpack.c.l.b16 %v5606
    %v7094 = vunpack.c.h.b16 %v5606
    %v7095 = vunpack.c.l.b16 %v5607
    %v7096 = vunpack.c.h.b16 %v5607
    %v7097 = vunpack.c.l.b16 %v5608
    %v7098 = vunpack.c.h.b16 %v5608
    %v7099 = vunpack.c.l.b16 %v5609
    %v7100 = vunpack.c.h.b16 %v5609
    %v7101 = vunpack.c.l.b16 %v5610
    %v7102 = vunpack.c.h.b16 %v5610
    %v7103 = vunpack.c.l.b16 %v5611
    %v7104 = vunpack.c.h.b16 %v5611
    %v7105 = vunpack.c.l.b16 %v5612
    %v7106 = vunpack.c.h.b16 %v5612
    %v7107 = vunpack.c.l.b16 %v5613
    %v7108 = vunpack.c.h.b16 %v5613
    %v7109 = vunpack.c.l.b16 %v5614
    %v7110 = vunpack.c.h.b16 %v5614
    %v7111 = vunpack.c.l.b16 %v5615
    %v7112 = vunpack.c.h.b16 %v5615
    %v7113 = vunpack.c.l.b16 %v5616
    %v7114 = vunpack.c.h.b16 %v5616
    %v7115 = vunpack.c.l.b16 %v5617
    %v7116 = vunpack.c.h.b16 %v5617
    %v7117 = vunpack.c.l.b16 %v5618
    %v7118 = vunpack.c.h.b16 %v5618
    %v7119 = vunpack.c.l.b16 %v5619
    %v7120 = vunpack.c.h.b16 %v5619
    %v7121 = vunpack.c.l.b16 %v5620
    %v7122 = vunpack.c.h.b16 %v5620
    %v7123 = vunpack.c.l.b16 %v5621
    %v7124 = vunpack.c.h.b16 %v5621
    %v7125 = vunpack.c.l.b16 %v5622
    %v7126 = vunpack.c.h.b16 %v5622
    %v7127 = vunpack.c.l.b16 %v5623
    %v7128 = vunpack.c.h.b16 %v5623
    %v7129 = vunpack.c.l.b16 %v5624
    %v7130 = vunpack.c.h.b16 %v5624
    %v7131 = vunpack.c.l.b16 %v5625
    %v7132 = vunpack.c.h.b16 %v5625
    %v7133 = vunpack.c.l.b16 %v5626
    %v7134 = vunpack.c.h.b16 %v5626
    %v7135 = vunpack.c.l.b16 %v5627
    %v7136 = vunpack.c.h.b16 %v5627
    %v7137 = vunpack.c.l.b16 %v5628
    %v7138 = vunpack.c.h.b16 %v5628
    %v7139 = vunpack.c.l.b16 %v5629
    %v7140 = vunpack.c.h.b16 %v5629
    %v7141 = vunpack.c.l.b16 %v5630
    %v7142 = vunpack.c.h.b16 %v5630
    %v7143 = vunpack.c.l.b16 %v5631
    %v7144 = vunpack.c.h.b16 %v5631
    %v7145 = vunpack.c.l.b16 %v5632
    %v7146 = vunpack.c.h.b16 %v5632
    %v7147 = vunpack.c.l.b16 %v5633
    %v7148 = vunpack.c.h.b16 %v5633
    %v7149 = vunpack.c.l.b16 %v5634
    %v7150 = vunpack.c.h.b16 %v5634
    %v7151 = vunpack.c.l.b16 %v5635
    %v7152 = vunpack.c.h.b16 %v5635
    %v7153 = vunpack.c.l.b16 %v5636
    %v7154 = vunpack.c.h.b16 %v5636
    %v7155 = vunpack.c.l.b16 %v5637
    %v7156 = vunpack.c.h.b16 %v5637
    %v7157 = vunpack.c.l.b16 %v5638
    %v7158 = vunpack.c.h.b16 %v5638
    %v7159 = vunpack.c.l.b16 %v5639
    %v7160 = vunpack.c.h.b16 %v5639
    %v7161 = vunpack.c.l.b16 %v5640
    %v7162 = vunpack.c.h.b16 %v5640
    %v7163 = vunpack.c.l.b16 %v5641
    %v7164 = vunpack.c.h.b16 %v5641
    %v7165 = vunpack.c.l.b16 %v5642
    %v7166 = vunpack.c.h.b16 %v5642
    %v7167 = vunpack.c.l.b16 %v5643
    %v7168 = vunpack.c.h.b16 %v5643
    %v7169 = vunpack.c.l.b16 %v5644
    %v7170 = vunpack.c.h.b16 %v5644
    %v7171 = vunpack.c.l.b16 %v5645
    %v7172 = vunpack.c.h.b16 %v5645
    %v7173 = vunpack.c.l.b16 %v5646
    %v7174 = vunpack.c.h.b16 %v5646
    %v7175 = vunpack.c.l.b16 %v5647
    %v7176 = vunpack.c.h.b16 %v5647
    %v7177 = vunpack.c.l.b16 %v5648
    %v7178 = vunpack.c.h.b16 %v5648
    %v7179 = vunpack.c.l.b16 %v5649
    %v7180 = vunpack.c.h.b16 %v5649
    %v7181 = vunpack.c.l.b16 %v5650
    %v7182 = vunpack.c.h.b16 %v5650
    %v7183 = vunpack.c.l.b16 %v5651
    %v7184 = vunpack.c.h.b16 %v5651
    %v7185 = vunpack.c.l.b16 %v5652
    %v7186 = vunpack.c.h.b16 %v5652
    %v7187 = vunpack.c.l.b16 %v5653
    %v7188 = vunpack.c.h.b16 %v5653
    %v7189 = vunpack.c.l.b16 %v5654
    %v7190 = vunpack.c.h.b16 %v5654
    %v7191 = vunpack.c.l.b16 %v5655
    %v7192 = vunpack.c.h.b16 %v5655
    %v7193 = vunpack.c.l.b16 %v5656
    %v7194 = vunpack.c.h.b16 %v5656
    %v7195 = vunpack.c.l.b16 %v5657
    %v7196 = vunpack.c.h.b16 %v5657
    %v7197 = vunpack.c.l.b16 %v5658
    %v7198 = vunpack.c.h.b16 %v5658
    %v7199 = vunpack.c.l.b16 %v5659
    %v7200 = vunpack.c.h.b16 %v5659
    %v7201 = vunpack.c.l.b16 %v5660
    %v7202 = vunpack.c.h.b16 %v5660
    %v7203 = vunpack.c.l.b16 %v5661
    %v7204 = vunpack.c.h.b16 %v5661
    %v7205 = vunpack.c.l.b16 %v5662
    %v7206 = vunpack.c.h.b16 %v5662
    %v7207 = vunpack.c.l.b16 %v5663
    %v7208 = vunpack.c.h.b16 %v5663
    %v7209 = vunpack.c.l.b16 %v5664
    %v7210 = vunpack.c.h.b16 %v5664
    %v7211 = vunpack.c.l.b16 %v5665
    %v7212 = vunpack.c.h.b16 %v5665
    %v7213 = vunpack.c.l.b16 %v5666
    %v7214 = vunpack.c.h.b16 %v5666
    %v7215 = vunpack.c.l.b16 %v5667
    %v7216 = vunpack.c.h.b16 %v5667
    %v7217 = vunpack.c.l.b16 %v5668
    %v7218 = vunpack.c.h.b16 %v5668
    %v7219 = vunpack.c.l.b16 %v5669
    %v7220 = vunpack.c.h.b16 %v5669
    %v7221 = vunpack.c.l.b16 %v5670
    %v7222 = vunpack.c.h.b16 %v5670
    %v7223 = vunpack.c.l.b16 %v5671
    %v7224 = vunpack.c.h.b16 %v5671
    %v7225 = vunpack.c.l.b16 %v5672
    %v7226 = vunpack.c.h.b16 %v5672
    %v7227 = vunpack.c.l.b16 %v5673
    %v7228 = vunpack.c.h.b16 %v5673
    %v7229 = vunpack.c.l.b16 %v5674
    %v7230 = vunpack.c.h.b16 %v5674
    %v7231 = vunpack.c.l.b16 %v5675
    %v7232 = vunpack.c.h.b16 %v5675
    %v7233 = vunpack.c.l.b16 %v5676
    %v7234 = vunpack.c.h.b16 %v5676
    %v7235 = vunpack.c.l.b16 %v5677
    %v7236 = vunpack.c.h.b16 %v5677
    %v7237 = vunpack.c.l.b16 %v5678
    %v7238 = vunpack.c.h.b16 %v5678
    %v7239 = vunpack.c.l.b16 %v5679
    %v7240 = vunpack.c.h.b16 %v5679
    %v7241 = vunpack.c.l.b16 %v5680
    %v7242 = vunpack.c.h.b16 %v5680
    %v7243 = vunpack.c.l.b16 %v5681
    %v7244 = vunpack.c.h.b16 %v5681
    %v7245 = vunpack.c.l.b16 %v5682
    %v7246 = vunpack.c.h.b16 %v5682
    %v7247 = vunpack.c.l.b16 %v5683
    %v7248 = vunpack.c.h.b16 %v5683
    %v7249 = vunpack.c.l.b16 %v5684
    %v7250 = vunpack.c.h.b16 %v5684
    %v7251 = vunpack.c.l.b16 %v5685
    %v7252 = vunpack.c.h.b16 %v5685
    %v7253 = vunpack.c.l.b16 %v5686
    %v7254 = vunpack.c.h.b16 %v5686
    %v7255 = vunpack.c.l.b16 %v5687
    %v7256 = vunpack.c.h.b16 %v5687
    %v7257 = vunpack.c.l.b16 %v5688
    %v7258 = vunpack.c.h.b16 %v5688
    %v7259 = vunpack.c.l.b16 %v5689
    %v7260 = vunpack.c.h.b16 %v5689
    %v7261 = vunpack.c.l.b16 %v5690
    %v7262 = vunpack.c.h.b16 %v5690
    %v7263 = vunpack.c.l.b16 %v5691
    %v7264 = vunpack.c.h.b16 %v5691
    %v7265 = vunpack.c.l.b16 %v5692
    %v7266 = vunpack.c.h.b16 %v5692
    %v7267 = vunpack.c.l.b16 %v5693
    %v7268 = vunpack.c.h.b16 %v5693
    %v7269 = vunpack.c.l.b16 %v5694
    %v7270 = vunpack.c.h.b16 %v5694
    %v7271 = vunpack.c.l.b16 %v5695
    %v7272 = vunpack.c.h.b16 %v5695
    %v7273 = vunpack.c.l.b16 %v5696
    %v7274 = vunpack.c.h.b16 %v5696
    %v7275 = vpack.c.b16 %v6259, %v6251
    %v7276 = vpack.c.b16 %v6260, %v6252
    %v7277 = vpack.c.b16 %v6261, %v6253
    %v7278 = vpack.c.b16 %v6262, %v6254
    %v7279 = vpack.c.b16 %v6263, %v6255
    %v7280 = vpack.c.b16 %v6264, %v6256
    %v7281 = vpack.c.b16 %v6265, %v6257
    %v7282 = vpack.c.b16 %v6266, %v6258
    %v7283 = vpack.c.b16 %v6275, %v6267
    %v7284 = vpack.c.b16 %v6276, %v6268
    %v7285 = vpack.c.b16 %v6277, %v6269
    %v7286 = vpack.c.b16 %v6278, %v6270
    %v7287 = vpack.c.b16 %v6279, %v6271
    %v7288 = vpack.c.b16 %v6280, %v6272
    %v7289 = vpack.c.b16 %v6281, %v6273
    %v7290 = vpack.c.b16 %v6282, %v6274
    %v7291 = vpack.c.b16 %v6291, %v6283
    %v7292 = vpack.c.b16 %v6292, %v6284
    %v7293 = vpack.c.b16 %v6293, %v6285
    %v7294 = vpack.c.b16 %v6294, %v6286
    %v7295 = vpack.c.b16 %v6295, %v6287
    %v7296 = vpack.c.b16 %v6296, %v6288
    %v7297 = vpack.c.b16 %v6297, %v6289
    %v7298 = vpack.c.b16 %v6298, %v6290
    %v7299 = vpack.c.b16 %v6307, %v6299
    %v7300 = vpack.c.b16 %v6308, %v6300
    %v7301 = vpack.c.b16 %v6309, %v6301
    %v7302 = vpack.c.b16 %v6310, %v6302
    %v7303 = vpack.c.b16 %v6311, %v6303
    %v7304 = vpack.c.b16 %v6312, %v6304
    %v7305 = vpack.c.b16 %v6313, %v6305
    %v7306 = vpack.c.b16 %v6314, %v6306
    %v7307 = vpack.c.b16 %v6323, %v6315
    %v7308 = vpack.c.b16 %v6324, %v6316
    %v7309 = vpack.c.b16 %v6325, %v6317
    %v7310 = vpack.c.b16 %v6326, %v6318
    %v7311 = vpack.c.b16 %v6327, %v6319
    %v7312 = vpack.c.b16 %v6328, %v6320
    %v7313 = vpack.c.b16 %v6329, %v6321
    %v7314 = vpack.c.b16 %v6330, %v6322
    %v7315 = vpack.c.b16 %v6339, %v6331
    %v7316 = vpack.c.b16 %v6340, %v6332
    %v7317 = vpack.c.b16 %v6341, %v6333
    %v7318 = vpack.c.b16 %v6342, %v6334
    %v7319 = vpack.c.b16 %v6343, %v6335
    %v7320 = vpack.c.b16 %v6344, %v6336
    %v7321 = vpack.c.b16 %v6345, %v6337
    %v7322 = vpack.c.b16 %v6346, %v6338
    %v7323 = vpack.c.b16 %v6355, %v6347
    %v7324 = vpack.c.b16 %v6356, %v6348
    %v7325 = vpack.c.b16 %v6357, %v6349
    %v7326 = vpack.c.b16 %v6358, %v6350
    %v7327 = vpack.c.b16 %v6359, %v6351
    %v7328 = vpack.c.b16 %v6360, %v6352
    %v7329 = vpack.c.b16 %v6361, %v6353
    %v7330 = vpack.c.b16 %v6362, %v6354
    %v7331 = vpack.c.b16 %v6371, %v6363
    %v7332 = vpack.c.b16 %v6372, %v6364
    %v7333 = vpack.c.b16 %v6373, %v6365
    %v7334 = vpack.c.b16 %v6374, %v6366
    %v7335 = vpack.c.b16 %v6375, %v6367
    %v7336 = vpack.c.b16 %v6376, %v6368
    %v7337 = vpack.c.b16 %v6377, %v6369
    %v7338 = vpack.c.b16 %v6378, %v6370
    %v7339 = vpack.c.b16 %v6387, %v6379
    %v7340 = vpack.c.b16 %v6388, %v6380
    %v7341 = vpack.c.b16 %v6389, %v6381
    %v7342 = vpack.c.b16 %v6390, %v6382
    %v7343 = vpack.c.b16 %v6391, %v6383
    %v7344 = vpack.c.b16 %v6392, %v6384
    %v7345 = vpack.c.b16 %v6393, %v6385
    %v7346 = vpack.c.b16 %v6394, %v6386
    %v7347 = vpack.c.b16 %v6403, %v6395
    %v7348 = vpack.c.b16 %v6404, %v6396
    %v7349 = vpack.c.b16 %v6405, %v6397
    %v7350 = vpack.c.b16 %v6406, %v6398
    %v7351 = vpack.c.b16 %v6407, %v6399
    %v7352 = vpack.c.b16 %v6408, %v6400
    %v7353 = vpack.c.b16 %v6409, %v6401
    %v7354 = vpack.c.b16 %v6410, %v6402
    %v7355 = vpack.c.b16 %v6419, %v6411
    %v7356 = vpack.c.b16 %v6420, %v6412
    %v7357 = vpack.c.b16 %v6421, %v6413
    %v7358 = vpack.c.b16 %v6422, %v6414
    %v7359 = vpack.c.b16 %v6423, %v6415
    %v7360 = vpack.c.b16 %v6424, %v6416
    %v7361 = vpack.c.b16 %v6425, %v6417
    %v7362 = vpack.c.b16 %v6426, %v6418
    %v7363 = vpack.c.b16 %v6435, %v6427
    %v7364 = vpack.c.b16 %v6436, %v6428
    %v7365 = vpack.c.b16 %v6437, %v6429
    %v7366 = vpack.c.b16 %v6438, %v6430
    %v7367 = vpack.c.b16 %v6439, %v6431
    %v7368 = vpack.c.b16 %v6440, %v6432
    %v7369 = vpack.c.b16 %v6441, %v6433
    %v7370 = vpack.c.b16 %v6442, %v6434
    %v7371 = vpack.c.b16 %v6451, %v6443
    %v7372 = vpack.c.b16 %v6452, %v6444
    %v7373 = vpack.c.b16 %v6453, %v6445
    %v7374 = vpack.c.b16 %v6454, %v6446
    %v7375 = vpack.c.b16 %v6455, %v6447
    %v7376 = vpack.c.b16 %v6456, %v6448
    %v7377 = vpack.c.b16 %v6457, %v6449
    %v7378 = vpack.c.b16 %v6458, %v6450
    %v7379 = vpack.c.b16 %v6467, %v6459
    %v7380 = vpack.c.b16 %v6468, %v6460
    %v7381 = vpack.c.b16 %v6469, %v6461
    %v7382 = vpack.c.b16 %v6470, %v6462
    %v7383 = vpack.c.b16 %v6471, %v6463
    %v7384 = vpack.c.b16 %v6472, %v6464
    %v7385 = vpack.c.b16 %v6473, %v6465
    %v7386 = vpack.c.b16 %v6474, %v6466
    %v7387 = vpack.c.b16 %v6483, %v6475
    %v7388 = vpack.c.b16 %v6484, %v6476
    %v7389 = vpack.c.b16 %v6485, %v6477
    %v7390 = vpack.c.b16 %v6486, %v6478
    %v7391 = vpack.c.b16 %v6487, %v6479
    %v7392 = vpack.c.b16 %v6488, %v6480
    %v7393 = vpack.c.b16 %v6489, %v6481
    %v7394 = vpack.c.b16 %v6490, %v6482
    %v7395 = vpack.c.b16 %v6499, %v6491
    %v7396 = vpack.c.b16 %v6500, %v6492
    %v7397 = vpack.c.b16 %v6501, %v6493
    %v7398 = vpack.c.b16 %v6502, %v6494
    %v7399 = vpack.c.b16 %v6503, %v6495
    %v7400 = vpack.c.b16 %v6504, %v6496
    %v7401 = vpack.c.b16 %v6505, %v6497
    %v7402 = vpack.c.b16 %v6506, %v6498
    %v7403 = vpack.c.b16 %v6515, %v6507
    %v7404 = vpack.c.b16 %v6516, %v6508
    %v7405 = vpack.c.b16 %v6517, %v6509
    %v7406 = vpack.c.b16 %v6518, %v6510
    %v7407 = vpack.c.b16 %v6519, %v6511
    %v7408 = vpack.c.b16 %v6520, %v6512
    %v7409 = vpack.c.b16 %v6521, %v6513
    %v7410 = vpack.c.b16 %v6522, %v6514
    %v7411 = vpack.c.b16 %v6531, %v6523
    %v7412 = vpack.c.b16 %v6532, %v6524
    %v7413 = vpack.c.b16 %v6533, %v6525
    %v7414 = vpack.c.b16 %v6534, %v6526
    %v7415 = vpack.c.b16 %v6535, %v6527
    %v7416 = vpack.c.b16 %v6536, %v6528
    %v7417 = vpack.c.b16 %v6537, %v6529
    %v7418 = vpack.c.b16 %v6538, %v6530
    %v7419 = vpack.c.b16 %v6547, %v6539
    %v7420 = vpack.c.b16 %v6548, %v6540
    %v7421 = vpack.c.b16 %v6549, %v6541
    %v7422 = vpack.c.b16 %v6550, %v6542
    %v7423 = vpack.c.b16 %v6551, %v6543
    %v7424 = vpack.c.b16 %v6552, %v6544
    %v7425 = vpack.c.b16 %v6553, %v6545
    %v7426 = vpack.c.b16 %v6554, %v6546
    %v7427 = vpack.c.b16 %v6563, %v6555
    %v7428 = vpack.c.b16 %v6564, %v6556
    %v7429 = vpack.c.b16 %v6565, %v6557
    %v7430 = vpack.c.b16 %v6566, %v6558
    %v7431 = vpack.c.b16 %v6567, %v6559
    %v7432 = vpack.c.b16 %v6568, %v6560
    %v7433 = vpack.c.b16 %v6569, %v6561
    %v7434 = vpack.c.b16 %v6570, %v6562
    %v7435 = vpack.c.b16 %v6579, %v6571
    %v7436 = vpack.c.b16 %v6580, %v6572
    %v7437 = vpack.c.b16 %v6581, %v6573
    %v7438 = vpack.c.b16 %v6582, %v6574
    %v7439 = vpack.c.b16 %v6583, %v6575
    %v7440 = vpack.c.b16 %v6584, %v6576
    %v7441 = vpack.c.b16 %v6585, %v6577
    %v7442 = vpack.c.b16 %v6586, %v6578
    %v7443 = vpack.c.b16 %v6595, %v6587
    %v7444 = vpack.c.b16 %v6596, %v6588
    %v7445 = vpack.c.b16 %v6597, %v6589
    %v7446 = vpack.c.b16 %v6598, %v6590
    %v7447 = vpack.c.b16 %v6599, %v6591
    %v7448 = vpack.c.b16 %v6600, %v6592
    %v7449 = vpack.c.b16 %v6601, %v6593
    %v7450 = vpack.c.b16 %v6602, %v6594
    %v7451 = vpack.c.b16 %v6611, %v6603
    %v7452 = vpack.c.b16 %v6612, %v6604
    %v7453 = vpack.c.b16 %v6613, %v6605
    %v7454 = vpack.c.b16 %v6614, %v6606
    %v7455 = vpack.c.b16 %v6615, %v6607
    %v7456 = vpack.c.b16 %v6616, %v6608
    %v7457 = vpack.c.b16 %v6617, %v6609
    %v7458 = vpack.c.b16 %v6618, %v6610
    %v7459 = vpack.c.b16 %v6627, %v6619
    %v7460 = vpack.c.b16 %v6628, %v6620
    %v7461 = vpack.c.b16 %v6629, %v6621
    %v7462 = vpack.c.b16 %v6630, %v6622
    %v7463 = vpack.c.b16 %v6631, %v6623
    %v7464 = vpack.c.b16 %v6632, %v6624
    %v7465 = vpack.c.b16 %v6633, %v6625
    %v7466 = vpack.c.b16 %v6634, %v6626
    %v7467 = vpack.c.b16 %v6643, %v6635
    %v7468 = vpack.c.b16 %v6644, %v6636
    %v7469 = vpack.c.b16 %v6645, %v6637
    %v7470 = vpack.c.b16 %v6646, %v6638
    %v7471 = vpack.c.b16 %v6647, %v6639
    %v7472 = vpack.c.b16 %v6648, %v6640
    %v7473 = vpack.c.b16 %v6649, %v6641
    %v7474 = vpack.c.b16 %v6650, %v6642
    %v7475 = vpack.c.b16 %v6659, %v6651
    %v7476 = vpack.c.b16 %v6660, %v6652
    %v7477 = vpack.c.b16 %v6661, %v6653
    %v7478 = vpack.c.b16 %v6662, %v6654
    %v7479 = vpack.c.b16 %v6663, %v6655
    %v7480 = vpack.c.b16 %v6664, %v6656
    %v7481 = vpack.c.b16 %v6665, %v6657
    %v7482 = vpack.c.b16 %v6666, %v6658
    %v7483 = vpack.c.b16 %v6675, %v6667
    %v7484 = vpack.c.b16 %v6676, %v6668
    %v7485 = vpack.c.b16 %v6677, %v6669
    %v7486 = vpack.c.b16 %v6678, %v6670
    %v7487 = vpack.c.b16 %v6679, %v6671
    %v7488 = vpack.c.b16 %v6680, %v6672
    %v7489 = vpack.c.b16 %v6681, %v6673
    %v7490 = vpack.c.b16 %v6682, %v6674
    %v7491 = vpack.c.b16 %v6691, %v6683
    %v7492 = vpack.c.b16 %v6692, %v6684
    %v7493 = vpack.c.b16 %v6693, %v6685
    %v7494 = vpack.c.b16 %v6694, %v6686
    %v7495 = vpack.c.b16 %v6695, %v6687
    %v7496 = vpack.c.b16 %v6696, %v6688
    %v7497 = vpack.c.b16 %v6697, %v6689
    %v7498 = vpack.c.b16 %v6698, %v6690
    %v7499 = vpack.c.b16 %v6707, %v6699
    %v7500 = vpack.c.b16 %v6708, %v6700
    %v7501 = vpack.c.b16 %v6709, %v6701
    %v7502 = vpack.c.b16 %v6710, %v6702
    %v7503 = vpack.c.b16 %v6711, %v6703
    %v7504 = vpack.c.b16 %v6712, %v6704
    %v7505 = vpack.c.b16 %v6713, %v6705
    %v7506 = vpack.c.b16 %v6714, %v6706
    %v7507 = vpack.c.b16 %v6723, %v6715
    %v7508 = vpack.c.b16 %v6724, %v6716
    %v7509 = vpack.c.b16 %v6725, %v6717
    %v7510 = vpack.c.b16 %v6726, %v6718
    %v7511 = vpack.c.b16 %v6727, %v6719
    %v7512 = vpack.c.b16 %v6728, %v6720
    %v7513 = vpack.c.b16 %v6729, %v6721
    %v7514 = vpack.c.b16 %v6730, %v6722
    %v7515 = vpack.c.b16 %v6739, %v6731
    %v7516 = vpack.c.b16 %v6740, %v6732
    %v7517 = vpack.c.b16 %v6741, %v6733
    %v7518 = vpack.c.b16 %v6742, %v6734
    %v7519 = vpack.c.b16 %v6743, %v6735
    %v7520 = vpack.c.b16 %v6744, %v6736
    %v7521 = vpack.c.b16 %v6745, %v6737
    %v7522 = vpack.c.b16 %v6746, %v6738
    %v7523 = vpack.c.b16 %v6755, %v6747
    %v7524 = vpack.c.b16 %v6756, %v6748
    %v7525 = vpack.c.b16 %v6757, %v6749
    %v7526 = vpack.c.b16 %v6758, %v6750
    %v7527 = vpack.c.b16 %v6759, %v6751
    %v7528 = vpack.c.b16 %v6760, %v6752
    %v7529 = vpack.c.b16 %v6761, %v6753
    %v7530 = vpack.c.b16 %v6762, %v6754
    %v7531 = vpack.c.b16 %v6771, %v6763
    %v7532 = vpack.c.b16 %v6772, %v6764
    %v7533 = vpack.c.b16 %v6773, %v6765
    %v7534 = vpack.c.b16 %v6774, %v6766
    %v7535 = vpack.c.b16 %v6775, %v6767
    %v7536 = vpack.c.b16 %v6776, %v6768
    %v7537 = vpack.c.b16 %v6777, %v6769
    %v7538 = vpack.c.b16 %v6778, %v6770
    %v7539 = vpack.c.b16 %v6787, %v6779
    %v7540 = vpack.c.b16 %v6788, %v6780
    %v7541 = vpack.c.b16 %v6789, %v6781
    %v7542 = vpack.c.b16 %v6790, %v6782
    %v7543 = vpack.c.b16 %v6791, %v6783
    %v7544 = vpack.c.b16 %v6792, %v6784
    %v7545 = vpack.c.b16 %v6793, %v6785
    %v7546 = vpack.c.b16 %v6794, %v6786
    %v7547 = vpack.c.b16 %v6803, %v6795
    %v7548 = vpack.c.b16 %v6804, %v6796
    %v7549 = vpack.c.b16 %v6805, %v6797
    %v7550 = vpack.c.b16 %v6806, %v6798
    %v7551 = vpack.c.b16 %v6807, %v6799
    %v7552 = vpack.c.b16 %v6808, %v6800
    %v7553 = vpack.c.b16 %v6809, %v6801
    %v7554 = vpack.c.b16 %v6810, %v6802
    %v7555 = vpack.c.b16 %v6819, %v6811
    %v7556 = vpack.c.b16 %v6820, %v6812
    %v7557 = vpack.c.b16 %v6821, %v6813
    %v7558 = vpack.c.b16 %v6822, %v6814
    %v7559 = vpack.c.b16 %v6823, %v6815
    %v7560 = vpack.c.b16 %v6824, %v6816
    %v7561 = vpack.c.b16 %v6825, %v6817
    %v7562 = vpack.c.b16 %v6826, %v6818
    %v7563 = vpack.c.b16 %v6835, %v6827
    %v7564 = vpack.c.b16 %v6836, %v6828
    %v7565 = vpack.c.b16 %v6837, %v6829
    %v7566 = vpack.c.b16 %v6838, %v6830
    %v7567 = vpack.c.b16 %v6839, %v6831
    %v7568 = vpack.c.b16 %v6840, %v6832
    %v7569 = vpack.c.b16 %v6841, %v6833
    %v7570 = vpack.c.b16 %v6842, %v6834
    %v7571 = vpack.c.b16 %v6851, %v6843
    %v7572 = vpack.c.b16 %v6852, %v6844
    %v7573 = vpack.c.b16 %v6853, %v6845
    %v7574 = vpack.c.b16 %v6854, %v6846
    %v7575 = vpack.c.b16 %v6855, %v6847
    %v7576 = vpack.c.b16 %v6856, %v6848
    %v7577 = vpack.c.b16 %v6857, %v6849
    %v7578 = vpack.c.b16 %v6858, %v6850
    %v7579 = vpack.c.b16 %v6867, %v6859
    %v7580 = vpack.c.b16 %v6868, %v6860
    %v7581 = vpack.c.b16 %v6869, %v6861
    %v7582 = vpack.c.b16 %v6870, %v6862
    %v7583 = vpack.c.b16 %v6871, %v6863
    %v7584 = vpack.c.b16 %v6872, %v6864
    %v7585 = vpack.c.b16 %v6873, %v6865
    %v7586 = vpack.c.b16 %v6874, %v6866
    %v7587 = vpack.c.b16 %v6883, %v6875
    %v7588 = vpack.c.b16 %v6884, %v6876
    %v7589 = vpack.c.b16 %v6885, %v6877
    %v7590 = vpack.c.b16 %v6886, %v6878
    %v7591 = vpack.c.b16 %v6887, %v6879
    %v7592 = vpack.c.b16 %v6888, %v6880
    %v7593 = vpack.c.b16 %v6889, %v6881
    %v7594 = vpack.c.b16 %v6890, %v6882
    %v7595 = vpack.c.b16 %v6899, %v6891
    %v7596 = vpack.c.b16 %v6900, %v6892
    %v7597 = vpack.c.b16 %v6901, %v6893
    %v7598 = vpack.c.b16 %v6902, %v6894
    %v7599 = vpack.c.b16 %v6903, %v6895
    %v7600 = vpack.c.b16 %v6904, %v6896
    %v7601 = vpack.c.b16 %v6905, %v6897
    %v7602 = vpack.c.b16 %v6906, %v6898
    %v7603 = vpack.c.b16 %v6915, %v6907
    %v7604 = vpack.c.b16 %v6916, %v6908
    %v7605 = vpack.c.b16 %v6917, %v6909
    %v7606 = vpack.c.b16 %v6918, %v6910
    %v7607 = vpack.c.b16 %v6919, %v6911
    %v7608 = vpack.c.b16 %v6920, %v6912
    %v7609 = vpack.c.b16 %v6921, %v6913
    %v7610 = vpack.c.b16 %v6922, %v6914
    %v7611 = vpack.c.b16 %v6931, %v6923
    %v7612 = vpack.c.b16 %v6932, %v6924
    %v7613 = vpack.c.b16 %v6933, %v6925
    %v7614 = vpack.c.b16 %v6934, %v6926
    %v7615 = vpack.c.b16 %v6935, %v6927
    %v7616 = vpack.c.b16 %v6936, %v6928
    %v7617 = vpack.c.b16 %v6937, %v6929
    %v7618 = vpack.c.b16 %v6938, %v6930
    %v7619 = vpack.c.b16 %v6947, %v6939
    %v7620 = vpack.c.b16 %v6948, %v6940
    %v7621 = vpack.c.b16 %v6949, %v6941
    %v7622 = vpack.c.b16 %v6950, %v6942
    %v7623 = vpack.c.b16 %v6951, %v6943
    %v7624 = vpack.c.b16 %v6952, %v6944
    %v7625 = vpack.c.b16 %v6953, %v6945
    %v7626 = vpack.c.b16 %v6954, %v6946
    %v7627 = vpack.c.b16 %v6963, %v6955
    %v7628 = vpack.c.b16 %v6964, %v6956
    %v7629 = vpack.c.b16 %v6965, %v6957
    %v7630 = vpack.c.b16 %v6966, %v6958
    %v7631 = vpack.c.b16 %v6967, %v6959
    %v7632 = vpack.c.b16 %v6968, %v6960
    %v7633 = vpack.c.b16 %v6969, %v6961
    %v7634 = vpack.c.b16 %v6970, %v6962
    %v7635 = vpack.c.b16 %v6979, %v6971
    %v7636 = vpack.c.b16 %v6980, %v6972
    %v7637 = vpack.c.b16 %v6981, %v6973
    %v7638 = vpack.c.b16 %v6982, %v6974
    %v7639 = vpack.c.b16 %v6983, %v6975
    %v7640 = vpack.c.b16 %v6984, %v6976
    %v7641 = vpack.c.b16 %v6985, %v6977
    %v7642 = vpack.c.b16 %v6986, %v6978
    %v7643 = vpack.c.b16 %v6995, %v6987
    %v7644 = vpack.c.b16 %v6996, %v6988
    %v7645 = vpack.c.b16 %v6997, %v6989
    %v7646 = vpack.c.b16 %v6998, %v6990
    %v7647 = vpack.c.b16 %v6999, %v6991
    %v7648 = vpack.c.b16 %v7000, %v6992
    %v7649 = vpack.c.b16 %v7001, %v6993
    %v7650 = vpack.c.b16 %v7002, %v6994
    %v7651 = vpack.c.b16 %v7011, %v7003
    %v7652 = vpack.c.b16 %v7012, %v7004
    %v7653 = vpack.c.b16 %v7013, %v7005
    %v7654 = vpack.c.b16 %v7014, %v7006
    %v7655 = vpack.c.b16 %v7015, %v7007
    %v7656 = vpack.c.b16 %v7016, %v7008
    %v7657 = vpack.c.b16 %v7017, %v7009
    %v7658 = vpack.c.b16 %v7018, %v7010
    %v7659 = vpack.c.b16 %v7027, %v7019
    %v7660 = vpack.c.b16 %v7028, %v7020
    %v7661 = vpack.c.b16 %v7029, %v7021
    %v7662 = vpack.c.b16 %v7030, %v7022
    %v7663 = vpack.c.b16 %v7031, %v7023
    %v7664 = vpack.c.b16 %v7032, %v7024
    %v7665 = vpack.c.b16 %v7033, %v7025
    %v7666 = vpack.c.b16 %v7034, %v7026
    %v7667 = vpack.c.b16 %v7043, %v7035
    %v7668 = vpack.c.b16 %v7044, %v7036
    %v7669 = vpack.c.b16 %v7045, %v7037
    %v7670 = vpack.c.b16 %v7046, %v7038
    %v7671 = vpack.c.b16 %v7047, %v7039
    %v7672 = vpack.c.b16 %v7048, %v7040
    %v7673 = vpack.c.b16 %v7049, %v7041
    %v7674 = vpack.c.b16 %v7050, %v7042
    %v7675 = vpack.c.b16 %v7059, %v7051
    %v7676 = vpack.c.b16 %v7060, %v7052
    %v7677 = vpack.c.b16 %v7061, %v7053
    %v7678 = vpack.c.b16 %v7062, %v7054
    %v7679 = vpack.c.b16 %v7063, %v7055
    %v7680 = vpack.c.b16 %v7064, %v7056
    %v7681 = vpack.c.b16 %v7065, %v7057
    %v7682 = vpack.c.b16 %v7066, %v7058
    %v7683 = vpack.c.b16 %v7075, %v7067
    %v7684 = vpack.c.b16 %v7076, %v7068
    %v7685 = vpack.c.b16 %v7077, %v7069
    %v7686 = vpack.c.b16 %v7078, %v7070
    %v7687 = vpack.c.b16 %v7079, %v7071
    %v7688 = vpack.c.b16 %v7080, %v7072
    %v7689 = vpack.c.b16 %v7081, %v7073
    %v7690 = vpack.c.b16 %v7082, %v7074
    %v7691 = vpack.c.b16 %v7091, %v7083
    %v7692 = vpack.c.b16 %v7092, %v7084
    %v7693 = vpack.c.b16 %v7093, %v7085
    %v7694 = vpack.c.b16 %v7094, %v7086
    %v7695 = vpack.c.b16 %v7095, %v7087
    %v7696 = vpack.c.b16 %v7096, %v7088
    %v7697 = vpack.c.b16 %v7097, %v7089
    %v7698 = vpack.c.b16 %v7098, %v7090
    %v7699 = vpack.c.b16 %v7107, %v7099
    %v7700 = vpack.c.b16 %v7108, %v7100
    %v7701 = vpack.c.b16 %v7109, %v7101
    %v7702 = vpack.c.b16 %v7110, %v7102
    %v7703 = vpack.c.b16 %v7111, %v7103
    %v7704 = vpack.c.b16 %v7112, %v7104
    %v7705 = vpack.c.b16 %v7113, %v7105
    %v7706 = vpack.c.b16 %v7114, %v7106
    %v7707 = vpack.c.b16 %v7123, %v7115
    %v7708 = vpack.c.b16 %v7124, %v7116
    %v7709 = vpack.c.b16 %v7125, %v7117
    %v7710 = vpack.c.b16 %v7126, %v7118
    %v7711 = vpack.c.b16 %v7127, %v7119
    %v7712 = vpack.c.b16 %v7128, %v7120
    %v7713 = vpack.c.b16 %v7129, %v7121
    %v7714 = vpack.c.b16 %v7130, %v7122
    %v7715 = vpack.c.b16 %v7139, %v7131
    %v7716 = vpack.c.b16 %v7140, %v7132
    %v7717 = vpack.c.b16 %v7141, %v7133
    %v7718 = vpack.c.b16 %v7142, %v7134
    %v7719 = vpack.c.b16 %v7143, %v7135
    %v7720 = vpack.c.b16 %v7144, %v7136
    %v7721 = vpack.c.b16 %v7145, %v7137
    %v7722 = vpack.c.b16 %v7146, %v7138
    %v7723 = vpack.c.b16 %v7155, %v7147
    %v7724 = vpack.c.b16 %v7156, %v7148
    %v7725 = vpack.c.b16 %v7157, %v7149
    %v7726 = vpack.c.b16 %v7158, %v7150
    %v7727 = vpack.c.b16 %v7159, %v7151
    %v7728 = vpack.c.b16 %v7160, %v7152
    %v7729 = vpack.c.b16 %v7161, %v7153
    %v7730 = vpack.c.b16 %v7162, %v7154
    %v7731 = vpack.c.b16 %v7171, %v7163
    %v7732 = vpack.c.b16 %v7172, %v7164
    %v7733 = vpack.c.b16 %v7173, %v7165
    %v7734 = vpack.c.b16 %v7174, %v7166
    %v7735 = vpack.c.b16 %v7175, %v7167
    %v7736 = vpack.c.b16 %v7176, %v7168
    %v7737 = vpack.c.b16 %v7177, %v7169
    %v7738 = vpack.c.b16 %v7178, %v7170
    %v7739 = vpack.c.b16 %v7187, %v7179
    %v7740 = vpack.c.b16 %v7188, %v7180
    %v7741 = vpack.c.b16 %v7189, %v7181
    %v7742 = vpack.c.b16 %v7190, %v7182
    %v7743 = vpack.c.b16 %v7191, %v7183
    %v7744 = vpack.c.b16 %v7192, %v7184
    %v7745 = vpack.c.b16 %v7193, %v7185
    %v7746 = vpack.c.b16 %v7194, %v7186
    %v7747 = vpack.c.b16 %v7203, %v7195
    %v7748 = vpack.c.b16 %v7204, %v7196
    %v7749 = vpack.c.b16 %v7205, %v7197
    %v7750 = vpack.c.b16 %v7206, %v7198
    %v7751 = vpack.c.b16 %v7207, %v7199
    %v7752 = vpack.c.b16 %v7208, %v7200
    %v7753 = vpack.c.b16 %v7209, %v7201
    %v7754 = vpack.c.b16 %v7210, %v7202
    %v7755 = vpack.c.b16 %v7219, %v7211
    %v7756 = vpack.c.b16 %v7220, %v7212
    %v7757 = vpack.c.b16 %v7221, %v7213
    %v7758 = vpack.c.b16 %v7222, %v7214
    %v7759 = vpack.c.b16 %v7223, %v7215
    %v7760 = vpack.c.b16 %v7224, %v7216
    %v7761 = vpack.c.b16 %v7225, %v7217
    %v7762 = vpack.c.b16 %v7226, %v7218
    %v7763 = vpack.c.b16 %v7235, %v7227
    %v7764 = vpack.c.b16 %v7236, %v7228
    %v7765 = vpack.c.b16 %v7237, %v7229
    %v7766 = vpack.c.b16 %v7238, %v7230
    %v7767 = vpack.c.b16 %v7239, %v7231
    %v7768 = vpack.c.b16 %v7240, %v7232
    %v7769 = vpack.c.b16 %v7241, %v7233
    %v7770 = vpack.c.b16 %v7242, %v7234
    %v7771 = vpack.c.b16 %v7251, %v7243
    %v7772 = vpack.c.b16 %v7252, %v7244
    %v7773 = vpack.c.b16 %v7253, %v7245
    %v7774 = vpack.c.b16 %v7254, %v7246
    %v7775 = vpack.c.b16 %v7255, %v7247
    %v7776 = vpack.c.b16 %v7256, %v7248
    %v7777 = vpack.c.b16 %v7257, %v7249
    %v7778 = vpack.c.b16 %v7258, %v7250
    %v7779 = vpack.c.b16 %v7267, %v7259
    %v7780 = vpack.c.b16 %v7268, %v7260
    %v7781 = vpack.c.b16 %v7269, %v7261
    %v7782 = vpack.c.b16 %v7270, %v7262
    %v7783 = vpack.c.b16 %v7271, %v7263
    %v7784 = vpack.c.b16 %v7272, %v7264
    %v7785 = vpack.c.b16 %v7273, %v7265
    %v7786 = vpack.c.b16 %v7274, %v7266
    %8299 = vmatprep.subr.bf16.mxu0 %v7332
    %8300 = vmatpush1.bf16.msra.mxu0 %v7331
    %8301 = vmatprep.subr.bf16.mxu0 %v7324
    %8302 = vmatpush1.bf16.msra.mxu0 %v7323
    %8303 = vmatprep.subr.bf16.mxu0 %v7316
    %8304 = vmatpush1.bf16.msra.mxu0 %v7315
    %8305 = vmatprep.subr.bf16.mxu0 %v7308
    %8306 = vmatpush1.bf16.msra.mxu0 %v7307
    %8307 = vmatprep.subr.bf16.mxu0 %v7300
    %8308 = vmatpush1.bf16.msra.mxu0 %v7299
    %8309 = vmatprep.subr.bf16.mxu0 %v7292
    %8310 = vmatpush1.bf16.msra.mxu0 %v7291
    %8311 = vmatprep.subr.bf16.mxu0 %v7284
    %8312 = vmatpush1.bf16.msra.mxu0 %v7283
    %8313 = vmatprep.subr.bf16.mxu0 %v7276
    %8314 = vmatpush1.bf16.msra.mxu0 %v7275
    %8315 = vmatprep.subr.bf16.mxu0 %v7396
    %8316 = vmatpush2.bf16.msra.mxu0 %v7395
    %8317 = vmatprep.subr.bf16.mxu0 %v7388
    %8318 = vmatpush2.bf16.msra.mxu0 %v7387
    %8319 = vmatprep.subr.bf16.mxu0 %v7380
    %8320 = vmatpush2.bf16.msra.mxu0 %v7379
    %8321 = vmatprep.subr.bf16.mxu0 %v7372
    %8322 = vmatpush2.bf16.msra.mxu0 %v7371
    %8323 = vmatprep.subr.bf16.mxu0 %v7364
    %8324 = vmatpush2.bf16.msra.mxu0 %v7363
    %8325 = vmatprep.subr.bf16.mxu0 %v7356
    %8326 = vmatpush2.bf16.msra.mxu0 %v7355
    %8327 = vmatprep.subr.bf16.mxu0 %v7348
    %8328 = vmatpush2.bf16.msra.mxu0 %v7347
    %8329 = vmatprep.subr.bf16.mxu0 %v7340
    %8330 = vmatpush2.bf16.msra.mxu0 %v7339
    %8331 = vmatprep.mubr.bf16.mxu0 %v5122
    %8332 = vmatmul.mubr.bf16.gmra.mxu0 %v5121
    %v8333 = vpop.f32.mrf.mxu0
    %v8334 = vadd.f32 %v5702, %v8333
    %v8335 = vpop.f32.mrf.mxu0
    %v8336 = vadd.f32 %v5706, %v8335
    %v8337 = vpop.f32.mrf.mxu0
    %v8338 = vadd.f32 %v5702, %v8337
    %v8339 = vpop.f32.mrf.mxu0
    %v8340 = vadd.f32 %v5706, %v8339
    %8341 = vmatprep.mubr.bf16.mxu0 %v5130
    %8342 = vmatmul.mubr.bf16.gmra.mxu0 %v5129
    %v8343 = vpop.f32.mrf.mxu0
    %v8344 = vadd.f32 %v5702, %v8343
    %v8345 = vpop.f32.mrf.mxu0
    %v8346 = vadd.f32 %v5706, %v8345
    %v8347 = vpop.f32.mrf.mxu0
    %v8348 = vadd.f32 %v5702, %v8347
    %v8349 = vpop.f32.mrf.mxu0
    %v8350 = vadd.f32 %v5706, %v8349
    %8351 = vmatprep.mubr.bf16.mxu0 %v5138
    %8352 = vmatmul.mubr.bf16.gmra.mxu0 %v5137
    %v8353 = vpop.f32.mrf.mxu0
    %v8354 = vadd.f32 %v5702, %v8353
    %v8355 = vpop.f32.mrf.mxu0
    %v8356 = vadd.f32 %v5706, %v8355
    %v8357 = vpop.f32.mrf.mxu0
    %v8358 = vadd.f32 %v5702, %v8357
    %v8359 = vpop.f32.mrf.mxu0
    %v8360 = vadd.f32 %v5706, %v8359
    %8361 = vmatprep.mubr.bf16.mxu0 %v5146
    %8362 = vmatmul.mubr.bf16.gmra.mxu0 %v5145
    %v8363 = vpop.f32.mrf.mxu0
    %v8364 = vadd.f32 %v5702, %v8363
    %v8365 = vpop.f32.mrf.mxu0
    %v8366 = vadd.f32 %v5706, %v8365
    %v8367 = vpop.f32.mrf.mxu0
    %v8368 = vadd.f32 %v5702, %v8367
    %v8369 = vpop.f32.mrf.mxu0
    %v8370 = vadd.f32 %v5706, %v8369
    %8371 = vmatprep.mubr.bf16.mxu0 %v5154
    %8372 = vmatmul.mubr.bf16.gmra.mxu0 %v5153
    %v8373 = vpop.f32.mrf.mxu0
    %v8374 = vadd.f32 %v5702, %v8373
    %v8375 = vpop.f32.mrf.mxu0
    %v8376 = vadd.f32 %v5706, %v8375
    %v8377 = vpop.f32.mrf.mxu0
    %v8378 = vadd.f32 %v5702, %v8377
    %v8379 = vpop.f32.mrf.mxu0
    %v8380 = vadd.f32 %v5706, %v8379
    %8381 = vmatprep.mubr.bf16.mxu0 %v5162
    %8382 = vmatmul.mubr.bf16.gmra.mxu0 %v5161
    %v8383 = vpop.f32.mrf.mxu0
    %v8384 = vadd.f32 %v5702, %v8383
    %v8385 = vpop.f32.mrf.mxu0
    %v8386 = vadd.f32 %v5706, %v8385
    %v8387 = vpop.f32.mrf.mxu0
    %v8388 = vadd.f32 %v5702, %v8387
    %v8389 = vpop.f32.mrf.mxu0
    %v8390 = vadd.f32 %v5706, %v8389
    %8391 = vmatprep.mubr.bf16.mxu0 %v5170
    %8392 = vmatmul.mubr.bf16.gmra.mxu0 %v5169
    %v8393 = vpop.f32.mrf.mxu0
    %v8394 = vadd.f32 %v5702, %v8393
    %v8395 = vpop.f32.mrf.mxu0
    %v8396 = vadd.f32 %v5706, %v8395
    %v8397 = vpop.f32.mrf.mxu0
    %v8398 = vadd.f32 %v5702, %v8397
    %v8399 = vpop.f32.mrf.mxu0
    %v8400 = vadd.f32 %v5706, %v8399
    %8401 = vmatprep.mubr.bf16.mxu0 %v5178
    %8402 = vmatmul.mubr.bf16.gmra.mxu0 %v5177
    %v8403 = vpop.f32.mrf.mxu0
    %v8404 = vadd.f32 %v5702, %v8403
    %v8405 = vpop.f32.mrf.mxu0
    %v8406 = vadd.f32 %v5706, %v8405
    %v8407 = vpop.f32.mrf.mxu0
    %v8408 = vadd.f32 %v5702, %v8407
    %v8409 = vpop.f32.mrf.mxu0
    %v8410 = vadd.f32 %v5706, %v8409
    %8411 = vdwg.mxu0
    %8412 = vmatprep.subr.bf16.mxu0 %v7460
    %8413 = vmatpush1.bf16.msra.mxu0 %v7459
    %8414 = vmatprep.subr.bf16.mxu0 %v7452
    %8415 = vmatpush1.bf16.msra.mxu0 %v7451
    %8416 = vmatprep.subr.bf16.mxu0 %v7444
    %8417 = vmatpush1.bf16.msra.mxu0 %v7443
    %8418 = vmatprep.subr.bf16.mxu0 %v7436
    %8419 = vmatpush1.bf16.msra.mxu0 %v7435
    %8420 = vmatprep.subr.bf16.mxu0 %v7428
    %8421 = vmatpush1.bf16.msra.mxu0 %v7427
    %8422 = vmatprep.subr.bf16.mxu0 %v7420
    %8423 = vmatpush1.bf16.msra.mxu0 %v7419
    %8424 = vmatprep.subr.bf16.mxu0 %v7412
    %8425 = vmatpush1.bf16.msra.mxu0 %v7411
    %8426 = vmatprep.subr.bf16.mxu0 %v7404
    %8427 = vmatpush1.bf16.msra.mxu0 %v7403
    %8428 = vmatprep.subr.bf16.mxu0 %v7524
    %8429 = vmatpush2.bf16.msra.mxu0 %v7523
    %8430 = vmatprep.subr.bf16.mxu0 %v7516
    %8431 = vmatpush2.bf16.msra.mxu0 %v7515
    %8432 = vmatprep.subr.bf16.mxu0 %v7508
    %8433 = vmatpush2.bf16.msra.mxu0 %v7507
    %8434 = vmatprep.subr.bf16.mxu0 %v7500
    %8435 = vmatpush2.bf16.msra.mxu0 %v7499
    %8436 = vmatprep.subr.bf16.mxu0 %v7492
    %8437 = vmatpush2.bf16.msra.mxu0 %v7491
    %8438 = vmatprep.subr.bf16.mxu0 %v7484
    %8439 = vmatpush2.bf16.msra.mxu0 %v7483
    %8440 = vmatprep.subr.bf16.mxu0 %v7476
    %8441 = vmatpush2.bf16.msra.mxu0 %v7475
    %8442 = vmatprep.subr.bf16.mxu0 %v7468
    %8443 = vmatpush2.bf16.msra.mxu0 %v7467
    %8444 = vmatprep.mubr.bf16.mxu0 %v5124
    %8445 = vmatmul.mubr.bf16.gmra.mxu0 %v5123
    %v8446 = vpop.f32.mrf.mxu0
    %v8447 = vadd.f32 %v8334, %v8446
    %v8448 = vpop.f32.mrf.mxu0
    %v8449 = vadd.f32 %v8336, %v8448
    %v8450 = vpop.f32.mrf.mxu0
    %v8451 = vadd.f32 %v8338, %v8450
    %v8452 = vpop.f32.mrf.mxu0
    %v8453 = vadd.f32 %v8340, %v8452
    %8454 = vmatprep.mubr.bf16.mxu0 %v5132
    %8455 = vmatmul.mubr.bf16.gmra.mxu0 %v5131
    %v8456 = vpop.f32.mrf.mxu0
    %v8457 = vadd.f32 %v8344, %v8456
    %v8458 = vpop.f32.mrf.mxu0
    %v8459 = vadd.f32 %v8346, %v8458
    %v8460 = vpop.f32.mrf.mxu0
    %v8461 = vadd.f32 %v8348, %v8460
    %v8462 = vpop.f32.mrf.mxu0
    %v8463 = vadd.f32 %v8350, %v8462
    %8464 = vmatprep.mubr.bf16.mxu0 %v5140
    %8465 = vmatmul.mubr.bf16.gmra.mxu0 %v5139
    %v8466 = vpop.f32.mrf.mxu0
    %v8467 = vadd.f32 %v8354, %v8466
    %v8468 = vpop.f32.mrf.mxu0
    %v8469 = vadd.f32 %v8356, %v8468
    %v8470 = vpop.f32.mrf.mxu0
    %v8471 = vadd.f32 %v8358, %v8470
    %v8472 = vpop.f32.mrf.mxu0
    %v8473 = vadd.f32 %v8360, %v8472
    %8474 = vmatprep.mubr.bf16.mxu0 %v5148
    %8475 = vmatmul.mubr.bf16.gmra.mxu0 %v5147
    %v8476 = vpop.f32.mrf.mxu0
    %v8477 = vadd.f32 %v8364, %v8476
    %v8478 = vpop.f32.mrf.mxu0
    %v8479 = vadd.f32 %v8366, %v8478
    %v8480 = vpop.f32.mrf.mxu0
    %v8481 = vadd.f32 %v8368, %v8480
    %v8482 = vpop.f32.mrf.mxu0
    %v8483 = vadd.f32 %v8370, %v8482
    %8484 = vmatprep.mubr.bf16.mxu0 %v5156
    %8485 = vmatmul.mubr.bf16.gmra.mxu0 %v5155
    %v8486 = vpop.f32.mrf.mxu0
    %v8487 = vadd.f32 %v8374, %v8486
    %v8488 = vpop.f32.mrf.mxu0
    %v8489 = vadd.f32 %v8376, %v8488
    %v8490 = vpop.f32.mrf.mxu0
    %v8491 = vadd.f32 %v8378, %v8490
    %v8492 = vpop.f32.mrf.mxu0
    %v8493 = vadd.f32 %v8380, %v8492
    %8494 = vmatprep.mubr.bf16.mxu0 %v5164
    %8495 = vmatmul.mubr.bf16.gmra.mxu0 %v5163
    %v8496 = vpop.f32.mrf.mxu0
    %v8497 = vadd.f32 %v8384, %v8496
    %v8498 = vpop.f32.mrf.mxu0
    %v8499 = vadd.f32 %v8386, %v8498
    %v8500 = vpop.f32.mrf.mxu0
    %v8501 = vadd.f32 %v8388, %v8500
    %v8502 = vpop.f32.mrf.mxu0
    %v8503 = vadd.f32 %v8390, %v8502
    %8504 = vmatprep.mubr.bf16.mxu0 %v5172
    %8505 = vmatmul.mubr.bf16.gmra.mxu0 %v5171
    %v8506 = vpop.f32.mrf.mxu0
    %v8507 = vadd.f32 %v8394, %v8506
    %v8508 = vpop.f32.mrf.mxu0
    %v8509 = vadd.f32 %v8396, %v8508
    %v8510 = vpop.f32.mrf.mxu0
    %v8511 = vadd.f32 %v8398, %v8510
    %v8512 = vpop.f32.mrf.mxu0
    %v8513 = vadd.f32 %v8400, %v8512
    %8514 = vmatprep.mubr.bf16.mxu0 %v5180
    %8515 = vmatmul.mubr.bf16.gmra.mxu0 %v5179
    %v8516 = vpop.f32.mrf.mxu0
    %v8517 = vadd.f32 %v8404, %v8516
    %v8518 = vpop.f32.mrf.mxu0
    %v8519 = vadd.f32 %v8406, %v8518
    %v8520 = vpop.f32.mrf.mxu0
    %v8521 = vadd.f32 %v8408, %v8520
    %v8522 = vpop.f32.mrf.mxu0
    %v8523 = vadd.f32 %v8410, %v8522
    %8524 = vdwg.mxu0
    %8525 = vmatprep.subr.bf16.mxu0 %v7588
    %8526 = vmatpush1.bf16.msra.mxu0 %v7587
    %8527 = vmatprep.subr.bf16.mxu0 %v7580
    %8528 = vmatpush1.bf16.msra.mxu0 %v7579
    %8529 = vmatprep.subr.bf16.mxu0 %v7572
    %8530 = vmatpush1.bf16.msra.mxu0 %v7571
    %8531 = vmatprep.subr.bf16.mxu0 %v7564
    %8532 = vmatpush1.bf16.msra.mxu0 %v7563
    %8533 = vmatprep.subr.bf16.mxu0 %v7556
    %8534 = vmatpush1.bf16.msra.mxu0 %v7555
    %8535 = vmatprep.subr.bf16.mxu0 %v7548
    %8536 = vmatpush1.bf16.msra.mxu0 %v7547
    %8537 = vmatprep.subr.bf16.mxu0 %v7540
    %8538 = vmatpush1.bf16.msra.mxu0 %v7539
    %8539 = vmatprep.subr.bf16.mxu0 %v7532
    %8540 = vmatpush1.bf16.msra.mxu0 %v7531
    %8541 = vmatprep.subr.bf16.mxu0 %v7652
    %8542 = vmatpush2.bf16.msra.mxu0 %v7651
    %8543 = vmatprep.subr.bf16.mxu0 %v7644
    %8544 = vmatpush2.bf16.msra.mxu0 %v7643
    %8545 = vmatprep.subr.bf16.mxu0 %v7636
    %8546 = vmatpush2.bf16.msra.mxu0 %v7635
    %8547 = vmatprep.subr.bf16.mxu0 %v7628
    %8548 = vmatpush2.bf16.msra.mxu0 %v7627
    %8549 = vmatprep.subr.bf16.mxu0 %v7620
    %8550 = vmatpush2.bf16.msra.mxu0 %v7619
    %8551 = vmatprep.subr.bf16.mxu0 %v7612
    %8552 = vmatpush2.bf16.msra.mxu0 %v7611
    %8553 = vmatprep.subr.bf16.mxu0 %v7604
    %8554 = vmatpush2.bf16.msra.mxu0 %v7603
    %8555 = vmatprep.subr.bf16.mxu0 %v7596
    %8556 = vmatpush2.bf16.msra.mxu0 %v7595
    %8557 = vmatprep.mubr.bf16.mxu0 %v5126
    %8558 = vmatmul.mubr.bf16.gmra.mxu0 %v5125
    %v8559 = vpop.f32.mrf.mxu0
    %v8560 = vadd.f32 %v8447, %v8559
    %v8561 = vpop.f32.mrf.mxu0
    %v8562 = vadd.f32 %v8449, %v8561
    %v8563 = vpop.f32.mrf.mxu0
    %v8564 = vadd.f32 %v8451, %v8563
    %v8565 = vpop.f32.mrf.mxu0
    %v8566 = vadd.f32 %v8453, %v8565
    %8567 = vmatprep.mubr.bf16.mxu0 %v5134
    %8568 = vmatmul.mubr.bf16.gmra.mxu0 %v5133
    %v8569 = vpop.f32.mrf.mxu0
    %v8570 = vadd.f32 %v8457, %v8569
    %v8571 = vpop.f32.mrf.mxu0
    %v8572 = vadd.f32 %v8459, %v8571
    %v8573 = vpop.f32.mrf.mxu0
    %v8574 = vadd.f32 %v8461, %v8573
    %v8575 = vpop.f32.mrf.mxu0
    %v8576 = vadd.f32 %v8463, %v8575
    %8577 = vmatprep.mubr.bf16.mxu0 %v5142
    %8578 = vmatmul.mubr.bf16.gmra.mxu0 %v5141
    %v8579 = vpop.f32.mrf.mxu0
    %v8580 = vadd.f32 %v8467, %v8579
    %v8581 = vpop.f32.mrf.mxu0
    %v8582 = vadd.f32 %v8469, %v8581
    %v8583 = vpop.f32.mrf.mxu0
    %v8584 = vadd.f32 %v8471, %v8583
    %v8585 = vpop.f32.mrf.mxu0
    %v8586 = vadd.f32 %v8473, %v8585
    %8587 = vmatprep.mubr.bf16.mxu0 %v5150
    %8588 = vmatmul.mubr.bf16.gmra.mxu0 %v5149
    %v8589 = vpop.f32.mrf.mxu0
    %v8590 = vadd.f32 %v8477, %v8589
    %v8591 = vpop.f32.mrf.mxu0
    %v8592 = vadd.f32 %v8479, %v8591
    %v8593 = vpop.f32.mrf.mxu0
    %v8594 = vadd.f32 %v8481, %v8593
    %v8595 = vpop.f32.mrf.mxu0
    %v8596 = vadd.f32 %v8483, %v8595
    %8597 = vmatprep.mubr.bf16.mxu0 %v5158
    %8598 = vmatmul.mubr.bf16.gmra.mxu0 %v5157
    %v8599 = vpop.f32.mrf.mxu0
    %v8600 = vadd.f32 %v8487, %v8599
    %v8601 = vpop.f32.mrf.mxu0
    %v8602 = vadd.f32 %v8489, %v8601
    %v8603 = vpop.f32.mrf.mxu0
    %v8604 = vadd.f32 %v8491, %v8603
    %v8605 = vpop.f32.mrf.mxu0
    %v8606 = vadd.f32 %v8493, %v8605
    %8607 = vmatprep.mubr.bf16.mxu0 %v5166
    %8608 = vmatmul.mubr.bf16.gmra.mxu0 %v5165
    %v8609 = vpop.f32.mrf.mxu0
    %v8610 = vadd.f32 %v8497, %v8609
    %v8611 = vpop.f32.mrf.mxu0
    %v8612 = vadd.f32 %v8499, %v8611
    %v8613 = vpop.f32.mrf.mxu0
    %v8614 = vadd.f32 %v8501, %v8613
    %v8615 = vpop.f32.mrf.mxu0
    %v8616 = vadd.f32 %v8503, %v8615
    %8617 = vmatprep.mubr.bf16.mxu0 %v5174
    %8618 = vmatmul.mubr.bf16.gmra.mxu0 %v5173
    %v8619 = vpop.f32.mrf.mxu0
    %v8620 = vadd.f32 %v8507, %v8619
    %v8621 = vpop.f32.mrf.mxu0
    %v8622 = vadd.f32 %v8509, %v8621
    %v8623 = vpop.f32.mrf.mxu0
    %v8624 = vadd.f32 %v8511, %v8623
    %v8625 = vpop.f32.mrf.mxu0
    %v8626 = vadd.f32 %v8513, %v8625
    %8627 = vmatprep.mubr.bf16.mxu0 %v5182
    %8628 = vmatmul.mubr.bf16.gmra.mxu0 %v5181
    %v8629 = vpop.f32.mrf.mxu0
    %v8630 = vadd.f32 %v8517, %v8629
    %v8631 = vpop.f32.mrf.mxu0
    %v8632 = vadd.f32 %v8519, %v8631
    %v8633 = vpop.f32.mrf.mxu0
    %v8634 = vadd.f32 %v8521, %v8633
    %v8635 = vpop.f32.mrf.mxu0
    %v8636 = vadd.f32 %v8523, %v8635
    %8637 = vdwg.mxu0
    %8638 = vmatprep.subr.bf16.mxu0 %v7716
    %8639 = vmatpush1.bf16.msra.mxu0 %v7715
    %8640 = vmatprep.subr.bf16.mxu0 %v7708
    %8641 = vmatpush1.bf16.msra.mxu0 %v7707
    %8642 = vmatprep.subr.bf16.mxu0 %v7700
    %8643 = vmatpush1.bf16.msra.mxu0 %v7699
    %8644 = vmatprep.subr.bf16.mxu0 %v7692
    %8645 = vmatpush1.bf16.msra.mxu0 %v7691
    %8646 = vmatprep.subr.bf16.mxu0 %v7684
    %8647 = vmatpush1.bf16.msra.mxu0 %v7683
    %8648 = vmatprep.subr.bf16.mxu0 %v7676
    %8649 = vmatpush1.bf16.msra.mxu0 %v7675
    %8650 = vmatprep.subr.bf16.mxu0 %v7668
    %8651 = vmatpush1.bf16.msra.mxu0 %v7667
    %8652 = vmatprep.subr.bf16.mxu0 %v7660
    %8653 = vmatpush1.bf16.msra.mxu0 %v7659
    %8654 = vmatprep.subr.bf16.mxu0 %v7780
    %8655 = vmatpush2.bf16.msra.mxu0 %v7779
    %8656 = vmatprep.subr.bf16.mxu0 %v7772
    %8657 = vmatpush2.bf16.msra.mxu0 %v7771
    %8658 = vmatprep.subr.bf16.mxu0 %v7764
    %8659 = vmatpush2.bf16.msra.mxu0 %v7763
    %8660 = vmatprep.subr.bf16.mxu0 %v7756
    %8661 = vmatpush2.bf16.msra.mxu0 %v7755
    %8662 = vmatprep.subr.bf16.mxu0 %v7748
    %8663 = vmatpush2.bf16.msra.mxu0 %v7747
    %8664 = vmatprep.subr.bf16.mxu0 %v7740
    %8665 = vmatpush2.bf16.msra.mxu0 %v7739
    %8666 = vmatprep.subr.bf16.mxu0 %v7732
    %8667 = vmatpush2.bf16.msra.mxu0 %v7731
    %8668 = vmatprep.subr.bf16.mxu0 %v7724
    %8669 = vmatpush2.bf16.msra.mxu0 %v7723
    %8670 = vmatprep.mubr.bf16.mxu0 %v5128
    %8671 = vmatmul.mubr.bf16.gmra.mxu0 %v5127
    %v8672 = vpop.f32.mrf.mxu0
    %v8673 = vadd.f32 %v8560, %v8672
    %v8674 = vpop.f32.mrf.mxu0
    %v8675 = vadd.f32 %v8562, %v8674
    %v8676 = vpop.f32.mrf.mxu0
    %v8677 = vadd.f32 %v8564, %v8676
    %v8678 = vpop.f32.mrf.mxu0
    %v8679 = vadd.f32 %v8566, %v8678
    %8680 = vmatprep.mubr.bf16.mxu0 %v5136
    %8681 = vmatmul.mubr.bf16.gmra.mxu0 %v5135
    %v8682 = vpop.f32.mrf.mxu0
    %v8683 = vadd.f32 %v8570, %v8682
    %v8684 = vpop.f32.mrf.mxu0
    %v8685 = vadd.f32 %v8572, %v8684
    %v8686 = vpop.f32.mrf.mxu0
    %v8687 = vadd.f32 %v8574, %v8686
    %v8688 = vpop.f32.mrf.mxu0
    %v8689 = vadd.f32 %v8576, %v8688
    %8690 = vmatprep.mubr.bf16.mxu0 %v5144
    %8691 = vmatmul.mubr.bf16.gmra.mxu0 %v5143
    %v8692 = vpop.f32.mrf.mxu0
    %v8693 = vadd.f32 %v8580, %v8692
    %v8694 = vpop.f32.mrf.mxu0
    %v8695 = vadd.f32 %v8582, %v8694
    %v8696 = vpop.f32.mrf.mxu0
    %v8697 = vadd.f32 %v8584, %v8696
    %v8698 = vpop.f32.mrf.mxu0
    %v8699 = vadd.f32 %v8586, %v8698
    %8700 = vmatprep.mubr.bf16.mxu0 %v5152
    %8701 = vmatmul.mubr.bf16.gmra.mxu0 %v5151
    %v8702 = vpop.f32.mrf.mxu0
    %v8703 = vadd.f32 %v8590, %v8702
    %v8704 = vpop.f32.mrf.mxu0
    %v8705 = vadd.f32 %v8592, %v8704
    %v8706 = vpop.f32.mrf.mxu0
    %v8707 = vadd.f32 %v8594, %v8706
    %v8708 = vpop.f32.mrf.mxu0
    %v8709 = vadd.f32 %v8596, %v8708
    %8710 = vmatprep.mubr.bf16.mxu0 %v5160
    %8711 = vmatmul.mubr.bf16.gmra.mxu0 %v5159
    %v8712 = vpop.f32.mrf.mxu0
    %v8713 = vadd.f32 %v8600, %v8712
    %v8714 = vpop.f32.mrf.mxu0
    %v8715 = vadd.f32 %v8602, %v8714
    %v8716 = vpop.f32.mrf.mxu0
    %v8717 = vadd.f32 %v8604, %v8716
    %v8718 = vpop.f32.mrf.mxu0
    %v8719 = vadd.f32 %v8606, %v8718
    %8720 = vmatprep.mubr.bf16.mxu0 %v5168
    %8721 = vmatmul.mubr.bf16.gmra.mxu0 %v5167
    %v8722 = vpop.f32.mrf.mxu0
    %v8723 = vadd.f32 %v8610, %v8722
    %v8724 = vpop.f32.mrf.mxu0
    %v8725 = vadd.f32 %v8612, %v8724
    %v8726 = vpop.f32.mrf.mxu0
    %v8727 = vadd.f32 %v8614, %v8726
    %v8728 = vpop.f32.mrf.mxu0
    %v8729 = vadd.f32 %v8616, %v8728
    %8730 = vmatprep.mubr.bf16.mxu0 %v5176
    %8731 = vmatmul.mubr.bf16.gmra.mxu0 %v5175
    %v8732 = vpop.f32.mrf.mxu0
    %v8733 = vadd.f32 %v8620, %v8732
    %v8734 = vpop.f32.mrf.mxu0
    %v8735 = vadd.f32 %v8622, %v8734
    %v8736 = vpop.f32.mrf.mxu0
    %v8737 = vadd.f32 %v8624, %v8736
    %v8738 = vpop.f32.mrf.mxu0
    %v8739 = vadd.f32 %v8626, %v8738
    %8740 = vmatprep.mubr.bf16.mxu0 %v5184
    %8741 = vmatmul.mubr.bf16.gmra.mxu0 %v5183
    %v8742 = vpop.f32.mrf.mxu0
    %v8743 = vadd.f32 %v8630, %v8742
    %v8744 = vpop.f32.mrf.mxu0
    %v8745 = vadd.f32 %v8632, %v8744
    %v8746 = vpop.f32.mrf.mxu0
    %v8747 = vadd.f32 %v8634, %v8746
    %v8748 = vpop.f32.mrf.mxu0
    %v8749 = vadd.f32 %v8636, %v8748
    %8750 = vdwg.mxu0
    %8751 = vmatprep.subr.bf16.mxu0 %v7334
    %8752 = vmatpush1.bf16.msra.mxu0 %v7333
    %8753 = vmatprep.subr.bf16.mxu0 %v7326
    %8754 = vmatpush1.bf16.msra.mxu0 %v7325
    %8755 = vmatprep.subr.bf16.mxu0 %v7318
    %8756 = vmatpush1.bf16.msra.mxu0 %v7317
    %8757 = vmatprep.subr.bf16.mxu0 %v7310
    %8758 = vmatpush1.bf16.msra.mxu0 %v7309
    %8759 = vmatprep.subr.bf16.mxu0 %v7302
    %8760 = vmatpush1.bf16.msra.mxu0 %v7301
    %8761 = vmatprep.subr.bf16.mxu0 %v7294
    %8762 = vmatpush1.bf16.msra.mxu0 %v7293
    %8763 = vmatprep.subr.bf16.mxu0 %v7286
    %8764 = vmatpush1.bf16.msra.mxu0 %v7285
    %8765 = vmatprep.subr.bf16.mxu0 %v7278
    %8766 = vmatpush1.bf16.msra.mxu0 %v7277
    %8767 = vmatprep.subr.bf16.mxu0 %v7398
    %8768 = vmatpush2.bf16.msra.mxu0 %v7397
    %8769 = vmatprep.subr.bf16.mxu0 %v7390
    %8770 = vmatpush2.bf16.msra.mxu0 %v7389
    %8771 = vmatprep.subr.bf16.mxu0 %v7382
    %8772 = vmatpush2.bf16.msra.mxu0 %v7381
    %8773 = vmatprep.subr.bf16.mxu0 %v7374
    %8774 = vmatpush2.bf16.msra.mxu0 %v7373
    %8775 = vmatprep.subr.bf16.mxu0 %v7366
    %8776 = vmatpush2.bf16.msra.mxu0 %v7365
    %8777 = vmatprep.subr.bf16.mxu0 %v7358
    %8778 = vmatpush2.bf16.msra.mxu0 %v7357
    %8779 = vmatprep.subr.bf16.mxu0 %v7350
    %8780 = vmatpush2.bf16.msra.mxu0 %v7349
    %8781 = vmatprep.subr.bf16.mxu0 %v7342
    %8782 = vmatpush2.bf16.msra.mxu0 %v7341
    %8783 = vmatprep.mubr.bf16.mxu0 %v5122
    %8784 = vmatmul.mubr.bf16.gmra.mxu0 %v5121
    %v8785 = vpop.f32.mrf.mxu0
    %v8786 = vadd.f32 %v5710, %v8785
    %v8787 = vpop.f32.mrf.mxu0
    %v8788 = vadd.f32 %v5714, %v8787
    %v8789 = vpop.f32.mrf.mxu0
    %v8790 = vadd.f32 %v5710, %v8789
    %v8791 = vpop.f32.mrf.mxu0
    %v8792 = vadd.f32 %v5714, %v8791
    %8793 = vmatprep.mubr.bf16.mxu0 %v5130
    %8794 = vmatmul.mubr.bf16.gmra.mxu0 %v5129
    %v8795 = vpop.f32.mrf.mxu0
    %v8796 = vadd.f32 %v5710, %v8795
    %v8797 = vpop.f32.mrf.mxu0
    %v8798 = vadd.f32 %v5714, %v8797
    %v8799 = vpop.f32.mrf.mxu0
    %v8800 = vadd.f32 %v5710, %v8799
    %v8801 = vpop.f32.mrf.mxu0
    %v8802 = vadd.f32 %v5714, %v8801
    %8803 = vmatprep.mubr.bf16.mxu0 %v5138
    %8804 = vmatmul.mubr.bf16.gmra.mxu0 %v5137
    %v8805 = vpop.f32.mrf.mxu0
    %v8806 = vadd.f32 %v5710, %v8805
    %v8807 = vpop.f32.mrf.mxu0
    %v8808 = vadd.f32 %v5714, %v8807
    %v8809 = vpop.f32.mrf.mxu0
    %v8810 = vadd.f32 %v5710, %v8809
    %v8811 = vpop.f32.mrf.mxu0
    %v8812 = vadd.f32 %v5714, %v8811
    %8813 = vmatprep.mubr.bf16.mxu0 %v5146
    %8814 = vmatmul.mubr.bf16.gmra.mxu0 %v5145
    %v8815 = vpop.f32.mrf.mxu0
    %v8816 = vadd.f32 %v5710, %v8815
    %v8817 = vpop.f32.mrf.mxu0
    %v8818 = vadd.f32 %v5714, %v8817
    %v8819 = vpop.f32.mrf.mxu0
    %v8820 = vadd.f32 %v5710, %v8819
    %v8821 = vpop.f32.mrf.mxu0
    %v8822 = vadd.f32 %v5714, %v8821
    %8823 = vmatprep.mubr.bf16.mxu0 %v5154
    %8824 = vmatmul.mubr.bf16.gmra.mxu0 %v5153
    %v8825 = vpop.f32.mrf.mxu0
    %v8826 = vadd.f32 %v5710, %v8825
    %v8827 = vpop.f32.mrf.mxu0
    %v8828 = vadd.f32 %v5714, %v8827
    %v8829 = vpop.f32.mrf.mxu0
    %v8830 = vadd.f32 %v5710, %v8829
    %v8831 = vpop.f32.mrf.mxu0
    %v8832 = vadd.f32 %v5714, %v8831
    %8833 = vmatprep.mubr.bf16.mxu0 %v5162
    %8834 = vmatmul.mubr.bf16.gmra.mxu0 %v5161
    %v8835 = vpop.f32.mrf.mxu0
    %v8836 = vadd.f32 %v5710, %v8835
    %v8837 = vpop.f32.mrf.mxu0
    %v8838 = vadd.f32 %v5714, %v8837
    %v8839 = vpop.f32.mrf.mxu0
    %v8840 = vadd.f32 %v5710, %v8839
    %v8841 = vpop.f32.mrf.mxu0
    %v8842 = vadd.f32 %v5714, %v8841
    %8843 = vmatprep.mubr.bf16.mxu0 %v5170
    %8844 = vmatmul.mubr.bf16.gmra.mxu0 %v5169
    %v8845 = vpop.f32.mrf.mxu0
    %v8846 = vadd.f32 %v5710, %v8845
    %v8847 = vpop.f32.mrf.mxu0
    %v8848 = vadd.f32 %v5714, %v8847
    %v8849 = vpop.f32.mrf.mxu0
    %v8850 = vadd.f32 %v5710, %v8849
    %v8851 = vpop.f32.mrf.mxu0
    %v8852 = vadd.f32 %v5714, %v8851
    %8853 = vmatprep.mubr.bf16.mxu0 %v5178
    %8854 = vmatmul.mubr.bf16.gmra.mxu0 %v5177
    %v8855 = vpop.f32.mrf.mxu0
    %v8856 = vadd.f32 %v5710, %v8855
    %v8857 = vpop.f32.mrf.mxu0
    %v8858 = vadd.f32 %v5714, %v8857
    %v8859 = vpop.f32.mrf.mxu0
    %v8860 = vadd.f32 %v5710, %v8859
    %v8861 = vpop.f32.mrf.mxu0
    %v8862 = vadd.f32 %v5714, %v8861
    %8863 = vdwg.mxu0
    %8864 = vmatprep.subr.bf16.mxu0 %v7462
    %8865 = vmatpush1.bf16.msra.mxu0 %v7461
    %8866 = vmatprep.subr.bf16.mxu0 %v7454
    %8867 = vmatpush1.bf16.msra.mxu0 %v7453
    %8868 = vmatprep.subr.bf16.mxu0 %v7446
    %8869 = vmatpush1.bf16.msra.mxu0 %v7445
    %8870 = vmatprep.subr.bf16.mxu0 %v7438
    %8871 = vmatpush1.bf16.msra.mxu0 %v7437
    %8872 = vmatprep.subr.bf16.mxu0 %v7430
    %8873 = vmatpush1.bf16.msra.mxu0 %v7429
    %8874 = vmatprep.subr.bf16.mxu0 %v7422
    %8875 = vmatpush1.bf16.msra.mxu0 %v7421
    %8876 = vmatprep.subr.bf16.mxu0 %v7414
    %8877 = vmatpush1.bf16.msra.mxu0 %v7413
    %8878 = vmatprep.subr.bf16.mxu0 %v7406
    %8879 = vmatpush1.bf16.msra.mxu0 %v7405
    %8880 = vmatprep.subr.bf16.mxu0 %v7526
    %8881 = vmatpush2.bf16.msra.mxu0 %v7525
    %8882 = vmatprep.subr.bf16.mxu0 %v7518
    %8883 = vmatpush2.bf16.msra.mxu0 %v7517
    %8884 = vmatprep.subr.bf16.mxu0 %v7510
    %8885 = vmatpush2.bf16.msra.mxu0 %v7509
    %8886 = vmatprep.subr.bf16.mxu0 %v7502
    %8887 = vmatpush2.bf16.msra.mxu0 %v7501
    %8888 = vmatprep.subr.bf16.mxu0 %v7494
    %8889 = vmatpush2.bf16.msra.mxu0 %v7493
    %8890 = vmatprep.subr.bf16.mxu0 %v7486
    %8891 = vmatpush2.bf16.msra.mxu0 %v7485
    %8892 = vmatprep.subr.bf16.mxu0 %v7478
    %8893 = vmatpush2.bf16.msra.mxu0 %v7477
    %8894 = vmatprep.subr.bf16.mxu0 %v7470
    %8895 = vmatpush2.bf16.msra.mxu0 %v7469
    %8896 = vmatprep.mubr.bf16.mxu0 %v5124
    %8897 = vmatmul.mubr.bf16.gmra.mxu0 %v5123
    %v8898 = vpop.f32.mrf.mxu0
    %v8899 = vadd.f32 %v8786, %v8898
    %v8900 = vpop.f32.mrf.mxu0
    %v8901 = vadd.f32 %v8788, %v8900
    %v8902 = vpop.f32.mrf.mxu0
    %v8903 = vadd.f32 %v8790, %v8902
    %v8904 = vpop.f32.mrf.mxu0
    %v8905 = vadd.f32 %v8792, %v8904
    %8906 = vmatprep.mubr.bf16.mxu0 %v5132
    %8907 = vmatmul.mubr.bf16.gmra.mxu0 %v5131
    %v8908 = vpop.f32.mrf.mxu0
    %v8909 = vadd.f32 %v8796, %v8908
    %v8910 = vpop.f32.mrf.mxu0
    %v8911 = vadd.f32 %v8798, %v8910
    %v8912 = vpop.f32.mrf.mxu0
    %v8913 = vadd.f32 %v8800, %v8912
    %v8914 = vpop.f32.mrf.mxu0
    %v8915 = vadd.f32 %v8802, %v8914
    %8916 = vmatprep.mubr.bf16.mxu0 %v5140
    %8917 = vmatmul.mubr.bf16.gmra.mxu0 %v5139
    %v8918 = vpop.f32.mrf.mxu0
    %v8919 = vadd.f32 %v8806, %v8918
    %v8920 = vpop.f32.mrf.mxu0
    %v8921 = vadd.f32 %v8808, %v8920
    %v8922 = vpop.f32.mrf.mxu0
    %v8923 = vadd.f32 %v8810, %v8922
    %v8924 = vpop.f32.mrf.mxu0
    %v8925 = vadd.f32 %v8812, %v8924
    %8926 = vmatprep.mubr.bf16.mxu0 %v5148
    %8927 = vmatmul.mubr.bf16.gmra.mxu0 %v5147
    %v8928 = vpop.f32.mrf.mxu0
    %v8929 = vadd.f32 %v8816, %v8928
    %v8930 = vpop.f32.mrf.mxu0
    %v8931 = vadd.f32 %v8818, %v8930
    %v8932 = vpop.f32.mrf.mxu0
    %v8933 = vadd.f32 %v8820, %v8932
    %v8934 = vpop.f32.mrf.mxu0
    %v8935 = vadd.f32 %v8822, %v8934
    %8936 = vmatprep.mubr.bf16.mxu0 %v5156
    %8937 = vmatmul.mubr.bf16.gmra.mxu0 %v5155
    %v8938 = vpop.f32.mrf.mxu0
    %v8939 = vadd.f32 %v8826, %v8938
    %v8940 = vpop.f32.mrf.mxu0
    %v8941 = vadd.f32 %v8828, %v8940
    %v8942 = vpop.f32.mrf.mxu0
    %v8943 = vadd.f32 %v8830, %v8942
    %v8944 = vpop.f32.mrf.mxu0
    %v8945 = vadd.f32 %v8832, %v8944
    %8946 = vmatprep.mubr.bf16.mxu0 %v5164
    %8947 = vmatmul.mubr.bf16.gmra.mxu0 %v5163
    %v8948 = vpop.f32.mrf.mxu0
    %v8949 = vadd.f32 %v8836, %v8948
    %v8950 = vpop.f32.mrf.mxu0
    %v8951 = vadd.f32 %v8838, %v8950
    %v8952 = vpop.f32.mrf.mxu0
    %v8953 = vadd.f32 %v8840, %v8952
    %v8954 = vpop.f32.mrf.mxu0
    %v8955 = vadd.f32 %v8842, %v8954
    %8956 = vmatprep.mubr.bf16.mxu0 %v5172
    %8957 = vmatmul.mubr.bf16.gmra.mxu0 %v5171
    %v8958 = vpop.f32.mrf.mxu0
    %v8959 = vadd.f32 %v8846, %v8958
    %v8960 = vpop.f32.mrf.mxu0
    %v8961 = vadd.f32 %v8848, %v8960
    %v8962 = vpop.f32.mrf.mxu0
    %v8963 = vadd.f32 %v8850, %v8962
    %v8964 = vpop.f32.mrf.mxu0
    %v8965 = vadd.f32 %v8852, %v8964
    %8966 = vmatprep.mubr.bf16.mxu0 %v5180
    %8967 = vmatmul.mubr.bf16.gmra.mxu0 %v5179
    %v8968 = vpop.f32.mrf.mxu0
    %v8969 = vadd.f32 %v8856, %v8968
    %v8970 = vpop.f32.mrf.mxu0
    %v8971 = vadd.f32 %v8858, %v8970
    %v8972 = vpop.f32.mrf.mxu0
    %v8973 = vadd.f32 %v8860, %v8972
    %v8974 = vpop.f32.mrf.mxu0
    %v8975 = vadd.f32 %v8862, %v8974
    %8976 = vdwg.mxu0
    %8977 = vmatprep.subr.bf16.mxu0 %v7590
    %8978 = vmatpush1.bf16.msra.mxu0 %v7589
    %8979 = vmatprep.subr.bf16.mxu0 %v7582
    %8980 = vmatpush1.bf16.msra.mxu0 %v7581
    %8981 = vmatprep.subr.bf16.mxu0 %v7574
    %8982 = vmatpush1.bf16.msra.mxu0 %v7573
    %8983 = vmatprep.subr.bf16.mxu0 %v7566
    %8984 = vmatpush1.bf16.msra.mxu0 %v7565
    %8985 = vmatprep.subr.bf16.mxu0 %v7558
    %8986 = vmatpush1.bf16.msra.mxu0 %v7557
    %8987 = vmatprep.subr.bf16.mxu0 %v7550
    %8988 = vmatpush1.bf16.msra.mxu0 %v7549
    %8989 = vmatprep.subr.bf16.mxu0 %v7542
    %8990 = vmatpush1.bf16.msra.mxu0 %v7541
    %8991 = vmatprep.subr.bf16.mxu0 %v7534
    %8992 = vmatpush1.bf16.msra.mxu0 %v7533
    %8993 = vmatprep.subr.bf16.mxu0 %v7654
    %8994 = vmatpush2.bf16.msra.mxu0 %v7653
    %8995 = vmatprep.subr.bf16.mxu0 %v7646
    %8996 = vmatpush2.bf16.msra.mxu0 %v7645
    %8997 = vmatprep.subr.bf16.mxu0 %v7638
    %8998 = vmatpush2.bf16.msra.mxu0 %v7637
    %8999 = vmatprep.subr.bf16.mxu0 %v7630
    %9000 = vmatpush2.bf16.msra.mxu0 %v7629
    %9001 = vmatprep.subr.bf16.mxu0 %v7622
    %9002 = vmatpush2.bf16.msra.mxu0 %v7621
    %9003 = vmatprep.subr.bf16.mxu0 %v7614
    %9004 = vmatpush2.bf16.msra.mxu0 %v7613
    %9005 = vmatprep.subr.bf16.mxu0 %v7606
    %9006 = vmatpush2.bf16.msra.mxu0 %v7605
    %9007 = vmatprep.subr.bf16.mxu0 %v7598
    %9008 = vmatpush2.bf16.msra.mxu0 %v7597
    %9009 = vmatprep.mubr.bf16.mxu0 %v5126
    %9010 = vmatmul.mubr.bf16.gmra.mxu0 %v5125
    %v9011 = vpop.f32.mrf.mxu0
    %v9012 = vadd.f32 %v8899, %v9011
    %v9013 = vpop.f32.mrf.mxu0
    %v9014 = vadd.f32 %v8901, %v9013
    %v9015 = vpop.f32.mrf.mxu0
    %v9016 = vadd.f32 %v8903, %v9015
    %v9017 = vpop.f32.mrf.mxu0
    %v9018 = vadd.f32 %v8905, %v9017
    %9019 = vmatprep.mubr.bf16.mxu0 %v5134
    %9020 = vmatmul.mubr.bf16.gmra.mxu0 %v5133
    %v9021 = vpop.f32.mrf.mxu0
    %v9022 = vadd.f32 %v8909, %v9021
    %v9023 = vpop.f32.mrf.mxu0
    %v9024 = vadd.f32 %v8911, %v9023
    %v9025 = vpop.f32.mrf.mxu0
    %v9026 = vadd.f32 %v8913, %v9025
    %v9027 = vpop.f32.mrf.mxu0
    %v9028 = vadd.f32 %v8915, %v9027
    %9029 = vmatprep.mubr.bf16.mxu0 %v5142
    %9030 = vmatmul.mubr.bf16.gmra.mxu0 %v5141
    %v9031 = vpop.f32.mrf.mxu0
    %v9032 = vadd.f32 %v8919, %v9031
    %v9033 = vpop.f32.mrf.mxu0
    %v9034 = vadd.f32 %v8921, %v9033
    %v9035 = vpop.f32.mrf.mxu0
    %v9036 = vadd.f32 %v8923, %v9035
    %v9037 = vpop.f32.mrf.mxu0
    %v9038 = vadd.f32 %v8925, %v9037
    %9039 = vmatprep.mubr.bf16.mxu0 %v5150
    %9040 = vmatmul.mubr.bf16.gmra.mxu0 %v5149
    %v9041 = vpop.f32.mrf.mxu0
    %v9042 = vadd.f32 %v8929, %v9041
    %v9043 = vpop.f32.mrf.mxu0
    %v9044 = vadd.f32 %v8931, %v9043
    %v9045 = vpop.f32.mrf.mxu0
    %v9046 = vadd.f32 %v8933, %v9045
    %v9047 = vpop.f32.mrf.mxu0
    %v9048 = vadd.f32 %v8935, %v9047
    %9049 = vmatprep.mubr.bf16.mxu0 %v5158
    %9050 = vmatmul.mubr.bf16.gmra.mxu0 %v5157
    %v9051 = vpop.f32.mrf.mxu0
    %v9052 = vadd.f32 %v8939, %v9051
    %v9053 = vpop.f32.mrf.mxu0
    %v9054 = vadd.f32 %v8941, %v9053
    %v9055 = vpop.f32.mrf.mxu0
    %v9056 = vadd.f32 %v8943, %v9055
    %v9057 = vpop.f32.mrf.mxu0
    %v9058 = vadd.f32 %v8945, %v9057
    %9059 = vmatprep.mubr.bf16.mxu0 %v5166
    %9060 = vmatmul.mubr.bf16.gmra.mxu0 %v5165
    %v9061 = vpop.f32.mrf.mxu0
    %v9062 = vadd.f32 %v8949, %v9061
    %v9063 = vpop.f32.mrf.mxu0
    %v9064 = vadd.f32 %v8951, %v9063
    %v9065 = vpop.f32.mrf.mxu0
    %v9066 = vadd.f32 %v8953, %v9065
    %v9067 = vpop.f32.mrf.mxu0
    %v9068 = vadd.f32 %v8955, %v9067
    %9069 = vmatprep.mubr.bf16.mxu0 %v5174
    %9070 = vmatmul.mubr.bf16.gmra.mxu0 %v5173
    %v9071 = vpop.f32.mrf.mxu0
    %v9072 = vadd.f32 %v8959, %v9071
    %v9073 = vpop.f32.mrf.mxu0
    %v9074 = vadd.f32 %v8961, %v9073
    %v9075 = vpop.f32.mrf.mxu0
    %v9076 = vadd.f32 %v8963, %v9075
    %v9077 = vpop.f32.mrf.mxu0
    %v9078 = vadd.f32 %v8965, %v9077
    %9079 = vmatprep.mubr.bf16.mxu0 %v5182
    %9080 = vmatmul.mubr.bf16.gmra.mxu0 %v5181
    %v9081 = vpop.f32.mrf.mxu0
    %v9082 = vadd.f32 %v8969, %v9081
    %v9083 = vpop.f32.mrf.mxu0
    %v9084 = vadd.f32 %v8971, %v9083
    %v9085 = vpop.f32.mrf.mxu0
    %v9086 = vadd.f32 %v8973, %v9085
    %v9087 = vpop.f32.mrf.mxu0
    %v9088 = vadd.f32 %v8975, %v9087
    %9089 = vdwg.mxu0
    %9090 = vmatprep.subr.bf16.mxu0 %v7718
    %9091 = vmatpush1.bf16.msra.mxu0 %v7717
    %9092 = vmatprep.subr.bf16.mxu0 %v7710
    %9093 = vmatpush1.bf16.msra.mxu0 %v7709
    %9094 = vmatprep.subr.bf16.mxu0 %v7702
    %9095 = vmatpush1.bf16.msra.mxu0 %v7701
    %9096 = vmatprep.subr.bf16.mxu0 %v7694
    %9097 = vmatpush1.bf16.msra.mxu0 %v7693
    %9098 = vmatprep.subr.bf16.mxu0 %v7686
    %9099 = vmatpush1.bf16.msra.mxu0 %v7685
    %9100 = vmatprep.subr.bf16.mxu0 %v7678
    %9101 = vmatpush1.bf16.msra.mxu0 %v7677
    %9102 = vmatprep.subr.bf16.mxu0 %v7670
    %9103 = vmatpush1.bf16.msra.mxu0 %v7669
    %9104 = vmatprep.subr.bf16.mxu0 %v7662
    %9105 = vmatpush1.bf16.msra.mxu0 %v7661
    %9106 = vmatprep.subr.bf16.mxu0 %v7782
    %9107 = vmatpush2.bf16.msra.mxu0 %v7781
    %9108 = vmatprep.subr.bf16.mxu0 %v7774
    %9109 = vmatpush2.bf16.msra.mxu0 %v7773
    %9110 = vmatprep.subr.bf16.mxu0 %v7766
    %9111 = vmatpush2.bf16.msra.mxu0 %v7765
    %9112 = vmatprep.subr.bf16.mxu0 %v7758
    %9113 = vmatpush2.bf16.msra.mxu0 %v7757
    %9114 = vmatprep.subr.bf16.mxu0 %v7750
    %9115 = vmatpush2.bf16.msra.mxu0 %v7749
    %9116 = vmatprep.subr.bf16.mxu0 %v7742
    %9117 = vmatpush2.bf16.msra.mxu0 %v7741
    %9118 = vmatprep.subr.bf16.mxu0 %v7734
    %9119 = vmatpush2.bf16.msra.mxu0 %v7733
    %9120 = vmatprep.subr.bf16.mxu0 %v7726
    %9121 = vmatpush2.bf16.msra.mxu0 %v7725
    %9122 = vmatprep.mubr.bf16.mxu0 %v5128
    %9123 = vmatmul.mubr.bf16.gmra.mxu0 %v5127
    %v9124 = vpop.f32.mrf.mxu0
    %v9125 = vadd.f32 %v9012, %v9124
    %v9126 = vpop.f32.mrf.mxu0
    %v9127 = vadd.f32 %v9014, %v9126
    %v9128 = vpop.f32.mrf.mxu0
    %v9129 = vadd.f32 %v9016, %v9128
    %v9130 = vpop.f32.mrf.mxu0
    %v9131 = vadd.f32 %v9018, %v9130
    %9132 = vmatprep.mubr.bf16.mxu0 %v5136
    %9133 = vmatmul.mubr.bf16.gmra.mxu0 %v5135
    %v9134 = vpop.f32.mrf.mxu0
    %v9135 = vadd.f32 %v9022, %v9134
    %v9136 = vpop.f32.mrf.mxu0
    %v9137 = vadd.f32 %v9024, %v9136
    %v9138 = vpop.f32.mrf.mxu0
    %v9139 = vadd.f32 %v9026, %v9138
    %v9140 = vpop.f32.mrf.mxu0
    %v9141 = vadd.f32 %v9028, %v9140
    %9142 = vmatprep.mubr.bf16.mxu0 %v5144
    %9143 = vmatmul.mubr.bf16.gmra.mxu0 %v5143
    %v9144 = vpop.f32.mrf.mxu0
    %v9145 = vadd.f32 %v9032, %v9144
    %v9146 = vpop.f32.mrf.mxu0
    %v9147 = vadd.f32 %v9034, %v9146
    %v9148 = vpop.f32.mrf.mxu0
    %v9149 = vadd.f32 %v9036, %v9148
    %v9150 = vpop.f32.mrf.mxu0
    %v9151 = vadd.f32 %v9038, %v9150
    %9152 = vmatprep.mubr.bf16.mxu0 %v5152
    %9153 = vmatmul.mubr.bf16.gmra.mxu0 %v5151
    %v9154 = vpop.f32.mrf.mxu0
    %v9155 = vadd.f32 %v9042, %v9154
    %v9156 = vpop.f32.mrf.mxu0
    %v9157 = vadd.f32 %v9044, %v9156
    %v9158 = vpop.f32.mrf.mxu0
    %v9159 = vadd.f32 %v9046, %v9158
    %v9160 = vpop.f32.mrf.mxu0
    %v9161 = vadd.f32 %v9048, %v9160
    %9162 = vmatprep.mubr.bf16.mxu0 %v5160
    %9163 = vmatmul.mubr.bf16.gmra.mxu0 %v5159
    %v9164 = vpop.f32.mrf.mxu0
    %v9165 = vadd.f32 %v9052, %v9164
    %v9166 = vpop.f32.mrf.mxu0
    %v9167 = vadd.f32 %v9054, %v9166
    %v9168 = vpop.f32.mrf.mxu0
    %v9169 = vadd.f32 %v9056, %v9168
    %v9170 = vpop.f32.mrf.mxu0
    %v9171 = vadd.f32 %v9058, %v9170
    %9172 = vmatprep.mubr.bf16.mxu0 %v5168
    %9173 = vmatmul.mubr.bf16.gmra.mxu0 %v5167
    %v9174 = vpop.f32.mrf.mxu0
    %v9175 = vadd.f32 %v9062, %v9174
    %v9176 = vpop.f32.mrf.mxu0
    %v9177 = vadd.f32 %v9064, %v9176
    %v9178 = vpop.f32.mrf.mxu0
    %v9179 = vadd.f32 %v9066, %v9178
    %v9180 = vpop.f32.mrf.mxu0
    %v9181 = vadd.f32 %v9068, %v9180
    %9182 = vmatprep.mubr.bf16.mxu0 %v5176
    %9183 = vmatmul.mubr.bf16.gmra.mxu0 %v5175
    %v9184 = vpop.f32.mrf.mxu0
    %v9185 = vadd.f32 %v9072, %v9184
    %v9186 = vpop.f32.mrf.mxu0
    %v9187 = vadd.f32 %v9074, %v9186
    %v9188 = vpop.f32.mrf.mxu0
    %v9189 = vadd.f32 %v9076, %v9188
    %v9190 = vpop.f32.mrf.mxu0
    %v9191 = vadd.f32 %v9078, %v9190
    %9192 = vmatprep.mubr.bf16.mxu0 %v5184
    %9193 = vmatmul.mubr.bf16.gmra.mxu0 %v5183
    %v9194 = vpop.f32.mrf.mxu0
    %v9195 = vadd.f32 %v9082, %v9194
    %v9196 = vpop.f32.mrf.mxu0
    %v9197 = vadd.f32 %v9084, %v9196
    %v9198 = vpop.f32.mrf.mxu0
    %v9199 = vadd.f32 %v9086, %v9198
    %v9200 = vpop.f32.mrf.mxu0
    %v9201 = vadd.f32 %v9088, %v9200
    %9202 = vdwg.mxu0
    %9203 = vmatprep.subr.bf16.mxu0 %v7336
    %9204 = vmatpush1.bf16.msra.mxu0 %v7335
    %9205 = vmatprep.subr.bf16.mxu0 %v7328
    %9206 = vmatpush1.bf16.msra.mxu0 %v7327
    %9207 = vmatprep.subr.bf16.mxu0 %v7320
    %9208 = vmatpush1.bf16.msra.mxu0 %v7319
    %9209 = vmatprep.subr.bf16.mxu0 %v7312
    %9210 = vmatpush1.bf16.msra.mxu0 %v7311
    %9211 = vmatprep.subr.bf16.mxu0 %v7304
    %9212 = vmatpush1.bf16.msra.mxu0 %v7303
    %9213 = vmatprep.subr.bf16.mxu0 %v7296
    %9214 = vmatpush1.bf16.msra.mxu0 %v7295
    %9215 = vmatprep.subr.bf16.mxu0 %v7288
    %9216 = vmatpush1.bf16.msra.mxu0 %v7287
    %9217 = vmatprep.subr.bf16.mxu0 %v7280
    %9218 = vmatpush1.bf16.msra.mxu0 %v7279
    %9219 = vmatprep.subr.bf16.mxu0 %v7400
    %9220 = vmatpush2.bf16.msra.mxu0 %v7399
    %9221 = vmatprep.subr.bf16.mxu0 %v7392
    %9222 = vmatpush2.bf16.msra.mxu0 %v7391
    %9223 = vmatprep.subr.bf16.mxu0 %v7384
    %9224 = vmatpush2.bf16.msra.mxu0 %v7383
    %9225 = vmatprep.subr.bf16.mxu0 %v7376
    %9226 = vmatpush2.bf16.msra.mxu0 %v7375
    %9227 = vmatprep.subr.bf16.mxu0 %v7368
    %9228 = vmatpush2.bf16.msra.mxu0 %v7367
    %9229 = vmatprep.subr.bf16.mxu0 %v7360
    %9230 = vmatpush2.bf16.msra.mxu0 %v7359
    %9231 = vmatprep.subr.bf16.mxu0 %v7352
    %9232 = vmatpush2.bf16.msra.mxu0 %v7351
    %9233 = vmatprep.subr.bf16.mxu0 %v7344
    %9234 = vmatpush2.bf16.msra.mxu0 %v7343
    %9235 = vmatprep.mubr.bf16.mxu0 %v5122
    %9236 = vmatmul.mubr.bf16.gmra.mxu0 %v5121
    %v9237 = vpop.f32.mrf.mxu0
    %v9238 = vadd.f32 %v5718, %v9237
    %v9239 = vpop.f32.mrf.mxu0
    %v9240 = vadd.f32 %v5722, %v9239
    %v9241 = vpop.f32.mrf.mxu0
    %v9242 = vadd.f32 %v5718, %v9241
    %v9243 = vpop.f32.mrf.mxu0
    %v9244 = vadd.f32 %v5722, %v9243
    %9245 = vmatprep.mubr.bf16.mxu0 %v5130
    %9246 = vmatmul.mubr.bf16.gmra.mxu0 %v5129
    %v9247 = vpop.f32.mrf.mxu0
    %v9248 = vadd.f32 %v5718, %v9247
    %v9249 = vpop.f32.mrf.mxu0
    %v9250 = vadd.f32 %v5722, %v9249
    %v9251 = vpop.f32.mrf.mxu0
    %v9252 = vadd.f32 %v5718, %v9251
    %v9253 = vpop.f32.mrf.mxu0
    %v9254 = vadd.f32 %v5722, %v9253
    %9255 = vmatprep.mubr.bf16.mxu0 %v5138
    %9256 = vmatmul.mubr.bf16.gmra.mxu0 %v5137
    %v9257 = vpop.f32.mrf.mxu0
    %v9258 = vadd.f32 %v5718, %v9257
    %v9259 = vpop.f32.mrf.mxu0
    %v9260 = vadd.f32 %v5722, %v9259
    %v9261 = vpop.f32.mrf.mxu0
    %v9262 = vadd.f32 %v5718, %v9261
    %v9263 = vpop.f32.mrf.mxu0
    %v9264 = vadd.f32 %v5722, %v9263
    %9265 = vmatprep.mubr.bf16.mxu0 %v5146
    %9266 = vmatmul.mubr.bf16.gmra.mxu0 %v5145
    %v9267 = vpop.f32.mrf.mxu0
    %v9268 = vadd.f32 %v5718, %v9267
    %v9269 = vpop.f32.mrf.mxu0
    %v9270 = vadd.f32 %v5722, %v9269
    %v9271 = vpop.f32.mrf.mxu0
    %v9272 = vadd.f32 %v5718, %v9271
    %v9273 = vpop.f32.mrf.mxu0
    %v9274 = vadd.f32 %v5722, %v9273
    %9275 = vmatprep.mubr.bf16.mxu0 %v5154
    %9276 = vmatmul.mubr.bf16.gmra.mxu0 %v5153
    %v9277 = vpop.f32.mrf.mxu0
    %v9278 = vadd.f32 %v5718, %v9277
    %v9279 = vpop.f32.mrf.mxu0
    %v9280 = vadd.f32 %v5722, %v9279
    %v9281 = vpop.f32.mrf.mxu0
    %v9282 = vadd.f32 %v5718, %v9281
    %v9283 = vpop.f32.mrf.mxu0
    %v9284 = vadd.f32 %v5722, %v9283
    %9285 = vmatprep.mubr.bf16.mxu0 %v5162
    %9286 = vmatmul.mubr.bf16.gmra.mxu0 %v5161
    %v9287 = vpop.f32.mrf.mxu0
    %v9288 = vadd.f32 %v5718, %v9287
    %v9289 = vpop.f32.mrf.mxu0
    %v9290 = vadd.f32 %v5722, %v9289
    %v9291 = vpop.f32.mrf.mxu0
    %v9292 = vadd.f32 %v5718, %v9291
    %v9293 = vpop.f32.mrf.mxu0
    %v9294 = vadd.f32 %v5722, %v9293
    %9295 = vmatprep.mubr.bf16.mxu0 %v5170
    %9296 = vmatmul.mubr.bf16.gmra.mxu0 %v5169
    %v9297 = vpop.f32.mrf.mxu0
    %v9298 = vadd.f32 %v5718, %v9297
    %v9299 = vpop.f32.mrf.mxu0
    %v9300 = vadd.f32 %v5722, %v9299
    %v9301 = vpop.f32.mrf.mxu0
    %v9302 = vadd.f32 %v5718, %v9301
    %v9303 = vpop.f32.mrf.mxu0
    %v9304 = vadd.f32 %v5722, %v9303
    %9305 = vmatprep.mubr.bf16.mxu0 %v5178
    %9306 = vmatmul.mubr.bf16.gmra.mxu0 %v5177
    %v9307 = vpop.f32.mrf.mxu0
    %v9308 = vadd.f32 %v5718, %v9307
    %v9309 = vpop.f32.mrf.mxu0
    %v9310 = vadd.f32 %v5722, %v9309
    %v9311 = vpop.f32.mrf.mxu0
    %v9312 = vadd.f32 %v5718, %v9311
    %v9313 = vpop.f32.mrf.mxu0
    %v9314 = vadd.f32 %v5722, %v9313
    %9315 = vdwg.mxu0
    %9316 = vmatprep.subr.bf16.mxu0 %v7464
    %9317 = vmatpush1.bf16.msra.mxu0 %v7463
    %9318 = vmatprep.subr.bf16.mxu0 %v7456
    %9319 = vmatpush1.bf16.msra.mxu0 %v7455
    %9320 = vmatprep.subr.bf16.mxu0 %v7448
    %9321 = vmatpush1.bf16.msra.mxu0 %v7447
    %9322 = vmatprep.subr.bf16.mxu0 %v7440
    %9323 = vmatpush1.bf16.msra.mxu0 %v7439
    %9324 = vmatprep.subr.bf16.mxu0 %v7432
    %9325 = vmatpush1.bf16.msra.mxu0 %v7431
    %9326 = vmatprep.subr.bf16.mxu0 %v7424
    %9327 = vmatpush1.bf16.msra.mxu0 %v7423
    %9328 = vmatprep.subr.bf16.mxu0 %v7416
    %9329 = vmatpush1.bf16.msra.mxu0 %v7415
    %9330 = vmatprep.subr.bf16.mxu0 %v7408
    %9331 = vmatpush1.bf16.msra.mxu0 %v7407
    %9332 = vmatprep.subr.bf16.mxu0 %v7528
    %9333 = vmatpush2.bf16.msra.mxu0 %v7527
    %9334 = vmatprep.subr.bf16.mxu0 %v7520
    %9335 = vmatpush2.bf16.msra.mxu0 %v7519
    %9336 = vmatprep.subr.bf16.mxu0 %v7512
    %9337 = vmatpush2.bf16.msra.mxu0 %v7511
    %9338 = vmatprep.subr.bf16.mxu0 %v7504
    %9339 = vmatpush2.bf16.msra.mxu0 %v7503
    %9340 = vmatprep.subr.bf16.mxu0 %v7496
    %9341 = vmatpush2.bf16.msra.mxu0 %v7495
    %9342 = vmatprep.subr.bf16.mxu0 %v7488
    %9343 = vmatpush2.bf16.msra.mxu0 %v7487
    %9344 = vmatprep.subr.bf16.mxu0 %v7480
    %9345 = vmatpush2.bf16.msra.mxu0 %v7479
    %9346 = vmatprep.subr.bf16.mxu0 %v7472
    %9347 = vmatpush2.bf16.msra.mxu0 %v7471
    %9348 = vmatprep.mubr.bf16.mxu0 %v5124
    %9349 = vmatmul.mubr.bf16.gmra.mxu0 %v5123
    %v9350 = vpop.f32.mrf.mxu0
    %v9351 = vadd.f32 %v9238, %v9350
    %v9352 = vpop.f32.mrf.mxu0
    %v9353 = vadd.f32 %v9240, %v9352
    %v9354 = vpop.f32.mrf.mxu0
    %v9355 = vadd.f32 %v9242, %v9354
    %v9356 = vpop.f32.mrf.mxu0
    %v9357 = vadd.f32 %v9244, %v9356
    %9358 = vmatprep.mubr.bf16.mxu0 %v5132
    %9359 = vmatmul.mubr.bf16.gmra.mxu0 %v5131
    %v9360 = vpop.f32.mrf.mxu0
    %v9361 = vadd.f32 %v9248, %v9360
    %v9362 = vpop.f32.mrf.mxu0
    %v9363 = vadd.f32 %v9250, %v9362
    %v9364 = vpop.f32.mrf.mxu0
    %v9365 = vadd.f32 %v9252, %v9364
    %v9366 = vpop.f32.mrf.mxu0
    %v9367 = vadd.f32 %v9254, %v9366
    %9368 = vmatprep.mubr.bf16.mxu0 %v5140
    %9369 = vmatmul.mubr.bf16.gmra.mxu0 %v5139
    %v9370 = vpop.f32.mrf.mxu0
    %v9371 = vadd.f32 %v9258, %v9370
    %v9372 = vpop.f32.mrf.mxu0
    %v9373 = vadd.f32 %v9260, %v9372
    %v9374 = vpop.f32.mrf.mxu0
    %v9375 = vadd.f32 %v9262, %v9374
    %v9376 = vpop.f32.mrf.mxu0
    %v9377 = vadd.f32 %v9264, %v9376
    %9378 = vmatprep.mubr.bf16.mxu0 %v5148
    %9379 = vmatmul.mubr.bf16.gmra.mxu0 %v5147
    %v9380 = vpop.f32.mrf.mxu0
    %v9381 = vadd.f32 %v9268, %v9380
    %v9382 = vpop.f32.mrf.mxu0
    %v9383 = vadd.f32 %v9270, %v9382
    %v9384 = vpop.f32.mrf.mxu0
    %v9385 = vadd.f32 %v9272, %v9384
    %v9386 = vpop.f32.mrf.mxu0
    %v9387 = vadd.f32 %v9274, %v9386
    %9388 = vmatprep.mubr.bf16.mxu0 %v5156
    %9389 = vmatmul.mubr.bf16.gmra.mxu0 %v5155
    %v9390 = vpop.f32.mrf.mxu0
    %v9391 = vadd.f32 %v9278, %v9390
    %v9392 = vpop.f32.mrf.mxu0
    %v9393 = vadd.f32 %v9280, %v9392
    %v9394 = vpop.f32.mrf.mxu0
    %v9395 = vadd.f32 %v9282, %v9394
    %v9396 = vpop.f32.mrf.mxu0
    %v9397 = vadd.f32 %v9284, %v9396
    %9398 = vmatprep.mubr.bf16.mxu0 %v5164
    %9399 = vmatmul.mubr.bf16.gmra.mxu0 %v5163
    %v9400 = vpop.f32.mrf.mxu0
    %v9401 = vadd.f32 %v9288, %v9400
    %v9402 = vpop.f32.mrf.mxu0
    %v9403 = vadd.f32 %v9290, %v9402
    %v9404 = vpop.f32.mrf.mxu0
    %v9405 = vadd.f32 %v9292, %v9404
    %v9406 = vpop.f32.mrf.mxu0
    %v9407 = vadd.f32 %v9294, %v9406
    %9408 = vmatprep.mubr.bf16.mxu0 %v5172
    %9409 = vmatmul.mubr.bf16.gmra.mxu0 %v5171
    %v9410 = vpop.f32.mrf.mxu0
    %v9411 = vadd.f32 %v9298, %v9410
    %v9412 = vpop.f32.mrf.mxu0
    %v9413 = vadd.f32 %v9300, %v9412
    %v9414 = vpop.f32.mrf.mxu0
    %v9415 = vadd.f32 %v9302, %v9414
    %v9416 = vpop.f32.mrf.mxu0
    %v9417 = vadd.f32 %v9304, %v9416
    %9418 = vmatprep.mubr.bf16.mxu0 %v5180
    %9419 = vmatmul.mubr.bf16.gmra.mxu0 %v5179
    %v9420 = vpop.f32.mrf.mxu0
    %v9421 = vadd.f32 %v9308, %v9420
    %v9422 = vpop.f32.mrf.mxu0
    %v9423 = vadd.f32 %v9310, %v9422
    %v9424 = vpop.f32.mrf.mxu0
    %v9425 = vadd.f32 %v9312, %v9424
    %v9426 = vpop.f32.mrf.mxu0
    %v9427 = vadd.f32 %v9314, %v9426
    %9428 = vdwg.mxu0
    %9429 = vmatprep.subr.bf16.mxu0 %v7592
    %9430 = vmatpush1.bf16.msra.mxu0 %v7591
    %9431 = vmatprep.subr.bf16.mxu0 %v7584
    %9432 = vmatpush1.bf16.msra.mxu0 %v7583
    %9433 = vmatprep.subr.bf16.mxu0 %v7576
    %9434 = vmatpush1.bf16.msra.mxu0 %v7575
    %9435 = vmatprep.subr.bf16.mxu0 %v7568
    %9436 = vmatpush1.bf16.msra.mxu0 %v7567
    %9437 = vmatprep.subr.bf16.mxu0 %v7560
    %9438 = vmatpush1.bf16.msra.mxu0 %v7559
    %9439 = vmatprep.subr.bf16.mxu0 %v7552
    %9440 = vmatpush1.bf16.msra.mxu0 %v7551
    %9441 = vmatprep.subr.bf16.mxu0 %v7544
    %9442 = vmatpush1.bf16.msra.mxu0 %v7543
    %9443 = vmatprep.subr.bf16.mxu0 %v7536
    %9444 = vmatpush1.bf16.msra.mxu0 %v7535
    %9445 = vmatprep.subr.bf16.mxu0 %v7656
    %9446 = vmatpush2.bf16.msra.mxu0 %v7655
    %9447 = vmatprep.subr.bf16.mxu0 %v7648
    %9448 = vmatpush2.bf16.msra.mxu0 %v7647
    %9449 = vmatprep.subr.bf16.mxu0 %v7640
    %9450 = vmatpush2.bf16.msra.mxu0 %v7639
    %9451 = vmatprep.subr.bf16.mxu0 %v7632
    %9452 = vmatpush2.bf16.msra.mxu0 %v7631
    %9453 = vmatprep.subr.bf16.mxu0 %v7624
    %9454 = vmatpush2.bf16.msra.mxu0 %v7623
    %9455 = vmatprep.subr.bf16.mxu0 %v7616
    %9456 = vmatpush2.bf16.msra.mxu0 %v7615
    %9457 = vmatprep.subr.bf16.mxu0 %v7608
    %9458 = vmatpush2.bf16.msra.mxu0 %v7607
    %9459 = vmatprep.subr.bf16.mxu0 %v7600
    %9460 = vmatpush2.bf16.msra.mxu0 %v7599
    %9461 = vmatprep.mubr.bf16.mxu0 %v5126
    %9462 = vmatmul.mubr.bf16.gmra.mxu0 %v5125
    %v9463 = vpop.f32.mrf.mxu0
    %v9464 = vadd.f32 %v9351, %v9463
    %v9465 = vpop.f32.mrf.mxu0
    %v9466 = vadd.f32 %v9353, %v9465
    %v9467 = vpop.f32.mrf.mxu0
    %v9468 = vadd.f32 %v9355, %v9467
    %v9469 = vpop.f32.mrf.mxu0
    %v9470 = vadd.f32 %v9357, %v9469
    %9471 = vmatprep.mubr.bf16.mxu0 %v5134
    %9472 = vmatmul.mubr.bf16.gmra.mxu0 %v5133
    %v9473 = vpop.f32.mrf.mxu0
    %v9474 = vadd.f32 %v9361, %v9473
    %v9475 = vpop.f32.mrf.mxu0
    %v9476 = vadd.f32 %v9363, %v9475
    %v9477 = vpop.f32.mrf.mxu0
    %v9478 = vadd.f32 %v9365, %v9477
    %v9479 = vpop.f32.mrf.mxu0
    %v9480 = vadd.f32 %v9367, %v9479
    %9481 = vmatprep.mubr.bf16.mxu0 %v5142
    %9482 = vmatmul.mubr.bf16.gmra.mxu0 %v5141
    %v9483 = vpop.f32.mrf.mxu0
    %v9484 = vadd.f32 %v9371, %v9483
    %v9485 = vpop.f32.mrf.mxu0
    %v9486 = vadd.f32 %v9373, %v9485
    %v9487 = vpop.f32.mrf.mxu0
    %v9488 = vadd.f32 %v9375, %v9487
    %v9489 = vpop.f32.mrf.mxu0
    %v9490 = vadd.f32 %v9377, %v9489
    %9491 = vmatprep.mubr.bf16.mxu0 %v5150
    %9492 = vmatmul.mubr.bf16.gmra.mxu0 %v5149
    %v9493 = vpop.f32.mrf.mxu0
    %v9494 = vadd.f32 %v9381, %v9493
    %v9495 = vpop.f32.mrf.mxu0
    %v9496 = vadd.f32 %v9383, %v9495
    %v9497 = vpop.f32.mrf.mxu0
    %v9498 = vadd.f32 %v9385, %v9497
    %v9499 = vpop.f32.mrf.mxu0
    %v9500 = vadd.f32 %v9387, %v9499
    %9501 = vmatprep.mubr.bf16.mxu0 %v5158
    %9502 = vmatmul.mubr.bf16.gmra.mxu0 %v5157
    %v9503 = vpop.f32.mrf.mxu0
    %v9504 = vadd.f32 %v9391, %v9503
    %v9505 = vpop.f32.mrf.mxu0
    %v9506 = vadd.f32 %v9393, %v9505
    %v9507 = vpop.f32.mrf.mxu0
    %v9508 = vadd.f32 %v9395, %v9507
    %v9509 = vpop.f32.mrf.mxu0
    %v9510 = vadd.f32 %v9397, %v9509
    %9511 = vmatprep.mubr.bf16.mxu0 %v5166
    %9512 = vmatmul.mubr.bf16.gmra.mxu0 %v5165
    %v9513 = vpop.f32.mrf.mxu0
    %v9514 = vadd.f32 %v9401, %v9513
    %v9515 = vpop.f32.mrf.mxu0
    %v9516 = vadd.f32 %v9403, %v9515
    %v9517 = vpop.f32.mrf.mxu0
    %v9518 = vadd.f32 %v9405, %v9517
    %v9519 = vpop.f32.mrf.mxu0
    %v9520 = vadd.f32 %v9407, %v9519
    %9521 = vmatprep.mubr.bf16.mxu0 %v5174
    %9522 = vmatmul.mubr.bf16.gmra.mxu0 %v5173
    %v9523 = vpop.f32.mrf.mxu0
    %v9524 = vadd.f32 %v9411, %v9523
    %v9525 = vpop.f32.mrf.mxu0
    %v9526 = vadd.f32 %v9413, %v9525
    %v9527 = vpop.f32.mrf.mxu0
    %v9528 = vadd.f32 %v9415, %v9527
    %v9529 = vpop.f32.mrf.mxu0
    %v9530 = vadd.f32 %v9417, %v9529
    %9531 = vmatprep.mubr.bf16.mxu0 %v5182
    %9532 = vmatmul.mubr.bf16.gmra.mxu0 %v5181
    %v9533 = vpop.f32.mrf.mxu0
    %v9534 = vadd.f32 %v9421, %v9533
    %v9535 = vpop.f32.mrf.mxu0
    %v9536 = vadd.f32 %v9423, %v9535
    %v9537 = vpop.f32.mrf.mxu0
    %v9538 = vadd.f32 %v9425, %v9537
    %v9539 = vpop.f32.mrf.mxu0
    %v9540 = vadd.f32 %v9427, %v9539
    %9541 = vdwg.mxu0
    %9542 = vmatprep.subr.bf16.mxu0 %v7720
    %9543 = vmatpush1.bf16.msra.mxu0 %v7719
    %9544 = vmatprep.subr.bf16.mxu0 %v7712
    %9545 = vmatpush1.bf16.msra.mxu0 %v7711
    %9546 = vmatprep.subr.bf16.mxu0 %v7704
    %9547 = vmatpush1.bf16.msra.mxu0 %v7703
    %9548 = vmatprep.subr.bf16.mxu0 %v7696
    %9549 = vmatpush1.bf16.msra.mxu0 %v7695
    %9550 = vmatprep.subr.bf16.mxu0 %v7688
    %9551 = vmatpush1.bf16.msra.mxu0 %v7687
    %9552 = vmatprep.subr.bf16.mxu0 %v7680
    %9553 = vmatpush1.bf16.msra.mxu0 %v7679
    %9554 = vmatprep.subr.bf16.mxu0 %v7672
    %9555 = vmatpush1.bf16.msra.mxu0 %v7671
    %9556 = vmatprep.subr.bf16.mxu0 %v7664
    %9557 = vmatpush1.bf16.msra.mxu0 %v7663
    %9558 = vmatprep.subr.bf16.mxu0 %v7784
    %9559 = vmatpush2.bf16.msra.mxu0 %v7783
    %9560 = vmatprep.subr.bf16.mxu0 %v7776
    %9561 = vmatpush2.bf16.msra.mxu0 %v7775
    %9562 = vmatprep.subr.bf16.mxu0 %v7768
    %9563 = vmatpush2.bf16.msra.mxu0 %v7767
    %9564 = vmatprep.subr.bf16.mxu0 %v7760
    %9565 = vmatpush2.bf16.msra.mxu0 %v7759
    %9566 = vmatprep.subr.bf16.mxu0 %v7752
    %9567 = vmatpush2.bf16.msra.mxu0 %v7751
    %9568 = vmatprep.subr.bf16.mxu0 %v7744
    %9569 = vmatpush2.bf16.msra.mxu0 %v7743
    %9570 = vmatprep.subr.bf16.mxu0 %v7736
    %9571 = vmatpush2.bf16.msra.mxu0 %v7735
    %9572 = vmatprep.subr.bf16.mxu0 %v7728
    %9573 = vmatpush2.bf16.msra.mxu0 %v7727
    %9574 = vmatprep.mubr.bf16.mxu0 %v5128
    %9575 = vmatmul.mubr.bf16.gmra.mxu0 %v5127
    %v9576 = vpop.f32.mrf.mxu0
    %v9577 = vadd.f32 %v9464, %v9576
    %v9578 = vpop.f32.mrf.mxu0
    %v9579 = vadd.f32 %v9466, %v9578
    %v9580 = vpop.f32.mrf.mxu0
    %v9581 = vadd.f32 %v9468, %v9580
    %v9582 = vpop.f32.mrf.mxu0
    %v9583 = vadd.f32 %v9470, %v9582
    %9584 = vmatprep.mubr.bf16.mxu0 %v5136
    %9585 = vmatmul.mubr.bf16.gmra.mxu0 %v5135
    %v9586 = vpop.f32.mrf.mxu0
    %v9587 = vadd.f32 %v9474, %v9586
    %v9588 = vpop.f32.mrf.mxu0
    %v9589 = vadd.f32 %v9476, %v9588
    %v9590 = vpop.f32.mrf.mxu0
    %v9591 = vadd.f32 %v9478, %v9590
    %v9592 = vpop.f32.mrf.mxu0
    %v9593 = vadd.f32 %v9480, %v9592
    %9594 = vmatprep.mubr.bf16.mxu0 %v5144
    %9595 = vmatmul.mubr.bf16.gmra.mxu0 %v5143
    %v9596 = vpop.f32.mrf.mxu0
    %v9597 = vadd.f32 %v9484, %v9596
    %v9598 = vpop.f32.mrf.mxu0
    %v9599 = vadd.f32 %v9486, %v9598
    %v9600 = vpop.f32.mrf.mxu0
    %v9601 = vadd.f32 %v9488, %v9600
    %v9602 = vpop.f32.mrf.mxu0
    %v9603 = vadd.f32 %v9490, %v9602
    %9604 = vmatprep.mubr.bf16.mxu0 %v5152
    %9605 = vmatmul.mubr.bf16.gmra.mxu0 %v5151
    %v9606 = vpop.f32.mrf.mxu0
    %v9607 = vadd.f32 %v9494, %v9606
    %v9608 = vpop.f32.mrf.mxu0
    %v9609 = vadd.f32 %v9496, %v9608
    %v9610 = vpop.f32.mrf.mxu0
    %v9611 = vadd.f32 %v9498, %v9610
    %v9612 = vpop.f32.mrf.mxu0
    %v9613 = vadd.f32 %v9500, %v9612
    %9614 = vmatprep.mubr.bf16.mxu0 %v5160
    %9615 = vmatmul.mubr.bf16.gmra.mxu0 %v5159
    %v9616 = vpop.f32.mrf.mxu0
    %v9617 = vadd.f32 %v9504, %v9616
    %v9618 = vpop.f32.mrf.mxu0
    %v9619 = vadd.f32 %v9506, %v9618
    %v9620 = vpop.f32.mrf.mxu0
    %v9621 = vadd.f32 %v9508, %v9620
    %v9622 = vpop.f32.mrf.mxu0
    %v9623 = vadd.f32 %v9510, %v9622
    %9624 = vmatprep.mubr.bf16.mxu0 %v5168
    %9625 = vmatmul.mubr.bf16.gmra.mxu0 %v5167
    %v9626 = vpop.f32.mrf.mxu0
    %v9627 = vadd.f32 %v9514, %v9626
    %v9628 = vpop.f32.mrf.mxu0
    %v9629 = vadd.f32 %v9516, %v9628
    %v9630 = vpop.f32.mrf.mxu0
    %v9631 = vadd.f32 %v9518, %v9630
    %v9632 = vpop.f32.mrf.mxu0
    %v9633 = vadd.f32 %v9520, %v9632
    %9634 = vmatprep.mubr.bf16.mxu0 %v5176
    %9635 = vmatmul.mubr.bf16.gmra.mxu0 %v5175
    %v9636 = vpop.f32.mrf.mxu0
    %v9637 = vadd.f32 %v9524, %v9636
    %v9638 = vpop.f32.mrf.mxu0
    %v9639 = vadd.f32 %v9526, %v9638
    %v9640 = vpop.f32.mrf.mxu0
    %v9641 = vadd.f32 %v9528, %v9640
    %v9642 = vpop.f32.mrf.mxu0
    %v9643 = vadd.f32 %v9530, %v9642
    %9644 = vmatprep.mubr.bf16.mxu0 %v5184
    %9645 = vmatmul.mubr.bf16.gmra.mxu0 %v5183
    %v9646 = vpop.f32.mrf.mxu0
    %v9647 = vadd.f32 %v9534, %v9646
    %v9648 = vpop.f32.mrf.mxu0
    %v9649 = vadd.f32 %v9536, %v9648
    %v9650 = vpop.f32.mrf.mxu0
    %v9651 = vadd.f32 %v9538, %v9650
    %v9652 = vpop.f32.mrf.mxu0
    %v9653 = vadd.f32 %v9540, %v9652
    %9654 = vdwg.mxu0
    %9655 = vmatprep.subr.bf16.mxu0 %v7338
    %9656 = vmatpush1.bf16.msra.mxu0 %v7337
    %9657 = vmatprep.subr.bf16.mxu0 %v7330
    %9658 = vmatpush1.bf16.msra.mxu0 %v7329
    %9659 = vmatprep.subr.bf16.mxu0 %v7322
    %9660 = vmatpush1.bf16.msra.mxu0 %v7321
    %9661 = vmatprep.subr.bf16.mxu0 %v7314
    %9662 = vmatpush1.bf16.msra.mxu0 %v7313
    %9663 = vmatprep.subr.bf16.mxu0 %v7306
    %9664 = vmatpush1.bf16.msra.mxu0 %v7305
    %9665 = vmatprep.subr.bf16.mxu0 %v7298
    %9666 = vmatpush1.bf16.msra.mxu0 %v7297
    %9667 = vmatprep.subr.bf16.mxu0 %v7290
    %9668 = vmatpush1.bf16.msra.mxu0 %v7289
    %9669 = vmatprep.subr.bf16.mxu0 %v7282
    %9670 = vmatpush1.bf16.msra.mxu0 %v7281
    %9671 = vmatprep.subr.bf16.mxu0 %v7402
    %9672 = vmatpush2.bf16.msra.mxu0 %v7401
    %9673 = vmatprep.subr.bf16.mxu0 %v7394
    %9674 = vmatpush2.bf16.msra.mxu0 %v7393
    %9675 = vmatprep.subr.bf16.mxu0 %v7386
    %9676 = vmatpush2.bf16.msra.mxu0 %v7385
    %9677 = vmatprep.subr.bf16.mxu0 %v7378
    %9678 = vmatpush2.bf16.msra.mxu0 %v7377
    %9679 = vmatprep.subr.bf16.mxu0 %v7370
    %9680 = vmatpush2.bf16.msra.mxu0 %v7369
    %9681 = vmatprep.subr.bf16.mxu0 %v7362
    %9682 = vmatpush2.bf16.msra.mxu0 %v7361
    %9683 = vmatprep.subr.bf16.mxu0 %v7354
    %9684 = vmatpush2.bf16.msra.mxu0 %v7353
    %9685 = vmatprep.subr.bf16.mxu0 %v7346
    %9686 = vmatpush2.bf16.msra.mxu0 %v7345
    %9687 = vmatprep.mubr.bf16.mxu0 %v5122
    %9688 = vmatmul.mubr.bf16.gmra.mxu0 %v5121
    %v9689 = vpop.f32.mrf.mxu0
    %v9690 = vadd.f32 %v5726, %v9689
    %v9691 = vpop.f32.mrf.mxu0
    %v9692 = vadd.f32 %v5730, %v9691
    %v9693 = vpop.f32.mrf.mxu0
    %v9694 = vadd.f32 %v5726, %v9693
    %v9695 = vpop.f32.mrf.mxu0
    %v9696 = vadd.f32 %v5730, %v9695
    %9697 = vmatprep.mubr.bf16.mxu0 %v5130
    %9698 = vmatmul.mubr.bf16.gmra.mxu0 %v5129
    %v9699 = vpop.f32.mrf.mxu0
    %v9700 = vadd.f32 %v5726, %v9699
    %v9701 = vpop.f32.mrf.mxu0
    %v9702 = vadd.f32 %v5730, %v9701
    %v9703 = vpop.f32.mrf.mxu0
    %v9704 = vadd.f32 %v5726, %v9703
    %v9705 = vpop.f32.mrf.mxu0
    %v9706 = vadd.f32 %v5730, %v9705
    %9707 = vmatprep.mubr.bf16.mxu0 %v5138
    %9708 = vmatmul.mubr.bf16.gmra.mxu0 %v5137
    %v9709 = vpop.f32.mrf.mxu0
    %v9710 = vadd.f32 %v5726, %v9709
    %v9711 = vpop.f32.mrf.mxu0
    %v9712 = vadd.f32 %v5730, %v9711
    %v9713 = vpop.f32.mrf.mxu0
    %v9714 = vadd.f32 %v5726, %v9713
    %v9715 = vpop.f32.mrf.mxu0
    %v9716 = vadd.f32 %v5730, %v9715
    %9717 = vmatprep.mubr.bf16.mxu0 %v5146
    %9718 = vmatmul.mubr.bf16.gmra.mxu0 %v5145
    %v9719 = vpop.f32.mrf.mxu0
    %v9720 = vadd.f32 %v5726, %v9719
    %v9721 = vpop.f32.mrf.mxu0
    %v9722 = vadd.f32 %v5730, %v9721
    %v9723 = vpop.f32.mrf.mxu0
    %v9724 = vadd.f32 %v5726, %v9723
    %v9725 = vpop.f32.mrf.mxu0
    %v9726 = vadd.f32 %v5730, %v9725
    %9727 = vmatprep.mubr.bf16.mxu0 %v5154
    %9728 = vmatmul.mubr.bf16.gmra.mxu0 %v5153
    %v9729 = vpop.f32.mrf.mxu0
    %v9730 = vadd.f32 %v5726, %v9729
    %v9731 = vpop.f32.mrf.mxu0
    %v9732 = vadd.f32 %v5730, %v9731
    %v9733 = vpop.f32.mrf.mxu0
    %v9734 = vadd.f32 %v5726, %v9733
    %v9735 = vpop.f32.mrf.mxu0
    %v9736 = vadd.f32 %v5730, %v9735
    %9737 = vmatprep.mubr.bf16.mxu0 %v5162
    %9738 = vmatmul.mubr.bf16.gmra.mxu0 %v5161
    %v9739 = vpop.f32.mrf.mxu0
    %v9740 = vadd.f32 %v5726, %v9739
    %v9741 = vpop.f32.mrf.mxu0
    %v9742 = vadd.f32 %v5730, %v9741
    %v9743 = vpop.f32.mrf.mxu0
    %v9744 = vadd.f32 %v5726, %v9743
    %v9745 = vpop.f32.mrf.mxu0
    %v9746 = vadd.f32 %v5730, %v9745
    %9747 = vmatprep.mubr.bf16.mxu0 %v5170
    %9748 = vmatmul.mubr.bf16.gmra.mxu0 %v5169
    %v9749 = vpop.f32.mrf.mxu0
    %v9750 = vadd.f32 %v5726, %v9749
    %v9751 = vpop.f32.mrf.mxu0
    %v9752 = vadd.f32 %v5730, %v9751
    %v9753 = vpop.f32.mrf.mxu0
    %v9754 = vadd.f32 %v5726, %v9753
    %v9755 = vpop.f32.mrf.mxu0
    %v9756 = vadd.f32 %v5730, %v9755
    %9757 = vmatprep.mubr.bf16.mxu0 %v5178
    %9758 = vmatmul.mubr.bf16.gmra.mxu0 %v5177
    %v9759 = vpop.f32.mrf.mxu0
    %v9760 = vadd.f32 %v5726, %v9759
    %v9761 = vpop.f32.mrf.mxu0
    %v9762 = vadd.f32 %v5730, %v9761
    %v9763 = vpop.f32.mrf.mxu0
    %v9764 = vadd.f32 %v5726, %v9763
    %v9765 = vpop.f32.mrf.mxu0
    %v9766 = vadd.f32 %v5730, %v9765
    %9767 = vdwg.mxu0
    %9768 = vmatprep.subr.bf16.mxu0 %v7466
    %9769 = vmatpush1.bf16.msra.mxu0 %v7465
    %9770 = vmatprep.subr.bf16.mxu0 %v7458
    %9771 = vmatpush1.bf16.msra.mxu0 %v7457
    %9772 = vmatprep.subr.bf16.mxu0 %v7450
    %9773 = vmatpush1.bf16.msra.mxu0 %v7449
    %9774 = vmatprep.subr.bf16.mxu0 %v7442
    %9775 = vmatpush1.bf16.msra.mxu0 %v7441
    %9776 = vmatprep.subr.bf16.mxu0 %v7434
    %9777 = vmatpush1.bf16.msra.mxu0 %v7433
    %9778 = vmatprep.subr.bf16.mxu0 %v7426
    %9779 = vmatpush1.bf16.msra.mxu0 %v7425
    %9780 = vmatprep.subr.bf16.mxu0 %v7418
    %9781 = vmatpush1.bf16.msra.mxu0 %v7417
    %9782 = vmatprep.subr.bf16.mxu0 %v7410
    %9783 = vmatpush1.bf16.msra.mxu0 %v7409
    %9784 = vmatprep.subr.bf16.mxu0 %v7530
    %9785 = vmatpush2.bf16.msra.mxu0 %v7529
    %9786 = vmatprep.subr.bf16.mxu0 %v7522
    %9787 = vmatpush2.bf16.msra.mxu0 %v7521
    %9788 = vmatprep.subr.bf16.mxu0 %v7514
    %9789 = vmatpush2.bf16.msra.mxu0 %v7513
    %9790 = vmatprep.subr.bf16.mxu0 %v7506
    %9791 = vmatpush2.bf16.msra.mxu0 %v7505
    %9792 = vmatprep.subr.bf16.mxu0 %v7498
    %9793 = vmatpush2.bf16.msra.mxu0 %v7497
    %9794 = vmatprep.subr.bf16.mxu0 %v7490
    %9795 = vmatpush2.bf16.msra.mxu0 %v7489
    %9796 = vmatprep.subr.bf16.mxu0 %v7482
    %9797 = vmatpush2.bf16.msra.mxu0 %v7481
    %9798 = vmatprep.subr.bf16.mxu0 %v7474
    %9799 = vmatpush2.bf16.msra.mxu0 %v7473
    %9800 = vmatprep.mubr.bf16.mxu0 %v5124
    %9801 = vmatmul.mubr.bf16.gmra.mxu0 %v5123
    %v9802 = vpop.f32.mrf.mxu0
    %v9803 = vadd.f32 %v9690, %v9802
    %v9804 = vpop.f32.mrf.mxu0
    %v9805 = vadd.f32 %v9692, %v9804
    %v9806 = vpop.f32.mrf.mxu0
    %v9807 = vadd.f32 %v9694, %v9806
    %v9808 = vpop.f32.mrf.mxu0
    %v9809 = vadd.f32 %v9696, %v9808
    %9810 = vmatprep.mubr.bf16.mxu0 %v5132
    %9811 = vmatmul.mubr.bf16.gmra.mxu0 %v5131
    %v9812 = vpop.f32.mrf.mxu0
    %v9813 = vadd.f32 %v9700, %v9812
    %v9814 = vpop.f32.mrf.mxu0
    %v9815 = vadd.f32 %v9702, %v9814
    %v9816 = vpop.f32.mrf.mxu0
    %v9817 = vadd.f32 %v9704, %v9816
    %v9818 = vpop.f32.mrf.mxu0
    %v9819 = vadd.f32 %v9706, %v9818
    %9820 = vmatprep.mubr.bf16.mxu0 %v5140
    %9821 = vmatmul.mubr.bf16.gmra.mxu0 %v5139
    %v9822 = vpop.f32.mrf.mxu0
    %v9823 = vadd.f32 %v9710, %v9822
    %v9824 = vpop.f32.mrf.mxu0
    %v9825 = vadd.f32 %v9712, %v9824
    %v9826 = vpop.f32.mrf.mxu0
    %v9827 = vadd.f32 %v9714, %v9826
    %v9828 = vpop.f32.mrf.mxu0
    %v9829 = vadd.f32 %v9716, %v9828
    %9830 = vmatprep.mubr.bf16.mxu0 %v5148
    %9831 = vmatmul.mubr.bf16.gmra.mxu0 %v5147
    %v9832 = vpop.f32.mrf.mxu0
    %v9833 = vadd.f32 %v9720, %v9832
    %v9834 = vpop.f32.mrf.mxu0
    %v9835 = vadd.f32 %v9722, %v9834
    %v9836 = vpop.f32.mrf.mxu0
    %v9837 = vadd.f32 %v9724, %v9836
    %v9838 = vpop.f32.mrf.mxu0
    %v9839 = vadd.f32 %v9726, %v9838
    %9840 = vmatprep.mubr.bf16.mxu0 %v5156
    %9841 = vmatmul.mubr.bf16.gmra.mxu0 %v5155
    %v9842 = vpop.f32.mrf.mxu0
    %v9843 = vadd.f32 %v9730, %v9842
    %v9844 = vpop.f32.mrf.mxu0
    %v9845 = vadd.f32 %v9732, %v9844
    %v9846 = vpop.f32.mrf.mxu0
    %v9847 = vadd.f32 %v9734, %v9846
    %v9848 = vpop.f32.mrf.mxu0
    %v9849 = vadd.f32 %v9736, %v9848
    %9850 = vmatprep.mubr.bf16.mxu0 %v5164
    %9851 = vmatmul.mubr.bf16.gmra.mxu0 %v5163
    %v9852 = vpop.f32.mrf.mxu0
    %v9853 = vadd.f32 %v9740, %v9852
    %v9854 = vpop.f32.mrf.mxu0
    %v9855 = vadd.f32 %v9742, %v9854
    %v9856 = vpop.f32.mrf.mxu0
    %v9857 = vadd.f32 %v9744, %v9856
    %v9858 = vpop.f32.mrf.mxu0
    %v9859 = vadd.f32 %v9746, %v9858
    %9860 = vmatprep.mubr.bf16.mxu0 %v5172
    %9861 = vmatmul.mubr.bf16.gmra.mxu0 %v5171
    %v9862 = vpop.f32.mrf.mxu0
    %v9863 = vadd.f32 %v9750, %v9862
    %v9864 = vpop.f32.mrf.mxu0
    %v9865 = vadd.f32 %v9752, %v9864
    %v9866 = vpop.f32.mrf.mxu0
    %v9867 = vadd.f32 %v9754, %v9866
    %v9868 = vpop.f32.mrf.mxu0
    %v9869 = vadd.f32 %v9756, %v9868
    %9870 = vmatprep.mubr.bf16.mxu0 %v5180
    %9871 = vmatmul.mubr.bf16.gmra.mxu0 %v5179
    %v9872 = vpop.f32.mrf.mxu0
    %v9873 = vadd.f32 %v9760, %v9872
    %v9874 = vpop.f32.mrf.mxu0
    %v9875 = vadd.f32 %v9762, %v9874
    %v9876 = vpop.f32.mrf.mxu0
    %v9877 = vadd.f32 %v9764, %v9876
    %v9878 = vpop.f32.mrf.mxu0
    %v9879 = vadd.f32 %v9766, %v9878
    %9880 = vdwg.mxu0
    %9881 = vmatprep.subr.bf16.mxu0 %v7594
    %9882 = vmatpush1.bf16.msra.mxu0 %v7593
    %9883 = vmatprep.subr.bf16.mxu0 %v7586
    %9884 = vmatpush1.bf16.msra.mxu0 %v7585
    %9885 = vmatprep.subr.bf16.mxu0 %v7578
    %9886 = vmatpush1.bf16.msra.mxu0 %v7577
    %9887 = vmatprep.subr.bf16.mxu0 %v7570
    %9888 = vmatpush1.bf16.msra.mxu0 %v7569
    %9889 = vmatprep.subr.bf16.mxu0 %v7562
    %9890 = vmatpush1.bf16.msra.mxu0 %v7561
    %9891 = vmatprep.subr.bf16.mxu0 %v7554
    %9892 = vmatpush1.bf16.msra.mxu0 %v7553
    %9893 = vmatprep.subr.bf16.mxu0 %v7546
    %9894 = vmatpush1.bf16.msra.mxu0 %v7545
    %9895 = vmatprep.subr.bf16.mxu0 %v7538
    %9896 = vmatpush1.bf16.msra.mxu0 %v7537
    %9897 = vmatprep.subr.bf16.mxu0 %v7658
    %9898 = vmatpush2.bf16.msra.mxu0 %v7657
    %9899 = vmatprep.subr.bf16.mxu0 %v7650
    %9900 = vmatpush2.bf16.msra.mxu0 %v7649
    %9901 = vmatprep.subr.bf16.mxu0 %v7642
    %9902 = vmatpush2.bf16.msra.mxu0 %v7641
    %9903 = vmatprep.subr.bf16.mxu0 %v7634
    %9904 = vmatpush2.bf16.msra.mxu0 %v7633
    %9905 = vmatprep.subr.bf16.mxu0 %v7626
    %9906 = vmatpush2.bf16.msra.mxu0 %v7625
    %9907 = vmatprep.subr.bf16.mxu0 %v7618
    %9908 = vmatpush2.bf16.msra.mxu0 %v7617
    %9909 = vmatprep.subr.bf16.mxu0 %v7610
    %9910 = vmatpush2.bf16.msra.mxu0 %v7609
    %9911 = vmatprep.subr.bf16.mxu0 %v7602
    %9912 = vmatpush2.bf16.msra.mxu0 %v7601
    %9913 = vmatprep.mubr.bf16.mxu0 %v5126
    %9914 = vmatmul.mubr.bf16.gmra.mxu0 %v5125
    %v9915 = vpop.f32.mrf.mxu0
    %v9916 = vadd.f32 %v9803, %v9915
    %v9917 = vpop.f32.mrf.mxu0
    %v9918 = vadd.f32 %v9805, %v9917
    %v9919 = vpop.f32.mrf.mxu0
    %v9920 = vadd.f32 %v9807, %v9919
    %v9921 = vpop.f32.mrf.mxu0
    %v9922 = vadd.f32 %v9809, %v9921
    %9923 = vmatprep.mubr.bf16.mxu0 %v5134
    %9924 = vmatmul.mubr.bf16.gmra.mxu0 %v5133
    %v9925 = vpop.f32.mrf.mxu0
    %v9926 = vadd.f32 %v9813, %v9925
    %v9927 = vpop.f32.mrf.mxu0
    %v9928 = vadd.f32 %v9815, %v9927
    %v9929 = vpop.f32.mrf.mxu0
    %v9930 = vadd.f32 %v9817, %v9929
    %v9931 = vpop.f32.mrf.mxu0
    %v9932 = vadd.f32 %v9819, %v9931
    %9933 = vmatprep.mubr.bf16.mxu0 %v5142
    %9934 = vmatmul.mubr.bf16.gmra.mxu0 %v5141
    %v9935 = vpop.f32.mrf.mxu0
    %v9936 = vadd.f32 %v9823, %v9935
    %v9937 = vpop.f32.mrf.mxu0
    %v9938 = vadd.f32 %v9825, %v9937
    %v9939 = vpop.f32.mrf.mxu0
    %v9940 = vadd.f32 %v9827, %v9939
    %v9941 = vpop.f32.mrf.mxu0
    %v9942 = vadd.f32 %v9829, %v9941
    %9943 = vmatprep.mubr.bf16.mxu0 %v5150
    %9944 = vmatmul.mubr.bf16.gmra.mxu0 %v5149
    %v9945 = vpop.f32.mrf.mxu0
    %v9946 = vadd.f32 %v9833, %v9945
    %v9947 = vpop.f32.mrf.mxu0
    %v9948 = vadd.f32 %v9835, %v9947
    %v9949 = vpop.f32.mrf.mxu0
    %v9950 = vadd.f32 %v9837, %v9949
    %v9951 = vpop.f32.mrf.mxu0
    %v9952 = vadd.f32 %v9839, %v9951
    %9953 = vmatprep.mubr.bf16.mxu0 %v5158
    %9954 = vmatmul.mubr.bf16.gmra.mxu0 %v5157
    %v9955 = vpop.f32.mrf.mxu0
    %v9956 = vadd.f32 %v9843, %v9955
    %v9957 = vpop.f32.mrf.mxu0
    %v9958 = vadd.f32 %v9845, %v9957
    %v9959 = vpop.f32.mrf.mxu0
    %v9960 = vadd.f32 %v9847, %v9959
    %v9961 = vpop.f32.mrf.mxu0
    %v9962 = vadd.f32 %v9849, %v9961
    %9963 = vmatprep.mubr.bf16.mxu0 %v5166
    %9964 = vmatmul.mubr.bf16.gmra.mxu0 %v5165
    %v9965 = vpop.f32.mrf.mxu0
    %v9966 = vadd.f32 %v9853, %v9965
    %v9967 = vpop.f32.mrf.mxu0
    %v9968 = vadd.f32 %v9855, %v9967
    %v9969 = vpop.f32.mrf.mxu0
    %v9970 = vadd.f32 %v9857, %v9969
    %v9971 = vpop.f32.mrf.mxu0
    %v9972 = vadd.f32 %v9859, %v9971
    %9973 = vmatprep.mubr.bf16.mxu0 %v5174
    %9974 = vmatmul.mubr.bf16.gmra.mxu0 %v5173
    %v9975 = vpop.f32.mrf.mxu0
    %v9976 = vadd.f32 %v9863, %v9975
    %v9977 = vpop.f32.mrf.mxu0
    %v9978 = vadd.f32 %v9865, %v9977
    %v9979 = vpop.f32.mrf.mxu0
    %v9980 = vadd.f32 %v9867, %v9979
    %v9981 = vpop.f32.mrf.mxu0
    %v9982 = vadd.f32 %v9869, %v9981
    %9983 = vmatprep.mubr.bf16.mxu0 %v5182
    %9984 = vmatmul.mubr.bf16.gmra.mxu0 %v5181
    %v9985 = vpop.f32.mrf.mxu0
    %v9986 = vadd.f32 %v9873, %v9985
    %v9987 = vpop.f32.mrf.mxu0
    %v9988 = vadd.f32 %v9875, %v9987
    %v9989 = vpop.f32.mrf.mxu0
    %v9990 = vadd.f32 %v9877, %v9989
    %v9991 = vpop.f32.mrf.mxu0
    %v9992 = vadd.f32 %v9879, %v9991
    %9993 = vdwg.mxu0
    %9994 = vmatprep.subr.bf16.mxu0 %v7722
    %9995 = vmatpush1.bf16.msra.mxu0 %v7721
    %9996 = vmatprep.subr.bf16.mxu0 %v7714
    %9997 = vmatpush1.bf16.msra.mxu0 %v7713
    %9998 = vmatprep.subr.bf16.mxu0 %v7706
    %9999 = vmatpush1.bf16.msra.mxu0 %v7705
    %10000 = vmatprep.subr.bf16.mxu0 %v7698
    %10001 = vmatpush1.bf16.msra.mxu0 %v7697
    %10002 = vmatprep.subr.bf16.mxu0 %v7690
    %10003 = vmatpush1.bf16.msra.mxu0 %v7689
    %10004 = vmatprep.subr.bf16.mxu0 %v7682
    %10005 = vmatpush1.bf16.msra.mxu0 %v7681
    %10006 = vmatprep.subr.bf16.mxu0 %v7674
    %10007 = vmatpush1.bf16.msra.mxu0 %v7673
    %10008 = vmatprep.subr.bf16.mxu0 %v7666
    %10009 = vmatpush1.bf16.msra.mxu0 %v7665
    %10010 = vmatprep.subr.bf16.mxu0 %v7786
    %10011 = vmatpush2.bf16.msra.mxu0 %v7785
    %10012 = vmatprep.subr.bf16.mxu0 %v7778
    %10013 = vmatpush2.bf16.msra.mxu0 %v7777
    %10014 = vmatprep.subr.bf16.mxu0 %v7770
    %10015 = vmatpush2.bf16.msra.mxu0 %v7769
    %10016 = vmatprep.subr.bf16.mxu0 %v7762
    %10017 = vmatpush2.bf16.msra.mxu0 %v7761
    %10018 = vmatprep.subr.bf16.mxu0 %v7754
    %10019 = vmatpush2.bf16.msra.mxu0 %v7753
    %10020 = vmatprep.subr.bf16.mxu0 %v7746
    %10021 = vmatpush2.bf16.msra.mxu0 %v7745
    %10022 = vmatprep.subr.bf16.mxu0 %v7738
    %10023 = vmatpush2.bf16.msra.mxu0 %v7737
    %10024 = vmatprep.subr.bf16.mxu0 %v7730
    %10025 = vmatpush2.bf16.msra.mxu0 %v7729
    %10026 = vmatprep.mubr.bf16.mxu0 %v5128
    %10027 = vmatmul.mubr.bf16.gmra.mxu0 %v5127
    %v10028 = vpop.f32.mrf.mxu0
    %v10029 = vadd.f32 %v9916, %v10028
    %v10030 = vpop.f32.mrf.mxu0
    %v10031 = vadd.f32 %v9918, %v10030
    %v10032 = vpop.f32.mrf.mxu0
    %v10033 = vadd.f32 %v9920, %v10032
    %v10034 = vpop.f32.mrf.mxu0
    %v10035 = vadd.f32 %v9922, %v10034
    %10036 = vmatprep.mubr.bf16.mxu0 %v5136
    %10037 = vmatmul.mubr.bf16.gmra.mxu0 %v5135
    %v10038 = vpop.f32.mrf.mxu0
    %v10039 = vadd.f32 %v9926, %v10038
    %v10040 = vpop.f32.mrf.mxu0
    %v10041 = vadd.f32 %v9928, %v10040
    %v10042 = vpop.f32.mrf.mxu0
    %v10043 = vadd.f32 %v9930, %v10042
    %v10044 = vpop.f32.mrf.mxu0
    %v10045 = vadd.f32 %v9932, %v10044
    %10046 = vmatprep.mubr.bf16.mxu0 %v5144
    %10047 = vmatmul.mubr.bf16.gmra.mxu0 %v5143
    %v10048 = vpop.f32.mrf.mxu0
    %v10049 = vadd.f32 %v9936, %v10048
    %v10050 = vpop.f32.mrf.mxu0
    %v10051 = vadd.f32 %v9938, %v10050
    %v10052 = vpop.f32.mrf.mxu0
    %v10053 = vadd.f32 %v9940, %v10052
    %v10054 = vpop.f32.mrf.mxu0
    %v10055 = vadd.f32 %v9942, %v10054
    %10056 = vmatprep.mubr.bf16.mxu0 %v5152
    %10057 = vmatmul.mubr.bf16.gmra.mxu0 %v5151
    %v10058 = vpop.f32.mrf.mxu0
    %v10059 = vadd.f32 %v9946, %v10058
    %v10060 = vpop.f32.mrf.mxu0
    %v10061 = vadd.f32 %v9948, %v10060
    %v10062 = vpop.f32.mrf.mxu0
    %v10063 = vadd.f32 %v9950, %v10062
    %v10064 = vpop.f32.mrf.mxu0
    %v10065 = vadd.f32 %v9952, %v10064
    %10066 = vmatprep.mubr.bf16.mxu0 %v5160
    %10067 = vmatmul.mubr.bf16.gmra.mxu0 %v5159
    %v10068 = vpop.f32.mrf.mxu0
    %v10069 = vadd.f32 %v9956, %v10068
    %v10070 = vpop.f32.mrf.mxu0
    %v10071 = vadd.f32 %v9958, %v10070
    %v10072 = vpop.f32.mrf.mxu0
    %v10073 = vadd.f32 %v9960, %v10072
    %v10074 = vpop.f32.mrf.mxu0
    %v10075 = vadd.f32 %v9962, %v10074
    %10076 = vmatprep.mubr.bf16.mxu0 %v5168
    %10077 = vmatmul.mubr.bf16.gmra.mxu0 %v5167
    %v10078 = vpop.f32.mrf.mxu0
    %v10079 = vadd.f32 %v9966, %v10078
    %v10080 = vpop.f32.mrf.mxu0
    %v10081 = vadd.f32 %v9968, %v10080
    %v10082 = vpop.f32.mrf.mxu0
    %v10083 = vadd.f32 %v9970, %v10082
    %v10084 = vpop.f32.mrf.mxu0
    %v10085 = vadd.f32 %v9972, %v10084
    %10086 = vmatprep.mubr.bf16.mxu0 %v5176
    %10087 = vmatmul.mubr.bf16.gmra.mxu0 %v5175
    %v10088 = vpop.f32.mrf.mxu0
    %v10089 = vadd.f32 %v9976, %v10088
    %v10090 = vpop.f32.mrf.mxu0
    %v10091 = vadd.f32 %v9978, %v10090
    %v10092 = vpop.f32.mrf.mxu0
    %v10093 = vadd.f32 %v9980, %v10092
    %v10094 = vpop.f32.mrf.mxu0
    %v10095 = vadd.f32 %v9982, %v10094
    %10096 = vmatprep.mubr.bf16.mxu0 %v5184
    %10097 = vmatmul.mubr.bf16.gmra.mxu0 %v5183
    %v10098 = vpop.f32.mrf.mxu0
    %v10099 = vadd.f32 %v9986, %v10098
    %v10100 = vpop.f32.mrf.mxu0
    %v10101 = vadd.f32 %v9988, %v10100
    %v10102 = vpop.f32.mrf.mxu0
    %v10103 = vadd.f32 %v9990, %v10102
    %v10104 = vpop.f32.mrf.mxu0
    %v10105 = vadd.f32 %v9992, %v10104
    %10106 = vdwg.mxu0
    %v10107 = vmax.f32 %v8673, 0.0
    %v10108 = vmax.f32 %v8675, 0.0
    %v10109 = vmax.f32 %v9125, 0.0
    %v10110 = vmax.f32 %v9127, 0.0
    %v10111 = vmax.f32 %v9577, 0.0
    %v10112 = vmax.f32 %v9579, 0.0
    %v10113 = vmax.f32 %v10029, 0.0
    %v10114 = vmax.f32 %v10031, 0.0
    %v10115 = vmax.f32 %v8677, 0.0
    %v10116 = vmax.f32 %v8679, 0.0
    %v10117 = vmax.f32 %v9129, 0.0
    %v10118 = vmax.f32 %v9131, 0.0
    %v10119 = vmax.f32 %v9581, 0.0
    %v10120 = vmax.f32 %v9583, 0.0
    %v10121 = vmax.f32 %v10033, 0.0
    %v10122 = vmax.f32 %v10035, 0.0
    %v10123 = vmax.f32 %v8683, 0.0
    %v10124 = vmax.f32 %v8685, 0.0
    %v10125 = vmax.f32 %v9135, 0.0
    %v10126 = vmax.f32 %v9137, 0.0
    %v10127 = vmax.f32 %v9587, 0.0
    %v10128 = vmax.f32 %v9589, 0.0
    %v10129 = vmax.f32 %v10039, 0.0
    %v10130 = vmax.f32 %v10041, 0.0
    %v10131 = vmax.f32 %v8687, 0.0
    %v10132 = vmax.f32 %v8689, 0.0
    %v10133 = vmax.f32 %v9139, 0.0
    %v10134 = vmax.f32 %v9141, 0.0
    %v10135 = vmax.f32 %v9591, 0.0
    %v10136 = vmax.f32 %v9593, 0.0
    %v10137 = vmax.f32 %v10043, 0.0
    %v10138 = vmax.f32 %v10045, 0.0
    %v10139 = vmax.f32 %v8693, 0.0
    %v10140 = vmax.f32 %v8695, 0.0
    %v10141 = vmax.f32 %v9145, 0.0
    %v10142 = vmax.f32 %v9147, 0.0
    %v10143 = vmax.f32 %v9597, 0.0
    %v10144 = vmax.f32 %v9599, 0.0
    %v10145 = vmax.f32 %v10049, 0.0
    %v10146 = vmax.f32 %v10051, 0.0
    %v10147 = vmax.f32 %v8697, 0.0
    %v10148 = vmax.f32 %v8699, 0.0
    %v10149 = vmax.f32 %v9149, 0.0
    %v10150 = vmax.f32 %v9151, 0.0
    %v10151 = vmax.f32 %v9601, 0.0
    %v10152 = vmax.f32 %v9603, 0.0
    %v10153 = vmax.f32 %v10053, 0.0
    %v10154 = vmax.f32 %v10055, 0.0
    %v10155 = vmax.f32 %v8703, 0.0
    %v10156 = vmax.f32 %v8705, 0.0
    %v10157 = vmax.f32 %v9155, 0.0
    %v10158 = vmax.f32 %v9157, 0.0
    %v10159 = vmax.f32 %v9607, 0.0
    %v10160 = vmax.f32 %v9609, 0.0
    %v10161 = vmax.f32 %v10059, 0.0
    %v10162 = vmax.f32 %v10061, 0.0
    %v10163 = vmax.f32 %v8707, 0.0
    %v10164 = vmax.f32 %v8709, 0.0
    %v10165 = vmax.f32 %v9159, 0.0
    %v10166 = vmax.f32 %v9161, 0.0
    %v10167 = vmax.f32 %v9611, 0.0
    %v10168 = vmax.f32 %v9613, 0.0
    %v10169 = vmax.f32 %v10063, 0.0
    %v10170 = vmax.f32 %v10065, 0.0
    %v10171 = vmax.f32 %v8713, 0.0
    %v10172 = vmax.f32 %v8715, 0.0
    %v10173 = vmax.f32 %v9165, 0.0
    %v10174 = vmax.f32 %v9167, 0.0
    %v10175 = vmax.f32 %v9617, 0.0
    %v10176 = vmax.f32 %v9619, 0.0
    %v10177 = vmax.f32 %v10069, 0.0
    %v10178 = vmax.f32 %v10071, 0.0
    %v10179 = vmax.f32 %v8717, 0.0
    %v10180 = vmax.f32 %v8719, 0.0
    %v10181 = vmax.f32 %v9169, 0.0
    %v10182 = vmax.f32 %v9171, 0.0
    %v10183 = vmax.f32 %v9621, 0.0
    %v10184 = vmax.f32 %v9623, 0.0
    %v10185 = vmax.f32 %v10073, 0.0
    %v10186 = vmax.f32 %v10075, 0.0
    %v10187 = vmax.f32 %v8723, 0.0
    %v10188 = vmax.f32 %v8725, 0.0
    %v10189 = vmax.f32 %v9175, 0.0
    %v10190 = vmax.f32 %v9177, 0.0
    %v10191 = vmax.f32 %v9627, 0.0
    %v10192 = vmax.f32 %v9629, 0.0
    %v10193 = vmax.f32 %v10079, 0.0
    %v10194 = vmax.f32 %v10081, 0.0
    %v10195 = vmax.f32 %v8727, 0.0
    %v10196 = vmax.f32 %v8729, 0.0
    %v10197 = vmax.f32 %v9179, 0.0
    %v10198 = vmax.f32 %v9181, 0.0
    %v10199 = vmax.f32 %v9631, 0.0
    %v10200 = vmax.f32 %v9633, 0.0
    %v10201 = vmax.f32 %v10083, 0.0
    %v10202 = vmax.f32 %v10085, 0.0
    %v10203 = vmax.f32 %v8733, 0.0
    %v10204 = vmax.f32 %v8735, 0.0
    %v10205 = vmax.f32 %v9185, 0.0
    %v10206 = vmax.f32 %v9187, 0.0
    %v10207 = vmax.f32 %v9637, 0.0
    %v10208 = vmax.f32 %v9639, 0.0
    %v10209 = vmax.f32 %v10089, 0.0
    %v10210 = vmax.f32 %v10091, 0.0
    %v10211 = vmax.f32 %v8737, 0.0
    %v10212 = vmax.f32 %v8739, 0.0
    %v10213 = vmax.f32 %v9189, 0.0
    %v10214 = vmax.f32 %v9191, 0.0
    %v10215 = vmax.f32 %v9641, 0.0
    %v10216 = vmax.f32 %v9643, 0.0
    %v10217 = vmax.f32 %v10093, 0.0
    %v10218 = vmax.f32 %v10095, 0.0
    %v10219 = vmax.f32 %v8743, 0.0
    %v10220 = vmax.f32 %v8745, 0.0
    %v10221 = vmax.f32 %v9195, 0.0
    %v10222 = vmax.f32 %v9197, 0.0
    %v10223 = vmax.f32 %v9647, 0.0
    %v10224 = vmax.f32 %v9649, 0.0
    %v10225 = vmax.f32 %v10099, 0.0
    %v10226 = vmax.f32 %v10101, 0.0
    %v10227 = vmax.f32 %v8747, 0.0
    %v10228 = vmax.f32 %v8749, 0.0
    %v10229 = vmax.f32 %v9199, 0.0
    %v10230 = vmax.f32 %v9201, 0.0
    %v10231 = vmax.f32 %v9651, 0.0
    %v10232 = vmax.f32 %v9653, 0.0
    %v10233 = vmax.f32 %v10103, 0.0
    %v10234 = vmax.f32 %v10105, 0.0
    %v10235 = vpack.c.bf16 %v10115, %v10107
    %v10236 = vpack.c.bf16 %v10116, %v10108
    %v10237 = vpack.c.bf16 %v10117, %v10109
    %v10238 = vpack.c.bf16 %v10118, %v10110
    %v10239 = vpack.c.bf16 %v10119, %v10111
    %v10240 = vpack.c.bf16 %v10120, %v10112
    %v10241 = vpack.c.bf16 %v10121, %v10113
    %v10242 = vpack.c.bf16 %v10122, %v10114
    %v10243 = vpack.c.bf16 %v10131, %v10123
    %v10244 = vpack.c.bf16 %v10132, %v10124
    %v10245 = vpack.c.bf16 %v10133, %v10125
    %v10246 = vpack.c.bf16 %v10134, %v10126
    %v10247 = vpack.c.bf16 %v10135, %v10127
    %v10248 = vpack.c.bf16 %v10136, %v10128
    %v10249 = vpack.c.bf16 %v10137, %v10129
    %v10250 = vpack.c.bf16 %v10138, %v10130
    %v10251 = vpack.c.bf16 %v10147, %v10139
    %v10252 = vpack.c.bf16 %v10148, %v10140
    %v10253 = vpack.c.bf16 %v10149, %v10141
    %v10254 = vpack.c.bf16 %v10150, %v10142
    %v10255 = vpack.c.bf16 %v10151, %v10143
    %v10256 = vpack.c.bf16 %v10152, %v10144
    %v10257 = vpack.c.bf16 %v10153, %v10145
    %v10258 = vpack.c.bf16 %v10154, %v10146
    %v10259 = vpack.c.bf16 %v10163, %v10155
    %v10260 = vpack.c.bf16 %v10164, %v10156
    %v10261 = vpack.c.bf16 %v10165, %v10157
    %v10262 = vpack.c.bf16 %v10166, %v10158
    %v10263 = vpack.c.bf16 %v10167, %v10159
    %v10264 = vpack.c.bf16 %v10168, %v10160
    %v10265 = vpack.c.bf16 %v10169, %v10161
    %v10266 = vpack.c.bf16 %v10170, %v10162
    %v10267 = vpack.c.bf16 %v10179, %v10171
    %v10268 = vpack.c.bf16 %v10180, %v10172
    %v10269 = vpack.c.bf16 %v10181, %v10173
    %v10270 = vpack.c.bf16 %v10182, %v10174
    %v10271 = vpack.c.bf16 %v10183, %v10175
    %v10272 = vpack.c.bf16 %v10184, %v10176
    %v10273 = vpack.c.bf16 %v10185, %v10177
    %v10274 = vpack.c.bf16 %v10186, %v10178
    %v10275 = vpack.c.bf16 %v10195, %v10187
    %v10276 = vpack.c.bf16 %v10196, %v10188
    %v10277 = vpack.c.bf16 %v10197, %v10189
    %v10278 = vpack.c.bf16 %v10198, %v10190
    %v10279 = vpack.c.bf16 %v10199, %v10191
    %v10280 = vpack.c.bf16 %v10200, %v10192
    %v10281 = vpack.c.bf16 %v10201, %v10193
    %v10282 = vpack.c.bf16 %v10202, %v10194
    %v10283 = vpack.c.bf16 %v10211, %v10203
    %v10284 = vpack.c.bf16 %v10212, %v10204
    %v10285 = vpack.c.bf16 %v10213, %v10205
    %v10286 = vpack.c.bf16 %v10214, %v10206
    %v10287 = vpack.c.bf16 %v10215, %v10207
    %v10288 = vpack.c.bf16 %v10216, %v10208
    %v10289 = vpack.c.bf16 %v10217, %v10209
    %v10290 = vpack.c.bf16 %v10218, %v10210
    %v10291 = vpack.c.bf16 %v10227, %v10219
    %v10292 = vpack.c.bf16 %v10228, %v10220
    %v10293 = vpack.c.bf16 %v10229, %v10221
    %v10294 = vpack.c.bf16 %v10230, %v10222
    %v10295 = vpack.c.bf16 %v10231, %v10223
    %v10296 = vpack.c.bf16 %v10232, %v10224
    %v10297 = vpack.c.bf16 %v10233, %v10225
    %v10298 = vpack.c.bf16 %v10234, %v10226
    %v10299 = vld [vmem:[#allocation9] sm:$0xf]
    %v10300 = vld [vmem:[#allocation9 + $0x4] sm:$0xf]
    %v10301 = vld [vmem:[#allocation9 + $0x8] sm:$0xf]
    %v10302 = vld [vmem:[#allocation9 + $0xc] sm:$0xf]
    %v10303 = vld [vmem:[#allocation9 + $0x10] sm:$0xf]
    %v10304 = vld [vmem:[#allocation9 + $0x14] sm:$0xf]
    %v10305 = vld [vmem:[#allocation9 + $0x18] sm:$0xf]
    %v10306 = vld [vmem:[#allocation9 + $0x1c] sm:$0xf]
    %v10307 = vld [vmem:[#allocation9 + $0x20] sm:$0xf]
    %v10308 = vld [vmem:[#allocation9 + $0x24] sm:$0xf]
    %v10309 = vld [vmem:[#allocation9 + $0x28] sm:$0xf]
    %v10310 = vld [vmem:[#allocation9 + $0x2c] sm:$0xf]
    %v10311 = vld [vmem:[#allocation9 + $0x30] sm:$0xf]
    %v10312 = vld [vmem:[#allocation9 + $0x34] sm:$0xf]
    %v10313 = vld [vmem:[#allocation9 + $0x38] sm:$0xf]
    %v10314 = vld [vmem:[#allocation9 + $0x3c] sm:$0xf]
    %v10315 = vld [vmem:[#allocation9 + $0x40] sm:$0xf]
    %v10316 = vld [vmem:[#allocation9 + $0x44] sm:$0xf]
    %v10317 = vld [vmem:[#allocation9 + $0x48] sm:$0xf]
    %v10318 = vld [vmem:[#allocation9 + $0x4c] sm:$0xf]
    %v10319 = vld [vmem:[#allocation9 + $0x50] sm:$0xf]
    %v10320 = vld [vmem:[#allocation9 + $0x54] sm:$0xf]
    %v10321 = vld [vmem:[#allocation9 + $0x58] sm:$0xf]
    %v10322 = vld [vmem:[#allocation9 + $0x5c] sm:$0xf]
    %v10323 = vld [vmem:[#allocation9 + $0x60] sm:$0xf]
    %v10324 = vld [vmem:[#allocation9 + $0x64] sm:$0xf]
    %v10325 = vld [vmem:[#allocation9 + $0x68] sm:$0xf]
    %v10326 = vld [vmem:[#allocation9 + $0x6c] sm:$0xf]
    %v10327 = vld [vmem:[#allocation9 + $0x70] sm:$0xf]
    %v10328 = vld [vmem:[#allocation9 + $0x74] sm:$0xf]
    %v10329 = vld [vmem:[#allocation9 + $0x78] sm:$0xf]
    %v10330 = vld [vmem:[#allocation9 + $0x7c] sm:$0xf]
    %v10331 = vld [vmem:[#allocation9 + $0x80] sm:$0xf]
    %v10332 = vld [vmem:[#allocation9 + $0x84] sm:$0xf]
    %v10333 = vld [vmem:[#allocation9 + $0x88] sm:$0xf]
    %v10334 = vld [vmem:[#allocation9 + $0x8c] sm:$0xf]
    %v10335 = vld [vmem:[#allocation9 + $0x90] sm:$0xf]
    %v10336 = vld [vmem:[#allocation9 + $0x94] sm:$0xf]
    %v10337 = vld [vmem:[#allocation9 + $0x98] sm:$0xf]
    %v10338 = vld [vmem:[#allocation9 + $0x9c] sm:$0xf]
    %v10339 = vld [vmem:[#allocation9 + $0xa0] sm:$0xf]
    %v10340 = vld [vmem:[#allocation9 + $0xa4] sm:$0xf]
    %v10341 = vld [vmem:[#allocation9 + $0xa8] sm:$0xf]
    %v10342 = vld [vmem:[#allocation9 + $0xac] sm:$0xf]
    %v10343 = vld [vmem:[#allocation9 + $0xb0] sm:$0xf]
    %v10344 = vld [vmem:[#allocation9 + $0xb4] sm:$0xf]
    %v10345 = vld [vmem:[#allocation9 + $0xb8] sm:$0xf]
    %v10346 = vld [vmem:[#allocation9 + $0xbc] sm:$0xf]
    %v10347 = vld [vmem:[#allocation9 + $0xc0] sm:$0xf]
    %v10348 = vld [vmem:[#allocation9 + $0xc4] sm:$0xf]
    %v10349 = vld [vmem:[#allocation9 + $0xc8] sm:$0xf]
    %v10350 = vld [vmem:[#allocation9 + $0xcc] sm:$0xf]
    %v10351 = vld [vmem:[#allocation9 + $0xd0] sm:$0xf]
    %v10352 = vld [vmem:[#allocation9 + $0xd4] sm:$0xf]
    %v10353 = vld [vmem:[#allocation9 + $0xd8] sm:$0xf]
    %v10354 = vld [vmem:[#allocation9 + $0xdc] sm:$0xf]
    %v10355 = vld [vmem:[#allocation9 + $0xe0] sm:$0xf]
    %v10356 = vld [vmem:[#allocation9 + $0xe4] sm:$0xf]
    %v10357 = vld [vmem:[#allocation9 + $0xe8] sm:$0xf]
    %v10358 = vld [vmem:[#allocation9 + $0xec] sm:$0xf]
    %v10359 = vld [vmem:[#allocation9 + $0xf0] sm:$0xf]
    %v10360 = vld [vmem:[#allocation9 + $0xf4] sm:$0xf]
    %v10361 = vld [vmem:[#allocation9 + $0xf8] sm:$0xf]
    %v10362 = vld [vmem:[#allocation9 + $0xfc] sm:$0xf]
    %v10363 = vld [vmem:[#allocation9 + $0x100] sm:$0xf]
    %v10364 = vld [vmem:[#allocation9 + $0x104] sm:$0xf]
    %v10365 = vld [vmem:[#allocation9 + $0x108] sm:$0xf]
    %v10366 = vld [vmem:[#allocation9 + $0x10c] sm:$0xf]
    %v10367 = vld [vmem:[#allocation9 + $0x110] sm:$0xf]
    %v10368 = vld [vmem:[#allocation9 + $0x114] sm:$0xf]
    %v10369 = vld [vmem:[#allocation9 + $0x118] sm:$0xf]
    %v10370 = vld [vmem:[#allocation9 + $0x11c] sm:$0xf]
    %v10371 = vld [vmem:[#allocation9 + $0x120] sm:$0xf]
    %v10372 = vld [vmem:[#allocation9 + $0x124] sm:$0xf]
    %v10373 = vld [vmem:[#allocation9 + $0x128] sm:$0xf]
    %v10374 = vld [vmem:[#allocation9 + $0x12c] sm:$0xf]
    %v10375 = vld [vmem:[#allocation9 + $0x130] sm:$0xf]
    %v10376 = vld [vmem:[#allocation9 + $0x134] sm:$0xf]
    %v10377 = vld [vmem:[#allocation9 + $0x138] sm:$0xf]
    %v10378 = vld [vmem:[#allocation9 + $0x13c] sm:$0xf]
    %v10379 = vld [vmem:[#allocation9 + $0x140] sm:$0xf]
    %v10380 = vld [vmem:[#allocation9 + $0x144] sm:$0xf]
    %v10381 = vld [vmem:[#allocation9 + $0x148] sm:$0xf]
    %v10382 = vld [vmem:[#allocation9 + $0x14c] sm:$0xf]
    %v10383 = vld [vmem:[#allocation9 + $0x150] sm:$0xf]
    %v10384 = vld [vmem:[#allocation9 + $0x154] sm:$0xf]
    %v10385 = vld [vmem:[#allocation9 + $0x158] sm:$0xf]
    %v10386 = vld [vmem:[#allocation9 + $0x15c] sm:$0xf]
    %v10387 = vld [vmem:[#allocation9 + $0x160] sm:$0xf]
    %v10388 = vld [vmem:[#allocation9 + $0x164] sm:$0xf]
    %v10389 = vld [vmem:[#allocation9 + $0x168] sm:$0xf]
    %v10390 = vld [vmem:[#allocation9 + $0x16c] sm:$0xf]
    %v10391 = vld [vmem:[#allocation9 + $0x170] sm:$0xf]
    %v10392 = vld [vmem:[#allocation9 + $0x174] sm:$0xf]
    %v10393 = vld [vmem:[#allocation9 + $0x178] sm:$0xf]
    %v10394 = vld [vmem:[#allocation9 + $0x17c] sm:$0xf]
    %v10395 = vld [vmem:[#allocation9 + $0x180] sm:$0xf]
    %v10396 = vld [vmem:[#allocation9 + $0x184] sm:$0xf]
    %v10397 = vld [vmem:[#allocation9 + $0x188] sm:$0xf]
    %v10398 = vld [vmem:[#allocation9 + $0x18c] sm:$0xf]
    %v10399 = vld [vmem:[#allocation9 + $0x190] sm:$0xf]
    %v10400 = vld [vmem:[#allocation9 + $0x194] sm:$0xf]
    %v10401 = vld [vmem:[#allocation9 + $0x198] sm:$0xf]
    %v10402 = vld [vmem:[#allocation9 + $0x19c] sm:$0xf]
    %v10403 = vld [vmem:[#allocation9 + $0x1a0] sm:$0xf]
    %v10404 = vld [vmem:[#allocation9 + $0x1a4] sm:$0xf]
    %v10405 = vld [vmem:[#allocation9 + $0x1a8] sm:$0xf]
    %v10406 = vld [vmem:[#allocation9 + $0x1ac] sm:$0xf]
    %v10407 = vld [vmem:[#allocation9 + $0x1b0] sm:$0xf]
    %v10408 = vld [vmem:[#allocation9 + $0x1b4] sm:$0xf]
    %v10409 = vld [vmem:[#allocation9 + $0x1b8] sm:$0xf]
    %v10410 = vld [vmem:[#allocation9 + $0x1bc] sm:$0xf]
    %v10411 = vld [vmem:[#allocation9 + $0x1c0] sm:$0xf]
    %v10412 = vld [vmem:[#allocation9 + $0x1c4] sm:$0xf]
    %v10413 = vld [vmem:[#allocation9 + $0x1c8] sm:$0xf]
    %v10414 = vld [vmem:[#allocation9 + $0x1cc] sm:$0xf]
    %v10415 = vld [vmem:[#allocation9 + $0x1d0] sm:$0xf]
    %v10416 = vld [vmem:[#allocation9 + $0x1d4] sm:$0xf]
    %v10417 = vld [vmem:[#allocation9 + $0x1d8] sm:$0xf]
    %v10418 = vld [vmem:[#allocation9 + $0x1dc] sm:$0xf]
    %v10419 = vld [vmem:[#allocation9 + $0x1e0] sm:$0xf]
    %v10420 = vld [vmem:[#allocation9 + $0x1e4] sm:$0xf]
    %v10421 = vld [vmem:[#allocation9 + $0x1e8] sm:$0xf]
    %v10422 = vld [vmem:[#allocation9 + $0x1ec] sm:$0xf]
    %v10423 = vld [vmem:[#allocation9 + $0x1f0] sm:$0xf]
    %v10424 = vld [vmem:[#allocation9 + $0x1f4] sm:$0xf]
    %v10425 = vld [vmem:[#allocation9 + $0x1f8] sm:$0xf]
    %v10426 = vld [vmem:[#allocation9 + $0x1fc] sm:$0xf]
    %v10427 = vld [vmem:[#allocation10] sm:$0x1]
    %v10429 = vlaneseq
    %v10430 = vshrl.u32 %v10429, 7
    %v10431 = vsub.s32 0, %v10430
    %v10432 = vrot.slane %v10427, %v10431
    %v10562 = vunpack.c.l.b16 %v10299
    %v10563 = vunpack.c.l.b16 %v10300
    %v10564 = vunpack.c.l.b16 %v10301
    %v10565 = vunpack.c.l.b16 %v10302
    %v10566 = vunpack.c.l.b16 %v10303
    %v10567 = vunpack.c.l.b16 %v10304
    %v10568 = vunpack.c.l.b16 %v10305
    %v10569 = vunpack.c.l.b16 %v10306
    %v10570 = vunpack.c.l.b16 %v10307
    %v10571 = vunpack.c.l.b16 %v10308
    %v10572 = vunpack.c.l.b16 %v10309
    %v10573 = vunpack.c.l.b16 %v10310
    %v10574 = vunpack.c.l.b16 %v10311
    %v10575 = vunpack.c.l.b16 %v10312
    %v10576 = vunpack.c.l.b16 %v10313
    %v10577 = vunpack.c.l.b16 %v10314
    %v10578 = vunpack.c.l.b16 %v10315
    %v10579 = vunpack.c.l.b16 %v10316
    %v10580 = vunpack.c.l.b16 %v10317
    %v10581 = vunpack.c.l.b16 %v10318
    %v10582 = vunpack.c.l.b16 %v10319
    %v10583 = vunpack.c.l.b16 %v10320
    %v10584 = vunpack.c.l.b16 %v10321
    %v10585 = vunpack.c.l.b16 %v10322
    %v10586 = vunpack.c.l.b16 %v10323
    %v10587 = vunpack.c.l.b16 %v10324
    %v10588 = vunpack.c.l.b16 %v10325
    %v10589 = vunpack.c.l.b16 %v10326
    %v10590 = vunpack.c.l.b16 %v10327
    %v10591 = vunpack.c.l.b16 %v10328
    %v10592 = vunpack.c.l.b16 %v10329
    %v10593 = vunpack.c.l.b16 %v10330
    %v10594 = vunpack.c.l.b16 %v10331
    %v10595 = vunpack.c.l.b16 %v10332
    %v10596 = vunpack.c.l.b16 %v10333
    %v10597 = vunpack.c.l.b16 %v10334
    %v10598 = vunpack.c.l.b16 %v10335
    %v10599 = vunpack.c.l.b16 %v10336
    %v10600 = vunpack.c.l.b16 %v10337
    %v10601 = vunpack.c.l.b16 %v10338
    %v10602 = vunpack.c.l.b16 %v10339
    %v10603 = vunpack.c.l.b16 %v10340
    %v10604 = vunpack.c.l.b16 %v10341
    %v10605 = vunpack.c.l.b16 %v10342
    %v10606 = vunpack.c.l.b16 %v10343
    %v10607 = vunpack.c.l.b16 %v10344
    %v10608 = vunpack.c.l.b16 %v10345
    %v10609 = vunpack.c.l.b16 %v10346
    %v10610 = vunpack.c.l.b16 %v10347
    %v10611 = vunpack.c.l.b16 %v10348
    %v10612 = vunpack.c.l.b16 %v10349
    %v10613 = vunpack.c.l.b16 %v10350
    %v10614 = vunpack.c.l.b16 %v10351
    %v10615 = vunpack.c.l.b16 %v10352
    %v10616 = vunpack.c.l.b16 %v10353
    %v10617 = vunpack.c.l.b16 %v10354
    %v10618 = vunpack.c.l.b16 %v10355
    %v10619 = vunpack.c.l.b16 %v10356
    %v10620 = vunpack.c.l.b16 %v10357
    %v10621 = vunpack.c.l.b16 %v10358
    %v10622 = vunpack.c.l.b16 %v10359
    %v10623 = vunpack.c.l.b16 %v10360
    %v10624 = vunpack.c.l.b16 %v10361
    %v10625 = vunpack.c.l.b16 %v10362
    %v10626 = vunpack.c.l.b16 %v10363
    %v10627 = vunpack.c.l.b16 %v10364
    %v10628 = vunpack.c.l.b16 %v10365
    %v10629 = vunpack.c.l.b16 %v10366
    %v10630 = vunpack.c.l.b16 %v10367
    %v10631 = vunpack.c.l.b16 %v10368
    %v10632 = vunpack.c.l.b16 %v10369
    %v10633 = vunpack.c.l.b16 %v10370
    %v10634 = vunpack.c.l.b16 %v10371
    %v10635 = vunpack.c.l.b16 %v10372
    %v10636 = vunpack.c.l.b16 %v10373
    %v10637 = vunpack.c.l.b16 %v10374
    %v10638 = vunpack.c.l.b16 %v10375
    %v10639 = vunpack.c.l.b16 %v10376
    %v10640 = vunpack.c.l.b16 %v10377
    %v10641 = vunpack.c.l.b16 %v10378
    %v10642 = vunpack.c.l.b16 %v10379
    %v10643 = vunpack.c.l.b16 %v10380
    %v10644 = vunpack.c.l.b16 %v10381
    %v10645 = vunpack.c.l.b16 %v10382
    %v10646 = vunpack.c.l.b16 %v10383
    %v10647 = vunpack.c.l.b16 %v10384
    %v10648 = vunpack.c.l.b16 %v10385
    %v10649 = vunpack.c.l.b16 %v10386
    %v10650 = vunpack.c.l.b16 %v10387
    %v10651 = vunpack.c.l.b16 %v10388
    %v10652 = vunpack.c.l.b16 %v10389
    %v10653 = vunpack.c.l.b16 %v10390
    %v10654 = vunpack.c.l.b16 %v10391
    %v10655 = vunpack.c.l.b16 %v10392
    %v10656 = vunpack.c.l.b16 %v10393
    %v10657 = vunpack.c.l.b16 %v10394
    %v10658 = vunpack.c.l.b16 %v10395
    %v10659 = vunpack.c.l.b16 %v10396
    %v10660 = vunpack.c.l.b16 %v10397
    %v10661 = vunpack.c.l.b16 %v10398
    %v10662 = vunpack.c.l.b16 %v10399
    %v10663 = vunpack.c.l.b16 %v10400
    %v10664 = vunpack.c.l.b16 %v10401
    %v10665 = vunpack.c.l.b16 %v10402
    %v10666 = vunpack.c.l.b16 %v10403
    %v10667 = vunpack.c.l.b16 %v10404
    %v10668 = vunpack.c.l.b16 %v10405
    %v10669 = vunpack.c.l.b16 %v10406
    %v10670 = vunpack.c.l.b16 %v10407
    %v10671 = vunpack.c.l.b16 %v10408
    %v10672 = vunpack.c.l.b16 %v10409
    %v10673 = vunpack.c.l.b16 %v10410
    %v10674 = vunpack.c.l.b16 %v10411
    %v10675 = vunpack.c.l.b16 %v10412
    %v10676 = vunpack.c.l.b16 %v10413
    %v10677 = vunpack.c.l.b16 %v10414
    %v10678 = vunpack.c.l.b16 %v10415
    %v10679 = vunpack.c.l.b16 %v10416
    %v10680 = vunpack.c.l.b16 %v10417
    %v10681 = vunpack.c.l.b16 %v10418
    %v10682 = vunpack.c.l.b16 %v10419
    %v10683 = vunpack.c.l.b16 %v10420
    %v10684 = vunpack.c.l.b16 %v10421
    %v10685 = vunpack.c.l.b16 %v10422
    %v10686 = vunpack.c.l.b16 %v10423
    %v10687 = vunpack.c.l.b16 %v10424
    %v10688 = vunpack.c.l.b16 %v10425
    %v10689 = vunpack.c.l.b16 %v10426
    %v10690 = vpack.c.b16 %v10563, %v10562
    %v10691 = vpack.c.b16 %v10565, %v10564
    %v10692 = vpack.c.b16 %v10567, %v10566
    %v10693 = vpack.c.b16 %v10569, %v10568
    %v10694 = vpack.c.b16 %v10571, %v10570
    %v10695 = vpack.c.b16 %v10573, %v10572
    %v10696 = vpack.c.b16 %v10575, %v10574
    %v10697 = vpack.c.b16 %v10577, %v10576
    %v10698 = vpack.c.b16 %v10579, %v10578
    %v10699 = vpack.c.b16 %v10581, %v10580
    %v10700 = vpack.c.b16 %v10583, %v10582
    %v10701 = vpack.c.b16 %v10585, %v10584
    %v10702 = vpack.c.b16 %v10587, %v10586
    %v10703 = vpack.c.b16 %v10589, %v10588
    %v10704 = vpack.c.b16 %v10591, %v10590
    %v10705 = vpack.c.b16 %v10593, %v10592
    %v10706 = vpack.c.b16 %v10595, %v10594
    %v10707 = vpack.c.b16 %v10597, %v10596
    %v10708 = vpack.c.b16 %v10599, %v10598
    %v10709 = vpack.c.b16 %v10601, %v10600
    %v10710 = vpack.c.b16 %v10603, %v10602
    %v10711 = vpack.c.b16 %v10605, %v10604
    %v10712 = vpack.c.b16 %v10607, %v10606
    %v10713 = vpack.c.b16 %v10609, %v10608
    %v10714 = vpack.c.b16 %v10611, %v10610
    %v10715 = vpack.c.b16 %v10613, %v10612
    %v10716 = vpack.c.b16 %v10615, %v10614
    %v10717 = vpack.c.b16 %v10617, %v10616
    %v10718 = vpack.c.b16 %v10619, %v10618
    %v10719 = vpack.c.b16 %v10621, %v10620
    %v10720 = vpack.c.b16 %v10623, %v10622
    %v10721 = vpack.c.b16 %v10625, %v10624
    %v10722 = vpack.c.b16 %v10627, %v10626
    %v10723 = vpack.c.b16 %v10629, %v10628
    %v10724 = vpack.c.b16 %v10631, %v10630
    %v10725 = vpack.c.b16 %v10633, %v10632
    %v10726 = vpack.c.b16 %v10635, %v10634
    %v10727 = vpack.c.b16 %v10637, %v10636
    %v10728 = vpack.c.b16 %v10639, %v10638
    %v10729 = vpack.c.b16 %v10641, %v10640
    %v10730 = vpack.c.b16 %v10643, %v10642
    %v10731 = vpack.c.b16 %v10645, %v10644
    %v10732 = vpack.c.b16 %v10647, %v10646
    %v10733 = vpack.c.b16 %v10649, %v10648
    %v10734 = vpack.c.b16 %v10651, %v10650
    %v10735 = vpack.c.b16 %v10653, %v10652
    %v10736 = vpack.c.b16 %v10655, %v10654
    %v10737 = vpack.c.b16 %v10657, %v10656
    %v10738 = vpack.c.b16 %v10659, %v10658
    %v10739 = vpack.c.b16 %v10661, %v10660
    %v10740 = vpack.c.b16 %v10663, %v10662
    %v10741 = vpack.c.b16 %v10665, %v10664
    %v10742 = vpack.c.b16 %v10667, %v10666
    %v10743 = vpack.c.b16 %v10669, %v10668
    %v10744 = vpack.c.b16 %v10671, %v10670
    %v10745 = vpack.c.b16 %v10673, %v10672
    %v10746 = vpack.c.b16 %v10675, %v10674
    %v10747 = vpack.c.b16 %v10677, %v10676
    %v10748 = vpack.c.b16 %v10679, %v10678
    %v10749 = vpack.c.b16 %v10681, %v10680
    %v10750 = vpack.c.b16 %v10683, %v10682
    %v10751 = vpack.c.b16 %v10685, %v10684
    %v10752 = vpack.c.b16 %v10687, %v10686
    %v10753 = vpack.c.b16 %v10689, %v10688
    %10818 = vmatprep.subr.bf16.mxu0 0
    %10819 = vmatpush1.bf16.msra.mxu0 %v10697
    %10820 = vmatprep.subr.bf16.mxu0 0
    %10821 = vmatpush1.bf16.msra.mxu0 %v10696
    %10822 = vmatprep.subr.bf16.mxu0 0
    %10823 = vmatpush1.bf16.msra.mxu0 %v10695
    %10824 = vmatprep.subr.bf16.mxu0 0
    %10825 = vmatpush1.bf16.msra.mxu0 %v10694
    %10826 = vmatprep.subr.bf16.mxu0 0
    %10827 = vmatpush1.bf16.msra.mxu0 %v10693
    %10828 = vmatprep.subr.bf16.mxu0 0
    %10829 = vmatpush1.bf16.msra.mxu0 %v10692
    %10830 = vmatprep.subr.bf16.mxu0 0
    %10831 = vmatpush1.bf16.msra.mxu0 %v10691
    %10832 = vmatprep.subr.bf16.mxu0 0
    %10833 = vmatpush1.bf16.msra.mxu0 %v10690
    %10834 = vmatprep.subr.bf16.mxu0 0
    %10835 = vmatpush2.bf16.msra.mxu0 %v10705
    %10836 = vmatprep.subr.bf16.mxu0 0
    %10837 = vmatpush2.bf16.msra.mxu0 %v10704
    %10838 = vmatprep.subr.bf16.mxu0 0
    %10839 = vmatpush2.bf16.msra.mxu0 %v10703
    %10840 = vmatprep.subr.bf16.mxu0 0
    %10841 = vmatpush2.bf16.msra.mxu0 %v10702
    %10842 = vmatprep.subr.bf16.mxu0 0
    %10843 = vmatpush2.bf16.msra.mxu0 %v10701
    %10844 = vmatprep.subr.bf16.mxu0 0
    %10845 = vmatpush2.bf16.msra.mxu0 %v10700
    %10846 = vmatprep.subr.bf16.mxu0 0
    %10847 = vmatpush2.bf16.msra.mxu0 %v10699
    %10848 = vmatprep.subr.bf16.mxu0 0
    %10849 = vmatpush2.bf16.msra.mxu0 %v10698
    %10850 = vmatprep.mubr.bf16.mxu0 %v10236
    %10851 = vmatmul.mubr.bf16.gmra.mxu0 %v10235
    %v10852 = vpop.f32.mrf.mxu0
    %v10853 = vadd.f32 %v10432, %v10852
    %v10854 = vpop.f32.mrf.mxu0
    %v10855 = vpop.f32.mrf.mxu0
    %v10856 = vadd.f32 %v10432, %v10855
    %v10857 = vpop.f32.mrf.mxu0
    %10858 = vmatprep.mubr.bf16.mxu0 %v10244
    %10859 = vmatmul.mubr.bf16.gmra.mxu0 %v10243
    %v10860 = vpop.f32.mrf.mxu0
    %v10861 = vadd.f32 %v10432, %v10860
    %v10862 = vpop.f32.mrf.mxu0
    %v10863 = vpop.f32.mrf.mxu0
    %v10864 = vadd.f32 %v10432, %v10863
    %v10865 = vpop.f32.mrf.mxu0
    %10866 = vmatprep.mubr.bf16.mxu0 %v10252
    %10867 = vmatmul.mubr.bf16.gmra.mxu0 %v10251
    %v10868 = vpop.f32.mrf.mxu0
    %v10869 = vadd.f32 %v10432, %v10868
    %v10870 = vpop.f32.mrf.mxu0
    %v10871 = vpop.f32.mrf.mxu0
    %v10872 = vadd.f32 %v10432, %v10871
    %v10873 = vpop.f32.mrf.mxu0
    %10874 = vmatprep.mubr.bf16.mxu0 %v10260
    %10875 = vmatmul.mubr.bf16.gmra.mxu0 %v10259
    %v10876 = vpop.f32.mrf.mxu0
    %v10877 = vadd.f32 %v10432, %v10876
    %v10878 = vpop.f32.mrf.mxu0
    %v10879 = vpop.f32.mrf.mxu0
    %v10880 = vadd.f32 %v10432, %v10879
    %v10881 = vpop.f32.mrf.mxu0
    %10882 = vmatprep.mubr.bf16.mxu0 %v10268
    %10883 = vmatmul.mubr.bf16.gmra.mxu0 %v10267
    %v10884 = vpop.f32.mrf.mxu0
    %v10885 = vadd.f32 %v10432, %v10884
    %v10886 = vpop.f32.mrf.mxu0
    %v10887 = vpop.f32.mrf.mxu0
    %v10888 = vadd.f32 %v10432, %v10887
    %v10889 = vpop.f32.mrf.mxu0
    %10890 = vmatprep.mubr.bf16.mxu0 %v10276
    %10891 = vmatmul.mubr.bf16.gmra.mxu0 %v10275
    %v10892 = vpop.f32.mrf.mxu0
    %v10893 = vadd.f32 %v10432, %v10892
    %v10894 = vpop.f32.mrf.mxu0
    %v10895 = vpop.f32.mrf.mxu0
    %v10896 = vadd.f32 %v10432, %v10895
    %v10897 = vpop.f32.mrf.mxu0
    %10898 = vmatprep.mubr.bf16.mxu0 %v10284
    %10899 = vmatmul.mubr.bf16.gmra.mxu0 %v10283
    %v10900 = vpop.f32.mrf.mxu0
    %v10901 = vadd.f32 %v10432, %v10900
    %v10902 = vpop.f32.mrf.mxu0
    %v10903 = vpop.f32.mrf.mxu0
    %v10904 = vadd.f32 %v10432, %v10903
    %v10905 = vpop.f32.mrf.mxu0
    %10906 = vmatprep.mubr.bf16.mxu0 %v10292
    %10907 = vmatmul.mubr.bf16.gmra.mxu0 %v10291
    %v10908 = vpop.f32.mrf.mxu0
    %v10909 = vadd.f32 %v10432, %v10908
    %v10910 = vpop.f32.mrf.mxu0
    %v10911 = vpop.f32.mrf.mxu0
    %v10912 = vadd.f32 %v10432, %v10911
    %v10913 = vpop.f32.mrf.mxu0
    %10914 = vdwg.mxu0
    %10915 = vmatprep.subr.bf16.mxu0 0
    %10916 = vmatpush1.bf16.msra.mxu0 %v10713
    %10917 = vmatprep.subr.bf16.mxu0 0
    %10918 = vmatpush1.bf16.msra.mxu0 %v10712
    %10919 = vmatprep.subr.bf16.mxu0 0
    %10920 = vmatpush1.bf16.msra.mxu0 %v10711
    %10921 = vmatprep.subr.bf16.mxu0 0
    %10922 = vmatpush1.bf16.msra.mxu0 %v10710
    %10923 = vmatprep.subr.bf16.mxu0 0
    %10924 = vmatpush1.bf16.msra.mxu0 %v10709
    %10925 = vmatprep.subr.bf16.mxu0 0
    %10926 = vmatpush1.bf16.msra.mxu0 %v10708
    %10927 = vmatprep.subr.bf16.mxu0 0
    %10928 = vmatpush1.bf16.msra.mxu0 %v10707
    %10929 = vmatprep.subr.bf16.mxu0 0
    %10930 = vmatpush1.bf16.msra.mxu0 %v10706
    %10931 = vmatprep.subr.bf16.mxu0 0
    %10932 = vmatpush2.bf16.msra.mxu0 %v10721
    %10933 = vmatprep.subr.bf16.mxu0 0
    %10934 = vmatpush2.bf16.msra.mxu0 %v10720
    %10935 = vmatprep.subr.bf16.mxu0 0
    %10936 = vmatpush2.bf16.msra.mxu0 %v10719
    %10937 = vmatprep.subr.bf16.mxu0 0
    %10938 = vmatpush2.bf16.msra.mxu0 %v10718
    %10939 = vmatprep.subr.bf16.mxu0 0
    %10940 = vmatpush2.bf16.msra.mxu0 %v10717
    %10941 = vmatprep.subr.bf16.mxu0 0
    %10942 = vmatpush2.bf16.msra.mxu0 %v10716
    %10943 = vmatprep.subr.bf16.mxu0 0
    %10944 = vmatpush2.bf16.msra.mxu0 %v10715
    %10945 = vmatprep.subr.bf16.mxu0 0
    %10946 = vmatpush2.bf16.msra.mxu0 %v10714
    %10947 = vmatprep.mubr.bf16.mxu0 %v10238
    %10948 = vmatmul.mubr.bf16.gmra.mxu0 %v10237
    %v10949 = vpop.f32.mrf.mxu0
    %v10950 = vadd.f32 %v10853, %v10949
    %v10951 = vpop.f32.mrf.mxu0
    %v10952 = vpop.f32.mrf.mxu0
    %v10953 = vadd.f32 %v10856, %v10952
    %v10954 = vpop.f32.mrf.mxu0
    %10955 = vmatprep.mubr.bf16.mxu0 %v10246
    %10956 = vmatmul.mubr.bf16.gmra.mxu0 %v10245
    %v10957 = vpop.f32.mrf.mxu0
    %v10958 = vadd.f32 %v10861, %v10957
    %v10959 = vpop.f32.mrf.mxu0
    %v10960 = vpop.f32.mrf.mxu0
    %v10961 = vadd.f32 %v10864, %v10960
    %v10962 = vpop.f32.mrf.mxu0
    %10963 = vmatprep.mubr.bf16.mxu0 %v10254
    %10964 = vmatmul.mubr.bf16.gmra.mxu0 %v10253
    %v10965 = vpop.f32.mrf.mxu0
    %v10966 = vadd.f32 %v10869, %v10965
    %v10967 = vpop.f32.mrf.mxu0
    %v10968 = vpop.f32.mrf.mxu0
    %v10969 = vadd.f32 %v10872, %v10968
    %v10970 = vpop.f32.mrf.mxu0
    %10971 = vmatprep.mubr.bf16.mxu0 %v10262
    %10972 = vmatmul.mubr.bf16.gmra.mxu0 %v10261
    %v10973 = vpop.f32.mrf.mxu0
    %v10974 = vadd.f32 %v10877, %v10973
    %v10975 = vpop.f32.mrf.mxu0
    %v10976 = vpop.f32.mrf.mxu0
    %v10977 = vadd.f32 %v10880, %v10976
    %v10978 = vpop.f32.mrf.mxu0
    %10979 = vmatprep.mubr.bf16.mxu0 %v10270
    %10980 = vmatmul.mubr.bf16.gmra.mxu0 %v10269
    %v10981 = vpop.f32.mrf.mxu0
    %v10982 = vadd.f32 %v10885, %v10981
    %v10983 = vpop.f32.mrf.mxu0
    %v10984 = vpop.f32.mrf.mxu0
    %v10985 = vadd.f32 %v10888, %v10984
    %v10986 = vpop.f32.mrf.mxu0
    %10987 = vmatprep.mubr.bf16.mxu0 %v10278
    %10988 = vmatmul.mubr.bf16.gmra.mxu0 %v10277
    %v10989 = vpop.f32.mrf.mxu0
    %v10990 = vadd.f32 %v10893, %v10989
    %v10991 = vpop.f32.mrf.mxu0
    %v10992 = vpop.f32.mrf.mxu0
    %v10993 = vadd.f32 %v10896, %v10992
    %v10994 = vpop.f32.mrf.mxu0
    %10995 = vmatprep.mubr.bf16.mxu0 %v10286
    %10996 = vmatmul.mubr.bf16.gmra.mxu0 %v10285
    %v10997 = vpop.f32.mrf.mxu0
    %v10998 = vadd.f32 %v10901, %v10997
    %v10999 = vpop.f32.mrf.mxu0
    %v11000 = vpop.f32.mrf.mxu0
    %v11001 = vadd.f32 %v10904, %v11000
    %v11002 = vpop.f32.mrf.mxu0
    %11003 = vmatprep.mubr.bf16.mxu0 %v10294
    %11004 = vmatmul.mubr.bf16.gmra.mxu0 %v10293
    %v11005 = vpop.f32.mrf.mxu0
    %v11006 = vadd.f32 %v10909, %v11005
    %v11007 = vpop.f32.mrf.mxu0
    %v11008 = vpop.f32.mrf.mxu0
    %v11009 = vadd.f32 %v10912, %v11008
    %v11010 = vpop.f32.mrf.mxu0
    %11011 = vdwg.mxu0
    %11012 = vmatprep.subr.bf16.mxu0 0
    %11013 = vmatpush1.bf16.msra.mxu0 %v10729
    %11014 = vmatprep.subr.bf16.mxu0 0
    %11015 = vmatpush1.bf16.msra.mxu0 %v10728
    %11016 = vmatprep.subr.bf16.mxu0 0
    %11017 = vmatpush1.bf16.msra.mxu0 %v10727
    %11018 = vmatprep.subr.bf16.mxu0 0
    %11019 = vmatpush1.bf16.msra.mxu0 %v10726
    %11020 = vmatprep.subr.bf16.mxu0 0
    %11021 = vmatpush1.bf16.msra.mxu0 %v10725
    %11022 = vmatprep.subr.bf16.mxu0 0
    %11023 = vmatpush1.bf16.msra.mxu0 %v10724
    %11024 = vmatprep.subr.bf16.mxu0 0
    %11025 = vmatpush1.bf16.msra.mxu0 %v10723
    %11026 = vmatprep.subr.bf16.mxu0 0
    %11027 = vmatpush1.bf16.msra.mxu0 %v10722
    %11028 = vmatprep.subr.bf16.mxu0 0
    %11029 = vmatpush2.bf16.msra.mxu0 %v10737
    %11030 = vmatprep.subr.bf16.mxu0 0
    %11031 = vmatpush2.bf16.msra.mxu0 %v10736
    %11032 = vmatprep.subr.bf16.mxu0 0
    %11033 = vmatpush2.bf16.msra.mxu0 %v10735
    %11034 = vmatprep.subr.bf16.mxu0 0
    %11035 = vmatpush2.bf16.msra.mxu0 %v10734
    %11036 = vmatprep.subr.bf16.mxu0 0
    %11037 = vmatpush2.bf16.msra.mxu0 %v10733
    %11038 = vmatprep.subr.bf16.mxu0 0
    %11039 = vmatpush2.bf16.msra.mxu0 %v10732
    %11040 = vmatprep.subr.bf16.mxu0 0
    %11041 = vmatpush2.bf16.msra.mxu0 %v10731
    %11042 = vmatprep.subr.bf16.mxu0 0
    %11043 = vmatpush2.bf16.msra.mxu0 %v10730
    %11044 = vmatprep.mubr.bf16.mxu0 %v10240
    %11045 = vmatmul.mubr.bf16.gmra.mxu0 %v10239
    %v11046 = vpop.f32.mrf.mxu0
    %v11047 = vadd.f32 %v10950, %v11046
    %v11048 = vpop.f32.mrf.mxu0
    %v11049 = vpop.f32.mrf.mxu0
    %v11050 = vadd.f32 %v10953, %v11049
    %v11051 = vpop.f32.mrf.mxu0
    %11052 = vmatprep.mubr.bf16.mxu0 %v10248
    %11053 = vmatmul.mubr.bf16.gmra.mxu0 %v10247
    %v11054 = vpop.f32.mrf.mxu0
    %v11055 = vadd.f32 %v10958, %v11054
    %v11056 = vpop.f32.mrf.mxu0
    %v11057 = vpop.f32.mrf.mxu0
    %v11058 = vadd.f32 %v10961, %v11057
    %v11059 = vpop.f32.mrf.mxu0
    %11060 = vmatprep.mubr.bf16.mxu0 %v10256
    %11061 = vmatmul.mubr.bf16.gmra.mxu0 %v10255
    %v11062 = vpop.f32.mrf.mxu0
    %v11063 = vadd.f32 %v10966, %v11062
    %v11064 = vpop.f32.mrf.mxu0
    %v11065 = vpop.f32.mrf.mxu0
    %v11066 = vadd.f32 %v10969, %v11065
    %v11067 = vpop.f32.mrf.mxu0
    %11068 = vmatprep.mubr.bf16.mxu0 %v10264
    %11069 = vmatmul.mubr.bf16.gmra.mxu0 %v10263
    %v11070 = vpop.f32.mrf.mxu0
    %v11071 = vadd.f32 %v10974, %v11070
    %v11072 = vpop.f32.mrf.mxu0
    %v11073 = vpop.f32.mrf.mxu0
    %v11074 = vadd.f32 %v10977, %v11073
    %v11075 = vpop.f32.mrf.mxu0
    %11076 = vmatprep.mubr.bf16.mxu0 %v10272
    %11077 = vmatmul.mubr.bf16.gmra.mxu0 %v10271
    %v11078 = vpop.f32.mrf.mxu0
    %v11079 = vadd.f32 %v10982, %v11078
    %v11080 = vpop.f32.mrf.mxu0
    %v11081 = vpop.f32.mrf.mxu0
    %v11082 = vadd.f32 %v10985, %v11081
    %v11083 = vpop.f32.mrf.mxu0
    %11084 = vmatprep.mubr.bf16.mxu0 %v10280
    %11085 = vmatmul.mubr.bf16.gmra.mxu0 %v10279
    %v11086 = vpop.f32.mrf.mxu0
    %v11087 = vadd.f32 %v10990, %v11086
    %v11088 = vpop.f32.mrf.mxu0
    %v11089 = vpop.f32.mrf.mxu0
    %v11090 = vadd.f32 %v10993, %v11089
    %v11091 = vpop.f32.mrf.mxu0
    %11092 = vmatprep.mubr.bf16.mxu0 %v10288
    %11093 = vmatmul.mubr.bf16.gmra.mxu0 %v10287
    %v11094 = vpop.f32.mrf.mxu0
    %v11095 = vadd.f32 %v10998, %v11094
    %v11096 = vpop.f32.mrf.mxu0
    %v11097 = vpop.f32.mrf.mxu0
    %v11098 = vadd.f32 %v11001, %v11097
    %v11099 = vpop.f32.mrf.mxu0
    %11100 = vmatprep.mubr.bf16.mxu0 %v10296
    %11101 = vmatmul.mubr.bf16.gmra.mxu0 %v10295
    %v11102 = vpop.f32.mrf.mxu0
    %v11103 = vadd.f32 %v11006, %v11102
    %v11104 = vpop.f32.mrf.mxu0
    %v11105 = vpop.f32.mrf.mxu0
    %v11106 = vadd.f32 %v11009, %v11105
    %v11107 = vpop.f32.mrf.mxu0
    %11108 = vdwg.mxu0
    %11109 = vmatprep.subr.bf16.mxu0 0
    %11110 = vmatpush1.bf16.msra.mxu0 %v10745
    %11111 = vmatprep.subr.bf16.mxu0 0
    %11112 = vmatpush1.bf16.msra.mxu0 %v10744
    %11113 = vmatprep.subr.bf16.mxu0 0
    %11114 = vmatpush1.bf16.msra.mxu0 %v10743
    %11115 = vmatprep.subr.bf16.mxu0 0
    %11116 = vmatpush1.bf16.msra.mxu0 %v10742
    %11117 = vmatprep.subr.bf16.mxu0 0
    %11118 = vmatpush1.bf16.msra.mxu0 %v10741
    %11119 = vmatprep.subr.bf16.mxu0 0
    %11120 = vmatpush1.bf16.msra.mxu0 %v10740
    %11121 = vmatprep.subr.bf16.mxu0 0
    %11122 = vmatpush1.bf16.msra.mxu0 %v10739
    %11123 = vmatprep.subr.bf16.mxu0 0
    %11124 = vmatpush1.bf16.msra.mxu0 %v10738
    %11125 = vmatprep.subr.bf16.mxu0 0
    %11126 = vmatpush2.bf16.msra.mxu0 %v10753
    %11127 = vmatprep.subr.bf16.mxu0 0
    %11128 = vmatpush2.bf16.msra.mxu0 %v10752
    %11129 = vmatprep.subr.bf16.mxu0 0
    %11130 = vmatpush2.bf16.msra.mxu0 %v10751
    %11131 = vmatprep.subr.bf16.mxu0 0
    %11132 = vmatpush2.bf16.msra.mxu0 %v10750
    %11133 = vmatprep.subr.bf16.mxu0 0
    %11134 = vmatpush2.bf16.msra.mxu0 %v10749
    %11135 = vmatprep.subr.bf16.mxu0 0
    %11136 = vmatpush2.bf16.msra.mxu0 %v10748
    %11137 = vmatprep.subr.bf16.mxu0 0
    %11138 = vmatpush2.bf16.msra.mxu0 %v10747
    %11139 = vmatprep.subr.bf16.mxu0 0
    %11140 = vmatpush2.bf16.msra.mxu0 %v10746
    %11141 = vmatprep.mubr.bf16.mxu0 %v10242
    %11142 = vmatmul.mubr.bf16.gmra.mxu0 %v10241
    %v11143 = vpop.f32.mrf.mxu0
    %v11144 = vadd.f32 %v11047, %v11143
    %v11145 = vpop.f32.mrf.mxu0
    %v11146 = vpop.f32.mrf.mxu0
    %v11147 = vadd.f32 %v11050, %v11146
    %v11148 = vpop.f32.mrf.mxu0
    %11149 = vmatprep.mubr.bf16.mxu0 %v10250
    %11150 = vmatmul.mubr.bf16.gmra.mxu0 %v10249
    %v11151 = vpop.f32.mrf.mxu0
    %v11152 = vadd.f32 %v11055, %v11151
    %v11153 = vpop.f32.mrf.mxu0
    %v11154 = vpop.f32.mrf.mxu0
    %v11155 = vadd.f32 %v11058, %v11154
    %v11156 = vpop.f32.mrf.mxu0
    %11157 = vmatprep.mubr.bf16.mxu0 %v10258
    %11158 = vmatmul.mubr.bf16.gmra.mxu0 %v10257
    %v11159 = vpop.f32.mrf.mxu0
    %v11160 = vadd.f32 %v11063, %v11159
    %v11161 = vpop.f32.mrf.mxu0
    %v11162 = vpop.f32.mrf.mxu0
    %v11163 = vadd.f32 %v11066, %v11162
    %v11164 = vpop.f32.mrf.mxu0
    %11165 = vmatprep.mubr.bf16.mxu0 %v10266
    %11166 = vmatmul.mubr.bf16.gmra.mxu0 %v10265
    %v11167 = vpop.f32.mrf.mxu0
    %v11168 = vadd.f32 %v11071, %v11167
    %v11169 = vpop.f32.mrf.mxu0
    %v11170 = vpop.f32.mrf.mxu0
    %v11171 = vadd.f32 %v11074, %v11170
    %v11172 = vpop.f32.mrf.mxu0
    %11173 = vmatprep.mubr.bf16.mxu0 %v10274
    %11174 = vmatmul.mubr.bf16.gmra.mxu0 %v10273
    %v11175 = vpop.f32.mrf.mxu0
    %v11176 = vadd.f32 %v11079, %v11175
    %v11177 = vpop.f32.mrf.mxu0
    %v11178 = vpop.f32.mrf.mxu0
    %v11179 = vadd.f32 %v11082, %v11178
    %v11180 = vpop.f32.mrf.mxu0
    %11181 = vmatprep.mubr.bf16.mxu0 %v10282
    %11182 = vmatmul.mubr.bf16.gmra.mxu0 %v10281
    %v11183 = vpop.f32.mrf.mxu0
    %v11184 = vadd.f32 %v11087, %v11183
    %v11185 = vpop.f32.mrf.mxu0
    %v11186 = vpop.f32.mrf.mxu0
    %v11187 = vadd.f32 %v11090, %v11186
    %v11188 = vpop.f32.mrf.mxu0
    %11189 = vmatprep.mubr.bf16.mxu0 %v10290
    %11190 = vmatmul.mubr.bf16.gmra.mxu0 %v10289
    %v11191 = vpop.f32.mrf.mxu0
    %v11192 = vadd.f32 %v11095, %v11191
    %v11193 = vpop.f32.mrf.mxu0
    %v11194 = vpop.f32.mrf.mxu0
    %v11195 = vadd.f32 %v11098, %v11194
    %v11196 = vpop.f32.mrf.mxu0
    %11197 = vmatprep.mubr.bf16.mxu0 %v10298
    %11198 = vmatmul.mubr.bf16.gmra.mxu0 %v10297
    %v11199 = vpop.f32.mrf.mxu0
    %v11200 = vadd.f32 %v11103, %v11199
    %v11201 = vpop.f32.mrf.mxu0
    %v11202 = vpop.f32.mrf.mxu0
    %v11203 = vadd.f32 %v11106, %v11202
    %v11204 = vpop.f32.mrf.mxu0
    %11205 = vdwg.mxu0
    %11206 = vst [vmem:[%s7] sm:$0xff] %v11144
    %11207 = vst [vmem:[%s7 + $0x8] sm:$0xff] %v11147
    %11208 = vst [vmem:[%s7 + $0x10] sm:$0xff] %v11152
    %11209 = vst [vmem:[%s7 + $0x18] sm:$0xff] %v11155
    %11210 = vst [vmem:[%s7 + $0x20] sm:$0xff] %v11160
    %11211 = vst [vmem:[%s7 + $0x28] sm:$0xff] %v11163
    %11212 = vst [vmem:[%s7 + $0x30] sm:$0xff] %v11168
    %11213 = vst [vmem:[%s7 + $0x38] sm:$0xff] %v11171
    %11214 = vst [vmem:[%s7 + $0x40] sm:$0xff] %v11176
    %11215 = vst [vmem:[%s7 + $0x48] sm:$0xff] %v11179
    %11216 = vst [vmem:[%s7 + $0x50] sm:$0xff] %v11184
    %11217 = vst [vmem:[%s7 + $0x58] sm:$0xff] %v11187
    %11218 = vst [vmem:[%s7 + $0x60] sm:$0xff] %v11192
    %11219 = vst [vmem:[%s7 + $0x68] sm:$0xff] %v11195
    %11220 = vst [vmem:[%s7 + $0x70] sm:$0xff] %v11200
    %11221 = vst [vmem:[%s7 + $0x78] sm:$0xff] %v11203
    // Predicated region
    $region54: #{qnet_forward.1} parent=1 // pred_check
      _
    $region55: #{qnet_forward.1} parent=1 // pred_check_branch
      %11223 = sbr.rel (0) target = $region57
    $region56: #{qnet_forward.1} parent=1 // pred_region
      _
    $region57: #{qnet_forward.1} parent=1 // pred_fallthru
      _
    // Predicated region
    $region58: #{qnet_forward.1} parent=1 // pred_check
      _
    $region59: #{qnet_forward.1} parent=1 // pred_check_branch
      %11225 = sbr.rel (0) target = $region61
    $region60: #{qnet_forward.1} parent=1 // pred_region
      _
    $region61: #{qnet_forward.1} parent=1 // pred_fallthru
      _
    %11226 = vsyncpa [#allocation3], 1
    %11227 = vsyncpa [#allocation5], 1
    %11228 = vsyncpa [#allocation8], 1
    %11229 = vsyncpa [#allocation11], 1

</llo_original>
